<compile_context>
chip_gen: v5e
topology: v5e:2x2
jax: 0.10.0
libtpu: 0.0.40
codegen_flags: <defaults>
</compile_context>

<pallas_src>
import functools
import math

import jax
import jax.numpy as jnp
import numpy as np
from jax import lax
from jax.experimental import pallas as pl
from jax.experimental.pallas import tpu as pltpu

_LN_EPS = 1e-5                       # torch.nn.LayerNorm default (spec uses nn.LayerNorm)
_VMEM_LIMIT = 64 * 1024 * 1024       # explicit scoped-VMEM cap (safe on v5e/v6e/v7x)


def _round_up(x: int, m: int) -> int:
    return ((x + m - 1) // m) * m


def _choose_row_tile(M: int, block_rows: int) -> int:
    """8-aligned row tile that divides M, <= block_rows, with >=2 grid steps when
    possible (so both v7x TensorCores get work)."""
    assert M % 8 == 0
    cap = min(block_rows, M if M <= 8 else max(M // 2, 8))
    tm = 8
    for cand in range(16, cap + 1, 8):
        if M % cand == 0:
            tm = cand
    return tm


def _layer_norm_f32(x, g, b, d_real: int):
    """LayerNorm over the last axis; x is zero-padded beyond d_real, so sums over the
    padded axis equal sums over the real features and we divide by the real dim."""
    inv_d = jnp.float32(1.0 / d_real)
    mean = jnp.sum(x, axis=-1, keepdims=True) * inv_d
    var = jnp.sum(x * x, axis=-1, keepdims=True) * inv_d - mean * mean
    return (x - mean) * lax.rsqrt(var + jnp.float32(_LN_EPS)) * g + b


def _in_kernel_dropout(y, seed_ref, dropout_p: float):
    # TODO(synk): hardware PRNG (pltpu.prng_seed) only lowers on real TPUs, not the
    # CPU interpreter; this path is only traced when training=True.
    pltpu.prng_seed(seed_ref[0] + pl.program_id(0))
    bits = pltpu.bitcast(pltpu.prng_random_bits(y.shape), jnp.uint32)
    bits31 = pltpu.bitcast(bits >> 1, jnp.int32)
    thresh = jnp.int32(int(round(dropout_p * float(1 << 31))))
    keep = bits31 >= thresh
    return y * jnp.where(keep, jnp.float32(1.0 / (1.0 - dropout_p)), jnp.float32(0.0))


# ---------------------------------------------------------------------------
# Kernel 1: fused LayerNorm + QKV projection (one resident (Dp, 3*Dp) weight)
# ---------------------------------------------------------------------------
def _ln_qkv_kernel(x_ref, g_ref, b_ref, w_ref, bias_ref, q_ref, k_ref, v_ref, *,
                   d_real: int, d_pad: int, compute_dtype):
    x = x_ref[...].astype(jnp.float32)                       # (TM, Dp)
    h = _layer_norm_f32(x, g_ref[...], b_ref[...], d_real)
    y = jnp.dot(h.astype(compute_dtype), w_ref[...],
                preferred_element_type=jnp.float32) + bias_ref[...]
    q_ref[...] = y[:, :d_pad].astype(q_ref.dtype)
    k_ref[...] = y[:, d_pad:2 * d_pad].astype(k_ref.dtype)
    v_ref[...] = y[:, 2 * d_pad:].astype(v_ref.dtype)


def _ln_qkv(x2, g, b, w_qkv, b_qkv, *, d_real, compute_dtype, block_rows):
    M, Dp = x2.shape
    tm = _choose_row_tile(M, block_rows)
    kern = functools.partial(_ln_qkv_kernel, d_real=d_real, d_pad=Dp,
                             compute_dtype=compute_dtype)
    q, k, v = pl.pallas_call(
        kern,
        out_shape=[jax.ShapeDtypeStruct((M, Dp), x2.dtype)] * 3,
        grid=(M // tm,),
        in_specs=[
            pl.BlockSpec((tm, Dp), lambda i: (i, 0)),
            pl.BlockSpec((1, Dp), lambda i: (0, 0)),          # gamma (resident)
            pl.BlockSpec((1, Dp), lambda i: (0, 0)),          # beta  (resident)
            pl.BlockSpec((Dp, 3 * Dp), lambda i: (0, 0)),     # W_qkv (resident)
            pl.BlockSpec((1, 3 * Dp), lambda i: (0, 0)),      # b_qkv (resident)
        ],
        out_specs=[pl.BlockSpec((tm, Dp), lambda i: (i, 0))] * 3,
        compiler_params=pltpu.CompilerParams(
            dimension_semantics=("parallel",),
            vmem_limit_bytes=_VMEM_LIMIT),
    )(x2, g, b, w_qkv, b_qkv)
    return q, k, v


# ---------------------------------------------------------------------------
# Kernel 2: attention (per-head dots in-kernel) + output projection + residual
#           (+ optional dropout), grid=(B,), lane-dense (Sp, Dp) blocks.
# ---------------------------------------------------------------------------
def _attn_kernel(seed_ref, q_ref, k_ref, v_ref, bias_ref, x_ref, wo_ref, bo_ref,
                 o_ref, *, n_heads: int, d_head: int, scale: float, compute_dtype,
                 dropout_p: float, apply_dropout: bool):
    q = q_ref[...].astype(compute_dtype)                     # (Sp, Dp)
    k = k_ref[...].astype(compute_dtype)
    v = v_ref[...].astype(compute_dtype)
    bias = bias_ref[...].astype(jnp.float32)                 # (1, Sp) additive mask
    head_outs = []
    for h in range(n_heads):
        sl = slice(h * d_head, (h + 1) * d_head)
        s = lax.dot_general(q[:, sl], k[:, sl], (((1,), (1,)), ((), ())),
                            preferred_element_type=jnp.float32)
        s = s * jnp.float32(scale) + bias
        m = jnp.max(s, axis=-1, keepdims=True)
        p = jnp.exp(s - m)
        p = p / jnp.sum(p, axis=-1, keepdims=True)
        head_outs.append(jnp.dot(p.astype(compute_dtype), v[:, sl],
                                 preferred_element_type=jnp.float32))
    a = jnp.concatenate(head_outs, axis=-1)                  # (Sp, D_real) f32
    d_pad = q.shape[-1]
    if d_pad > a.shape[-1]:
        a = jnp.concatenate(
            [a, jnp.zeros((a.shape[0], d_pad - a.shape[-1]), jnp.float32)], axis=-1)
    y = jnp.dot(a.astype(compute_dtype), wo_ref[...],
                preferred_element_type=jnp.float32) + bo_ref[...]
    if apply_dropout:
        y = _in_kernel_dropout(y, seed_ref, dropout_p)
    o_ref[...] = (x_ref[...].astype(jnp.float32) + y).astype(o_ref.dtype)


def _attention(q, k, v, attn_bias, x_res, wo, bo, *, n_heads, d_head, compute_dtype,
               dropout_p, training, seed):
    """q, k, v, x_res: (B, Sp, Dp); attn_bias: (B, 1, Sp); returns x_res + proj(MHA)."""
    B, Sp, Dp = q.shape
    apply_dropout = bool(training) and float(dropout_p) > 0.0
    kern = functools.partial(
        _attn_kernel, n_heads=n_heads, d_head=d_head, scale=1.0 / math.sqrt(d_head),
        compute_dtype=compute_dtype, dropout_p=float(dropout_p),
        apply_dropout=apply_dropout)
    seed_arr = jnp.array([seed], jnp.int32)
    # TODO(synk): for long sequences this per-batch full-score kernel should become a
    # flash-style KV-tiled kernel; molecule graphs keep S small so Sp x Sp fits VMEM.
    return pl.pallas_call(
        kern,
        out_shape=jax.ShapeDtypeStruct((B, Sp, Dp), x_res.dtype),
        grid_spec=pltpu.PrefetchScalarGridSpec(
            num_scalar_prefetch=1,                 # dropout seed lands in SMEM
            grid=(B,),
            in_specs=[
                pl.BlockSpec((None, Sp, Dp), lambda b, s: (b, 0, 0)),   # q
                pl.BlockSpec((None, Sp, Dp), lambda b, s: (b, 0, 0)),   # k
                pl.BlockSpec((None, Sp, Dp), lambda b, s: (b, 0, 0)),   # v
                pl.BlockSpec((None, 1, Sp), lambda b, s: (b, 0, 0)),    # mask bias
                pl.BlockSpec((None, Sp, Dp), lambda b, s: (b, 0, 0)),   # residual x
                pl.BlockSpec((Dp, Dp), lambda b, s: (0, 0)),            # Wo (resident)
                pl.BlockSpec((1, Dp), lambda b, s: (0, 0)),             # bo (resident)
            ],
            out_specs=pl.BlockSpec((None, Sp, Dp), lambda b, s: (b, 0, 0)),
        ),
        compiler_params=pltpu.CompilerParams(
            dimension_semantics=("parallel",),
            vmem_limit_bytes=_VMEM_LIMIT),
    )(seed_arr, q, k, v, attn_bias, x_res, wo, bo)


# ---------------------------------------------------------------------------
# Kernel 3: fused LayerNorm + FFN (W1 / ReLU / W2) + residual (+ dropout);
#           the (TM, d_ff) intermediate never leaves VMEM.
# ---------------------------------------------------------------------------
def _ln_ffn_kernel(seed_ref, x_ref, g_ref, b_ref, w1_ref, b1_ref, w2_ref, b2_ref,
                   o_ref, *, d_real: int, compute_dtype, dropout_p: float,
                   apply_dropout: bool):
    x = x_ref[...].astype(jnp.float32)                       # (TM, Dp)
    h = _layer_norm_f32(x, g_ref[...], b_ref[...], d_real)
    t = jnp.dot(h.astype(compute_dtype), w1_ref[...],
                preferred_element_type=jnp.float32) + b1_ref[...]
    t = jnp.maximum(t, jnp.float32(0.0))
    y = jnp.dot(t.astype(compute_dtype), w2_ref[...],
                preferred_element_type=jnp.float32) + b2_ref[...]
    if apply_dropout:
        y = _in_kernel_dropout(y, seed_ref, dropout_p)
    o_ref[...] = (x + y).astype(o_ref.dtype)


def _ln_ffn(x2, g, b, w1, b1, w2, b2, *, d_real, compute_dtype, dropout_p, training,
            seed, block_rows):
    M, Dp = x2.shape
    Fp = w1.shape[1]
    tm = _choose_row_tile(M, block_rows)
    apply_dropout = bool(training) and float(dropout_p) > 0.0
    kern = functools.partial(_ln_ffn_kernel, d_real=d_real, compute_dtype=compute_dtype,
                             dropout_p=float(dropout_p), apply_dropout=apply_dropout)
    seed_arr = jnp.array([seed], jnp.int32)
    return pl.pallas_call(
        kern,
        out_shape=jax.ShapeDtypeStruct((M, Dp), x2.dtype),
        grid_spec=pltpu.PrefetchScalarGridSpec(
            num_scalar_prefetch=1,
            grid=(M // tm,),
            in_specs=[
                pl.BlockSpec((tm, Dp), lambda i, s: (i, 0)),
                pl.BlockSpec((1, Dp), lambda i, s: (0, 0)),
                pl.BlockSpec((1, Dp), lambda i, s: (0, 0)),
                pl.BlockSpec((Dp, Fp), lambda i, s: (0, 0)),   # W1 (resident)
                pl.BlockSpec((1, Fp), lambda i, s: (0, 0)),
                pl.BlockSpec((Fp, Dp), lambda i, s: (0, 0)),   # W2 (resident)
                pl.BlockSpec((1, Dp), lambda i, s: (0, 0)),
            ],
            out_specs=pl.BlockSpec((tm, Dp), lambda i, s: (i, 0)),
        ),
        compiler_params=pltpu.CompilerParams(
            dimension_semantics=("parallel",),
            vmem_limit_bytes=_VMEM_LIMIT),
    )(seed_arr, x2, g, b, w1, b1, w2, b2)


# ---------------------------------------------------------------------------
# Kernel 4: final LayerNorm
# ---------------------------------------------------------------------------
def _final_ln_kernel(x_ref, g_ref, b_ref, o_ref, *, d_real: int):
    x = x_ref[...].astype(jnp.float32)
    o_ref[...] = _layer_norm_f32(x, g_ref[...], b_ref[...], d_real).astype(o_ref.dtype)


def _final_layer_norm(x2, g, b, *, d_real, block_rows):
    M, Dp = x2.shape
    tm = _choose_row_tile(M, block_rows)
    return pl.pallas_call(
        functools.partial(_final_ln_kernel, d_real=d_real),
        out_shape=jax.ShapeDtypeStruct((M, Dp), x2.dtype),
        grid=(M // tm,),
        in_specs=[
            pl.BlockSpec((tm, Dp), lambda i: (i, 0)),
            pl.BlockSpec((1, Dp), lambda i: (0, 0)),
            pl.BlockSpec((1, Dp), lambda i: (0, 0)),
        ],
        out_specs=pl.BlockSpec((tm, Dp), lambda i: (i, 0)),
        compiler_params=pltpu.CompilerParams(
            dimension_semantics=("parallel",),
            vmem_limit_bytes=_VMEM_LIMIT),
    )(x2, g, b)


# ---------------------------------------------------------------------------
# Parameter preparation (done ONCE, outside the forward / jit): transpose to (K, N),
# pad to lane-dense multiples of 128, concatenate Wq/Wk/Wv, cast weights to the MXU
# compute dtype (bf16 by default, f32 accumulation); biases/LN params stay f32.
# ---------------------------------------------------------------------------
def prepare_encoder_params(params, *, compute_dtype=jnp.bfloat16):
    D = params["ln_g"].shape[0]
    Dp = _round_up(D, 128)

    def pad_vec(v, n):
        v = v.reshape(1, -1).astype(jnp.float32)
        return jnp.pad(v, ((0, 0), (0, n - v.shape[1]))) if v.shape[1] != n else v

    def pad_w(w, kp, np_):
        wt = w.T.astype(compute_dtype)                 # (K, N)
        pk, pn = kp - wt.shape[0], np_ - wt.shape[1]
        return jnp.pad(wt, ((0, pk), (0, pn))) if (pk or pn) else wt

    layers = []
    for p in params["layers"]:
        F = p["w1"].shape[0]
        Fp = _round_up(F, 128)
        layers.append(dict(
            ln0_g=pad_vec(p["ln0_g"], Dp), ln0_b=pad_vec(p["ln0_b"], Dp),
            w_qkv=jnp.concatenate([pad_w(p["wq"], Dp, Dp), pad_w(p["wk"], Dp, Dp),
                                   pad_w(p["wv"], Dp, Dp)], axis=1),
            b_qkv=jnp.concatenate([pad_vec(p["bq"], Dp), pad_vec(p["bk"], Dp),
                                   pad_vec(p["bv"], Dp)], axis=1),
            wo=pad_w(p["wo"], Dp, Dp), bo=pad_vec(p["bo"], Dp),
            ln1_g=pad_vec(p["ln1_g"], Dp), ln1_b=pad_vec(p["ln1_b"], Dp),
            w1=pad_w(p["w1"], Dp, Fp), b1=pad_vec(p["b1"], Fp),
            w2=pad_w(p["w2"], Fp, Dp), b2=pad_vec(p["b2"], Dp),
        ))
    return dict(layers=layers, ln_g=pad_vec(params["ln_g"], Dp),
                ln_b=pad_vec(params["ln_b"], Dp))


# ---------------------------------------------------------------------------
# Encoder forward (3 pallas_calls per layer + final LN)
# ---------------------------------------------------------------------------
def encoder_forward(x, mask, prep, *, d_model: int, n_heads: int, dropout_p: float = 0.0,
                    training: bool = False, seed: int = 0, block_rows: int = 256):
    B, S, D = x.shape
    assert D == d_model
    Dp = prep["ln_g"].shape[1]
    Sp = _round_up(S, 8)
    cdt = prep["layers"][0]["w_qkv"].dtype
    d_head = d_model // n_heads

    xw = x
    if Sp != S or Dp != D:
        xw = jnp.pad(x, ((0, 0), (0, Sp - S), (0, Dp - D)))   # zero pads keep LN exact
    m = mask if Sp == S else jnp.pad(mask, ((0, 0), (0, Sp - S)))
    attn_bias = ((m.astype(jnp.float32) - 1.0) * 1e9).reshape(B, 1, Sp)

    M = B * Sp
    x2 = xw.reshape(M, Dp)                                    # free reshape, lane-dense

    for li, p in enumerate(prep["layers"]):
        base_seed = seed + 16 * li
        # --- sublayer 0: x = x + dropout( Wo @ MHA(LN(x)) + bo ) ---
        q2, k2, v2 = _ln_qkv(x2, p["ln0_g"], p["ln0_b"], p["w_qkv"], p["b_qkv"],
                             d_real=d_model, compute_dtype=cdt, block_rows=block_rows)
        x3 = _attention(q2.reshape(B, Sp, Dp), k2.reshape(B, Sp, Dp),
                        v2.reshape(B, Sp, Dp), attn_bias, x2.reshape(B, Sp, Dp),
                        p["wo"], p["bo"], n_heads=n_heads, d_head=d_head,
                        compute_dtype=cdt, dropout_p=dropout_p, training=training,
                        seed=base_seed)
        x2 = x3.reshape(M, Dp)
        # --- sublayer 1: x = x + dropout( FFN(LN(x)) ) ---
        x2 = _ln_ffn(x2, p["ln1_g"], p["ln1_b"], p["w1"], p["b1"], p["w2"], p["b2"],
                     d_real=d_model, compute_dtype=cdt, dropout_p=dropout_p,
                     training=training, seed=base_seed + 1, block_rows=block_rows)

    out2 = _final_layer_norm(x2, prep["ln_g"], prep["ln_b"], d_real=d_model,
                             block_rows=block_rows)
    out = out2.reshape(B, Sp, Dp)
    if Sp != S or Dp != D:
        out = out[:, :S, :D]
    return out


# ---------------------------------------------------------------------------
# Parameter init + pure-JAX reference (eval mode) for the correctness check
# ---------------------------------------------------------------------------
def _init_linear(key, d_out, d_in):
    kw, kb = jax.random.split(key)
    bound = 1.0 / math.sqrt(d_in)
    w = jax.random.uniform(kw, (d_out, d_in), jnp.float32, -bound, bound)
    b = jax.random.uniform(kb, (d_out,), jnp.float32, -bound, bound)
    return w, b


def init_encoder_params(key, *, d_model, d_ff, n_layers):
    layers = []
    keys = jax.random.split(key, n_layers + 1)
    for lk in keys[:n_layers]:
        ks = jax.random.split(lk, 10)
        wq, bq = _init_linear(ks[0], d_model, d_model)
        wk, bk = _init_linear(ks[1], d_model, d_model)
        wv, bv = _init_linear(ks[2], d_model, d_model)
        wo, bo = _init_linear(ks[3], d_model, d_model)
        w1, b1 = _init_linear(ks[4], d_ff, d_model)
        w2, b2 = _init_linear(ks[5], d_model, d_ff)
        layers.append(dict(
            wq=wq, bq=bq, wk=wk, bk=bk, wv=wv, bv=bv, wo=wo, bo=bo,
            w1=w1, b1=b1, w2=w2, b2=b2,
            ln0_g=1.0 + 0.1 * jax.random.normal(ks[6], (d_model,), jnp.float32),
            ln0_b=0.1 * jax.random.normal(ks[7], (d_model,), jnp.float32),
            ln1_g=1.0 + 0.1 * jax.random.normal(ks[8], (d_model,), jnp.float32),
            ln1_b=0.1 * jax.random.normal(ks[9], (d_model,), jnp.float32),
        ))
    kf = jax.random.split(keys[-1], 2)
    return {
        "layers": layers,
        "ln_g": 1.0 + 0.1 * jax.random.normal(kf[0], (d_model,), jnp.float32),
        "ln_b": 0.1 * jax.random.normal(kf[1], (d_model,), jnp.float32),
    }


def ref_encoder(x, mask, params, *, n_heads):
    def ln(t, g, b, eps=_LN_EPS):
        mu = jnp.mean(t, -1, keepdims=True)
        var = jnp.mean((t - mu) ** 2, -1, keepdims=True)
        return (t - mu) / jnp.sqrt(var + eps) * g + b

    B, S, D = x.shape
    H = n_heads
    dk = D // H
    bias = (mask.astype(jnp.float32) - 1.0) * 1e9
    for p in params["layers"]:
        h = ln(x, p["ln0_g"], p["ln0_b"])
        q = h @ p["wq"].T + p["bq"]
        k = h @ p["wk"].T + p["bk"]
        v = h @ p["wv"].T + p["bv"]
        qh = q.reshape(B, S, H, dk).transpose(0, 2, 1, 3)
        kh = k.reshape(B, S, H, dk).transpose(0, 2, 1, 3)
        vh = v.reshape(B, S, H, dk).transpose(0, 2, 1, 3)
        scores = jnp.einsum("bhqd,bhkd->bhqk", qh, kh) / math.sqrt(dk)
        scores = scores + bias[:, None, None, :]
        attn = jax.nn.softmax(scores, axis=-1)
        ah = jnp.einsum("bhqk,bhkd->bhqd", attn, vh)
        a = ah.transpose(0, 2, 1, 3).reshape(B, S, D)
        x = x + (a @ p["wo"].T + p["bo"])
        h = ln(x, p["ln1_g"], p["ln1_b"])
        f = jnp.maximum(h @ p["w1"].T + p["b1"], 0.0)
        x = x + (f @ p["w2"].T + p["b2"])
    return ln(x, params["ln_g"], params["ln_b"])


if __name__ == "__main__":
    # Accurate f32 matmuls for the XLA reference and the f32 kernel path.
    jax.config.update("jax_default_matmul_precision", "highest")

    # Small shapes consistent with the module.
    B, S, D, H, DFF, NL = 2, 8, 128, 8, 256, 2
    DROPOUT = 0.1   # module hyperparameter; eval-mode forward is dropout-free

    key = jax.random.PRNGKey(0)
    kx, kp = jax.random.split(key, 2)
    x = jax.random.normal(kx, (B, S, D), jnp.float32)
    mask = jnp.ones((B, S), jnp.int32).at[1, 6:].set(0)   # pad out last 2 tokens of batch 1
    params = init_encoder_params(kp, d_model=D, d_ff=DFF, n_layers=NL)
    ref = ref_encoder(x, mask, params, n_heads=H)

    fwd = jax.jit(functools.partial(
        encoder_forward, d_model=D, n_heads=H, dropout_p=DROPOUT, training=False))

    # f32 MXU-input path: tight correctness check against the pure-JAX reference.
    prep_f32 = prepare_encoder_params(params, compute_dtype=jnp.float32)
    out_f32 = jax.block_until_ready(fwd(x, mask, prep_f32))
    assert out_f32.shape == (B, S, D)
    np.testing.assert_allclose(np.asarray(out_f32), np.asarray(ref),
                               rtol=2e-3, atol=2e-3)

    # bf16 MXU-input / f32-accumulation path (production default): looser sanity check.
    prep_bf16 = prepare_encoder_params(params, compute_dtype=jnp.bfloat16)
    out_bf16 = jax.block_until_ready(fwd(x, mask, prep_bf16))
    assert out_bf16.shape == (B, S, D)
    assert bool(jnp.all(jnp.isfinite(out_bf16)))
    assert float(jnp.max(jnp.abs(out_bf16 - ref))) < 0.25

    # TODO(synk): train-mode dropout (pltpu.prng_seed hardware PRNG) is implemented in
    # the kernels but not exercised here: the interpret/CPU runner has no lowering for
    # prng_seed; eval-mode forward (dropout identity) matches PyTorch module.eval().

    print("KERNEL_OK")
</pallas_src>

<mosaic_0001>
module attributes {stable_mosaic.version = 11 : i64} {
  func.func @_attn_kernel(%arg0: i32, %arg1: memref<1xi32, #tpu.memory_space<smem>>, %arg2: memref<1x8x128xf32, #tpu.memory_space<vmem>>, %arg3: memref<1x8x128xf32, #tpu.memory_space<vmem>>, %arg4: memref<1x8x128xf32, #tpu.memory_space<vmem>>, %arg5: memref<1x1x8xf32, #tpu.memory_space<vmem>>, %arg6: memref<1x8x128xf32, #tpu.memory_space<vmem>>, %arg7: memref<128x128xf32, #tpu.memory_space<vmem>>, %arg8: memref<1x128xf32, #tpu.memory_space<vmem>>, %arg9: memref<1x8x128xf32, #tpu.memory_space<vmem>>) attributes {dimension_semantics = [#tpu.dimension_semantics<parallel>], iteration_bounds = array<i64: 2>, scalar_prefetch = 1 : i64, scratch_operands = 0 : i64, tpu.core_type = #tpu.core_type<tc>, window_params = [{transform_indices = @transform_0, window_bounds = array<i64: 1, 8, 128>}, {transform_indices = @transform_1, window_bounds = array<i64: 1, 8, 128>}, {transform_indices = @transform_2, window_bounds = array<i64: 1, 8, 128>}, {transform_indices = @transform_3, window_bounds = array<i64: 1, 1, 8>}, {transform_indices = @transform_4, window_bounds = array<i64: 1, 8, 128>}, {pipeline_mode = #tpu.pipeline_mode<synchronous>, transform_indices = @transform_5, window_bounds = array<i64: 128, 128>}, {pipeline_mode = #tpu.pipeline_mode<synchronous>, transform_indices = @transform_6, window_bounds = array<i64: 1, 128>}, {transform_indices = @transform_7, window_bounds = array<i64: 1, 8, 128>}]} {
    %c0 = arith.constant 0 : index
    %c0_0 = arith.constant 0 : index
    %c0_1 = arith.constant 0 : index
    %0 = vector.load %arg2[%c0, %c0_0, %c0_1] : memref<1x8x128xf32, #tpu.memory_space<vmem>>, vector<1x8x128xf32>
    %1 = vector.shape_cast %0 : vector<1x8x128xf32> to vector<8x128xf32>
    %c0_2 = arith.constant 0 : index
    %c0_3 = arith.constant 0 : index
    %c0_4 = arith.constant 0 : index
    %2 = vector.load %arg3[%c0_2, %c0_3, %c0_4] : memref<1x8x128xf32, #tpu.memory_space<vmem>>, vector<1x8x128xf32>
    %3 = vector.shape_cast %2 : vector<1x8x128xf32> to vector<8x128xf32>
    %c0_5 = arith.constant 0 : index
    %c0_6 = arith.constant 0 : index
    %c0_7 = arith.constant 0 : index
    %4 = vector.load %arg4[%c0_5, %c0_6, %c0_7] : memref<1x8x128xf32, #tpu.memory_space<vmem>>, vector<1x8x128xf32>
    %5 = vector.shape_cast %4 : vector<1x8x128xf32> to vector<8x128xf32>
    %c0_8 = arith.constant 0 : index
    %c0_9 = arith.constant 0 : index
    %c0_10 = arith.constant 0 : index
    %6 = vector.load %arg5[%c0_8, %c0_9, %c0_10] : memref<1x1x8xf32, #tpu.memory_space<vmem>>, vector<1x1x8xf32>
    %7 = vector.shape_cast %6 : vector<1x1x8xf32> to vector<1x8xf32>
    %8 = vector.extract_strided_slice %1 {offsets = [0, 0], sizes = [8, 16], strides = [1, 1]} : vector<8x128xf32> to vector<8x16xf32>
    %9 = vector.extract_strided_slice %3 {offsets = [0, 0], sizes = [8, 16], strides = [1, 1]} : vector<8x128xf32> to vector<8x16xf32>
    %cst = arith.constant dense<0.000000e+00> : vector<8x8xf32>
    %10 = tpu.matmul %8, %9, %cst {dimension_numbers = #tpu.dot_dimension_numbers<[1], [1], [0], [0], [0, 0, 1, 0], [], []>, precision = #tpu.contract_precision<fp32>} : vector<8x16xf32>, vector<8x16xf32>, vector<8x8xf32> -> vector<8x8xf32>
    %cst_11 = arith.constant 2.500000e-01 : f32
    %11 = vector.broadcast %cst_11 : f32 to vector<8x8xf32>
    %12 = arith.mulf %10, %11 : vector<8x8xf32>
    %13 = vector.broadcast %7 : vector<1x8xf32> to vector<8x8xf32>
    %14 = arith.addf %12, %13 : vector<8x8xf32>
    %cst_12 = arith.constant dense<0xFF800000> : vector<8xf32>
    %15 = vector.multi_reduction <maximumf>, %14, %cst_12 [1] : vector<8x8xf32> to vector<8xf32>
    %16 = vector.shape_cast %15 : vector<8xf32> to vector<8x1xf32>
    %17 = vector.broadcast %16 : vector<8x1xf32> to vector<8x8xf32>
    %18 = arith.subf %14, %17 : vector<8x8xf32>
    %19 = math.exp %18 : vector<8x8xf32>
    %cst_13 = arith.constant dense<0.000000e+00> : vector<8xf32>
    %20 = vector.multi_reduction <add>, %19, %cst_13 [1] : vector<8x8xf32> to vector<8xf32>
    %21 = vector.shape_cast %20 : vector<8xf32> to vector<8x1xf32>
    %22 = vector.broadcast %21 : vector<8x1xf32> to vector<8x8xf32>
    %23 = arith.divf %19, %22 : vector<8x8xf32>
    %24 = vector.extract_strided_slice %5 {offsets = [0, 0], sizes = [8, 16], strides = [1, 1]} : vector<8x128xf32> to vector<8x16xf32>
    %cst_14 = arith.constant dense<0.000000e+00> : vector<8x16xf32>
    %25 = tpu.matmul %23, %24, %cst_14 {dimension_numbers = #tpu.dot_dimension_numbers<[1], [0], [0], [1], [0, 0, 1, 1], [], []>, precision = #tpu.contract_precision<fp32>} : vector<8x8xf32>, vector<8x16xf32>, vector<8x16xf32> -> vector<8x16xf32>
    %26 = vector.extract_strided_slice %1 {offsets = [0, 16], sizes = [8, 16], strides = [1, 1]} : vector<8x128xf32> to vector<8x16xf32>
    %27 = vector.extract_strided_slice %3 {offsets = [0, 16], sizes = [8, 16], strides = [1, 1]} : vector<8x128xf32> to vector<8x16xf32>
    %cst_15 = arith.constant dense<0.000000e+00> : vector<8x8xf32>
    %28 = tpu.matmul %26, %27, %cst_15 {dimension_numbers = #tpu.dot_dimension_numbers<[1], [1], [0], [0], [0, 0, 1, 0], [], []>, precision = #tpu.contract_precision<fp32>} : vector<8x16xf32>, vector<8x16xf32>, vector<8x8xf32> -> vector<8x8xf32>
    %cst_16 = arith.constant 2.500000e-01 : f32
    %29 = vector.broadcast %cst_16 : f32 to vector<8x8xf32>
    %30 = arith.mulf %28, %29 : vector<8x8xf32>
    %31 = vector.broadcast %7 : vector<1x8xf32> to vector<8x8xf32>
    %32 = arith.addf %30, %31 : vector<8x8xf32>
    %cst_17 = arith.constant dense<0xFF800000> : vector<8xf32>
    %33 = vector.multi_reduction <maximumf>, %32, %cst_17 [1] : vector<8x8xf32> to vector<8xf32>
    %34 = vector.shape_cast %33 : vector<8xf32> to vector<8x1xf32>
    %35 = vector.broadcast %34 : vector<8x1xf32> to vector<8x8xf32>
    %36 = arith.subf %32, %35 : vector<8x8xf32>
    %37 = math.exp %36 : vector<8x8xf32>
    %cst_18 = arith.constant dense<0.000000e+00> : vector<8xf32>
    %38 = vector.multi_reduction <add>, %37, %cst_18 [1] : vector<8x8xf32> to vector<8xf32>
    %39 = vector.shape_cast %38 : vector<8xf32> to vector<8x1xf32>
    %40 = vector.broadcast %39 : vector<8x1xf32> to vector<8x8xf32>
    %41 = arith.divf %37, %40 : vector<8x8xf32>
    %42 = vector.extract_strided_slice %5 {offsets = [0, 16], sizes = [8, 16], strides = [1, 1]} : vector<8x128xf32> to vector<8x16xf32>
    %cst_19 = arith.constant dense<0.000000e+00> : vector<8x16xf32>
    %43 = tpu.matmul %41, %42, %cst_19 {dimension_numbers = #tpu.dot_dimension_numbers<[1], [0], [0], [1], [0, 0, 1, 1], [], []>, precision = #tpu.contract_precision<fp32>} : vector<8x8xf32>, vector<8x16xf32>, vector<8x16xf32> -> vector<8x16xf32>
    %44 = vector.extract_strided_slice %1 {offsets = [0, 32], sizes = [8, 16], strides = [1, 1]} : vector<8x128xf32> to vector<8x16xf32>
    %45 = vector.extract_strided_slice %3 {offsets = [0, 32], sizes = [8, 16], strides = [1, 1]} : vector<8x128xf32> to vector<8x16xf32>
    %cst_20 = arith.constant dense<0.000000e+00> : vector<8x8xf32>
    %46 = tpu.matmul %44, %45, %cst_20 {dimension_numbers = #tpu.dot_dimension_numbers<[1], [1], [0], [0], [0, 0, 1, 0], [], []>, precision = #tpu.contract_precision<fp32>} : vector<8x16xf32>, vector<8x16xf32>, vector<8x8xf32> -> vector<8x8xf32>
    %cst_21 = arith.constant 2.500000e-01 : f32
    %47 = vector.broadcast %cst_21 : f32 to vector<8x8xf32>
    %48 = arith.mulf %46, %47 : vector<8x8xf32>
    %49 = vector.broadcast %7 : vector<1x8xf32> to vector<8x8xf32>
    %50 = arith.addf %48, %49 : vector<8x8xf32>
    %cst_22 = arith.constant dense<0xFF800000> : vector<8xf32>
    %51 = vector.multi_reduction <maximumf>, %50, %cst_22 [1] : vector<8x8xf32> to vector<8xf32>
    %52 = vector.shape_cast %51 : vector<8xf32> to vector<8x1xf32>
    %53 = vector.broadcast %52 : vector<8x1xf32> to vector<8x8xf32>
    %54 = arith.subf %50, %53 : vector<8x8xf32>
    %55 = math.exp %54 : vector<8x8xf32>
    %cst_23 = arith.constant dense<0.000000e+00> : vector<8xf32>
    %56 = vector.multi_reduction <add>, %55, %cst_23 [1] : vector<8x8xf32> to vector<8xf32>
    %57 = vector.shape_cast %56 : vector<8xf32> to vector<8x1xf32>
    %58 = vector.broadcast %57 : vector<8x1xf32> to vector<8x8xf32>
    %59 = arith.divf %55, %58 : vector<8x8xf32>
    %60 = vector.extract_strided_slice %5 {offsets = [0, 32], sizes = [8, 16], strides = [1, 1]} : vector<8x128xf32> to vector<8x16xf32>
    %cst_24 = arith.constant dense<0.000000e+00> : vector<8x16xf32>
    %61 = tpu.matmul %59, %60, %cst_24 {dimension_numbers = #tpu.dot_dimension_numbers<[1], [0], [0], [1], [0, 0, 1, 1], [], []>, precision = #tpu.contract_precision<fp32>} : vector<8x8xf32>, vector<8x16xf32>, vector<8x16xf32> -> vector<8x16xf32>
    %62 = vector.extract_strided_slice %1 {offsets = [0, 48], sizes = [8, 16], strides = [1, 1]} : vector<8x128xf32> to vector<8x16xf32>
    %63 = vector.extract_strided_slice %3 {offsets = [0, 48], sizes = [8, 16], strides = [1, 1]} : vector<8x128xf32> to vector<8x16xf32>
    %cst_25 = arith.constant dense<0.000000e+00> : vector<8x8xf32>
    %64 = tpu.matmul %62, %63, %cst_25 {dimension_numbers = #tpu.dot_dimension_numbers<[1], [1], [0], [0], [0, 0, 1, 0], [], []>, precision = #tpu.contract_precision<fp32>} : vector<8x16xf32>, vector<8x16xf32>, vector<8x8xf32> -> vector<8x8xf32>
    %cst_26 = arith.constant 2.500000e-01 : f32
    %65 = vector.broadcast %cst_26 : f32 to vector<8x8xf32>
    %66 = arith.mulf %64, %65 : vector<8x8xf32>
    %67 = vector.broadcast %7 : vector<1x8xf32> to vector<8x8xf32>
    %68 = arith.addf %66, %67 : vector<8x8xf32>
    %cst_27 = arith.constant dense<0xFF800000> : vector<8xf32>
    %69 = vector.multi_reduction <maximumf>, %68, %cst_27 [1] : vector<8x8xf32> to vector<8xf32>
    %70 = vector.shape_cast %69 : vector<8xf32> to vector<8x1xf32>
    %71 = vector.broadcast %70 : vector<8x1xf32> to vector<8x8xf32>
    %72 = arith.subf %68, %71 : vector<8x8xf32>
    %73 = math.exp %72 : vector<8x8xf32>
    %cst_28 = arith.constant dense<0.000000e+00> : vector<8xf32>
    %74 = vector.multi_reduction <add>, %73, %cst_28 [1] : vector<8x8xf32> to vector<8xf32>
    %75 = vector.shape_cast %74 : vector<8xf32> to vector<8x1xf32>
    %76 = vector.broadcast %75 : vector<8x1xf32> to vector<8x8xf32>
    %77 = arith.divf %73, %76 : vector<8x8xf32>
    %78 = vector.extract_strided_slice %5 {offsets = [0, 48], sizes = [8, 16], strides = [1, 1]} : vector<8x128xf32> to vector<8x16xf32>
    %cst_29 = arith.constant dense<0.000000e+00> : vector<8x16xf32>
    %79 = tpu.matmul %77, %78, %cst_29 {dimension_numbers = #tpu.dot_dimension_numbers<[1], [0], [0], [1], [0, 0, 1, 1], [], []>, precision = #tpu.contract_precision<fp32>} : vector<8x8xf32>, vector<8x16xf32>, vector<8x16xf32> -> vector<8x16xf32>
    %80 = vector.extract_strided_slice %1 {offsets = [0, 64], sizes = [8, 16], strides = [1, 1]} : vector<8x128xf32> to vector<8x16xf32>
    %81 = vector.extract_strided_slice %3 {offsets = [0, 64], sizes = [8, 16], strides = [1, 1]} : vector<8x128xf32> to vector<8x16xf32>
    %cst_30 = arith.constant dense<0.000000e+00> : vector<8x8xf32>
    %82 = tpu.matmul %80, %81, %cst_30 {dimension_numbers = #tpu.dot_dimension_numbers<[1], [1], [0], [0], [0, 0, 1, 0], [], []>, precision = #tpu.contract_precision<fp32>} : vector<8x16xf32>, vector<8x16xf32>, vector<8x8xf32> -> vector<8x8xf32>
    %cst_31 = arith.constant 2.500000e-01 : f32
    %83 = vector.broadcast %cst_31 : f32 to vector<8x8xf32>
    %84 = arith.mulf %82, %83 : vector<8x8xf32>
    %85 = vector.broadcast %7 : vector<1x8xf32> to vector<8x8xf32>
    %86 = arith.addf %84, %85 : vector<8x8xf32>
    %cst_32 = arith.constant dense<0xFF800000> : vector<8xf32>
    %87 = vector.multi_reduction <maximumf>, %86, %cst_32 [1] : vector<8x8xf32> to vector<8xf32>
    %88 = vector.shape_cast %87 : vector<8xf32> to vector<8x1xf32>
    %89 = vector.broadcast %88 : vector<8x1xf32> to vector<8x8xf32>
    %90 = arith.subf %86, %89 : vector<8x8xf32>
    %91 = math.exp %90 : vector<8x8xf32>
    %cst_33 = arith.constant dense<0.000000e+00> : vector<8xf32>
    %92 = vector.multi_reduction <add>, %91, %cst_33 [1] : vector<8x8xf32> to vector<8xf32>
    %93 = vector.shape_cast %92 : vector<8xf32> to vector<8x1xf32>
    %94 = vector.broadcast %93 : vector<8x1xf32> to vector<8x8xf32>
    %95 = arith.divf %91, %94 : vector<8x8xf32>
    %96 = vector.extract_strided_slice %5 {offsets = [0, 64], sizes = [8, 16], strides = [1, 1]} : vector<8x128xf32> to vector<8x16xf32>
    %cst_34 = arith.constant dense<0.000000e+00> : vector<8x16xf32>
    %97 = tpu.matmul %95, %96, %cst_34 {dimension_numbers = #tpu.dot_dimension_numbers<[1], [0], [0], [1], [0, 0, 1, 1], [], []>, precision = #tpu.contract_precision<fp32>} : vector<8x8xf32>, vector<8x16xf32>, vector<8x16xf32> -> vector<8x16xf32>
    %98 = vector.extract_strided_slice %1 {offsets = [0, 80], sizes = [8, 16], strides = [1, 1]} : vector<8x128xf32> to vector<8x16xf32>
    %99 = vector.extract_strided_slice %3 {offsets = [0, 80], sizes = [8, 16], strides = [1, 1]} : vector<8x128xf32> to vector<8x16xf32>
    %cst_35 = arith.constant dense<0.000000e+00> : vector<8x8xf32>
    %100 = tpu.matmul %98, %99, %cst_35 {dimension_numbers = #tpu.dot_dimension_numbers<[1], [1], [0], [0], [0, 0, 1, 0], [], []>, precision = #tpu.contract_precision<fp32>} : vector<8x16xf32>, vector<8x16xf32>, vector<8x8xf32> -> vector<8x8xf32>
    %cst_36 = arith.constant 2.500000e-01 : f32
    %101 = vector.broadcast %cst_36 : f32 to vector<8x8xf32>
    %102 = arith.mulf %100, %101 : vector<8x8xf32>
    %103 = vector.broadcast %7 : vector<1x8xf32> to vector<8x8xf32>
    %104 = arith.addf %102, %103 : vector<8x8xf32>
    %cst_37 = arith.constant dense<0xFF800000> : vector<8xf32>
    %105 = vector.multi_reduction <maximumf>, %104, %cst_37 [1] : vector<8x8xf32> to vector<8xf32>
    %106 = vector.shape_cast %105 : vector<8xf32> to vector<8x1xf32>
    %107 = vector.broadcast %106 : vector<8x1xf32> to vector<8x8xf32>
    %108 = arith.subf %104, %107 : vector<8x8xf32>
    %109 = math.exp %108 : vector<8x8xf32>
    %cst_38 = arith.constant dense<0.000000e+00> : vector<8xf32>
    %110 = vector.multi_reduction <add>, %109, %cst_38 [1] : vector<8x8xf32> to vector<8xf32>
    %111 = vector.shape_cast %110 : vector<8xf32> to vector<8x1xf32>
    %112 = vector.broadcast %111 : vector<8x1xf32> to vector<8x8xf32>
    %113 = arith.divf %109, %112 : vector<8x8xf32>
    %114 = vector.extract_strided_slice %5 {offsets = [0, 80], sizes = [8, 16], strides = [1, 1]} : vector<8x128xf32> to vector<8x16xf32>
    %cst_39 = arith.constant dense<0.000000e+00> : vector<8x16xf32>
    %115 = tpu.matmul %113, %114, %cst_39 {dimension_numbers = #tpu.dot_dimension_numbers<[1], [0], [0], [1], [0, 0, 1, 1], [], []>, precision = #tpu.contract_precision<fp32>} : vector<8x8xf32>, vector<8x16xf32>, vector<8x16xf32> -> vector<8x16xf32>
    %116 = vector.extract_strided_slice %1 {offsets = [0, 96], sizes = [8, 16], strides = [1, 1]} : vector<8x128xf32> to vector<8x16xf32>
    %117 = vector.extract_strided_slice %3 {offsets = [0, 96], sizes = [8, 16], strides = [1, 1]} : vector<8x128xf32> to vector<8x16xf32>
    %cst_40 = arith.constant dense<0.000000e+00> : vector<8x8xf32>
    %118 = tpu.matmul %116, %117, %cst_40 {dimension_numbers = #tpu.dot_dimension_numbers<[1], [1], [0], [0], [0, 0, 1, 0], [], []>, precision = #tpu.contract_precision<fp32>} : vector<8x16xf32>, vector<8x16xf32>, vector<8x8xf32> -> vector<8x8xf32>
    %cst_41 = arith.constant 2.500000e-01 : f32
    %119 = vector.broadcast %cst_41 : f32 to vector<8x8xf32>
    %120 = arith.mulf %118, %119 : vector<8x8xf32>
    %121 = vector.broadcast %7 : vector<1x8xf32> to vector<8x8xf32>
    %122 = arith.addf %120, %121 : vector<8x8xf32>
    %cst_42 = arith.constant dense<0xFF800000> : vector<8xf32>
    %123 = vector.multi_reduction <maximumf>, %122, %cst_42 [1] : vector<8x8xf32> to vector<8xf32>
    %124 = vector.shape_cast %123 : vector<8xf32> to vector<8x1xf32>
    %125 = vector.broadcast %124 : vector<8x1xf32> to vector<8x8xf32>
    %126 = arith.subf %122, %125 : vector<8x8xf32>
    %127 = math.exp %126 : vector<8x8xf32>
    %cst_43 = arith.constant dense<0.000000e+00> : vector<8xf32>
    %128 = vector.multi_reduction <add>, %127, %cst_43 [1] : vector<8x8xf32> to vector<8xf32>
    %129 = vector.shape_cast %128 : vector<8xf32> to vector<8x1xf32>
    %130 = vector.broadcast %129 : vector<8x1xf32> to vector<8x8xf32>
    %131 = arith.divf %127, %130 : vector<8x8xf32>
    %132 = vector.extract_strided_slice %5 {offsets = [0, 96], sizes = [8, 16], strides = [1, 1]} : vector<8x128xf32> to vector<8x16xf32>
    %cst_44 = arith.constant dense<0.000000e+00> : vector<8x16xf32>
    %133 = tpu.matmul %131, %132, %cst_44 {dimension_numbers = #tpu.dot_dimension_numbers<[1], [0], [0], [1], [0, 0, 1, 1], [], []>, precision = #tpu.contract_precision<fp32>} : vector<8x8xf32>, vector<8x16xf32>, vector<8x16xf32> -> vector<8x16xf32>
    %134 = vector.extract_strided_slice %1 {offsets = [0, 112], sizes = [8, 16], strides = [1, 1]} : vector<8x128xf32> to vector<8x16xf32>
    %135 = vector.extract_strided_slice %3 {offsets = [0, 112], sizes = [8, 16], strides = [1, 1]} : vector<8x128xf32> to vector<8x16xf32>
    %cst_45 = arith.constant dense<0.000000e+00> : vector<8x8xf32>
    %136 = tpu.matmul %134, %135, %cst_45 {dimension_numbers = #tpu.dot_dimension_numbers<[1], [1], [0], [0], [0, 0, 1, 0], [], []>, precision = #tpu.contract_precision<fp32>} : vector<8x16xf32>, vector<8x16xf32>, vector<8x8xf32> -> vector<8x8xf32>
    %cst_46 = arith.constant 2.500000e-01 : f32
    %137 = vector.broadcast %cst_46 : f32 to vector<8x8xf32>
    %138 = arith.mulf %136, %137 : vector<8x8xf32>
    %139 = vector.broadcast %7 : vector<1x8xf32> to vector<8x8xf32>
    %140 = arith.addf %138, %139 : vector<8x8xf32>
    %cst_47 = arith.constant dense<0xFF800000> : vector<8xf32>
    %141 = vector.multi_reduction <maximumf>, %140, %cst_47 [1] : vector<8x8xf32> to vector<8xf32>
    %142 = vector.shape_cast %141 : vector<8xf32> to vector<8x1xf32>
    %143 = vector.broadcast %142 : vector<8x1xf32> to vector<8x8xf32>
    %144 = arith.subf %140, %143 : vector<8x8xf32>
    %145 = math.exp %144 : vector<8x8xf32>
    %cst_48 = arith.constant dense<0.000000e+00> : vector<8xf32>
    %146 = vector.multi_reduction <add>, %145, %cst_48 [1] : vector<8x8xf32> to vector<8xf32>
    %147 = vector.shape_cast %146 : vector<8xf32> to vector<8x1xf32>
    %148 = vector.broadcast %147 : vector<8x1xf32> to vector<8x8xf32>
    %149 = arith.divf %145, %148 : vector<8x8xf32>
    %150 = vector.extract_strided_slice %5 {offsets = [0, 112], sizes = [8, 16], strides = [1, 1]} : vector<8x128xf32> to vector<8x16xf32>
    %cst_49 = arith.constant dense<0.000000e+00> : vector<8x16xf32>
    %151 = tpu.matmul %149, %150, %cst_49 {dimension_numbers = #tpu.dot_dimension_numbers<[1], [0], [0], [1], [0, 0, 1, 1], [], []>, precision = #tpu.contract_precision<fp32>} : vector<8x8xf32>, vector<8x16xf32>, vector<8x16xf32> -> vector<8x16xf32>
    %152 = tpu.concatenate %25, %43, %61, %79, %97, %115, %133, %151 in 1 : vector<8x16xf32>, vector<8x16xf32>, vector<8x16xf32>, vector<8x16xf32>, vector<8x16xf32>, vector<8x16xf32>, vector<8x16xf32>, vector<8x16xf32> -> vector<8x128xf32>
    %c0_50 = arith.constant 0 : index
    %c0_51 = arith.constant 0 : index
    %153 = vector.load %arg7[%c0_50, %c0_51] : memref<128x128xf32, #tpu.memory_space<vmem>>, vector<128x128xf32>
    %cst_52 = arith.constant dense<0.000000e+00> : vector<8x128xf32>
    %154 = tpu.matmul %152, %153, %cst_52 {dimension_numbers = #tpu.dot_dimension_numbers<[1], [0], [0], [1], [0, 0, 1, 1], [], []>, precision = #tpu.contract_precision<fp32>} : vector<8x128xf32>, vector<128x128xf32>, vector<8x128xf32> -> vector<8x128xf32>
    %c0_53 = arith.constant 0 : index
    %c0_54 = arith.constant 0 : index
    %155 = vector.load %arg8[%c0_53, %c0_54] : memref<1x128xf32, #tpu.memory_space<vmem>>, vector<1x128xf32>
    %156 = vector.broadcast %155 : vector<1x128xf32> to vector<8x128xf32>
    %157 = arith.addf %154, %156 : vector<8x128xf32>
    %c0_55 = arith.constant 0 : index
    %c0_56 = arith.constant 0 : index
    %c0_57 = arith.constant 0 : index
    %158 = vector.load %arg6[%c0_55, %c0_56, %c0_57] : memref<1x8x128xf32, #tpu.memory_space<vmem>>, vector<1x8x128xf32>
    %159 = vector.shape_cast %158 : vector<1x8x128xf32> to vector<8x128xf32>
    %160 = arith.addf %159, %157 : vector<8x128xf32>
    %c0_58 = arith.constant 0 : index
    %c0_59 = arith.constant 0 : index
    %c0_60 = arith.constant 0 : index
    %161 = vector.load %arg9[%c0_58, %c0_59, %c0_60] : memref<1x8x128xf32, #tpu.memory_space<vmem>>, vector<1x8x128xf32>
    %162 = vector.shape_cast %161 : vector<1x8x128xf32> to vector<8x128xf32>
    %163 = vector.shape_cast %160 : vector<8x128xf32> to vector<1x8x128xf32>
    tpu.vector_store %arg9[%c0_58, %c0_59, %c0_60], %163 {strides = array<i32>} : memref<1x8x128xf32, #tpu.memory_space<vmem>>, vector<1x8x128xf32>,
    return
  }
  func.func @transform_0(%arg0: i32, %arg1: memref<1xi32, #tpu.memory_space<smem>>) -> (i32, i32, i32) {
    %c0_i32 = arith.constant 0 : i32
    %c0_i32_0 = arith.constant 0 : i32
    %c0_i32_1 = arith.constant 0 : i32
    return %arg0, %c0_i32, %c0_i32_0 : i32, i32, i32
  }
  func.func @transform_1(%arg0: i32, %arg1: memref<1xi32, #tpu.memory_space<smem>>) -> (i32, i32, i32) {
    %c0_i32 = arith.constant 0 : i32
    %c0_i32_0 = arith.constant 0 : i32
    %c0_i32_1 = arith.constant 0 : i32
    return %arg0, %c0_i32, %c0_i32_0 : i32, i32, i32
  }
  func.func @transform_2(%arg0: i32, %arg1: memref<1xi32, #tpu.memory_space<smem>>) -> (i32, i32, i32) {
    %c0_i32 = arith.constant 0 : i32
    %c0_i32_0 = arith.constant 0 : i32
    %c0_i32_1 = arith.constant 0 : i32
    return %arg0, %c0_i32, %c0_i32_0 : i32, i32, i32
  }
  func.func @transform_3(%arg0: i32, %arg1: memref<1xi32, #tpu.memory_space<smem>>) -> (i32, i32, i32) {
    %c0_i32 = arith.constant 0 : i32
    %c0_i32_0 = arith.constant 0 : i32
    %c0_i32_1 = arith.constant 0 : i32
    return %arg0, %c0_i32, %c0_i32_0 : i32, i32, i32
  }
  func.func @transform_4(%arg0: i32, %arg1: memref<1xi32, #tpu.memory_space<smem>>) -> (i32, i32, i32) {
    %c0_i32 = arith.constant 0 : i32
    %c0_i32_0 = arith.constant 0 : i32
    %c0_i32_1 = arith.constant 0 : i32
    return %arg0, %c0_i32, %c0_i32_0 : i32, i32, i32
  }
  func.func @transform_5(%arg0: i32, %arg1: memref<1xi32, #tpu.memory_space<smem>>) -> (i32, i32) {
    %c0_i32 = arith.constant 0 : i32
    %c0_i32_0 = arith.constant 0 : i32
    %c0_i32_1 = arith.constant 0 : i32
    return %c0_i32, %c0_i32_0 : i32, i32
  }
  func.func @transform_6(%arg0: i32, %arg1: memref<1xi32, #tpu.memory_space<smem>>) -> (i32, i32) {
    %c0_i32 = arith.constant 0 : i32
    %c0_i32_0 = arith.constant 0 : i32
    %c0_i32_1 = arith.constant 0 : i32
    return %c0_i32, %c0_i32_0 : i32, i32
  }
  func.func @transform_7(%arg0: i32, %arg1: memref<1xi32, #tpu.memory_space<smem>>) -> (i32, i32, i32) {
    %c0_i32 = arith.constant 0 : i32
    %c0_i32_0 = arith.constant 0 : i32
    %c0_i32_1 = arith.constant 0 : i32
    return %arg0, %c0_i32, %c0_i32_0 : i32, i32, i32
  }
}

module attributes {stable_mosaic.version = 11 : i64} {
  func.func @_ln_qkv_kernel(%arg0: i32, %arg1: memref<8x128xf32, #tpu.memory_space<vmem>>, %arg2: memref<1x128xf32, #tpu.memory_space<vmem>>, %arg3: memref<1x128xf32, #tpu.memory_space<vmem>>, %arg4: memref<128x384xf32, #tpu.memory_space<vmem>>, %arg5: memref<1x384xf32, #tpu.memory_space<vmem>>, %arg6: memref<8x128xf32, #tpu.memory_space<vmem>>, %arg7: memref<8x128xf32, #tpu.memory_space<vmem>>, %arg8: memref<8x128xf32, #tpu.memory_space<vmem>>) attributes {dimension_semantics = [#tpu.dimension_semantics<parallel>], iteration_bounds = array<i64: 2>, scalar_prefetch = 0 : i64, scratch_operands = 0 : i64, tpu.core_type = #tpu.core_type<tc>, window_params = [{transform_indices = @transform_0, window_bounds = array<i64: 8, 128>}, {pipeline_mode = #tpu.pipeline_mode<synchronous>, transform_indices = @transform_1, window_bounds = array<i64: 1, 128>}, {pipeline_mode = #tpu.pipeline_mode<synchronous>, transform_indices = @transform_2, window_bounds = array<i64: 1, 128>}, {pipeline_mode = #tpu.pipeline_mode<synchronous>, transform_indices = @transform_3, window_bounds = array<i64: 128, 384>}, {pipeline_mode = #tpu.pipeline_mode<synchronous>, transform_indices = @transform_4, window_bounds = array<i64: 1, 384>}, {transform_indices = @transform_5, window_bounds = array<i64: 8, 128>}, {transform_indices = @transform_6, window_bounds = array<i64: 8, 128>}, {transform_indices = @transform_7, window_bounds = array<i64: 8, 128>}]} {
    %c0 = arith.constant 0 : index
    %c0_0 = arith.constant 0 : index
    %0 = vector.load %arg1[%c0, %c0_0] : memref<8x128xf32, #tpu.memory_space<vmem>>, vector<8x128xf32>
    %c0_1 = arith.constant 0 : index
    %c0_2 = arith.constant 0 : index
    %1 = vector.load %arg2[%c0_1, %c0_2] : memref<1x128xf32, #tpu.memory_space<vmem>>, vector<1x128xf32>
    %c0_3 = arith.constant 0 : index
    %c0_4 = arith.constant 0 : index
    %2 = vector.load %arg3[%c0_3, %c0_4] : memref<1x128xf32, #tpu.memory_space<vmem>>, vector<1x128xf32>
    %cst = arith.constant dense<0.000000e+00> : vector<8xf32>
    %3 = vector.multi_reduction <add>, %0, %cst [1] : vector<8x128xf32> to vector<8xf32>
    %4 = vector.shape_cast %3 : vector<8xf32> to vector<8x1xf32>
    %cst_5 = arith.constant 7.812500e-03 : f32
    %5 = vector.broadcast %cst_5 : f32 to vector<8x1xf32>
    %6 = arith.mulf %4, %5 : vector<8x1xf32>
    %7 = arith.mulf %0, %0 : vector<8x128xf32>
    %cst_6 = arith.constant dense<0.000000e+00> : vector<8xf32>
    %8 = vector.multi_reduction <add>, %7, %cst_6 [1] : vector<8x128xf32> to vector<8xf32>
    %9 = vector.shape_cast %8 : vector<8xf32> to vector<8x1xf32>
    %cst_7 = arith.constant 7.812500e-03 : f32
    %10 = vector.broadcast %cst_7 : f32 to vector<8x1xf32>
    %11 = arith.mulf %9, %10 : vector<8x1xf32>
    %12 = arith.mulf %6, %6 : vector<8x1xf32>
    %13 = arith.subf %11, %12 : vector<8x1xf32>
    %14 = vector.broadcast %6 : vector<8x1xf32> to vector<8x128xf32>
    %15 = arith.subf %0, %14 : vector<8x128xf32>
    %cst_8 = arith.constant 9.99999974E-6 : f32
    %16 = vector.broadcast %cst_8 : f32 to vector<8x1xf32>
    %17 = arith.addf %13, %16 : vector<8x1xf32>
    %18 = math.rsqrt %17 : vector<8x1xf32>
    %19 = vector.broadcast %18 : vector<8x1xf32> to vector<8x128xf32>
    %20 = arith.mulf %15, %19 : vector<8x128xf32>
    %21 = vector.broadcast %1 : vector<1x128xf32> to vector<8x128xf32>
    %22 = arith.mulf %20, %21 : vector<8x128xf32>
    %23 = vector.broadcast %2 : vector<1x128xf32> to vector<8x128xf32>
    %24 = arith.addf %22, %23 : vector<8x128xf32>
    %c0_9 = arith.constant 0 : index
    %c0_10 = arith.constant 0 : index
    %25 = vector.load %arg4[%c0_9, %c0_10] : memref<128x384xf32, #tpu.memory_space<vmem>>, vector<128x384xf32>
    %cst_11 = arith.constant dense<0.000000e+00> : vector<8x384xf32>
    %26 = tpu.matmul %24, %25, %cst_11 {dimension_numbers = #tpu.dot_dimension_numbers<[1], [0], [0], [1], [0, 0, 1, 1], [], []>, precision = #tpu.contract_precision<fp32>} : vector<8x128xf32>, vector<128x384xf32>, vector<8x384xf32> -> vector<8x384xf32>
    %c0_12 = arith.constant 0 : index
    %c0_13 = arith.constant 0 : index
    %27 = vector.load %arg5[%c0_12, %c0_13] : memref<1x384xf32, #tpu.memory_space<vmem>>, vector<1x384xf32>
    %28 = vector.broadcast %27 : vector<1x384xf32> to vector<8x384xf32>
    %29 = arith.addf %26, %28 : vector<8x384xf32>
    %30 = vector.extract_strided_slice %29 {offsets = [0, 0], sizes = [8, 128], strides = [1, 1]} : vector<8x384xf32> to vector<8x128xf32>
    %c0_14 = arith.constant 0 : index
    %c0_15 = arith.constant 0 : index
    %31 = vector.load %arg6[%c0_14, %c0_15] : memref<8x128xf32, #tpu.memory_space<vmem>>, vector<8x128xf32>
    tpu.vector_store %arg6[%c0_14, %c0_15], %30 {strides = array<i32>} : memref<8x128xf32, #tpu.memory_space<vmem>>, vector<8x128xf32>,
    %32 = vector.extract_strided_slice %29 {offsets = [0, 128], sizes = [8, 128], strides = [1, 1]} : vector<8x384xf32> to vector<8x128xf32>
    %c0_16 = arith.constant 0 : index
    %c0_17 = arith.constant 0 : index
    %33 = vector.load %arg7[%c0_16, %c0_17] : memref<8x128xf32, #tpu.memory_space<vmem>>, vector<8x128xf32>
    tpu.vector_store %arg7[%c0_16, %c0_17], %32 {strides = array<i32>} : memref<8x128xf32, #tpu.memory_space<vmem>>, vector<8x128xf32>,
    %34 = vector.extract_strided_slice %29 {offsets = [0, 256], sizes = [8, 128], strides = [1, 1]} : vector<8x384xf32> to vector<8x128xf32>
    %c0_18 = arith.constant 0 : index
    %c0_19 = arith.constant 0 : index
    %35 = vector.load %arg8[%c0_18, %c0_19] : memref<8x128xf32, #tpu.memory_space<vmem>>, vector<8x128xf32>
    tpu.vector_store %arg8[%c0_18, %c0_19], %34 {strides = array<i32>} : memref<8x128xf32, #tpu.memory_space<vmem>>, vector<8x128xf32>,
    return
  }
  func.func @transform_0(%arg0: i32) -> (i32, i32) {
    %c0_i32 = arith.constant 0 : i32
    %c0_i32_0 = arith.constant 0 : i32
    return %arg0, %c0_i32 : i32, i32
  }
  func.func @transform_1(%arg0: i32) -> (i32, i32) {
    %c0_i32 = arith.constant 0 : i32
    %c0_i32_0 = arith.constant 0 : i32
    %c0_i32_1 = arith.constant 0 : i32
    return %c0_i32, %c0_i32_0 : i32, i32
  }
  func.func @transform_2(%arg0: i32) -> (i32, i32) {
    %c0_i32 = arith.constant 0 : i32
    %c0_i32_0 = arith.constant 0 : i32
    %c0_i32_1 = arith.constant 0 : i32
    return %c0_i32, %c0_i32_0 : i32, i32
  }
  func.func @transform_3(%arg0: i32) -> (i32, i32) {
    %c0_i32 = arith.constant 0 : i32
    %c0_i32_0 = arith.constant 0 : i32
    %c0_i32_1 = arith.constant 0 : i32
    return %c0_i32, %c0_i32_0 : i32, i32
  }
  func.func @transform_4(%arg0: i32) -> (i32, i32) {
    %c0_i32 = arith.constant 0 : i32
    %c0_i32_0 = arith.constant 0 : i32
    %c0_i32_1 = arith.constant 0 : i32
    return %c0_i32, %c0_i32_0 : i32, i32
  }
  func.func @transform_5(%arg0: i32) -> (i32, i32) {
    %c0_i32 = arith.constant 0 : i32
    %c0_i32_0 = arith.constant 0 : i32
    return %arg0, %c0_i32 : i32, i32
  }
  func.func @transform_6(%arg0: i32) -> (i32, i32) {
    %c0_i32 = arith.constant 0 : i32
    %c0_i32_0 = arith.constant 0 : i32
    return %arg0, %c0_i32 : i32, i32
  }
  func.func @transform_7(%arg0: i32) -> (i32, i32) {
    %c0_i32 = arith.constant 0 : i32
    %c0_i32_0 = arith.constant 0 : i32
    return %arg0, %c0_i32 : i32, i32
  }
}

module attributes {stable_mosaic.version = 11 : i64} {
  func.func @_ln_ffn_kernel(%arg0: i32, %arg1: memref<1xi32, #tpu.memory_space<smem>>, %arg2: memref<8x128xf32, #tpu.memory_space<vmem>>, %arg3: memref<1x128xf32, #tpu.memory_space<vmem>>, %arg4: memref<1x128xf32, #tpu.memory_space<vmem>>, %arg5: memref<128x256xf32, #tpu.memory_space<vmem>>, %arg6: memref<1x256xf32, #tpu.memory_space<vmem>>, %arg7: memref<256x128xf32, #tpu.memory_space<vmem>>, %arg8: memref<1x128xf32, #tpu.memory_space<vmem>>, %arg9: memref<8x128xf32, #tpu.memory_space<vmem>>) attributes {dimension_semantics = [#tpu.dimension_semantics<parallel>], iteration_bounds = array<i64: 2>, scalar_prefetch = 1 : i64, scratch_operands = 0 : i64, tpu.core_type = #tpu.core_type<tc>, window_params = [{transform_indices = @transform_0, window_bounds = array<i64: 8, 128>}, {pipeline_mode = #tpu.pipeline_mode<synchronous>, transform_indices = @transform_1, window_bounds = array<i64: 1, 128>}, {pipeline_mode = #tpu.pipeline_mode<synchronous>, transform_indices = @transform_2, window_bounds = array<i64: 1, 128>}, {pipeline_mode = #tpu.pipeline_mode<synchronous>, transform_indices = @transform_3, window_bounds = array<i64: 128, 256>}, {pipeline_mode = #tpu.pipeline_mode<synchronous>, transform_indices = @transform_4, window_bounds = array<i64: 1, 256>}, {pipeline_mode = #tpu.pipeline_mode<synchronous>, transform_indices = @transform_5, window_bounds = array<i64: 256, 128>}, {pipeline_mode = #tpu.pipeline_mode<synchronous>, transform_indices = @transform_6, window_bounds = array<i64: 1, 128>}, {transform_indices = @transform_7, window_bounds = array<i64: 8, 128>}]} {
    %c0 = arith.constant 0 : index
    %c0_0 = arith.constant 0 : index
    %0 = vector.load %arg2[%c0, %c0_0] : memref<8x128xf32, #tpu.memory_space<vmem>>, vector<8x128xf32>
    %c0_1 = arith.constant 0 : index
    %c0_2 = arith.constant 0 : index
    %1 = vector.load %arg3[%c0_1, %c0_2] : memref<1x128xf32, #tpu.memory_space<vmem>>, vector<1x128xf32>
    %c0_3 = arith.constant 0 : index
    %c0_4 = arith.constant 0 : index
    %2 = vector.load %arg4[%c0_3, %c0_4] : memref<1x128xf32, #tpu.memory_space<vmem>>, vector<1x128xf32>
    %cst = arith.constant dense<0.000000e+00> : vector<8xf32>
    %3 = vector.multi_reduction <add>, %0, %cst [1] : vector<8x128xf32> to vector<8xf32>
    %4 = vector.shape_cast %3 : vector<8xf32> to vector<8x1xf32>
    %cst_5 = arith.constant 7.812500e-03 : f32
    %5 = vector.broadcast %cst_5 : f32 to vector<8x1xf32>
    %6 = arith.mulf %4, %5 : vector<8x1xf32>
    %7 = arith.mulf %0, %0 : vector<8x128xf32>
    %cst_6 = arith.constant dense<0.000000e+00> : vector<8xf32>
    %8 = vector.multi_reduction <add>, %7, %cst_6 [1] : vector<8x128xf32> to vector<8xf32>
    %9 = vector.shape_cast %8 : vector<8xf32> to vector<8x1xf32>
    %cst_7 = arith.constant 7.812500e-03 : f32
    %10 = vector.broadcast %cst_7 : f32 to vector<8x1xf32>
    %11 = arith.mulf %9, %10 : vector<8x1xf32>
    %12 = arith.mulf %6, %6 : vector<8x1xf32>
    %13 = arith.subf %11, %12 : vector<8x1xf32>
    %14 = vector.broadcast %6 : vector<8x1xf32> to vector<8x128xf32>
    %15 = arith.subf %0, %14 : vector<8x128xf32>
    %cst_8 = arith.constant 9.99999974E-6 : f32
    %16 = vector.broadcast %cst_8 : f32 to vector<8x1xf32>
    %17 = arith.addf %13, %16 : vector<8x1xf32>
    %18 = math.rsqrt %17 : vector<8x1xf32>
    %19 = vector.broadcast %18 : vector<8x1xf32> to vector<8x128xf32>
    %20 = arith.mulf %15, %19 : vector<8x128xf32>
    %21 = vector.broadcast %1 : vector<1x128xf32> to vector<8x128xf32>
    %22 = arith.mulf %20, %21 : vector<8x128xf32>
    %23 = vector.broadcast %2 : vector<1x128xf32> to vector<8x128xf32>
    %24 = arith.addf %22, %23 : vector<8x128xf32>
    %c0_9 = arith.constant 0 : index
    %c0_10 = arith.constant 0 : index
    %25 = vector.load %arg5[%c0_9, %c0_10] : memref<128x256xf32, #tpu.memory_space<vmem>>, vector<128x256xf32>
    %cst_11 = arith.constant dense<0.000000e+00> : vector<8x256xf32>
    %26 = tpu.matmul %24, %25, %cst_11 {dimension_numbers = #tpu.dot_dimension_numbers<[1], [0], [0], [1], [0, 0, 1, 1], [], []>, precision = #tpu.contract_precision<fp32>} : vector<8x128xf32>, vector<128x256xf32>, vector<8x256xf32> -> vector<8x256xf32>
    %c0_12 = arith.constant 0 : index
    %c0_13 = arith.constant 0 : index
    %27 = vector.load %arg6[%c0_12, %c0_13] : memref<1x256xf32, #tpu.memory_space<vmem>>, vector<1x256xf32>
    %28 = vector.broadcast %27 : vector<1x256xf32> to vector<8x256xf32>
    %29 = arith.addf %26, %28 : vector<8x256xf32>
    %cst_14 = arith.constant 0.000000e+00 : f32
    %30 = vector.broadcast %cst_14 : f32 to vector<8x256xf32>
    %31 = arith.maximumf %29, %30 : vector<8x256xf32>
    %c0_15 = arith.constant 0 : index
    %c0_16 = arith.constant 0 : index
    %32 = vector.load %arg7[%c0_15, %c0_16] : memref<256x128xf32, #tpu.memory_space<vmem>>, vector<256x128xf32>
    %cst_17 = arith.constant dense<0.000000e+00> : vector<8x128xf32>
    %33 = tpu.matmul %31, %32, %cst_17 {dimension_numbers = #tpu.dot_dimension_numbers<[1], [0], [0], [1], [0, 0, 1, 1], [], []>, precision = #tpu.contract_precision<fp32>} : vector<8x256xf32>, vector<256x128xf32>, vector<8x128xf32> -> vector<8x128xf32>
    %c0_18 = arith.constant 0 : index
    %c0_19 = arith.constant 0 : index
    %34 = vector.load %arg8[%c0_18, %c0_19] : memref<1x128xf32, #tpu.memory_space<vmem>>, vector<1x128xf32>
    %35 = vector.broadcast %34 : vector<1x128xf32> to vector<8x128xf32>
    %36 = arith.addf %33, %35 : vector<8x128xf32>
    %37 = arith.addf %0, %36 : vector<8x128xf32>
    %c0_20 = arith.constant 0 : index
    %c0_21 = arith.constant 0 : index
    %38 = vector.load %arg9[%c0_20, %c0_21] : memref<8x128xf32, #tpu.memory_space<vmem>>, vector<8x128xf32>
    tpu.vector_store %arg9[%c0_20, %c0_21], %37 {strides = array<i32>} : memref<8x128xf32, #tpu.memory_space<vmem>>, vector<8x128xf32>,
    return
  }
  func.func @transform_0(%arg0: i32, %arg1: memref<1xi32, #tpu.memory_space<smem>>) -> (i32, i32) {
    %c0_i32 = arith.constant 0 : i32
    %c0_i32_0 = arith.constant 0 : i32
    return %arg0, %c0_i32 : i32, i32
  }
  func.func @transform_1(%arg0: i32, %arg1: memref<1xi32, #tpu.memory_space<smem>>) -> (i32, i32) {
    %c0_i32 = arith.constant 0 : i32
    %c0_i32_0 = arith.constant 0 : i32
    %c0_i32_1 = arith.constant 0 : i32
    return %c0_i32, %c0_i32_0 : i32, i32
  }
  func.func @transform_2(%arg0: i32, %arg1: memref<1xi32, #tpu.memory_space<smem>>) -> (i32, i32) {
    %c0_i32 = arith.constant 0 : i32
    %c0_i32_0 = arith.constant 0 : i32
    %c0_i32_1 = arith.constant 0 : i32
    return %c0_i32, %c0_i32_0 : i32, i32
  }
  func.func @transform_3(%arg0: i32, %arg1: memref<1xi32, #tpu.memory_space<smem>>) -> (i32, i32) {
    %c0_i32 = arith.constant 0 : i32
    %c0_i32_0 = arith.constant 0 : i32
    %c0_i32_1 = arith.constant 0 : i32
    return %c0_i32, %c0_i32_0 : i32, i32
  }
  func.func @transform_4(%arg0: i32, %arg1: memref<1xi32, #tpu.memory_space<smem>>) -> (i32, i32) {
    %c0_i32 = arith.constant 0 : i32
    %c0_i32_0 = arith.constant 0 : i32
    %c0_i32_1 = arith.constant 0 : i32
    return %c0_i32, %c0_i32_0 : i32, i32
  }
  func.func @transform_5(%arg0: i32, %arg1: memref<1xi32, #tpu.memory_space<smem>>) -> (i32, i32) {
    %c0_i32 = arith.constant 0 : i32
    %c0_i32_0 = arith.constant 0 : i32
    %c0_i32_1 = arith.constant 0 : i32
    return %c0_i32, %c0_i32_0 : i32, i32
  }
  func.func @transform_6(%arg0: i32, %arg1: memref<1xi32, #tpu.memory_space<smem>>) -> (i32, i32) {
    %c0_i32 = arith.constant 0 : i32
    %c0_i32_0 = arith.constant 0 : i32
    %c0_i32_1 = arith.constant 0 : i32
    return %c0_i32, %c0_i32_0 : i32, i32
  }
  func.func @transform_7(%arg0: i32, %arg1: memref<1xi32, #tpu.memory_space<smem>>) -> (i32, i32) {
    %c0_i32 = arith.constant 0 : i32
    %c0_i32_0 = arith.constant 0 : i32
    return %arg0, %c0_i32 : i32, i32
  }
}

module attributes {stable_mosaic.version = 11 : i64} {
  func.func @_final_ln_kernel(%arg0: i32, %arg1: memref<8x128xf32, #tpu.memory_space<vmem>>, %arg2: memref<1x128xf32, #tpu.memory_space<vmem>>, %arg3: memref<1x128xf32, #tpu.memory_space<vmem>>, %arg4: memref<8x128xf32, #tpu.memory_space<vmem>>) attributes {dimension_semantics = [#tpu.dimension_semantics<parallel>], iteration_bounds = array<i64: 2>, scalar_prefetch = 0 : i64, scratch_operands = 0 : i64, tpu.core_type = #tpu.core_type<tc>, window_params = [{transform_indices = @transform_0, window_bounds = array<i64: 8, 128>}, {pipeline_mode = #tpu.pipeline_mode<synchronous>, transform_indices = @transform_1, window_bounds = array<i64: 1, 128>}, {pipeline_mode = #tpu.pipeline_mode<synchronous>, transform_indices = @transform_2, window_bounds = array<i64: 1, 128>}, {transform_indices = @transform_3, window_bounds = array<i64: 8, 128>}]} {
    %c0 = arith.constant 0 : index
    %c0_0 = arith.constant 0 : index
    %0 = vector.load %arg1[%c0, %c0_0] : memref<8x128xf32, #tpu.memory_space<vmem>>, vector<8x128xf32>
    %c0_1 = arith.constant 0 : index
    %c0_2 = arith.constant 0 : index
    %1 = vector.load %arg2[%c0_1, %c0_2] : memref<1x128xf32, #tpu.memory_space<vmem>>, vector<1x128xf32>
    %c0_3 = arith.constant 0 : index
    %c0_4 = arith.constant 0 : index
    %2 = vector.load %arg3[%c0_3, %c0_4] : memref<1x128xf32, #tpu.memory_space<vmem>>, vector<1x128xf32>
    %cst = arith.constant dense<0.000000e+00> : vector<8xf32>
    %3 = vector.multi_reduction <add>, %0, %cst [1] : vector<8x128xf32> to vector<8xf32>
    %4 = vector.shape_cast %3 : vector<8xf32> to vector<8x1xf32>
    %cst_5 = arith.constant 7.812500e-03 : f32
    %5 = vector.broadcast %cst_5 : f32 to vector<8x1xf32>
    %6 = arith.mulf %4, %5 : vector<8x1xf32>
    %7 = arith.mulf %0, %0 : vector<8x128xf32>
    %cst_6 = arith.constant dense<0.000000e+00> : vector<8xf32>
    %8 = vector.multi_reduction <add>, %7, %cst_6 [1] : vector<8x128xf32> to vector<8xf32>
    %9 = vector.shape_cast %8 : vector<8xf32> to vector<8x1xf32>
    %cst_7 = arith.constant 7.812500e-03 : f32
    %10 = vector.broadcast %cst_7 : f32 to vector<8x1xf32>
    %11 = arith.mulf %9, %10 : vector<8x1xf32>
    %12 = arith.mulf %6, %6 : vector<8x1xf32>
    %13 = arith.subf %11, %12 : vector<8x1xf32>
    %14 = vector.broadcast %6 : vector<8x1xf32> to vector<8x128xf32>
    %15 = arith.subf %0, %14 : vector<8x128xf32>
    %cst_8 = arith.constant 9.99999974E-6 : f32
    %16 = vector.broadcast %cst_8 : f32 to vector<8x1xf32>
    %17 = arith.addf %13, %16 : vector<8x1xf32>
    %18 = math.rsqrt %17 : vector<8x1xf32>
    %19 = vector.broadcast %18 : vector<8x1xf32> to vector<8x128xf32>
    %20 = arith.mulf %15, %19 : vector<8x128xf32>
    %21 = vector.broadcast %1 : vector<1x128xf32> to vector<8x128xf32>
    %22 = arith.mulf %20, %21 : vector<8x128xf32>
    %23 = vector.broadcast %2 : vector<1x128xf32> to vector<8x128xf32>
    %24 = arith.addf %22, %23 : vector<8x128xf32>
    %c0_9 = arith.constant 0 : index
    %c0_10 = arith.constant 0 : index
    %25 = vector.load %arg4[%c0_9, %c0_10] : memref<8x128xf32, #tpu.memory_space<vmem>>, vector<8x128xf32>
    tpu.vector_store %arg4[%c0_9, %c0_10], %24 {strides = array<i32>} : memref<8x128xf32, #tpu.memory_space<vmem>>, vector<8x128xf32>,
    return
  }
  func.func @transform_0(%arg0: i32) -> (i32, i32) {
    %c0_i32 = arith.constant 0 : i32
    %c0_i32_0 = arith.constant 0 : i32
    return %arg0, %c0_i32 : i32, i32
  }
  func.func @transform_1(%arg0: i32) -> (i32, i32) {
    %c0_i32 = arith.constant 0 : i32
    %c0_i32_0 = arith.constant 0 : i32
    %c0_i32_1 = arith.constant 0 : i32
    return %c0_i32, %c0_i32_0 : i32, i32
  }
  func.func @transform_2(%arg0: i32) -> (i32, i32) {
    %c0_i32 = arith.constant 0 : i32
    %c0_i32_0 = arith.constant 0 : i32
    %c0_i32_1 = arith.constant 0 : i32
    return %c0_i32, %c0_i32_0 : i32, i32
  }
  func.func @transform_3(%arg0: i32) -> (i32, i32) {
    %c0_i32 = arith.constant 0 : i32
    %c0_i32_0 = arith.constant 0 : i32
    return %arg0, %c0_i32 : i32, i32
  }
}

</mosaic_0001>

<llo_original>
// kernel: encoder_forward.7
$region0: #{encoder_forward.7}
  #allocation0 [shape = 'u32[]', space=smem, size = 0x4, offset = 0x4, fixed_abs, tag = 'smem constant byte address 0x4 - core index']
  #allocation1 [shape = 'u32[72,128]{1,0:T(1,128)}', space=vmem, size = 0x9000, scoped, tag = 'internal scratch']
  %s0 = inlined_call_operand.vmem [shape: f32[16,128], index: 0, kind: input, shape index: {}]
  %s1 = inlined_call_operand.vmem [shape: f32[1,128], index: 1, kind: input, shape index: {}]
  %s2 = inlined_call_operand.vmem [shape: f32[1,128], index: 2, kind: input, shape index: {}]
  %s3 = inlined_call_operand.hbm [shape: f32[128,384], index: 3, kind: input, shape index: {}]
  %s4 = inlined_call_operand.vmem [shape: f32[1,384], index: 4, kind: input, shape index: {}]
  %s5 = inlined_call_operand.vmem [shape: f32[16,128], index: 5, kind: output, shape index: {0}]
  %s6 = inlined_call_operand.vmem [shape: f32[16,128], index: 6, kind: output, shape index: {1}]
  %s7 = inlined_call_operand.vmem [shape: f32[16,128], index: 7, kind: output, shape index: {2}]
  %8 = xla_tuple %s5, %s6, %s7
  %s9 = sld [smem:[#allocation0]]
  $region73: #{encoder_forward.7} parent=0
    _
  %s11 = ssub.s32 1, %s9
  %s12 = scalar_select 0, %s11, %s9
  $region1: #{encoder_forward.7} parent=0
    #allocation2 [shape = 'u8[196608]{0}', space=vmem, size = 0x30000, scoped, tag = 'input window, operand 3, single buffered']
    #allocation3 [shape = 's32[2]{0}', space=sflag, size = 0x8, scoped, tag = 'scoped memory for encoder_forward.7']
    %13 = vsyncpa [#allocation3], 0
    loop: start=0, step=1, limit=4
    $region2: #{encoder_forward.7} parent=1 // loop_pre_header
      _
    $region3: #{encoder_forward.7} parent=1 // loop_header
      %s15 = sphi 0, %s19
      %p16 = scmp.ge.s32.totalorder %s15, 4
      %s25 = sphi 0, %s27
      %s28 = sphi 0, %s25
      %s29 = sphi 0, %s28
      %s45 = sphi 0, %s29
      %s49 = sphi 0, %s49
      %s51 = sphi 0, %s49
      %s52 = sphi 0, %s51
      %s66 = sphi 0, %s52
      %s70 = sphi 0, %s70
      %s72 = sphi 0, %s70
      %s73 = sphi 0, %s72
      %s87 = sphi 0, %s73
      %s91 = sphi 0, %s91
      %s93 = sphi 0, %s91
      %s94 = sphi 0, %s93
      %s108 = sphi 0, %s94
      %s112 = sphi 0, %s112
      %s114 = sphi 0, %s112
      %s115 = sphi 0, %s114
      %s129 = sphi 0, %s115
      %s135 = sphi 0, %s137
      %s138 = sphi 0, %s135
      %s139 = sphi 0, %s138
      %s155 = sphi 0, %s139
      %s161 = sphi 0, %s163
      %s164 = sphi 0, %s161
      %s165 = sphi 0, %s164
      %s181 = sphi 0, %s165
      %s187 = sphi 0, %s189
      %s190 = sphi 0, %s187
      %s191 = sphi 0, %s190
      %s207 = sphi 0, %s191
    $region4: #{encoder_forward.7} parent=1 // loop_header_branch
      %18 = sbr.rel (%p16) target = $region8
    $region5: #{encoder_forward.7} parent=1 // loop_body
      %s20 = ssub.s32 %s15, 1
      %s21 = ssub.s32 %s15, 2
      %s22 = sadd.s32 %s15, 1
      %s23 = ssub.s32 %s15, %s22
      %p24 = scmp.eq.s32.totalorder %s23, 0
      %s26 = sadd.s32 %s25, 1
      %s27 = scalar_select %p24, %s25, %s26
      %p30 = pneg %p24
      %p31 = scmp.eq.s32.totalorder %s15, 1
      %p32 = por %p30, %p31
      %p33 = scmp.ne.s32.totalorder %s25, %s28
      %p34 = scmp.eq.s32.totalorder %s15, 0
      %p35 = por %p33, %p34
      %p36 = scmp.ne.s32.totalorder %s25, %s28
      %p37 = scmp.eq.s32.totalorder %s20, 1
      %p38 = por %p36, %p37
      %p39 = scmp.ne.s32.totalorder %s28, %s29
      %p40 = scmp.eq.s32.totalorder %s20, 0
      %p41 = por %p39, %p40
      %p42 = scmp.ne.s32.totalorder %s28, %s29
      %p43 = scmp.eq.s32.totalorder %s21, 1
      %p44 = por %p42, %p43
      %p46 = scmp.ne.s32.totalorder %s29, %s45
      %p47 = scmp.eq.s32.totalorder %s21, 0
      %p48 = por %p46, %p47
      %s50 = sadd.s32 %s49, 1
      %p53 = scmp.eq.s32.totalorder %s15, 1
      %p54 = scmp.ne.s32.totalorder %s49, %s51
      %p55 = scmp.eq.s32.totalorder %s15, 0
      %p56 = por %p54, %p55
      %p57 = scmp.ne.s32.totalorder %s49, %s51
      %p58 = scmp.eq.s32.totalorder %s20, 1
      %p59 = por %p57, %p58
      %p60 = scmp.ne.s32.totalorder %s51, %s52
      %p61 = scmp.eq.s32.totalorder %s20, 0
      %p62 = por %p60, %p61
      %p63 = scmp.ne.s32.totalorder %s51, %s52
      %p64 = scmp.eq.s32.totalorder %s21, 1
      %p65 = por %p63, %p64
      %p67 = scmp.ne.s32.totalorder %s52, %s66
      %p68 = scmp.eq.s32.totalorder %s21, 0
      %p69 = por %p67, %p68
      %s71 = sadd.s32 %s70, 1
      %p74 = scmp.eq.s32.totalorder %s15, 1
      %p75 = scmp.ne.s32.totalorder %s70, %s72
      %p76 = scmp.eq.s32.totalorder %s15, 0
      %p77 = por %p75, %p76
      %p78 = scmp.ne.s32.totalorder %s70, %s72
      %p79 = scmp.eq.s32.totalorder %s20, 1
      %p80 = por %p78, %p79
      %p81 = scmp.ne.s32.totalorder %s72, %s73
      %p82 = scmp.eq.s32.totalorder %s20, 0
      %p83 = por %p81, %p82
      %p84 = scmp.ne.s32.totalorder %s72, %s73
      %p85 = scmp.eq.s32.totalorder %s21, 1
      %p86 = por %p84, %p85
      %p88 = scmp.ne.s32.totalorder %s73, %s87
      %p89 = scmp.eq.s32.totalorder %s21, 0
      %p90 = por %p88, %p89
      %s92 = sadd.s32 %s91, 1
      %p95 = scmp.eq.s32.totalorder %s15, 1
      %p96 = scmp.ne.s32.totalorder %s91, %s93
      %p97 = scmp.eq.s32.totalorder %s15, 0
      %p98 = por %p96, %p97
      %p99 = scmp.ne.s32.totalorder %s91, %s93
      %p100 = scmp.eq.s32.totalorder %s20, 1
      %p101 = por %p99, %p100
      %p102 = scmp.ne.s32.totalorder %s93, %s94
      %p103 = scmp.eq.s32.totalorder %s20, 0
      %p104 = por %p102, %p103
      %p105 = scmp.ne.s32.totalorder %s93, %s94
      %p106 = scmp.eq.s32.totalorder %s21, 1
      %p107 = por %p105, %p106
      %p109 = scmp.ne.s32.totalorder %s94, %s108
      %p110 = scmp.eq.s32.totalorder %s21, 0
      %p111 = por %p109, %p110
      %s113 = sadd.s32 %s112, 1
      %p116 = scmp.eq.s32.totalorder %s15, 1
      %p117 = scmp.ne.s32.totalorder %s112, %s114
      %p118 = scmp.eq.s32.totalorder %s15, 0
      %p119 = por %p117, %p118
      %p120 = scmp.ne.s32.totalorder %s112, %s114
      %p121 = scmp.eq.s32.totalorder %s20, 1
      %p122 = por %p120, %p121
      %p123 = scmp.ne.s32.totalorder %s114, %s115
      %p124 = scmp.eq.s32.totalorder %s20, 0
      %p125 = por %p123, %p124
      %p126 = scmp.ne.s32.totalorder %s114, %s115
      %p127 = scmp.eq.s32.totalorder %s21, 1
      %p128 = por %p126, %p127
      %p130 = scmp.ne.s32.totalorder %s115, %s129
      %p131 = scmp.eq.s32.totalorder %s21, 0
      %p132 = por %p130, %p131
      %s133 = ssub.s32 %s15, %s22
      %p134 = scmp.eq.s32.totalorder %s133, 0
      %s136 = sadd.s32 %s135, 1
      %s137 = scalar_select %p134, %s135, %s136
      %p140 = pneg %p134
      %p141 = scmp.eq.s32.totalorder %s15, 1
      %p142 = por %p140, %p141
      %p143 = scmp.ne.s32.totalorder %s135, %s138
      %p144 = scmp.eq.s32.totalorder %s15, 0
      %p145 = por %p143, %p144
      %p146 = scmp.ne.s32.totalorder %s135, %s138
      %p147 = scmp.eq.s32.totalorder %s20, 1
      %p148 = por %p146, %p147
      %p149 = scmp.ne.s32.totalorder %s138, %s139
      %p150 = scmp.eq.s32.totalorder %s20, 0
      %p151 = por %p149, %p150
      %p152 = scmp.ne.s32.totalorder %s138, %s139
      %p153 = scmp.eq.s32.totalorder %s21, 1
      %p154 = por %p152, %p153
      %p156 = scmp.ne.s32.totalorder %s139, %s155
      %p157 = scmp.eq.s32.totalorder %s21, 0
      %p158 = por %p156, %p157
      %s159 = ssub.s32 %s15, %s22
      %p160 = scmp.eq.s32.totalorder %s159, 0
      %s162 = sadd.s32 %s161, 1
      %s163 = scalar_select %p160, %s161, %s162
      %p166 = pneg %p160
      %p167 = scmp.eq.s32.totalorder %s15, 1
      %p168 = por %p166, %p167
      %p169 = scmp.ne.s32.totalorder %s161, %s164
      %p170 = scmp.eq.s32.totalorder %s15, 0
      %p171 = por %p169, %p170
      %p172 = scmp.ne.s32.totalorder %s161, %s164
      %p173 = scmp.eq.s32.totalorder %s20, 1
      %p174 = por %p172, %p173
      %p175 = scmp.ne.s32.totalorder %s164, %s165
      %p176 = scmp.eq.s32.totalorder %s20, 0
      %p177 = por %p175, %p176
      %p178 = scmp.ne.s32.totalorder %s164, %s165
      %p179 = scmp.eq.s32.totalorder %s21, 1
      %p180 = por %p178, %p179
      %p182 = scmp.ne.s32.totalorder %s165, %s181
      %p183 = scmp.eq.s32.totalorder %s21, 0
      %p184 = por %p182, %p183
      %s185 = ssub.s32 %s15, %s22
      %p186 = scmp.eq.s32.totalorder %s185, 0
      %s188 = sadd.s32 %s187, 1
      %s189 = scalar_select %p186, %s187, %s188
      %p192 = pneg %p186
      %p193 = scmp.eq.s32.totalorder %s15, 1
      %p194 = por %p192, %p193
      %p195 = scmp.ne.s32.totalorder %s187, %s190
      %p196 = scmp.eq.s32.totalorder %s15, 0
      %p197 = por %p195, %p196
      %p198 = scmp.ne.s32.totalorder %s187, %s190
      %p199 = scmp.eq.s32.totalorder %s20, 1
      %p200 = por %p198, %p199
      %p201 = scmp.ne.s32.totalorder %s190, %s191
      %p202 = scmp.eq.s32.totalorder %s20, 0
      %p203 = por %p201, %p202
      %p204 = scmp.ne.s32.totalorder %s190, %s191
      %p205 = scmp.eq.s32.totalorder %s21, 1
      %p206 = por %p204, %p205
      %p208 = scmp.ne.s32.totalorder %s191, %s207
      %p209 = scmp.eq.s32.totalorder %s21, 0
      %p210 = por %p208, %p209
      %p211 = scmp.le.s32.totalorder 1, %s15
      %p212 = scmp.lt.s32.totalorder %s15, 3
      %p213 = pnand %p211, %p212
      %p214 = pneg %p213
      // Predicated region
      $region9: #{encoder_forward.7} parent=5 // pred_check
        _
      $region10: #{encoder_forward.7} parent=5 // pred_check_branch
        %216 = sbr.rel (%p213) target = $region12
      $region11: #{encoder_forward.7} parent=5 // pred_region
        %s217 = ssub.s32 %s15, 1
        // Predicated region
        $region13: #{encoder_forward.7} parent=11 // pred_check
          %p218 = pneg %p62
        $region14: #{encoder_forward.7} parent=11 // pred_check_branch
          %220 = sbr.rel (%p218) target = $region16
        $region15: #{encoder_forward.7} parent=11 // pred_region
          _
        $region16: #{encoder_forward.7} parent=11 // pred_fallthru
          _
        // Predicated region
        $region17: #{encoder_forward.7} parent=11 // pred_check
          %p221 = pneg %p83
        $region18: #{encoder_forward.7} parent=11 // pred_check_branch
          %223 = sbr.rel (%p221) target = $region20
        $region19: #{encoder_forward.7} parent=11 // pred_region
          _
        $region20: #{encoder_forward.7} parent=11 // pred_fallthru
          _
        // Predicated region
        $region21: #{encoder_forward.7} parent=11 // pred_check
          %p224 = pneg %p104
        $region22: #{encoder_forward.7} parent=11 // pred_check_branch
          %226 = sbr.rel (%p224) target = $region24
        $region23: #{encoder_forward.7} parent=11 // pred_region
          %228 = vsyncadd [#allocation3], 0
          %s229 = sshll.u32 %s3, 4
          %s230 = int_to_ptr.hbm [resolvable:$true] %s229
          %s231 = sshll.u32 [#allocation2], 4
          %s232 = int_to_ptr.vmem [resolvable:$true] %s231
          %237 = dma.hbm_to_vmem [thread:$0]  %s230, 6144, %s232, [#allocation3], 384, 384, 24
        $region24: #{encoder_forward.7} parent=11 // pred_fallthru
          _
        // Predicated region
        $region25: #{encoder_forward.7} parent=11 // pred_check
          %p238 = pneg %p125
        $region26: #{encoder_forward.7} parent=11 // pred_check_branch
          %240 = sbr.rel (%p238) target = $region28
        $region27: #{encoder_forward.7} parent=11 // pred_region
          _
        $region28: #{encoder_forward.7} parent=11 // pred_fallthru
          _
      $region12: #{encoder_forward.7} parent=5 // pred_fallthru
        _
      %p241 = scmp.lt.s32.totalorder %s15, 2
      // Predicated region
      $region29: #{encoder_forward.7} parent=5 // pred_check
        %p242 = pneg %p241
      $region30: #{encoder_forward.7} parent=5 // pred_check_branch
        %244 = sbr.rel (%p242) target = $region32
      $region31: #{encoder_forward.7} parent=5 // pred_region
        // Predicated region
        $region33: #{encoder_forward.7} parent=31 // pred_check
          %p245 = pneg %p35
        $region34: #{encoder_forward.7} parent=31 // pred_check_branch
          %247 = sbr.rel (%p245) target = $region36
        $region35: #{encoder_forward.7} parent=31 // pred_region
          %p248 = scmp.lt.s32.totalorder %s15, 1
          %s249 = scalar_select %p248, %s15, 1
          %s250 = smul.addr %s249, 8
          %s251 = scalar_lea.vmem %s0, %s250
        $region36: #{encoder_forward.7} parent=31 // pred_fallthru
          _
      $region32: #{encoder_forward.7} parent=5 // pred_fallthru
        _
      %p252 = scmp.le.s32.totalorder 1, %s15
      %p253 = scmp.lt.s32.totalorder %s15, 3
      %p254 = pnand %p252, %p253
      %p255 = pneg %p254
      // Predicated region
      $region37: #{encoder_forward.7} parent=5 // pred_check
        _
      $region38: #{encoder_forward.7} parent=5 // pred_check_branch
        %257 = sbr.rel (%p254) target = $region40
      $region39: #{encoder_forward.7} parent=5 // pred_region
        %s258 = ssub.s32 %s15, 1
        // Predicated region
        $region41: #{encoder_forward.7} parent=39 // pred_check
          %p259 = pneg %p104
        $region42: #{encoder_forward.7} parent=39 // pred_check_branch
          %261 = sbr.rel (%p259) target = $region44
        $region43: #{encoder_forward.7} parent=39 // pred_region
          %263 = dma.done [#allocation3], 6144
        $region44: #{encoder_forward.7} parent=39 // pred_fallthru
          _
        %p264 = scmp.lt.s32.totalorder %s20, 1
        %s265 = scalar_select %p264, %s20, 1
        %s266 = smul.addr %s265, 8
        %s267 = scalar_lea.vmem %s0, %s266
        %p268 = pneg %p41
        %p269 = pneg %p38
        %p270 = pneg %p62
        %p271 = pneg %p59
        %p272 = pneg %p83
        %p273 = pneg %p80
        %p274 = pneg %p104
        %p275 = pneg %p101
        %p276 = pneg %p125
        %p277 = pneg %p122
        %p278 = pneg %p151
        %p279 = pneg %p148
        %p280 = scmp.lt.s32.totalorder %s20, 1
        %s281 = scalar_select %p280, %s20, 1
        %s282 = smul.addr %s281, 8
        %s283 = scalar_lea.vmem %s5, %s282
        %p284 = pneg %p177
        %p285 = pneg %p174
        %p286 = scmp.lt.s32.totalorder %s20, 1
        %s287 = scalar_select %p286, %s20, 1
        %s288 = smul.addr %s287, 8
        %s289 = scalar_lea.vmem %s6, %s288
        %p290 = pneg %p203
        %p291 = pneg %p200
        %p292 = scmp.lt.s32.totalorder %s20, 1
        %s293 = scalar_select %p292, %s20, 1
        %s294 = smul.addr %s293, 8
        %s295 = scalar_lea.vmem %s7, %s294
        %p296 = scmp.lt.s32.totalorder %s20, 1
        %s297 = scalar_select %p296, %s20, 1
        %s298 = smul.addr %s297, 8
        %s299 = scalar_lea.vmem %s0, %s298
        %p300 = scmp.lt.s32.totalorder %s20, 1
        %s301 = scalar_select %p300, %s20, 1
        %s302 = smul.addr %s301, 8
        %s303 = scalar_lea.vmem %s5, %s302
        %p304 = scmp.lt.s32.totalorder %s20, 1
        %s305 = scalar_select %p304, %s20, 1
        %s306 = smul.addr %s305, 8
        %s307 = scalar_lea.vmem %s6, %s306
        %p308 = scmp.lt.s32.totalorder %s20, 1
        %s309 = scalar_select %p308, %s20, 1
        %s310 = smul.addr %s309, 8
        %s311 = scalar_lea.vmem %s7, %s310
        %v312 = vld [vmem:[%s299] sm:$0xff]
        %v313 = vld [vmem:[%s1] sm:$0x1]
        %v314 = vld [vmem:[%s2] sm:$0x1]
        %315 = vadd.xlane.f32.xlu0 %v312
        %v316 = vpop.xlane.xlu0 %315
        %v317 = vmul.f32 %v316, 0.0078125
        %v318 = vmul.f32 %v312, %v312
        %319 = vadd.xlane.f32.xlu0 %v318
        %v320 = vpop.xlane.xlu0 %319
        %v321 = vmul.f32 %v320, 0.0078125
        %v322 = vmul.f32 %v317, %v317
        %v323 = vsub.f32 %v321, %v322
        %v324 = vsub.f32 %v312, %v317
        %v325 = vadd.f32 %v323, 1e-05
        %v326 = vrsqrt.pop %v325
        %v327 = vmul.f32 %v326, %v325
        %v328 = vmul.f32 %v327, %v326
        %v329 = vmul.f32 0.5, %v328
        %v330 = vsub.f32 1.5, %v329
        %v331 = vmul.f32 %v326, %v330
        %vm332 = vweird.f32 %v325
        %vm333 = vweird.f32 %v326
        %vm334 = vmor %vm332, %vm333
        %v335 = vsel %vm334, %v326, %v331
        %v336 = vmul.f32 %v324, %v335
        %v338 = vperm.slane %v313, 0
        %v340 = vmul.f32 %v336, %v338
        %v342 = vperm.slane %v314, 0
        %v344 = vadd.f32 %v340, %v342
        %v345 = vld [vmem:[#allocation2] sm:$0xff]
        %v346 = vld [vmem:[#allocation2 + $0x8] sm:$0xff]
        %v347 = vld [vmem:[#allocation2 + $0x10] sm:$0xff]
        %v348 = vld [vmem:[#allocation2 + $0x18] sm:$0xff]
        %v349 = vld [vmem:[#allocation2 + $0x20] sm:$0xff]
        %v350 = vld [vmem:[#allocation2 + $0x28] sm:$0xff]
        %v351 = vld [vmem:[#allocation2 + $0x30] sm:$0xff]
        %v352 = vld [vmem:[#allocation2 + $0x38] sm:$0xff]
        %v353 = vld [vmem:[#allocation2 + $0x40] sm:$0xff]
        %v354 = vld [vmem:[#allocation2 + $0x48] sm:$0xff]
        %v355 = vld [vmem:[#allocation2 + $0x50] sm:$0xff]
        %v356 = vld [vmem:[#allocation2 + $0x58] sm:$0xff]
        %v357 = vld [vmem:[#allocation2 + $0x60] sm:$0xff]
        %v358 = vld [vmem:[#allocation2 + $0x68] sm:$0xff]
        %v359 = vld [vmem:[#allocation2 + $0x70] sm:$0xff]
        %v360 = vld [vmem:[#allocation2 + $0x78] sm:$0xff]
        %v361 = vld [vmem:[#allocation2 + $0x80] sm:$0xff]
        %v362 = vld [vmem:[#allocation2 + $0x88] sm:$0xff]
        %v363 = vld [vmem:[#allocation2 + $0x90] sm:$0xff]
        %v364 = vld [vmem:[#allocation2 + $0x98] sm:$0xff]
        %v365 = vld [vmem:[#allocation2 + $0xa0] sm:$0xff]
        %v366 = vld [vmem:[#allocation2 + $0xa8] sm:$0xff]
        %v367 = vld [vmem:[#allocation2 + $0xb0] sm:$0xff]
        %v368 = vld [vmem:[#allocation2 + $0xb8] sm:$0xff]
        %v369 = vld [vmem:[#allocation2 + $0xc0] sm:$0xff]
        %v370 = vld [vmem:[#allocation2 + $0xc8] sm:$0xff]
        %v371 = vld [vmem:[#allocation2 + $0xd0] sm:$0xff]
        %v372 = vld [vmem:[#allocation2 + $0xd8] sm:$0xff]
        %v373 = vld [vmem:[#allocation2 + $0xe0] sm:$0xff]
        %v374 = vld [vmem:[#allocation2 + $0xe8] sm:$0xff]
        %v375 = vld [vmem:[#allocation2 + $0xf0] sm:$0xff]
        %v376 = vld [vmem:[#allocation2 + $0xf8] sm:$0xff]
        %v377 = vld [vmem:[#allocation2 + $0x100] sm:$0xff]
        %v378 = vld [vmem:[#allocation2 + $0x108] sm:$0xff]
        %v379 = vld [vmem:[#allocation2 + $0x110] sm:$0xff]
        %v380 = vld [vmem:[#allocation2 + $0x118] sm:$0xff]
        %v381 = vld [vmem:[#allocation2 + $0x120] sm:$0xff]
        %v382 = vld [vmem:[#allocation2 + $0x128] sm:$0xff]
        %v383 = vld [vmem:[#allocation2 + $0x130] sm:$0xff]
        %v384 = vld [vmem:[#allocation2 + $0x138] sm:$0xff]
        %v385 = vld [vmem:[#allocation2 + $0x140] sm:$0xff]
        %v386 = vld [vmem:[#allocation2 + $0x148] sm:$0xff]
        %v387 = vld [vmem:[#allocation2 + $0x150] sm:$0xff]
        %v388 = vld [vmem:[#allocation2 + $0x158] sm:$0xff]
        %v389 = vld [vmem:[#allocation2 + $0x160] sm:$0xff]
        %v390 = vld [vmem:[#allocation2 + $0x168] sm:$0xff]
        %v391 = vld [vmem:[#allocation2 + $0x170] sm:$0xff]
        %v392 = vld [vmem:[#allocation2 + $0x178] sm:$0xff]
        %v393 = vld [vmem:[%s4] sm:$0x7]
        %v395 = vperm.slane %v393, 0
        %v396 = vperm.slane %v393, 1
        %v397 = vperm.slane %v393, 2
        %v401 = vand.u32 %v390, 4294901760
        %402 = vmatpush.msra.mxu0 %v401
        %v403 = vand.u32 %v387, 4294901760
        %404 = vmatpush.msra.mxu0 %v403
        %v405 = vand.u32 %v384, 4294901760
        %406 = vmatpush.msra.mxu0 %v405
        %v407 = vand.u32 %v381, 4294901760
        %408 = vmatpush.msra.mxu0 %v407
        %v409 = vand.u32 %v378, 4294901760
        %410 = vmatpush.msra.mxu0 %v409
        %v411 = vand.u32 %v375, 4294901760
        %412 = vmatpush.msra.mxu0 %v411
        %v413 = vand.u32 %v372, 4294901760
        %414 = vmatpush.msra.mxu0 %v413
        %v415 = vand.u32 %v369, 4294901760
        %416 = vmatpush.msra.mxu0 %v415
        %v417 = vand.u32 %v366, 4294901760
        %418 = vmatpush.msra.mxu0 %v417
        %v419 = vand.u32 %v363, 4294901760
        %420 = vmatpush.msra.mxu0 %v419
        %v421 = vand.u32 %v360, 4294901760
        %422 = vmatpush.msra.mxu0 %v421
        %v423 = vand.u32 %v357, 4294901760
        %424 = vmatpush.msra.mxu0 %v423
        %v425 = vand.u32 %v354, 4294901760
        %426 = vmatpush.msra.mxu0 %v425
        %v427 = vand.u32 %v351, 4294901760
        %428 = vmatpush.msra.mxu0 %v427
        %v429 = vand.u32 %v348, 4294901760
        %430 = vmatpush.msra.mxu0 %v429
        %v431 = vand.u32 %v345, 4294901760
        %432 = vmatpush.msra.mxu0 %v431
        %v433 = vand.u32 %v344, 4294901760
        %v434 = vsub.f32 %v344, %v433
        %v435 = vand.u32 %v434, 4294901760
        %v436 = vsub.f32 %v434, %v435
        %v437 = vand.u32 %v436, 4294901760
        %438 = vmatmul.f32.gmra.mxu0 %v437
        %v439 = vpop.f32.mrf.mxu0
        %v440 = vadd.f32 %v395, %v439
        %441 = vdwg.mxu0
        %v442 = vand.u32 %v390, 4294901760
        %v443 = vsub.f32 %v390, %v442
        %v444 = vand.u32 %v443, 4294901760
        %v445 = vsub.f32 %v443, %v444
        %v446 = vand.u32 %v445, 4294901760
        %447 = vmatpush.msra.mxu0 %v446
        %v448 = vand.u32 %v387, 4294901760
        %v449 = vsub.f32 %v387, %v448
        %v450 = vand.u32 %v449, 4294901760
        %v451 = vsub.f32 %v449, %v450
        %v452 = vand.u32 %v451, 4294901760
        %453 = vmatpush.msra.mxu0 %v452
        %v454 = vand.u32 %v384, 4294901760
        %v455 = vsub.f32 %v384, %v454
        %v456 = vand.u32 %v455, 4294901760
        %v457 = vsub.f32 %v455, %v456
        %v458 = vand.u32 %v457, 4294901760
        %459 = vmatpush.msra.mxu0 %v458
        %v460 = vand.u32 %v381, 4294901760
        %v461 = vsub.f32 %v381, %v460
        %v462 = vand.u32 %v461, 4294901760
        %v463 = vsub.f32 %v461, %v462
        %v464 = vand.u32 %v463, 4294901760
        %465 = vmatpush.msra.mxu0 %v464
        %v466 = vand.u32 %v378, 4294901760
        %v467 = vsub.f32 %v378, %v466
        %v468 = vand.u32 %v467, 4294901760
        %v469 = vsub.f32 %v467, %v468
        %v470 = vand.u32 %v469, 4294901760
        %471 = vmatpush.msra.mxu0 %v470
        %v472 = vand.u32 %v375, 4294901760
        %v473 = vsub.f32 %v375, %v472
        %v474 = vand.u32 %v473, 4294901760
        %v475 = vsub.f32 %v473, %v474
        %v476 = vand.u32 %v475, 4294901760
        %477 = vmatpush.msra.mxu0 %v476
        %v478 = vand.u32 %v372, 4294901760
        %v479 = vsub.f32 %v372, %v478
        %v480 = vand.u32 %v479, 4294901760
        %v481 = vsub.f32 %v479, %v480
        %v482 = vand.u32 %v481, 4294901760
        %483 = vmatpush.msra.mxu0 %v482
        %v484 = vand.u32 %v369, 4294901760
        %v485 = vsub.f32 %v369, %v484
        %v486 = vand.u32 %v485, 4294901760
        %v487 = vsub.f32 %v485, %v486
        %v488 = vand.u32 %v487, 4294901760
        %489 = vmatpush.msra.mxu0 %v488
        %v490 = vand.u32 %v366, 4294901760
        %v491 = vsub.f32 %v366, %v490
        %v492 = vand.u32 %v491, 4294901760
        %v493 = vsub.f32 %v491, %v492
        %v494 = vand.u32 %v493, 4294901760
        %495 = vmatpush.msra.mxu0 %v494
        %v496 = vand.u32 %v363, 4294901760
        %v497 = vsub.f32 %v363, %v496
        %v498 = vand.u32 %v497, 4294901760
        %v499 = vsub.f32 %v497, %v498
        %v500 = vand.u32 %v499, 4294901760
        %501 = vmatpush.msra.mxu0 %v500
        %v502 = vand.u32 %v360, 4294901760
        %v503 = vsub.f32 %v360, %v502
        %v504 = vand.u32 %v503, 4294901760
        %v505 = vsub.f32 %v503, %v504
        %v506 = vand.u32 %v505, 4294901760
        %507 = vmatpush.msra.mxu0 %v506
        %v508 = vand.u32 %v357, 4294901760
        %v509 = vsub.f32 %v357, %v508
        %v510 = vand.u32 %v509, 4294901760
        %v511 = vsub.f32 %v509, %v510
        %v512 = vand.u32 %v511, 4294901760
        %513 = vmatpush.msra.mxu0 %v512
        %v514 = vand.u32 %v354, 4294901760
        %v515 = vsub.f32 %v354, %v514
        %v516 = vand.u32 %v515, 4294901760
        %v517 = vsub.f32 %v515, %v516
        %v518 = vand.u32 %v517, 4294901760
        %519 = vmatpush.msra.mxu0 %v518
        %v520 = vand.u32 %v351, 4294901760
        %v521 = vsub.f32 %v351, %v520
        %v522 = vand.u32 %v521, 4294901760
        %v523 = vsub.f32 %v521, %v522
        %v524 = vand.u32 %v523, 4294901760
        %525 = vmatpush.msra.mxu0 %v524
        %v526 = vand.u32 %v348, 4294901760
        %v527 = vsub.f32 %v348, %v526
        %v528 = vand.u32 %v527, 4294901760
        %v529 = vsub.f32 %v527, %v528
        %v530 = vand.u32 %v529, 4294901760
        %531 = vmatpush.msra.mxu0 %v530
        %v532 = vand.u32 %v345, 4294901760
        %v533 = vsub.f32 %v345, %v532
        %v534 = vand.u32 %v533, 4294901760
        %v535 = vsub.f32 %v533, %v534
        %v536 = vand.u32 %v535, 4294901760
        %537 = vmatpush.msra.mxu0 %v536
        %v538 = vand.u32 %v344, 4294901760
        %539 = vmatmul.f32.gmra.mxu0 %v538
        %v540 = vpop.f32.mrf.mxu0
        %v541 = vadd.f32 %v440, %v540
        %542 = vdwg.mxu0
        %v543 = vand.u32 %v390, 4294901760
        %v544 = vsub.f32 %v390, %v543
        %545 = vmatpush.msra.mxu0 %v544
        %v546 = vand.u32 %v387, 4294901760
        %v547 = vsub.f32 %v387, %v546
        %548 = vmatpush.msra.mxu0 %v547
        %v549 = vand.u32 %v384, 4294901760
        %v550 = vsub.f32 %v384, %v549
        %551 = vmatpush.msra.mxu0 %v550
        %v552 = vand.u32 %v381, 4294901760
        %v553 = vsub.f32 %v381, %v552
        %554 = vmatpush.msra.mxu0 %v553
        %v555 = vand.u32 %v378, 4294901760
        %v556 = vsub.f32 %v378, %v555
        %557 = vmatpush.msra.mxu0 %v556
        %v558 = vand.u32 %v375, 4294901760
        %v559 = vsub.f32 %v375, %v558
        %560 = vmatpush.msra.mxu0 %v559
        %v561 = vand.u32 %v372, 4294901760
        %v562 = vsub.f32 %v372, %v561
        %563 = vmatpush.msra.mxu0 %v562
        %v564 = vand.u32 %v369, 4294901760
        %v565 = vsub.f32 %v369, %v564
        %566 = vmatpush.msra.mxu0 %v565
        %v567 = vand.u32 %v366, 4294901760
        %v568 = vsub.f32 %v366, %v567
        %569 = vmatpush.msra.mxu0 %v568
        %v570 = vand.u32 %v363, 4294901760
        %v571 = vsub.f32 %v363, %v570
        %572 = vmatpush.msra.mxu0 %v571
        %v573 = vand.u32 %v360, 4294901760
        %v574 = vsub.f32 %v360, %v573
        %575 = vmatpush.msra.mxu0 %v574
        %v576 = vand.u32 %v357, 4294901760
        %v577 = vsub.f32 %v357, %v576
        %578 = vmatpush.msra.mxu0 %v577
        %v579 = vand.u32 %v354, 4294901760
        %v580 = vsub.f32 %v354, %v579
        %581 = vmatpush.msra.mxu0 %v580
        %v582 = vand.u32 %v351, 4294901760
        %v583 = vsub.f32 %v351, %v582
        %584 = vmatpush.msra.mxu0 %v583
        %v585 = vand.u32 %v348, 4294901760
        %v586 = vsub.f32 %v348, %v585
        %587 = vmatpush.msra.mxu0 %v586
        %v588 = vand.u32 %v345, 4294901760
        %v589 = vsub.f32 %v345, %v588
        %590 = vmatpush.msra.mxu0 %v589
        %v591 = vand.u32 %v344, 4294901760
        %v592 = vsub.f32 %v344, %v591
        %593 = vmatmul.f32.gmra.mxu0 %v592
        %v594 = vpop.f32.mrf.mxu0
        %v595 = vadd.f32 %v541, %v594
        %596 = vdwg.mxu0
        %v597 = vand.u32 %v390, 4294901760
        %598 = vmatpush.msra.mxu0 %v597
        %v599 = vand.u32 %v387, 4294901760
        %600 = vmatpush.msra.mxu0 %v599
        %v601 = vand.u32 %v384, 4294901760
        %602 = vmatpush.msra.mxu0 %v601
        %v603 = vand.u32 %v381, 4294901760
        %604 = vmatpush.msra.mxu0 %v603
        %v605 = vand.u32 %v378, 4294901760
        %606 = vmatpush.msra.mxu0 %v605
        %v607 = vand.u32 %v375, 4294901760
        %608 = vmatpush.msra.mxu0 %v607
        %v609 = vand.u32 %v372, 4294901760
        %610 = vmatpush.msra.mxu0 %v609
        %v611 = vand.u32 %v369, 4294901760
        %612 = vmatpush.msra.mxu0 %v611
        %v613 = vand.u32 %v366, 4294901760
        %614 = vmatpush.msra.mxu0 %v613
        %v615 = vand.u32 %v363, 4294901760
        %616 = vmatpush.msra.mxu0 %v615
        %v617 = vand.u32 %v360, 4294901760
        %618 = vmatpush.msra.mxu0 %v617
        %v619 = vand.u32 %v357, 4294901760
        %620 = vmatpush.msra.mxu0 %v619
        %v621 = vand.u32 %v354, 4294901760
        %622 = vmatpush.msra.mxu0 %v621
        %v623 = vand.u32 %v351, 4294901760
        %624 = vmatpush.msra.mxu0 %v623
        %v625 = vand.u32 %v348, 4294901760
        %626 = vmatpush.msra.mxu0 %v625
        %v627 = vand.u32 %v345, 4294901760
        %628 = vmatpush.msra.mxu0 %v627
        %v629 = vand.u32 %v344, 4294901760
        %v630 = vsub.f32 %v344, %v629
        %v631 = vand.u32 %v630, 4294901760
        %632 = vmatmul.f32.gmra.mxu0 %v631
        %v633 = vpop.f32.mrf.mxu0
        %v634 = vadd.f32 %v595, %v633
        %635 = vdwg.mxu0
        %v636 = vand.u32 %v390, 4294901760
        %v637 = vsub.f32 %v390, %v636
        %v638 = vand.u32 %v637, 4294901760
        %639 = vmatpush.msra.mxu0 %v638
        %v640 = vand.u32 %v387, 4294901760
        %v641 = vsub.f32 %v387, %v640
        %v642 = vand.u32 %v641, 4294901760
        %643 = vmatpush.msra.mxu0 %v642
        %v644 = vand.u32 %v384, 4294901760
        %v645 = vsub.f32 %v384, %v644
        %v646 = vand.u32 %v645, 4294901760
        %647 = vmatpush.msra.mxu0 %v646
        %v648 = vand.u32 %v381, 4294901760
        %v649 = vsub.f32 %v381, %v648
        %v650 = vand.u32 %v649, 4294901760
        %651 = vmatpush.msra.mxu0 %v650
        %v652 = vand.u32 %v378, 4294901760
        %v653 = vsub.f32 %v378, %v652
        %v654 = vand.u32 %v653, 4294901760
        %655 = vmatpush.msra.mxu0 %v654
        %v656 = vand.u32 %v375, 4294901760
        %v657 = vsub.f32 %v375, %v656
        %v658 = vand.u32 %v657, 4294901760
        %659 = vmatpush.msra.mxu0 %v658
        %v660 = vand.u32 %v372, 4294901760
        %v661 = vsub.f32 %v372, %v660
        %v662 = vand.u32 %v661, 4294901760
        %663 = vmatpush.msra.mxu0 %v662
        %v664 = vand.u32 %v369, 4294901760
        %v665 = vsub.f32 %v369, %v664
        %v666 = vand.u32 %v665, 4294901760
        %667 = vmatpush.msra.mxu0 %v666
        %v668 = vand.u32 %v366, 4294901760
        %v669 = vsub.f32 %v366, %v668
        %v670 = vand.u32 %v669, 4294901760
        %671 = vmatpush.msra.mxu0 %v670
        %v672 = vand.u32 %v363, 4294901760
        %v673 = vsub.f32 %v363, %v672
        %v674 = vand.u32 %v673, 4294901760
        %675 = vmatpush.msra.mxu0 %v674
        %v676 = vand.u32 %v360, 4294901760
        %v677 = vsub.f32 %v360, %v676
        %v678 = vand.u32 %v677, 4294901760
        %679 = vmatpush.msra.mxu0 %v678
        %v680 = vand.u32 %v357, 4294901760
        %v681 = vsub.f32 %v357, %v680
        %v682 = vand.u32 %v681, 4294901760
        %683 = vmatpush.msra.mxu0 %v682
        %v684 = vand.u32 %v354, 4294901760
        %v685 = vsub.f32 %v354, %v684
        %v686 = vand.u32 %v685, 4294901760
        %687 = vmatpush.msra.mxu0 %v686
        %v688 = vand.u32 %v351, 4294901760
        %v689 = vsub.f32 %v351, %v688
        %v690 = vand.u32 %v689, 4294901760
        %691 = vmatpush.msra.mxu0 %v690
        %v692 = vand.u32 %v348, 4294901760
        %v693 = vsub.f32 %v348, %v692
        %v694 = vand.u32 %v693, 4294901760
        %695 = vmatpush.msra.mxu0 %v694
        %v696 = vand.u32 %v345, 4294901760
        %v697 = vsub.f32 %v345, %v696
        %v698 = vand.u32 %v697, 4294901760
        %699 = vmatpush.msra.mxu0 %v698
        %v700 = vand.u32 %v344, 4294901760
        %701 = vmatmul.f32.gmra.mxu0 %v700
        %v702 = vpop.f32.mrf.mxu0
        %v703 = vadd.f32 %v634, %v702
        %704 = vdwg.mxu0
        %v705 = vand.u32 %v390, 4294901760
        %706 = vmatpush.msra.mxu0 %v705
        %v707 = vand.u32 %v387, 4294901760
        %708 = vmatpush.msra.mxu0 %v707
        %v709 = vand.u32 %v384, 4294901760
        %710 = vmatpush.msra.mxu0 %v709
        %v711 = vand.u32 %v381, 4294901760
        %712 = vmatpush.msra.mxu0 %v711
        %v713 = vand.u32 %v378, 4294901760
        %714 = vmatpush.msra.mxu0 %v713
        %v715 = vand.u32 %v375, 4294901760
        %716 = vmatpush.msra.mxu0 %v715
        %v717 = vand.u32 %v372, 4294901760
        %718 = vmatpush.msra.mxu0 %v717
        %v719 = vand.u32 %v369, 4294901760
        %720 = vmatpush.msra.mxu0 %v719
        %v721 = vand.u32 %v366, 4294901760
        %722 = vmatpush.msra.mxu0 %v721
        %v723 = vand.u32 %v363, 4294901760
        %724 = vmatpush.msra.mxu0 %v723
        %v725 = vand.u32 %v360, 4294901760
        %726 = vmatpush.msra.mxu0 %v725
        %v727 = vand.u32 %v357, 4294901760
        %728 = vmatpush.msra.mxu0 %v727
        %v729 = vand.u32 %v354, 4294901760
        %730 = vmatpush.msra.mxu0 %v729
        %v731 = vand.u32 %v351, 4294901760
        %732 = vmatpush.msra.mxu0 %v731
        %v733 = vand.u32 %v348, 4294901760
        %734 = vmatpush.msra.mxu0 %v733
        %v735 = vand.u32 %v345, 4294901760
        %736 = vmatpush.msra.mxu0 %v735
        %v737 = vand.u32 %v344, 4294901760
        %738 = vmatmul.f32.gmra.mxu0 %v737
        %v739 = vpop.f32.mrf.mxu0
        %v740 = vadd.f32 %v703, %v739
        %741 = vdwg.mxu0
        %v742 = vand.u32 %v391, 4294901760
        %743 = vmatpush.msra.mxu0 %v742
        %v744 = vand.u32 %v388, 4294901760
        %745 = vmatpush.msra.mxu0 %v744
        %v746 = vand.u32 %v385, 4294901760
        %747 = vmatpush.msra.mxu0 %v746
        %v748 = vand.u32 %v382, 4294901760
        %749 = vmatpush.msra.mxu0 %v748
        %v750 = vand.u32 %v379, 4294901760
        %751 = vmatpush.msra.mxu0 %v750
        %v752 = vand.u32 %v376, 4294901760
        %753 = vmatpush.msra.mxu0 %v752
        %v754 = vand.u32 %v373, 4294901760
        %755 = vmatpush.msra.mxu0 %v754
        %v756 = vand.u32 %v370, 4294901760
        %757 = vmatpush.msra.mxu0 %v756
        %v758 = vand.u32 %v367, 4294901760
        %759 = vmatpush.msra.mxu0 %v758
        %v760 = vand.u32 %v364, 4294901760
        %761 = vmatpush.msra.mxu0 %v760
        %v762 = vand.u32 %v361, 4294901760
        %763 = vmatpush.msra.mxu0 %v762
        %v764 = vand.u32 %v358, 4294901760
        %765 = vmatpush.msra.mxu0 %v764
        %v766 = vand.u32 %v355, 4294901760
        %767 = vmatpush.msra.mxu0 %v766
        %v768 = vand.u32 %v352, 4294901760
        %769 = vmatpush.msra.mxu0 %v768
        %v770 = vand.u32 %v349, 4294901760
        %771 = vmatpush.msra.mxu0 %v770
        %v772 = vand.u32 %v346, 4294901760
        %773 = vmatpush.msra.mxu0 %v772
        %v774 = vand.u32 %v344, 4294901760
        %v775 = vsub.f32 %v344, %v774
        %v776 = vand.u32 %v775, 4294901760
        %v777 = vsub.f32 %v775, %v776
        %v778 = vand.u32 %v777, 4294901760
        %779 = vmatmul.f32.gmra.mxu0 %v778
        %v780 = vpop.f32.mrf.mxu0
        %v781 = vadd.f32 %v396, %v780
        %782 = vdwg.mxu0
        %v783 = vand.u32 %v391, 4294901760
        %v784 = vsub.f32 %v391, %v783
        %v785 = vand.u32 %v784, 4294901760
        %v786 = vsub.f32 %v784, %v785
        %v787 = vand.u32 %v786, 4294901760
        %788 = vmatpush.msra.mxu0 %v787
        %v789 = vand.u32 %v388, 4294901760
        %v790 = vsub.f32 %v388, %v789
        %v791 = vand.u32 %v790, 4294901760
        %v792 = vsub.f32 %v790, %v791
        %v793 = vand.u32 %v792, 4294901760
        %794 = vmatpush.msra.mxu0 %v793
        %v795 = vand.u32 %v385, 4294901760
        %v796 = vsub.f32 %v385, %v795
        %v797 = vand.u32 %v796, 4294901760
        %v798 = vsub.f32 %v796, %v797
        %v799 = vand.u32 %v798, 4294901760
        %800 = vmatpush.msra.mxu0 %v799
        %v801 = vand.u32 %v382, 4294901760
        %v802 = vsub.f32 %v382, %v801
        %v803 = vand.u32 %v802, 4294901760
        %v804 = vsub.f32 %v802, %v803
        %v805 = vand.u32 %v804, 4294901760
        %806 = vmatpush.msra.mxu0 %v805
        %v807 = vand.u32 %v379, 4294901760
        %v808 = vsub.f32 %v379, %v807
        %v809 = vand.u32 %v808, 4294901760
        %v810 = vsub.f32 %v808, %v809
        %v811 = vand.u32 %v810, 4294901760
        %812 = vmatpush.msra.mxu0 %v811
        %v813 = vand.u32 %v376, 4294901760
        %v814 = vsub.f32 %v376, %v813
        %v815 = vand.u32 %v814, 4294901760
        %v816 = vsub.f32 %v814, %v815
        %v817 = vand.u32 %v816, 4294901760
        %818 = vmatpush.msra.mxu0 %v817
        %v819 = vand.u32 %v373, 4294901760
        %v820 = vsub.f32 %v373, %v819
        %v821 = vand.u32 %v820, 4294901760
        %v822 = vsub.f32 %v820, %v821
        %v823 = vand.u32 %v822, 4294901760
        %824 = vmatpush.msra.mxu0 %v823
        %v825 = vand.u32 %v370, 4294901760
        %v826 = vsub.f32 %v370, %v825
        %v827 = vand.u32 %v826, 4294901760
        %v828 = vsub.f32 %v826, %v827
        %v829 = vand.u32 %v828, 4294901760
        %830 = vmatpush.msra.mxu0 %v829
        %v831 = vand.u32 %v367, 4294901760
        %v832 = vsub.f32 %v367, %v831
        %v833 = vand.u32 %v832, 4294901760
        %v834 = vsub.f32 %v832, %v833
        %v835 = vand.u32 %v834, 4294901760
        %836 = vmatpush.msra.mxu0 %v835
        %v837 = vand.u32 %v364, 4294901760
        %v838 = vsub.f32 %v364, %v837
        %v839 = vand.u32 %v838, 4294901760
        %v840 = vsub.f32 %v838, %v839
        %v841 = vand.u32 %v840, 4294901760
        %842 = vmatpush.msra.mxu0 %v841
        %v843 = vand.u32 %v361, 4294901760
        %v844 = vsub.f32 %v361, %v843
        %v845 = vand.u32 %v844, 4294901760
        %v846 = vsub.f32 %v844, %v845
        %v847 = vand.u32 %v846, 4294901760
        %848 = vmatpush.msra.mxu0 %v847
        %v849 = vand.u32 %v358, 4294901760
        %v850 = vsub.f32 %v358, %v849
        %v851 = vand.u32 %v850, 4294901760
        %v852 = vsub.f32 %v850, %v851
        %v853 = vand.u32 %v852, 4294901760
        %854 = vmatpush.msra.mxu0 %v853
        %v855 = vand.u32 %v355, 4294901760
        %v856 = vsub.f32 %v355, %v855
        %v857 = vand.u32 %v856, 4294901760
        %v858 = vsub.f32 %v856, %v857
        %v859 = vand.u32 %v858, 4294901760
        %860 = vmatpush.msra.mxu0 %v859
        %v861 = vand.u32 %v352, 4294901760
        %v862 = vsub.f32 %v352, %v861
        %v863 = vand.u32 %v862, 4294901760
        %v864 = vsub.f32 %v862, %v863
        %v865 = vand.u32 %v864, 4294901760
        %866 = vmatpush.msra.mxu0 %v865
        %v867 = vand.u32 %v349, 4294901760
        %v868 = vsub.f32 %v349, %v867
        %v869 = vand.u32 %v868, 4294901760
        %v870 = vsub.f32 %v868, %v869
        %v871 = vand.u32 %v870, 4294901760
        %872 = vmatpush.msra.mxu0 %v871
        %v873 = vand.u32 %v346, 4294901760
        %v874 = vsub.f32 %v346, %v873
        %v875 = vand.u32 %v874, 4294901760
        %v876 = vsub.f32 %v874, %v875
        %v877 = vand.u32 %v876, 4294901760
        %878 = vmatpush.msra.mxu0 %v877
        %v879 = vand.u32 %v344, 4294901760
        %880 = vmatmul.f32.gmra.mxu0 %v879
        %v881 = vpop.f32.mrf.mxu0
        %v882 = vadd.f32 %v781, %v881
        %883 = vdwg.mxu0
        %v884 = vand.u32 %v391, 4294901760
        %v885 = vsub.f32 %v391, %v884
        %886 = vmatpush.msra.mxu0 %v885
        %v887 = vand.u32 %v388, 4294901760
        %v888 = vsub.f32 %v388, %v887
        %889 = vmatpush.msra.mxu0 %v888
        %v890 = vand.u32 %v385, 4294901760
        %v891 = vsub.f32 %v385, %v890
        %892 = vmatpush.msra.mxu0 %v891
        %v893 = vand.u32 %v382, 4294901760
        %v894 = vsub.f32 %v382, %v893
        %895 = vmatpush.msra.mxu0 %v894
        %v896 = vand.u32 %v379, 4294901760
        %v897 = vsub.f32 %v379, %v896
        %898 = vmatpush.msra.mxu0 %v897
        %v899 = vand.u32 %v376, 4294901760
        %v900 = vsub.f32 %v376, %v899
        %901 = vmatpush.msra.mxu0 %v900
        %v902 = vand.u32 %v373, 4294901760
        %v903 = vsub.f32 %v373, %v902
        %904 = vmatpush.msra.mxu0 %v903
        %v905 = vand.u32 %v370, 4294901760
        %v906 = vsub.f32 %v370, %v905
        %907 = vmatpush.msra.mxu0 %v906
        %v908 = vand.u32 %v367, 4294901760
        %v909 = vsub.f32 %v367, %v908
        %910 = vmatpush.msra.mxu0 %v909
        %v911 = vand.u32 %v364, 4294901760
        %v912 = vsub.f32 %v364, %v911
        %913 = vmatpush.msra.mxu0 %v912
        %v914 = vand.u32 %v361, 4294901760
        %v915 = vsub.f32 %v361, %v914
        %916 = vmatpush.msra.mxu0 %v915
        %v917 = vand.u32 %v358, 4294901760
        %v918 = vsub.f32 %v358, %v917
        %919 = vmatpush.msra.mxu0 %v918
        %v920 = vand.u32 %v355, 4294901760
        %v921 = vsub.f32 %v355, %v920
        %922 = vmatpush.msra.mxu0 %v921
        %v923 = vand.u32 %v352, 4294901760
        %v924 = vsub.f32 %v352, %v923
        %925 = vmatpush.msra.mxu0 %v924
        %v926 = vand.u32 %v349, 4294901760
        %v927 = vsub.f32 %v349, %v926
        %928 = vmatpush.msra.mxu0 %v927
        %v929 = vand.u32 %v346, 4294901760
        %v930 = vsub.f32 %v346, %v929
        %931 = vmatpush.msra.mxu0 %v930
        %v932 = vand.u32 %v344, 4294901760
        %v933 = vsub.f32 %v344, %v932
        %934 = vmatmul.f32.gmra.mxu0 %v933
        %v935 = vpop.f32.mrf.mxu0
        %v936 = vadd.f32 %v882, %v935
        %937 = vdwg.mxu0
        %v938 = vand.u32 %v391, 4294901760
        %939 = vmatpush.msra.mxu0 %v938
        %v940 = vand.u32 %v388, 4294901760
        %941 = vmatpush.msra.mxu0 %v940
        %v942 = vand.u32 %v385, 4294901760
        %943 = vmatpush.msra.mxu0 %v942
        %v944 = vand.u32 %v382, 4294901760
        %945 = vmatpush.msra.mxu0 %v944
        %v946 = vand.u32 %v379, 4294901760
        %947 = vmatpush.msra.mxu0 %v946
        %v948 = vand.u32 %v376, 4294901760
        %949 = vmatpush.msra.mxu0 %v948
        %v950 = vand.u32 %v373, 4294901760
        %951 = vmatpush.msra.mxu0 %v950
        %v952 = vand.u32 %v370, 4294901760
        %953 = vmatpush.msra.mxu0 %v952
        %v954 = vand.u32 %v367, 4294901760
        %955 = vmatpush.msra.mxu0 %v954
        %v956 = vand.u32 %v364, 4294901760
        %957 = vmatpush.msra.mxu0 %v956
        %v958 = vand.u32 %v361, 4294901760
        %959 = vmatpush.msra.mxu0 %v958
        %v960 = vand.u32 %v358, 4294901760
        %961 = vmatpush.msra.mxu0 %v960
        %v962 = vand.u32 %v355, 4294901760
        %963 = vmatpush.msra.mxu0 %v962
        %v964 = vand.u32 %v352, 4294901760
        %965 = vmatpush.msra.mxu0 %v964
        %v966 = vand.u32 %v349, 4294901760
        %967 = vmatpush.msra.mxu0 %v966
        %v968 = vand.u32 %v346, 4294901760
        %969 = vmatpush.msra.mxu0 %v968
        %v970 = vand.u32 %v344, 4294901760
        %v971 = vsub.f32 %v344, %v970
        %v972 = vand.u32 %v971, 4294901760
        %973 = vmatmul.f32.gmra.mxu0 %v972
        %v974 = vpop.f32.mrf.mxu0
        %v975 = vadd.f32 %v936, %v974
        %976 = vdwg.mxu0
        %v977 = vand.u32 %v391, 4294901760
        %v978 = vsub.f32 %v391, %v977
        %v979 = vand.u32 %v978, 4294901760
        %980 = vmatpush.msra.mxu0 %v979
        %v981 = vand.u32 %v388, 4294901760
        %v982 = vsub.f32 %v388, %v981
        %v983 = vand.u32 %v982, 4294901760
        %984 = vmatpush.msra.mxu0 %v983
        %v985 = vand.u32 %v385, 4294901760
        %v986 = vsub.f32 %v385, %v985
        %v987 = vand.u32 %v986, 4294901760
        %988 = vmatpush.msra.mxu0 %v987
        %v989 = vand.u32 %v382, 4294901760
        %v990 = vsub.f32 %v382, %v989
        %v991 = vand.u32 %v990, 4294901760
        %992 = vmatpush.msra.mxu0 %v991
        %v993 = vand.u32 %v379, 4294901760
        %v994 = vsub.f32 %v379, %v993
        %v995 = vand.u32 %v994, 4294901760
        %996 = vmatpush.msra.mxu0 %v995
        %v997 = vand.u32 %v376, 4294901760
        %v998 = vsub.f32 %v376, %v997
        %v999 = vand.u32 %v998, 4294901760
        %1000 = vmatpush.msra.mxu0 %v999
        %v1001 = vand.u32 %v373, 4294901760
        %v1002 = vsub.f32 %v373, %v1001
        %v1003 = vand.u32 %v1002, 4294901760
        %1004 = vmatpush.msra.mxu0 %v1003
        %v1005 = vand.u32 %v370, 4294901760
        %v1006 = vsub.f32 %v370, %v1005
        %v1007 = vand.u32 %v1006, 4294901760
        %1008 = vmatpush.msra.mxu0 %v1007
        %v1009 = vand.u32 %v367, 4294901760
        %v1010 = vsub.f32 %v367, %v1009
        %v1011 = vand.u32 %v1010, 4294901760
        %1012 = vmatpush.msra.mxu0 %v1011
        %v1013 = vand.u32 %v364, 4294901760
        %v1014 = vsub.f32 %v364, %v1013
        %v1015 = vand.u32 %v1014, 4294901760
        %1016 = vmatpush.msra.mxu0 %v1015
        %v1017 = vand.u32 %v361, 4294901760
        %v1018 = vsub.f32 %v361, %v1017
        %v1019 = vand.u32 %v1018, 4294901760
        %1020 = vmatpush.msra.mxu0 %v1019
        %v1021 = vand.u32 %v358, 4294901760
        %v1022 = vsub.f32 %v358, %v1021
        %v1023 = vand.u32 %v1022, 4294901760
        %1024 = vmatpush.msra.mxu0 %v1023
        %v1025 = vand.u32 %v355, 4294901760
        %v1026 = vsub.f32 %v355, %v1025
        %v1027 = vand.u32 %v1026, 4294901760
        %1028 = vmatpush.msra.mxu0 %v1027
        %v1029 = vand.u32 %v352, 4294901760
        %v1030 = vsub.f32 %v352, %v1029
        %v1031 = vand.u32 %v1030, 4294901760
        %1032 = vmatpush.msra.mxu0 %v1031
        %v1033 = vand.u32 %v349, 4294901760
        %v1034 = vsub.f32 %v349, %v1033
        %v1035 = vand.u32 %v1034, 4294901760
        %1036 = vmatpush.msra.mxu0 %v1035
        %v1037 = vand.u32 %v346, 4294901760
        %v1038 = vsub.f32 %v346, %v1037
        %v1039 = vand.u32 %v1038, 4294901760
        %1040 = vmatpush.msra.mxu0 %v1039
        %v1041 = vand.u32 %v344, 4294901760
        %1042 = vmatmul.f32.gmra.mxu0 %v1041
        %v1043 = vpop.f32.mrf.mxu0
        %v1044 = vadd.f32 %v975, %v1043
        %1045 = vdwg.mxu0
        %v1046 = vand.u32 %v391, 4294901760
        %1047 = vmatpush.msra.mxu0 %v1046
        %v1048 = vand.u32 %v388, 4294901760
        %1049 = vmatpush.msra.mxu0 %v1048
        %v1050 = vand.u32 %v385, 4294901760
        %1051 = vmatpush.msra.mxu0 %v1050
        %v1052 = vand.u32 %v382, 4294901760
        %1053 = vmatpush.msra.mxu0 %v1052
        %v1054 = vand.u32 %v379, 4294901760
        %1055 = vmatpush.msra.mxu0 %v1054
        %v1056 = vand.u32 %v376, 4294901760
        %1057 = vmatpush.msra.mxu0 %v1056
        %v1058 = vand.u32 %v373, 4294901760
        %1059 = vmatpush.msra.mxu0 %v1058
        %v1060 = vand.u32 %v370, 4294901760
        %1061 = vmatpush.msra.mxu0 %v1060
        %v1062 = vand.u32 %v367, 4294901760
        %1063 = vmatpush.msra.mxu0 %v1062
        %v1064 = vand.u32 %v364, 4294901760
        %1065 = vmatpush.msra.mxu0 %v1064
        %v1066 = vand.u32 %v361, 4294901760
        %1067 = vmatpush.msra.mxu0 %v1066
        %v1068 = vand.u32 %v358, 4294901760
        %1069 = vmatpush.msra.mxu0 %v1068
        %v1070 = vand.u32 %v355, 4294901760
        %1071 = vmatpush.msra.mxu0 %v1070
        %v1072 = vand.u32 %v352, 4294901760
        %1073 = vmatpush.msra.mxu0 %v1072
        %v1074 = vand.u32 %v349, 4294901760
        %1075 = vmatpush.msra.mxu0 %v1074
        %v1076 = vand.u32 %v346, 4294901760
        %1077 = vmatpush.msra.mxu0 %v1076
        %v1078 = vand.u32 %v344, 4294901760
        %1079 = vmatmul.f32.gmra.mxu0 %v1078
        %v1080 = vpop.f32.mrf.mxu0
        %v1081 = vadd.f32 %v1044, %v1080
        %1082 = vdwg.mxu0
        %v1083 = vand.u32 %v392, 4294901760
        %1084 = vmatpush.msra.mxu0 %v1083
        %v1085 = vand.u32 %v389, 4294901760
        %1086 = vmatpush.msra.mxu0 %v1085
        %v1087 = vand.u32 %v386, 4294901760
        %1088 = vmatpush.msra.mxu0 %v1087
        %v1089 = vand.u32 %v383, 4294901760
        %1090 = vmatpush.msra.mxu0 %v1089
        %v1091 = vand.u32 %v380, 4294901760
        %1092 = vmatpush.msra.mxu0 %v1091
        %v1093 = vand.u32 %v377, 4294901760
        %1094 = vmatpush.msra.mxu0 %v1093
        %v1095 = vand.u32 %v374, 4294901760
        %1096 = vmatpush.msra.mxu0 %v1095
        %v1097 = vand.u32 %v371, 4294901760
        %1098 = vmatpush.msra.mxu0 %v1097
        %v1099 = vand.u32 %v368, 4294901760
        %1100 = vmatpush.msra.mxu0 %v1099
        %v1101 = vand.u32 %v365, 4294901760
        %1102 = vmatpush.msra.mxu0 %v1101
        %v1103 = vand.u32 %v362, 4294901760
        %1104 = vmatpush.msra.mxu0 %v1103
        %v1105 = vand.u32 %v359, 4294901760
        %1106 = vmatpush.msra.mxu0 %v1105
        %v1107 = vand.u32 %v356, 4294901760
        %1108 = vmatpush.msra.mxu0 %v1107
        %v1109 = vand.u32 %v353, 4294901760
        %1110 = vmatpush.msra.mxu0 %v1109
        %v1111 = vand.u32 %v350, 4294901760
        %1112 = vmatpush.msra.mxu0 %v1111
        %v1113 = vand.u32 %v347, 4294901760
        %1114 = vmatpush.msra.mxu0 %v1113
        %v1115 = vand.u32 %v344, 4294901760
        %v1116 = vsub.f32 %v344, %v1115
        %v1117 = vand.u32 %v1116, 4294901760
        %v1118 = vsub.f32 %v1116, %v1117
        %v1119 = vand.u32 %v1118, 4294901760
        %1120 = vmatmul.f32.gmra.mxu0 %v1119
        %v1121 = vpop.f32.mrf.mxu0
        %v1122 = vadd.f32 %v397, %v1121
        %1123 = vdwg.mxu0
        %v1124 = vand.u32 %v392, 4294901760
        %v1125 = vsub.f32 %v392, %v1124
        %v1126 = vand.u32 %v1125, 4294901760
        %v1127 = vsub.f32 %v1125, %v1126
        %v1128 = vand.u32 %v1127, 4294901760
        %1129 = vmatpush.msra.mxu0 %v1128
        %v1130 = vand.u32 %v389, 4294901760
        %v1131 = vsub.f32 %v389, %v1130
        %v1132 = vand.u32 %v1131, 4294901760
        %v1133 = vsub.f32 %v1131, %v1132
        %v1134 = vand.u32 %v1133, 4294901760
        %1135 = vmatpush.msra.mxu0 %v1134
        %v1136 = vand.u32 %v386, 4294901760
        %v1137 = vsub.f32 %v386, %v1136
        %v1138 = vand.u32 %v1137, 4294901760
        %v1139 = vsub.f32 %v1137, %v1138
        %v1140 = vand.u32 %v1139, 4294901760
        %1141 = vmatpush.msra.mxu0 %v1140
        %v1142 = vand.u32 %v383, 4294901760
        %v1143 = vsub.f32 %v383, %v1142
        %v1144 = vand.u32 %v1143, 4294901760
        %v1145 = vsub.f32 %v1143, %v1144
        %v1146 = vand.u32 %v1145, 4294901760
        %1147 = vmatpush.msra.mxu0 %v1146
        %v1148 = vand.u32 %v380, 4294901760
        %v1149 = vsub.f32 %v380, %v1148
        %v1150 = vand.u32 %v1149, 4294901760
        %v1151 = vsub.f32 %v1149, %v1150
        %v1152 = vand.u32 %v1151, 4294901760
        %1153 = vmatpush.msra.mxu0 %v1152
        %v1154 = vand.u32 %v377, 4294901760
        %v1155 = vsub.f32 %v377, %v1154
        %v1156 = vand.u32 %v1155, 4294901760
        %v1157 = vsub.f32 %v1155, %v1156
        %v1158 = vand.u32 %v1157, 4294901760
        %1159 = vmatpush.msra.mxu0 %v1158
        %v1160 = vand.u32 %v374, 4294901760
        %v1161 = vsub.f32 %v374, %v1160
        %v1162 = vand.u32 %v1161, 4294901760
        %v1163 = vsub.f32 %v1161, %v1162
        %v1164 = vand.u32 %v1163, 4294901760
        %1165 = vmatpush.msra.mxu0 %v1164
        %v1166 = vand.u32 %v371, 4294901760
        %v1167 = vsub.f32 %v371, %v1166
        %v1168 = vand.u32 %v1167, 4294901760
        %v1169 = vsub.f32 %v1167, %v1168
        %v1170 = vand.u32 %v1169, 4294901760
        %1171 = vmatpush.msra.mxu0 %v1170
        %v1172 = vand.u32 %v368, 4294901760
        %v1173 = vsub.f32 %v368, %v1172
        %v1174 = vand.u32 %v1173, 4294901760
        %v1175 = vsub.f32 %v1173, %v1174
        %v1176 = vand.u32 %v1175, 4294901760
        %1177 = vmatpush.msra.mxu0 %v1176
        %v1178 = vand.u32 %v365, 4294901760
        %v1179 = vsub.f32 %v365, %v1178
        %v1180 = vand.u32 %v1179, 4294901760
        %v1181 = vsub.f32 %v1179, %v1180
        %v1182 = vand.u32 %v1181, 4294901760
        %1183 = vmatpush.msra.mxu0 %v1182
        %v1184 = vand.u32 %v362, 4294901760
        %v1185 = vsub.f32 %v362, %v1184
        %v1186 = vand.u32 %v1185, 4294901760
        %v1187 = vsub.f32 %v1185, %v1186
        %v1188 = vand.u32 %v1187, 4294901760
        %1189 = vmatpush.msra.mxu0 %v1188
        %v1190 = vand.u32 %v359, 4294901760
        %v1191 = vsub.f32 %v359, %v1190
        %v1192 = vand.u32 %v1191, 4294901760
        %v1193 = vsub.f32 %v1191, %v1192
        %v1194 = vand.u32 %v1193, 4294901760
        %1195 = vmatpush.msra.mxu0 %v1194
        %v1196 = vand.u32 %v356, 4294901760
        %v1197 = vsub.f32 %v356, %v1196
        %v1198 = vand.u32 %v1197, 4294901760
        %v1199 = vsub.f32 %v1197, %v1198
        %v1200 = vand.u32 %v1199, 4294901760
        %1201 = vmatpush.msra.mxu0 %v1200
        %v1202 = vand.u32 %v353, 4294901760
        %v1203 = vsub.f32 %v353, %v1202
        %v1204 = vand.u32 %v1203, 4294901760
        %v1205 = vsub.f32 %v1203, %v1204
        %v1206 = vand.u32 %v1205, 4294901760
        %1207 = vmatpush.msra.mxu0 %v1206
        %v1208 = vand.u32 %v350, 4294901760
        %v1209 = vsub.f32 %v350, %v1208
        %v1210 = vand.u32 %v1209, 4294901760
        %v1211 = vsub.f32 %v1209, %v1210
        %v1212 = vand.u32 %v1211, 4294901760
        %1213 = vmatpush.msra.mxu0 %v1212
        %v1214 = vand.u32 %v347, 4294901760
        %v1215 = vsub.f32 %v347, %v1214
        %v1216 = vand.u32 %v1215, 4294901760
        %v1217 = vsub.f32 %v1215, %v1216
        %v1218 = vand.u32 %v1217, 4294901760
        %1219 = vmatpush.msra.mxu0 %v1218
        %v1220 = vand.u32 %v344, 4294901760
        %1221 = vmatmul.f32.gmra.mxu0 %v1220
        %v1222 = vpop.f32.mrf.mxu0
        %v1223 = vadd.f32 %v1122, %v1222
        %1224 = vdwg.mxu0
        %v1225 = vand.u32 %v392, 4294901760
        %v1226 = vsub.f32 %v392, %v1225
        %1227 = vmatpush.msra.mxu0 %v1226
        %v1228 = vand.u32 %v389, 4294901760
        %v1229 = vsub.f32 %v389, %v1228
        %1230 = vmatpush.msra.mxu0 %v1229
        %v1231 = vand.u32 %v386, 4294901760
        %v1232 = vsub.f32 %v386, %v1231
        %1233 = vmatpush.msra.mxu0 %v1232
        %v1234 = vand.u32 %v383, 4294901760
        %v1235 = vsub.f32 %v383, %v1234
        %1236 = vmatpush.msra.mxu0 %v1235
        %v1237 = vand.u32 %v380, 4294901760
        %v1238 = vsub.f32 %v380, %v1237
        %1239 = vmatpush.msra.mxu0 %v1238
        %v1240 = vand.u32 %v377, 4294901760
        %v1241 = vsub.f32 %v377, %v1240
        %1242 = vmatpush.msra.mxu0 %v1241
        %v1243 = vand.u32 %v374, 4294901760
        %v1244 = vsub.f32 %v374, %v1243
        %1245 = vmatpush.msra.mxu0 %v1244
        %v1246 = vand.u32 %v371, 4294901760
        %v1247 = vsub.f32 %v371, %v1246
        %1248 = vmatpush.msra.mxu0 %v1247
        %v1249 = vand.u32 %v368, 4294901760
        %v1250 = vsub.f32 %v368, %v1249
        %1251 = vmatpush.msra.mxu0 %v1250
        %v1252 = vand.u32 %v365, 4294901760
        %v1253 = vsub.f32 %v365, %v1252
        %1254 = vmatpush.msra.mxu0 %v1253
        %v1255 = vand.u32 %v362, 4294901760
        %v1256 = vsub.f32 %v362, %v1255
        %1257 = vmatpush.msra.mxu0 %v1256
        %v1258 = vand.u32 %v359, 4294901760
        %v1259 = vsub.f32 %v359, %v1258
        %1260 = vmatpush.msra.mxu0 %v1259
        %v1261 = vand.u32 %v356, 4294901760
        %v1262 = vsub.f32 %v356, %v1261
        %1263 = vmatpush.msra.mxu0 %v1262
        %v1264 = vand.u32 %v353, 4294901760
        %v1265 = vsub.f32 %v353, %v1264
        %1266 = vmatpush.msra.mxu0 %v1265
        %v1267 = vand.u32 %v350, 4294901760
        %v1268 = vsub.f32 %v350, %v1267
        %1269 = vmatpush.msra.mxu0 %v1268
        %v1270 = vand.u32 %v347, 4294901760
        %v1271 = vsub.f32 %v347, %v1270
        %1272 = vmatpush.msra.mxu0 %v1271
        %v1273 = vand.u32 %v344, 4294901760
        %v1274 = vsub.f32 %v344, %v1273
        %1275 = vmatmul.f32.gmra.mxu0 %v1274
        %v1276 = vpop.f32.mrf.mxu0
        %v1277 = vadd.f32 %v1223, %v1276
        %1278 = vdwg.mxu0
        %v1279 = vand.u32 %v392, 4294901760
        %1280 = vmatpush.msra.mxu0 %v1279
        %v1281 = vand.u32 %v389, 4294901760
        %1282 = vmatpush.msra.mxu0 %v1281
        %v1283 = vand.u32 %v386, 4294901760
        %1284 = vmatpush.msra.mxu0 %v1283
        %v1285 = vand.u32 %v383, 4294901760
        %1286 = vmatpush.msra.mxu0 %v1285
        %v1287 = vand.u32 %v380, 4294901760
        %1288 = vmatpush.msra.mxu0 %v1287
        %v1289 = vand.u32 %v377, 4294901760
        %1290 = vmatpush.msra.mxu0 %v1289
        %v1291 = vand.u32 %v374, 4294901760
        %1292 = vmatpush.msra.mxu0 %v1291
        %v1293 = vand.u32 %v371, 4294901760
        %1294 = vmatpush.msra.mxu0 %v1293
        %v1295 = vand.u32 %v368, 4294901760
        %1296 = vmatpush.msra.mxu0 %v1295
        %v1297 = vand.u32 %v365, 4294901760
        %1298 = vmatpush.msra.mxu0 %v1297
        %v1299 = vand.u32 %v362, 4294901760
        %1300 = vmatpush.msra.mxu0 %v1299
        %v1301 = vand.u32 %v359, 4294901760
        %1302 = vmatpush.msra.mxu0 %v1301
        %v1303 = vand.u32 %v356, 4294901760
        %1304 = vmatpush.msra.mxu0 %v1303
        %v1305 = vand.u32 %v353, 4294901760
        %1306 = vmatpush.msra.mxu0 %v1305
        %v1307 = vand.u32 %v350, 4294901760
        %1308 = vmatpush.msra.mxu0 %v1307
        %v1309 = vand.u32 %v347, 4294901760
        %1310 = vmatpush.msra.mxu0 %v1309
        %v1311 = vand.u32 %v344, 4294901760
        %v1312 = vsub.f32 %v344, %v1311
        %v1313 = vand.u32 %v1312, 4294901760
        %1314 = vmatmul.f32.gmra.mxu0 %v1313
        %v1315 = vpop.f32.mrf.mxu0
        %v1316 = vadd.f32 %v1277, %v1315
        %1317 = vdwg.mxu0
        %v1318 = vand.u32 %v392, 4294901760
        %v1319 = vsub.f32 %v392, %v1318
        %v1320 = vand.u32 %v1319, 4294901760
        %1321 = vmatpush.msra.mxu0 %v1320
        %v1322 = vand.u32 %v389, 4294901760
        %v1323 = vsub.f32 %v389, %v1322
        %v1324 = vand.u32 %v1323, 4294901760
        %1325 = vmatpush.msra.mxu0 %v1324
        %v1326 = vand.u32 %v386, 4294901760
        %v1327 = vsub.f32 %v386, %v1326
        %v1328 = vand.u32 %v1327, 4294901760
        %1329 = vmatpush.msra.mxu0 %v1328
        %v1330 = vand.u32 %v383, 4294901760
        %v1331 = vsub.f32 %v383, %v1330
        %v1332 = vand.u32 %v1331, 4294901760
        %1333 = vmatpush.msra.mxu0 %v1332
        %v1334 = vand.u32 %v380, 4294901760
        %v1335 = vsub.f32 %v380, %v1334
        %v1336 = vand.u32 %v1335, 4294901760
        %1337 = vmatpush.msra.mxu0 %v1336
        %v1338 = vand.u32 %v377, 4294901760
        %v1339 = vsub.f32 %v377, %v1338
        %v1340 = vand.u32 %v1339, 4294901760
        %1341 = vmatpush.msra.mxu0 %v1340
        %v1342 = vand.u32 %v374, 4294901760
        %v1343 = vsub.f32 %v374, %v1342
        %v1344 = vand.u32 %v1343, 4294901760
        %1345 = vmatpush.msra.mxu0 %v1344
        %v1346 = vand.u32 %v371, 4294901760
        %v1347 = vsub.f32 %v371, %v1346
        %v1348 = vand.u32 %v1347, 4294901760
        %1349 = vmatpush.msra.mxu0 %v1348
        %v1350 = vand.u32 %v368, 4294901760
        %v1351 = vsub.f32 %v368, %v1350
        %v1352 = vand.u32 %v1351, 4294901760
        %1353 = vmatpush.msra.mxu0 %v1352
        %v1354 = vand.u32 %v365, 4294901760
        %v1355 = vsub.f32 %v365, %v1354
        %v1356 = vand.u32 %v1355, 4294901760
        %1357 = vmatpush.msra.mxu0 %v1356
        %v1358 = vand.u32 %v362, 4294901760
        %v1359 = vsub.f32 %v362, %v1358
        %v1360 = vand.u32 %v1359, 4294901760
        %1361 = vmatpush.msra.mxu0 %v1360
        %v1362 = vand.u32 %v359, 4294901760
        %v1363 = vsub.f32 %v359, %v1362
        %v1364 = vand.u32 %v1363, 4294901760
        %1365 = vmatpush.msra.mxu0 %v1364
        %v1366 = vand.u32 %v356, 4294901760
        %v1367 = vsub.f32 %v356, %v1366
        %v1368 = vand.u32 %v1367, 4294901760
        %1369 = vmatpush.msra.mxu0 %v1368
        %v1370 = vand.u32 %v353, 4294901760
        %v1371 = vsub.f32 %v353, %v1370
        %v1372 = vand.u32 %v1371, 4294901760
        %1373 = vmatpush.msra.mxu0 %v1372
        %v1374 = vand.u32 %v350, 4294901760
        %v1375 = vsub.f32 %v350, %v1374
        %v1376 = vand.u32 %v1375, 4294901760
        %1377 = vmatpush.msra.mxu0 %v1376
        %v1378 = vand.u32 %v347, 4294901760
        %v1379 = vsub.f32 %v347, %v1378
        %v1380 = vand.u32 %v1379, 4294901760
        %1381 = vmatpush.msra.mxu0 %v1380
        %v1382 = vand.u32 %v344, 4294901760
        %1383 = vmatmul.f32.gmra.mxu0 %v1382
        %v1384 = vpop.f32.mrf.mxu0
        %v1385 = vadd.f32 %v1316, %v1384
        %1386 = vdwg.mxu0
        %v1387 = vand.u32 %v392, 4294901760
        %1388 = vmatpush.msra.mxu0 %v1387
        %v1389 = vand.u32 %v389, 4294901760
        %1390 = vmatpush.msra.mxu0 %v1389
        %v1391 = vand.u32 %v386, 4294901760
        %1392 = vmatpush.msra.mxu0 %v1391
        %v1393 = vand.u32 %v383, 4294901760
        %1394 = vmatpush.msra.mxu0 %v1393
        %v1395 = vand.u32 %v380, 4294901760
        %1396 = vmatpush.msra.mxu0 %v1395
        %v1397 = vand.u32 %v377, 4294901760
        %1398 = vmatpush.msra.mxu0 %v1397
        %v1399 = vand.u32 %v374, 4294901760
        %1400 = vmatpush.msra.mxu0 %v1399
        %v1401 = vand.u32 %v371, 4294901760
        %1402 = vmatpush.msra.mxu0 %v1401
        %v1403 = vand.u32 %v368, 4294901760
        %1404 = vmatpush.msra.mxu0 %v1403
        %v1405 = vand.u32 %v365, 4294901760
        %1406 = vmatpush.msra.mxu0 %v1405
        %v1407 = vand.u32 %v362, 4294901760
        %1408 = vmatpush.msra.mxu0 %v1407
        %v1409 = vand.u32 %v359, 4294901760
        %1410 = vmatpush.msra.mxu0 %v1409
        %v1411 = vand.u32 %v356, 4294901760
        %1412 = vmatpush.msra.mxu0 %v1411
        %v1413 = vand.u32 %v353, 4294901760
        %1414 = vmatpush.msra.mxu0 %v1413
        %v1415 = vand.u32 %v350, 4294901760
        %1416 = vmatpush.msra.mxu0 %v1415
        %v1417 = vand.u32 %v347, 4294901760
        %1418 = vmatpush.msra.mxu0 %v1417
        %v1419 = vand.u32 %v344, 4294901760
        %1420 = vmatmul.f32.gmra.mxu0 %v1419
        %v1421 = vpop.f32.mrf.mxu0
        %v1422 = vadd.f32 %v1385, %v1421
        %1423 = vdwg.mxu0
        %1424 = vst [vmem:[%s303] sm:$0xff] %v740
        %1425 = vst [vmem:[%s307] sm:$0xff] %v1081
        %1426 = vst [vmem:[%s311] sm:$0xff] %v1422
        %p1427 = scmp.lt.s32.totalorder %s20, 1
        %s1428 = scalar_select %p1427, %s20, 1
        %s1429 = smul.addr %s1428, 8
        %s1430 = scalar_lea.vmem %s5, %s1429
        %p1431 = scmp.lt.s32.totalorder %s20, 1
        %s1432 = scalar_select %p1431, %s20, 1
        %s1433 = smul.addr %s1432, 8
        %s1434 = scalar_lea.vmem %s6, %s1433
        %p1435 = scmp.lt.s32.totalorder %s20, 1
        %s1436 = scalar_select %p1435, %s20, 1
        %s1437 = smul.addr %s1436, 8
        %s1438 = scalar_lea.vmem %s7, %s1437
        // Predicated region
        $region45: #{encoder_forward.7} parent=39 // pred_check
          %p1439 = pneg %p148
        $region46: #{encoder_forward.7} parent=39 // pred_check_branch
          %1441 = sbr.rel (%p1439) target = $region48
        $region47: #{encoder_forward.7} parent=39 // pred_region
          _
        $region48: #{encoder_forward.7} parent=39 // pred_fallthru
          _
        // Predicated region
        $region49: #{encoder_forward.7} parent=39 // pred_check
          %p1442 = pneg %p174
        $region50: #{encoder_forward.7} parent=39 // pred_check_branch
          %1444 = sbr.rel (%p1442) target = $region52
        $region51: #{encoder_forward.7} parent=39 // pred_region
          _
        $region52: #{encoder_forward.7} parent=39 // pred_fallthru
          _
        // Predicated region
        $region53: #{encoder_forward.7} parent=39 // pred_check
          %p1445 = pneg %p200
        $region54: #{encoder_forward.7} parent=39 // pred_check_branch
          %1447 = sbr.rel (%p1445) target = $region56
        $region55: #{encoder_forward.7} parent=39 // pred_region
          _
        $region56: #{encoder_forward.7} parent=39 // pred_fallthru
          _
      $region40: #{encoder_forward.7} parent=5 // pred_fallthru
        _
      %p1448 = scmp.le.s32.totalorder 2, %s15
      // Predicated region
      $region57: #{encoder_forward.7} parent=5 // pred_check
        %p1449 = pneg %p1448
      $region58: #{encoder_forward.7} parent=5 // pred_check_branch
        %1451 = sbr.rel (%p1449) target = $region60
      $region59: #{encoder_forward.7} parent=5 // pred_region
        %s1452 = ssub.s32 %s15, 2
        // Predicated region
        $region61: #{encoder_forward.7} parent=59 // pred_check
          %p1453 = pneg %p154
        $region62: #{encoder_forward.7} parent=59 // pred_check_branch
          %1455 = sbr.rel (%p1453) target = $region64
        $region63: #{encoder_forward.7} parent=59 // pred_region
          %p1456 = scmp.lt.s32.totalorder %s21, 1
          %s1457 = scalar_select %p1456, %s21, 1
          %s1458 = smul.addr %s1457, 8
          %s1459 = scalar_lea.vmem %s5, %s1458
        $region64: #{encoder_forward.7} parent=59 // pred_fallthru
          _
        // Predicated region
        $region65: #{encoder_forward.7} parent=59 // pred_check
          %p1460 = pneg %p180
        $region66: #{encoder_forward.7} parent=59 // pred_check_branch
          %1462 = sbr.rel (%p1460) target = $region68
        $region67: #{encoder_forward.7} parent=59 // pred_region
          %p1463 = scmp.lt.s32.totalorder %s21, 1
          %s1464 = scalar_select %p1463, %s21, 1
          %s1465 = smul.addr %s1464, 8
          %s1466 = scalar_lea.vmem %s6, %s1465
        $region68: #{encoder_forward.7} parent=59 // pred_fallthru
          _
        // Predicated region
        $region69: #{encoder_forward.7} parent=59 // pred_check
          %p1467 = pneg %p206
        $region70: #{encoder_forward.7} parent=59 // pred_check_branch
          %1469 = sbr.rel (%p1467) target = $region72
        $region71: #{encoder_forward.7} parent=59 // pred_region
          %p1470 = scmp.lt.s32.totalorder %s21, 1
          %s1471 = scalar_select %p1470, %s21, 1
          %s1472 = smul.addr %s1471, 8
          %s1473 = scalar_lea.vmem %s7, %s1472
        $region72: #{encoder_forward.7} parent=59 // pred_fallthru
          _
      $region60: #{encoder_forward.7} parent=5 // pred_fallthru
        _
    $region6: #{encoder_forward.7} parent=1 // loop_footer
      %s19 = sadd.s32 1, %s15
    $region7: #{encoder_forward.7} parent=1 // loop_footer_branch
      %14 = sbr.rel target = $region3
    $region8: #{encoder_forward.7} parent=1 // loop_exit
      _
    %1474 = vsyncpa [#allocation3], 1
    %s1475 = scalar_lea.sflag [#allocation3], 1
    %1476 = vsyncpa %s1475, 1

// kernel: encoder_forward.9
$region0: #{encoder_forward.9}
  #allocation0 [shape = 'u32[]', space=smem, size = 0x4, offset = 0x4, fixed_abs, tag = 'smem constant byte address 0x4 - core index']
  #allocation1 [shape = 'u32[72,128]{1,0:T(1,128)}', space=vmem, size = 0x9000, scoped, tag = 'internal scratch']
  #allocation2 [shape = 's32[1]{0}', space=sflag, size = 0x4, scoped, tag = 'scoped memory for encoder_forward.9']
  #allocation3 [shape = 's32[1]{0:T(128)S(6)}', space=smem, size = 0x200, scoped, tag = 'prefetched SMEM operand 0']
  %s0 = inlined_call_operand.<no memory space> [shape: s32[1], index: 0, kind: input, shape index: {}]
  %s1 = inlined_call_operand.vmem [shape: f32[16,128], index: 1, kind: input, shape index: {}]
  %s2 = inlined_call_operand.vmem [shape: f32[1,128], index: 2, kind: input, shape index: {}]
  %s3 = inlined_call_operand.vmem [shape: f32[1,128], index: 3, kind: input, shape index: {}]
  %s4 = inlined_call_operand.hbm [shape: f32[128,256], index: 4, kind: input, shape index: {}]
  %s5 = inlined_call_operand.vmem [shape: f32[1,256], index: 5, kind: input, shape index: {}]
  %s6 = inlined_call_operand.hbm [shape: f32[256,128], index: 6, kind: input, shape index: {}]
  %s7 = inlined_call_operand.vmem [shape: f32[1,128], index: 7, kind: input, shape index: {}]
  %s8 = inlined_call_operand.vmem [shape: f32[16,128], index: 8, kind: output, shape index: {}]
  %s9 = sld [smem:[#allocation0]]
  $region69: #{encoder_forward.9} parent=0
    _
  %s11 = ssub.s32 1, %s9
  %s12 = scalar_select 0, %s11, %s9
  %13 = sst [smem:[#allocation3]] %s0
  $region1: #{encoder_forward.9} parent=0
    #allocation4 [shape = 'u8[131072]{0}', space=vmem, size = 0x20000, scoped, tag = 'input window, operand 4, single buffered']
    #allocation5 [shape = 's32[2]{0}', space=sflag, size = 0x8, scoped, tag = 'scoped memory for encoder_forward.9']
    #allocation6 [shape = 'u8[131072]{0}', space=vmem, size = 0x20000, scoped, tag = 'input window, operand 6, single buffered']
    #allocation7 [shape = 's32[1]{0}', space=sflag, size = 0x4, scoped, tag = 'scoped memory for encoder_forward.9']
    %14 = vsyncpa [#allocation5], 0
    %15 = vsyncpa [#allocation7], 0
    loop: start=0, step=1, limit=4
    $region2: #{encoder_forward.9} parent=1 // loop_pre_header
      _
    $region3: #{encoder_forward.9} parent=1 // loop_header
      %s17 = sphi 0, %s21
      %p18 = scmp.ge.s32.totalorder %s17, 4
      %s27 = sphi 0, %s29
      %s30 = sphi 0, %s27
      %s31 = sphi 0, %s30
      %s47 = sphi 0, %s31
      %s51 = sphi 0, %s51
      %s53 = sphi 0, %s51
      %s54 = sphi 0, %s53
      %s68 = sphi 0, %s54
      %s72 = sphi 0, %s72
      %s74 = sphi 0, %s72
      %s75 = sphi 0, %s74
      %s89 = sphi 0, %s75
      %s93 = sphi 0, %s93
      %s95 = sphi 0, %s93
      %s96 = sphi 0, %s95
      %s110 = sphi 0, %s96
      %s114 = sphi 0, %s114
      %s116 = sphi 0, %s114
      %s117 = sphi 0, %s116
      %s131 = sphi 0, %s117
      %s135 = sphi 0, %s135
      %s137 = sphi 0, %s135
      %s138 = sphi 0, %s137
      %s152 = sphi 0, %s138
      %s156 = sphi 0, %s156
      %s158 = sphi 0, %s156
      %s159 = sphi 0, %s158
      %s173 = sphi 0, %s159
      %s179 = sphi 0, %s181
      %s182 = sphi 0, %s179
      %s183 = sphi 0, %s182
      %s199 = sphi 0, %s183
    $region4: #{encoder_forward.9} parent=1 // loop_header_branch
      %20 = sbr.rel (%p18) target = $region8
    $region5: #{encoder_forward.9} parent=1 // loop_body
      %s22 = ssub.s32 %s17, 1
      %s23 = ssub.s32 %s17, 2
      %s24 = sadd.s32 %s17, 1
      %s25 = ssub.s32 %s17, %s24
      %p26 = scmp.eq.s32.totalorder %s25, 0
      %s28 = sadd.s32 %s27, 1
      %s29 = scalar_select %p26, %s27, %s28
      %p32 = pneg %p26
      %p33 = scmp.eq.s32.totalorder %s17, 1
      %p34 = por %p32, %p33
      %p35 = scmp.ne.s32.totalorder %s27, %s30
      %p36 = scmp.eq.s32.totalorder %s17, 0
      %p37 = por %p35, %p36
      %p38 = scmp.ne.s32.totalorder %s27, %s30
      %p39 = scmp.eq.s32.totalorder %s22, 1
      %p40 = por %p38, %p39
      %p41 = scmp.ne.s32.totalorder %s30, %s31
      %p42 = scmp.eq.s32.totalorder %s22, 0
      %p43 = por %p41, %p42
      %p44 = scmp.ne.s32.totalorder %s30, %s31
      %p45 = scmp.eq.s32.totalorder %s23, 1
      %p46 = por %p44, %p45
      %p48 = scmp.ne.s32.totalorder %s31, %s47
      %p49 = scmp.eq.s32.totalorder %s23, 0
      %p50 = por %p48, %p49
      %s52 = sadd.s32 %s51, 1
      %p55 = scmp.eq.s32.totalorder %s17, 1
      %p56 = scmp.ne.s32.totalorder %s51, %s53
      %p57 = scmp.eq.s32.totalorder %s17, 0
      %p58 = por %p56, %p57
      %p59 = scmp.ne.s32.totalorder %s51, %s53
      %p60 = scmp.eq.s32.totalorder %s22, 1
      %p61 = por %p59, %p60
      %p62 = scmp.ne.s32.totalorder %s53, %s54
      %p63 = scmp.eq.s32.totalorder %s22, 0
      %p64 = por %p62, %p63
      %p65 = scmp.ne.s32.totalorder %s53, %s54
      %p66 = scmp.eq.s32.totalorder %s23, 1
      %p67 = por %p65, %p66
      %p69 = scmp.ne.s32.totalorder %s54, %s68
      %p70 = scmp.eq.s32.totalorder %s23, 0
      %p71 = por %p69, %p70
      %s73 = sadd.s32 %s72, 1
      %p76 = scmp.eq.s32.totalorder %s17, 1
      %p77 = scmp.ne.s32.totalorder %s72, %s74
      %p78 = scmp.eq.s32.totalorder %s17, 0
      %p79 = por %p77, %p78
      %p80 = scmp.ne.s32.totalorder %s72, %s74
      %p81 = scmp.eq.s32.totalorder %s22, 1
      %p82 = por %p80, %p81
      %p83 = scmp.ne.s32.totalorder %s74, %s75
      %p84 = scmp.eq.s32.totalorder %s22, 0
      %p85 = por %p83, %p84
      %p86 = scmp.ne.s32.totalorder %s74, %s75
      %p87 = scmp.eq.s32.totalorder %s23, 1
      %p88 = por %p86, %p87
      %p90 = scmp.ne.s32.totalorder %s75, %s89
      %p91 = scmp.eq.s32.totalorder %s23, 0
      %p92 = por %p90, %p91
      %s94 = sadd.s32 %s93, 1
      %p97 = scmp.eq.s32.totalorder %s17, 1
      %p98 = scmp.ne.s32.totalorder %s93, %s95
      %p99 = scmp.eq.s32.totalorder %s17, 0
      %p100 = por %p98, %p99
      %p101 = scmp.ne.s32.totalorder %s93, %s95
      %p102 = scmp.eq.s32.totalorder %s22, 1
      %p103 = por %p101, %p102
      %p104 = scmp.ne.s32.totalorder %s95, %s96
      %p105 = scmp.eq.s32.totalorder %s22, 0
      %p106 = por %p104, %p105
      %p107 = scmp.ne.s32.totalorder %s95, %s96
      %p108 = scmp.eq.s32.totalorder %s23, 1
      %p109 = por %p107, %p108
      %p111 = scmp.ne.s32.totalorder %s96, %s110
      %p112 = scmp.eq.s32.totalorder %s23, 0
      %p113 = por %p111, %p112
      %s115 = sadd.s32 %s114, 1
      %p118 = scmp.eq.s32.totalorder %s17, 1
      %p119 = scmp.ne.s32.totalorder %s114, %s116
      %p120 = scmp.eq.s32.totalorder %s17, 0
      %p121 = por %p119, %p120
      %p122 = scmp.ne.s32.totalorder %s114, %s116
      %p123 = scmp.eq.s32.totalorder %s22, 1
      %p124 = por %p122, %p123
      %p125 = scmp.ne.s32.totalorder %s116, %s117
      %p126 = scmp.eq.s32.totalorder %s22, 0
      %p127 = por %p125, %p126
      %p128 = scmp.ne.s32.totalorder %s116, %s117
      %p129 = scmp.eq.s32.totalorder %s23, 1
      %p130 = por %p128, %p129
      %p132 = scmp.ne.s32.totalorder %s117, %s131
      %p133 = scmp.eq.s32.totalorder %s23, 0
      %p134 = por %p132, %p133
      %s136 = sadd.s32 %s135, 1
      %p139 = scmp.eq.s32.totalorder %s17, 1
      %p140 = scmp.ne.s32.totalorder %s135, %s137
      %p141 = scmp.eq.s32.totalorder %s17, 0
      %p142 = por %p140, %p141
      %p143 = scmp.ne.s32.totalorder %s135, %s137
      %p144 = scmp.eq.s32.totalorder %s22, 1
      %p145 = por %p143, %p144
      %p146 = scmp.ne.s32.totalorder %s137, %s138
      %p147 = scmp.eq.s32.totalorder %s22, 0
      %p148 = por %p146, %p147
      %p149 = scmp.ne.s32.totalorder %s137, %s138
      %p150 = scmp.eq.s32.totalorder %s23, 1
      %p151 = por %p149, %p150
      %p153 = scmp.ne.s32.totalorder %s138, %s152
      %p154 = scmp.eq.s32.totalorder %s23, 0
      %p155 = por %p153, %p154
      %s157 = sadd.s32 %s156, 1
      %p160 = scmp.eq.s32.totalorder %s17, 1
      %p161 = scmp.ne.s32.totalorder %s156, %s158
      %p162 = scmp.eq.s32.totalorder %s17, 0
      %p163 = por %p161, %p162
      %p164 = scmp.ne.s32.totalorder %s156, %s158
      %p165 = scmp.eq.s32.totalorder %s22, 1
      %p166 = por %p164, %p165
      %p167 = scmp.ne.s32.totalorder %s158, %s159
      %p168 = scmp.eq.s32.totalorder %s22, 0
      %p169 = por %p167, %p168
      %p170 = scmp.ne.s32.totalorder %s158, %s159
      %p171 = scmp.eq.s32.totalorder %s23, 1
      %p172 = por %p170, %p171
      %p174 = scmp.ne.s32.totalorder %s159, %s173
      %p175 = scmp.eq.s32.totalorder %s23, 0
      %p176 = por %p174, %p175
      %s177 = ssub.s32 %s17, %s24
      %p178 = scmp.eq.s32.totalorder %s177, 0
      %s180 = sadd.s32 %s179, 1
      %s181 = scalar_select %p178, %s179, %s180
      %p184 = pneg %p178
      %p185 = scmp.eq.s32.totalorder %s17, 1
      %p186 = por %p184, %p185
      %p187 = scmp.ne.s32.totalorder %s179, %s182
      %p188 = scmp.eq.s32.totalorder %s17, 0
      %p189 = por %p187, %p188
      %p190 = scmp.ne.s32.totalorder %s179, %s182
      %p191 = scmp.eq.s32.totalorder %s22, 1
      %p192 = por %p190, %p191
      %p193 = scmp.ne.s32.totalorder %s182, %s183
      %p194 = scmp.eq.s32.totalorder %s22, 0
      %p195 = por %p193, %p194
      %p196 = scmp.ne.s32.totalorder %s182, %s183
      %p197 = scmp.eq.s32.totalorder %s23, 1
      %p198 = por %p196, %p197
      %p200 = scmp.ne.s32.totalorder %s183, %s199
      %p201 = scmp.eq.s32.totalorder %s23, 0
      %p202 = por %p200, %p201
      %p203 = scmp.le.s32.totalorder 1, %s17
      %p204 = scmp.lt.s32.totalorder %s17, 3
      %p205 = pnand %p203, %p204
      %p206 = pneg %p205
      // Predicated region
      $region9: #{encoder_forward.9} parent=5 // pred_check
        _
      $region10: #{encoder_forward.9} parent=5 // pred_check_branch
        %208 = sbr.rel (%p205) target = $region12
      $region11: #{encoder_forward.9} parent=5 // pred_region
        %s209 = ssub.s32 %s17, 1
        // Predicated region
        $region13: #{encoder_forward.9} parent=11 // pred_check
          %p210 = pneg %p64
        $region14: #{encoder_forward.9} parent=11 // pred_check_branch
          %212 = sbr.rel (%p210) target = $region16
        $region15: #{encoder_forward.9} parent=11 // pred_region
          _
        $region16: #{encoder_forward.9} parent=11 // pred_fallthru
          _
        // Predicated region
        $region17: #{encoder_forward.9} parent=11 // pred_check
          %p213 = pneg %p85
        $region18: #{encoder_forward.9} parent=11 // pred_check_branch
          %215 = sbr.rel (%p213) target = $region20
        $region19: #{encoder_forward.9} parent=11 // pred_region
          _
        $region20: #{encoder_forward.9} parent=11 // pred_fallthru
          _
        // Predicated region
        $region21: #{encoder_forward.9} parent=11 // pred_check
          %p216 = pneg %p106
        $region22: #{encoder_forward.9} parent=11 // pred_check_branch
          %218 = sbr.rel (%p216) target = $region24
        $region23: #{encoder_forward.9} parent=11 // pred_region
          %220 = vsyncadd [#allocation5], 0
          %s221 = sshll.u32 %s4, 4
          %s222 = int_to_ptr.hbm [resolvable:$true] %s221
          %s223 = sshll.u32 [#allocation4], 4
          %s224 = int_to_ptr.vmem [resolvable:$true] %s223
          %229 = dma.hbm_to_vmem [thread:$0]  %s222, 4096, %s224, [#allocation5], 256, 256, 16
        $region24: #{encoder_forward.9} parent=11 // pred_fallthru
          _
        // Predicated region
        $region25: #{encoder_forward.9} parent=11 // pred_check
          %p230 = pneg %p127
        $region26: #{encoder_forward.9} parent=11 // pred_check_branch
          %232 = sbr.rel (%p230) target = $region28
        $region27: #{encoder_forward.9} parent=11 // pred_region
          _
        $region28: #{encoder_forward.9} parent=11 // pred_fallthru
          _
        // Predicated region
        $region29: #{encoder_forward.9} parent=11 // pred_check
          %p233 = pneg %p148
        $region30: #{encoder_forward.9} parent=11 // pred_check_branch
          %235 = sbr.rel (%p233) target = $region32
        $region31: #{encoder_forward.9} parent=11 // pred_region
          %237 = vsyncadd [#allocation7], 0
          %s238 = sshll.u32 %s6, 4
          %s239 = int_to_ptr.hbm [resolvable:$true] %s238
          %s240 = sshll.u32 [#allocation6], 4
          %s241 = int_to_ptr.vmem [resolvable:$true] %s240
          %246 = dma.hbm_to_vmem [thread:$0]  %s239, 4096, %s241, [#allocation7], 128, 128, 8
        $region32: #{encoder_forward.9} parent=11 // pred_fallthru
          _
        // Predicated region
        $region33: #{encoder_forward.9} parent=11 // pred_check
          %p247 = pneg %p169
        $region34: #{encoder_forward.9} parent=11 // pred_check_branch
          %249 = sbr.rel (%p247) target = $region36
        $region35: #{encoder_forward.9} parent=11 // pred_region
          _
        $region36: #{encoder_forward.9} parent=11 // pred_fallthru
          _
      $region12: #{encoder_forward.9} parent=5 // pred_fallthru
        _
      %p250 = scmp.lt.s32.totalorder %s17, 2
      // Predicated region
      $region37: #{encoder_forward.9} parent=5 // pred_check
        %p251 = pneg %p250
      $region38: #{encoder_forward.9} parent=5 // pred_check_branch
        %253 = sbr.rel (%p251) target = $region40
      $region39: #{encoder_forward.9} parent=5 // pred_region
        // Predicated region
        $region41: #{encoder_forward.9} parent=39 // pred_check
          %p254 = pneg %p37
        $region42: #{encoder_forward.9} parent=39 // pred_check_branch
          %256 = sbr.rel (%p254) target = $region44
        $region43: #{encoder_forward.9} parent=39 // pred_region
          %p257 = scmp.lt.s32.totalorder %s17, 1
          %s258 = scalar_select %p257, %s17, 1
          %s259 = smul.addr %s258, 8
          %s260 = scalar_lea.vmem %s1, %s259
        $region44: #{encoder_forward.9} parent=39 // pred_fallthru
          _
      $region40: #{encoder_forward.9} parent=5 // pred_fallthru
        _
      %p261 = scmp.le.s32.totalorder 1, %s17
      %p262 = scmp.lt.s32.totalorder %s17, 3
      %p263 = pnand %p261, %p262
      %p264 = pneg %p263
      // Predicated region
      $region45: #{encoder_forward.9} parent=5 // pred_check
        _
      $region46: #{encoder_forward.9} parent=5 // pred_check_branch
        %266 = sbr.rel (%p263) target = $region48
      $region47: #{encoder_forward.9} parent=5 // pred_region
        %s267 = ssub.s32 %s17, 1
        // Predicated region
        $region49: #{encoder_forward.9} parent=47 // pred_check
          %p268 = pneg %p106
        $region50: #{encoder_forward.9} parent=47 // pred_check_branch
          %270 = sbr.rel (%p268) target = $region52
        $region51: #{encoder_forward.9} parent=47 // pred_region
          %272 = dma.done [#allocation5], 4096
        $region52: #{encoder_forward.9} parent=47 // pred_fallthru
          _
        // Predicated region
        $region53: #{encoder_forward.9} parent=47 // pred_check
          %p273 = pneg %p148
        $region54: #{encoder_forward.9} parent=47 // pred_check_branch
          %275 = sbr.rel (%p273) target = $region56
        $region55: #{encoder_forward.9} parent=47 // pred_region
          %277 = dma.done [#allocation7], 4096
        $region56: #{encoder_forward.9} parent=47 // pred_fallthru
          _
        %p278 = scmp.lt.s32.totalorder %s22, 1
        %s279 = scalar_select %p278, %s22, 1
        %s280 = smul.addr %s279, 8
        %s281 = scalar_lea.vmem %s1, %s280
        %p282 = pneg %p43
        %p283 = pneg %p40
        %p284 = pneg %p64
        %p285 = pneg %p61
        %p286 = pneg %p85
        %p287 = pneg %p82
        %p288 = pneg %p106
        %p289 = pneg %p103
        %p290 = pneg %p127
        %p291 = pneg %p124
        %p292 = pneg %p148
        %p293 = pneg %p145
        %p294 = pneg %p169
        %p295 = pneg %p166
        %p296 = pneg %p195
        %p297 = pneg %p192
        %p298 = scmp.lt.s32.totalorder %s22, 1
        %s299 = scalar_select %p298, %s22, 1
        %s300 = smul.addr %s299, 8
        %s301 = scalar_lea.vmem %s8, %s300
        %p302 = scmp.lt.s32.totalorder %s22, 1
        %s303 = scalar_select %p302, %s22, 1
        %s304 = smul.addr %s303, 8
        %s305 = scalar_lea.vmem %s1, %s304
        %p306 = scmp.lt.s32.totalorder %s22, 1
        %s307 = scalar_select %p306, %s22, 1
        %s308 = smul.addr %s307, 8
        %s309 = scalar_lea.vmem %s8, %s308
        %v310 = vld [vmem:[%s305] sm:$0xff]
        %v311 = vld [vmem:[%s2] sm:$0x1]
        %v312 = vld [vmem:[%s3] sm:$0x1]
        %313 = vadd.xlane.f32.xlu0 %v310
        %v314 = vpop.xlane.xlu0 %313
        %v315 = vmul.f32 %v314, 0.0078125
        %v316 = vmul.f32 %v310, %v310
        %317 = vadd.xlane.f32.xlu0 %v316
        %v318 = vpop.xlane.xlu0 %317
        %v319 = vmul.f32 %v318, 0.0078125
        %v320 = vmul.f32 %v315, %v315
        %v321 = vsub.f32 %v319, %v320
        %v322 = vsub.f32 %v310, %v315
        %v323 = vadd.f32 %v321, 1e-05
        %v324 = vrsqrt.pop %v323
        %v325 = vmul.f32 %v324, %v323
        %v326 = vmul.f32 %v325, %v324
        %v327 = vmul.f32 0.5, %v326
        %v328 = vsub.f32 1.5, %v327
        %v329 = vmul.f32 %v324, %v328
        %vm330 = vweird.f32 %v323
        %vm331 = vweird.f32 %v324
        %vm332 = vmor %vm330, %vm331
        %v333 = vsel %vm332, %v324, %v329
        %v334 = vmul.f32 %v322, %v333
        %v336 = vperm.slane %v311, 0
        %v338 = vmul.f32 %v334, %v336
        %v340 = vperm.slane %v312, 0
        %v342 = vadd.f32 %v338, %v340
        %v343 = vld [vmem:[#allocation4] sm:$0xff]
        %v344 = vld [vmem:[#allocation4 + $0x8] sm:$0xff]
        %v345 = vld [vmem:[#allocation4 + $0x10] sm:$0xff]
        %v346 = vld [vmem:[#allocation4 + $0x18] sm:$0xff]
        %v347 = vld [vmem:[#allocation4 + $0x20] sm:$0xff]
        %v348 = vld [vmem:[#allocation4 + $0x28] sm:$0xff]
        %v349 = vld [vmem:[#allocation4 + $0x30] sm:$0xff]
        %v350 = vld [vmem:[#allocation4 + $0x38] sm:$0xff]
        %v351 = vld [vmem:[#allocation4 + $0x40] sm:$0xff]
        %v352 = vld [vmem:[#allocation4 + $0x48] sm:$0xff]
        %v353 = vld [vmem:[#allocation4 + $0x50] sm:$0xff]
        %v354 = vld [vmem:[#allocation4 + $0x58] sm:$0xff]
        %v355 = vld [vmem:[#allocation4 + $0x60] sm:$0xff]
        %v356 = vld [vmem:[#allocation4 + $0x68] sm:$0xff]
        %v357 = vld [vmem:[#allocation4 + $0x70] sm:$0xff]
        %v358 = vld [vmem:[#allocation4 + $0x78] sm:$0xff]
        %v359 = vld [vmem:[#allocation4 + $0x80] sm:$0xff]
        %v360 = vld [vmem:[#allocation4 + $0x88] sm:$0xff]
        %v361 = vld [vmem:[#allocation4 + $0x90] sm:$0xff]
        %v362 = vld [vmem:[#allocation4 + $0x98] sm:$0xff]
        %v363 = vld [vmem:[#allocation4 + $0xa0] sm:$0xff]
        %v364 = vld [vmem:[#allocation4 + $0xa8] sm:$0xff]
        %v365 = vld [vmem:[#allocation4 + $0xb0] sm:$0xff]
        %v366 = vld [vmem:[#allocation4 + $0xb8] sm:$0xff]
        %v367 = vld [vmem:[#allocation4 + $0xc0] sm:$0xff]
        %v368 = vld [vmem:[#allocation4 + $0xc8] sm:$0xff]
        %v369 = vld [vmem:[#allocation4 + $0xd0] sm:$0xff]
        %v370 = vld [vmem:[#allocation4 + $0xd8] sm:$0xff]
        %v371 = vld [vmem:[#allocation4 + $0xe0] sm:$0xff]
        %v372 = vld [vmem:[#allocation4 + $0xe8] sm:$0xff]
        %v373 = vld [vmem:[#allocation4 + $0xf0] sm:$0xff]
        %v374 = vld [vmem:[#allocation4 + $0xf8] sm:$0xff]
        %v375 = vld [vmem:[%s5] sm:$0x3]
        %v377 = vperm.slane %v375, 0
        %v378 = vperm.slane %v375, 1
        %v381 = vand.u32 %v373, 4294901760
        %382 = vmatpush.msra.mxu0 %v381
        %v383 = vand.u32 %v371, 4294901760
        %384 = vmatpush.msra.mxu0 %v383
        %v385 = vand.u32 %v369, 4294901760
        %386 = vmatpush.msra.mxu0 %v385
        %v387 = vand.u32 %v367, 4294901760
        %388 = vmatpush.msra.mxu0 %v387
        %v389 = vand.u32 %v365, 4294901760
        %390 = vmatpush.msra.mxu0 %v389
        %v391 = vand.u32 %v363, 4294901760
        %392 = vmatpush.msra.mxu0 %v391
        %v393 = vand.u32 %v361, 4294901760
        %394 = vmatpush.msra.mxu0 %v393
        %v395 = vand.u32 %v359, 4294901760
        %396 = vmatpush.msra.mxu0 %v395
        %v397 = vand.u32 %v357, 4294901760
        %398 = vmatpush.msra.mxu0 %v397
        %v399 = vand.u32 %v355, 4294901760
        %400 = vmatpush.msra.mxu0 %v399
        %v401 = vand.u32 %v353, 4294901760
        %402 = vmatpush.msra.mxu0 %v401
        %v403 = vand.u32 %v351, 4294901760
        %404 = vmatpush.msra.mxu0 %v403
        %v405 = vand.u32 %v349, 4294901760
        %406 = vmatpush.msra.mxu0 %v405
        %v407 = vand.u32 %v347, 4294901760
        %408 = vmatpush.msra.mxu0 %v407
        %v409 = vand.u32 %v345, 4294901760
        %410 = vmatpush.msra.mxu0 %v409
        %v411 = vand.u32 %v343, 4294901760
        %412 = vmatpush.msra.mxu0 %v411
        %v413 = vand.u32 %v342, 4294901760
        %v414 = vsub.f32 %v342, %v413
        %v415 = vand.u32 %v414, 4294901760
        %v416 = vsub.f32 %v414, %v415
        %v417 = vand.u32 %v416, 4294901760
        %418 = vmatmul.f32.gmra.mxu0 %v417
        %v419 = vpop.f32.mrf.mxu0
        %v420 = vadd.f32 %v377, %v419
        %421 = vdwg.mxu0
        %v422 = vand.u32 %v373, 4294901760
        %v423 = vsub.f32 %v373, %v422
        %v424 = vand.u32 %v423, 4294901760
        %v425 = vsub.f32 %v423, %v424
        %v426 = vand.u32 %v425, 4294901760
        %427 = vmatpush.msra.mxu0 %v426
        %v428 = vand.u32 %v371, 4294901760
        %v429 = vsub.f32 %v371, %v428
        %v430 = vand.u32 %v429, 4294901760
        %v431 = vsub.f32 %v429, %v430
        %v432 = vand.u32 %v431, 4294901760
        %433 = vmatpush.msra.mxu0 %v432
        %v434 = vand.u32 %v369, 4294901760
        %v435 = vsub.f32 %v369, %v434
        %v436 = vand.u32 %v435, 4294901760
        %v437 = vsub.f32 %v435, %v436
        %v438 = vand.u32 %v437, 4294901760
        %439 = vmatpush.msra.mxu0 %v438
        %v440 = vand.u32 %v367, 4294901760
        %v441 = vsub.f32 %v367, %v440
        %v442 = vand.u32 %v441, 4294901760
        %v443 = vsub.f32 %v441, %v442
        %v444 = vand.u32 %v443, 4294901760
        %445 = vmatpush.msra.mxu0 %v444
        %v446 = vand.u32 %v365, 4294901760
        %v447 = vsub.f32 %v365, %v446
        %v448 = vand.u32 %v447, 4294901760
        %v449 = vsub.f32 %v447, %v448
        %v450 = vand.u32 %v449, 4294901760
        %451 = vmatpush.msra.mxu0 %v450
        %v452 = vand.u32 %v363, 4294901760
        %v453 = vsub.f32 %v363, %v452
        %v454 = vand.u32 %v453, 4294901760
        %v455 = vsub.f32 %v453, %v454
        %v456 = vand.u32 %v455, 4294901760
        %457 = vmatpush.msra.mxu0 %v456
        %v458 = vand.u32 %v361, 4294901760
        %v459 = vsub.f32 %v361, %v458
        %v460 = vand.u32 %v459, 4294901760
        %v461 = vsub.f32 %v459, %v460
        %v462 = vand.u32 %v461, 4294901760
        %463 = vmatpush.msra.mxu0 %v462
        %v464 = vand.u32 %v359, 4294901760
        %v465 = vsub.f32 %v359, %v464
        %v466 = vand.u32 %v465, 4294901760
        %v467 = vsub.f32 %v465, %v466
        %v468 = vand.u32 %v467, 4294901760
        %469 = vmatpush.msra.mxu0 %v468
        %v470 = vand.u32 %v357, 4294901760
        %v471 = vsub.f32 %v357, %v470
        %v472 = vand.u32 %v471, 4294901760
        %v473 = vsub.f32 %v471, %v472
        %v474 = vand.u32 %v473, 4294901760
        %475 = vmatpush.msra.mxu0 %v474
        %v476 = vand.u32 %v355, 4294901760
        %v477 = vsub.f32 %v355, %v476
        %v478 = vand.u32 %v477, 4294901760
        %v479 = vsub.f32 %v477, %v478
        %v480 = vand.u32 %v479, 4294901760
        %481 = vmatpush.msra.mxu0 %v480
        %v482 = vand.u32 %v353, 4294901760
        %v483 = vsub.f32 %v353, %v482
        %v484 = vand.u32 %v483, 4294901760
        %v485 = vsub.f32 %v483, %v484
        %v486 = vand.u32 %v485, 4294901760
        %487 = vmatpush.msra.mxu0 %v486
        %v488 = vand.u32 %v351, 4294901760
        %v489 = vsub.f32 %v351, %v488
        %v490 = vand.u32 %v489, 4294901760
        %v491 = vsub.f32 %v489, %v490
        %v492 = vand.u32 %v491, 4294901760
        %493 = vmatpush.msra.mxu0 %v492
        %v494 = vand.u32 %v349, 4294901760
        %v495 = vsub.f32 %v349, %v494
        %v496 = vand.u32 %v495, 4294901760
        %v497 = vsub.f32 %v495, %v496
        %v498 = vand.u32 %v497, 4294901760
        %499 = vmatpush.msra.mxu0 %v498
        %v500 = vand.u32 %v347, 4294901760
        %v501 = vsub.f32 %v347, %v500
        %v502 = vand.u32 %v501, 4294901760
        %v503 = vsub.f32 %v501, %v502
        %v504 = vand.u32 %v503, 4294901760
        %505 = vmatpush.msra.mxu0 %v504
        %v506 = vand.u32 %v345, 4294901760
        %v507 = vsub.f32 %v345, %v506
        %v508 = vand.u32 %v507, 4294901760
        %v509 = vsub.f32 %v507, %v508
        %v510 = vand.u32 %v509, 4294901760
        %511 = vmatpush.msra.mxu0 %v510
        %v512 = vand.u32 %v343, 4294901760
        %v513 = vsub.f32 %v343, %v512
        %v514 = vand.u32 %v513, 4294901760
        %v515 = vsub.f32 %v513, %v514
        %v516 = vand.u32 %v515, 4294901760
        %517 = vmatpush.msra.mxu0 %v516
        %v518 = vand.u32 %v342, 4294901760
        %519 = vmatmul.f32.gmra.mxu0 %v518
        %v520 = vpop.f32.mrf.mxu0
        %v521 = vadd.f32 %v420, %v520
        %522 = vdwg.mxu0
        %v523 = vand.u32 %v373, 4294901760
        %v524 = vsub.f32 %v373, %v523
        %525 = vmatpush.msra.mxu0 %v524
        %v526 = vand.u32 %v371, 4294901760
        %v527 = vsub.f32 %v371, %v526
        %528 = vmatpush.msra.mxu0 %v527
        %v529 = vand.u32 %v369, 4294901760
        %v530 = vsub.f32 %v369, %v529
        %531 = vmatpush.msra.mxu0 %v530
        %v532 = vand.u32 %v367, 4294901760
        %v533 = vsub.f32 %v367, %v532
        %534 = vmatpush.msra.mxu0 %v533
        %v535 = vand.u32 %v365, 4294901760
        %v536 = vsub.f32 %v365, %v535
        %537 = vmatpush.msra.mxu0 %v536
        %v538 = vand.u32 %v363, 4294901760
        %v539 = vsub.f32 %v363, %v538
        %540 = vmatpush.msra.mxu0 %v539
        %v541 = vand.u32 %v361, 4294901760
        %v542 = vsub.f32 %v361, %v541
        %543 = vmatpush.msra.mxu0 %v542
        %v544 = vand.u32 %v359, 4294901760
        %v545 = vsub.f32 %v359, %v544
        %546 = vmatpush.msra.mxu0 %v545
        %v547 = vand.u32 %v357, 4294901760
        %v548 = vsub.f32 %v357, %v547
        %549 = vmatpush.msra.mxu0 %v548
        %v550 = vand.u32 %v355, 4294901760
        %v551 = vsub.f32 %v355, %v550
        %552 = vmatpush.msra.mxu0 %v551
        %v553 = vand.u32 %v353, 4294901760
        %v554 = vsub.f32 %v353, %v553
        %555 = vmatpush.msra.mxu0 %v554
        %v556 = vand.u32 %v351, 4294901760
        %v557 = vsub.f32 %v351, %v556
        %558 = vmatpush.msra.mxu0 %v557
        %v559 = vand.u32 %v349, 4294901760
        %v560 = vsub.f32 %v349, %v559
        %561 = vmatpush.msra.mxu0 %v560
        %v562 = vand.u32 %v347, 4294901760
        %v563 = vsub.f32 %v347, %v562
        %564 = vmatpush.msra.mxu0 %v563
        %v565 = vand.u32 %v345, 4294901760
        %v566 = vsub.f32 %v345, %v565
        %567 = vmatpush.msra.mxu0 %v566
        %v568 = vand.u32 %v343, 4294901760
        %v569 = vsub.f32 %v343, %v568
        %570 = vmatpush.msra.mxu0 %v569
        %v571 = vand.u32 %v342, 4294901760
        %v572 = vsub.f32 %v342, %v571
        %573 = vmatmul.f32.gmra.mxu0 %v572
        %v574 = vpop.f32.mrf.mxu0
        %v575 = vadd.f32 %v521, %v574
        %576 = vdwg.mxu0
        %v577 = vand.u32 %v373, 4294901760
        %578 = vmatpush.msra.mxu0 %v577
        %v579 = vand.u32 %v371, 4294901760
        %580 = vmatpush.msra.mxu0 %v579
        %v581 = vand.u32 %v369, 4294901760
        %582 = vmatpush.msra.mxu0 %v581
        %v583 = vand.u32 %v367, 4294901760
        %584 = vmatpush.msra.mxu0 %v583
        %v585 = vand.u32 %v365, 4294901760
        %586 = vmatpush.msra.mxu0 %v585
        %v587 = vand.u32 %v363, 4294901760
        %588 = vmatpush.msra.mxu0 %v587
        %v589 = vand.u32 %v361, 4294901760
        %590 = vmatpush.msra.mxu0 %v589
        %v591 = vand.u32 %v359, 4294901760
        %592 = vmatpush.msra.mxu0 %v591
        %v593 = vand.u32 %v357, 4294901760
        %594 = vmatpush.msra.mxu0 %v593
        %v595 = vand.u32 %v355, 4294901760
        %596 = vmatpush.msra.mxu0 %v595
        %v597 = vand.u32 %v353, 4294901760
        %598 = vmatpush.msra.mxu0 %v597
        %v599 = vand.u32 %v351, 4294901760
        %600 = vmatpush.msra.mxu0 %v599
        %v601 = vand.u32 %v349, 4294901760
        %602 = vmatpush.msra.mxu0 %v601
        %v603 = vand.u32 %v347, 4294901760
        %604 = vmatpush.msra.mxu0 %v603
        %v605 = vand.u32 %v345, 4294901760
        %606 = vmatpush.msra.mxu0 %v605
        %v607 = vand.u32 %v343, 4294901760
        %608 = vmatpush.msra.mxu0 %v607
        %v609 = vand.u32 %v342, 4294901760
        %v610 = vsub.f32 %v342, %v609
        %v611 = vand.u32 %v610, 4294901760
        %612 = vmatmul.f32.gmra.mxu0 %v611
        %v613 = vpop.f32.mrf.mxu0
        %v614 = vadd.f32 %v575, %v613
        %615 = vdwg.mxu0
        %v616 = vand.u32 %v373, 4294901760
        %v617 = vsub.f32 %v373, %v616
        %v618 = vand.u32 %v617, 4294901760
        %619 = vmatpush.msra.mxu0 %v618
        %v620 = vand.u32 %v371, 4294901760
        %v621 = vsub.f32 %v371, %v620
        %v622 = vand.u32 %v621, 4294901760
        %623 = vmatpush.msra.mxu0 %v622
        %v624 = vand.u32 %v369, 4294901760
        %v625 = vsub.f32 %v369, %v624
        %v626 = vand.u32 %v625, 4294901760
        %627 = vmatpush.msra.mxu0 %v626
        %v628 = vand.u32 %v367, 4294901760
        %v629 = vsub.f32 %v367, %v628
        %v630 = vand.u32 %v629, 4294901760
        %631 = vmatpush.msra.mxu0 %v630
        %v632 = vand.u32 %v365, 4294901760
        %v633 = vsub.f32 %v365, %v632
        %v634 = vand.u32 %v633, 4294901760
        %635 = vmatpush.msra.mxu0 %v634
        %v636 = vand.u32 %v363, 4294901760
        %v637 = vsub.f32 %v363, %v636
        %v638 = vand.u32 %v637, 4294901760
        %639 = vmatpush.msra.mxu0 %v638
        %v640 = vand.u32 %v361, 4294901760
        %v641 = vsub.f32 %v361, %v640
        %v642 = vand.u32 %v641, 4294901760
        %643 = vmatpush.msra.mxu0 %v642
        %v644 = vand.u32 %v359, 4294901760
        %v645 = vsub.f32 %v359, %v644
        %v646 = vand.u32 %v645, 4294901760
        %647 = vmatpush.msra.mxu0 %v646
        %v648 = vand.u32 %v357, 4294901760
        %v649 = vsub.f32 %v357, %v648
        %v650 = vand.u32 %v649, 4294901760
        %651 = vmatpush.msra.mxu0 %v650
        %v652 = vand.u32 %v355, 4294901760
        %v653 = vsub.f32 %v355, %v652
        %v654 = vand.u32 %v653, 4294901760
        %655 = vmatpush.msra.mxu0 %v654
        %v656 = vand.u32 %v353, 4294901760
        %v657 = vsub.f32 %v353, %v656
        %v658 = vand.u32 %v657, 4294901760
        %659 = vmatpush.msra.mxu0 %v658
        %v660 = vand.u32 %v351, 4294901760
        %v661 = vsub.f32 %v351, %v660
        %v662 = vand.u32 %v661, 4294901760
        %663 = vmatpush.msra.mxu0 %v662
        %v664 = vand.u32 %v349, 4294901760
        %v665 = vsub.f32 %v349, %v664
        %v666 = vand.u32 %v665, 4294901760
        %667 = vmatpush.msra.mxu0 %v666
        %v668 = vand.u32 %v347, 4294901760
        %v669 = vsub.f32 %v347, %v668
        %v670 = vand.u32 %v669, 4294901760
        %671 = vmatpush.msra.mxu0 %v670
        %v672 = vand.u32 %v345, 4294901760
        %v673 = vsub.f32 %v345, %v672
        %v674 = vand.u32 %v673, 4294901760
        %675 = vmatpush.msra.mxu0 %v674
        %v676 = vand.u32 %v343, 4294901760
        %v677 = vsub.f32 %v343, %v676
        %v678 = vand.u32 %v677, 4294901760
        %679 = vmatpush.msra.mxu0 %v678
        %v680 = vand.u32 %v342, 4294901760
        %681 = vmatmul.f32.gmra.mxu0 %v680
        %v682 = vpop.f32.mrf.mxu0
        %v683 = vadd.f32 %v614, %v682
        %684 = vdwg.mxu0
        %v685 = vand.u32 %v373, 4294901760
        %686 = vmatpush.msra.mxu0 %v685
        %v687 = vand.u32 %v371, 4294901760
        %688 = vmatpush.msra.mxu0 %v687
        %v689 = vand.u32 %v369, 4294901760
        %690 = vmatpush.msra.mxu0 %v689
        %v691 = vand.u32 %v367, 4294901760
        %692 = vmatpush.msra.mxu0 %v691
        %v693 = vand.u32 %v365, 4294901760
        %694 = vmatpush.msra.mxu0 %v693
        %v695 = vand.u32 %v363, 4294901760
        %696 = vmatpush.msra.mxu0 %v695
        %v697 = vand.u32 %v361, 4294901760
        %698 = vmatpush.msra.mxu0 %v697
        %v699 = vand.u32 %v359, 4294901760
        %700 = vmatpush.msra.mxu0 %v699
        %v701 = vand.u32 %v357, 4294901760
        %702 = vmatpush.msra.mxu0 %v701
        %v703 = vand.u32 %v355, 4294901760
        %704 = vmatpush.msra.mxu0 %v703
        %v705 = vand.u32 %v353, 4294901760
        %706 = vmatpush.msra.mxu0 %v705
        %v707 = vand.u32 %v351, 4294901760
        %708 = vmatpush.msra.mxu0 %v707
        %v709 = vand.u32 %v349, 4294901760
        %710 = vmatpush.msra.mxu0 %v709
        %v711 = vand.u32 %v347, 4294901760
        %712 = vmatpush.msra.mxu0 %v711
        %v713 = vand.u32 %v345, 4294901760
        %714 = vmatpush.msra.mxu0 %v713
        %v715 = vand.u32 %v343, 4294901760
        %716 = vmatpush.msra.mxu0 %v715
        %v717 = vand.u32 %v342, 4294901760
        %718 = vmatmul.f32.gmra.mxu0 %v717
        %v719 = vpop.f32.mrf.mxu0
        %v720 = vadd.f32 %v683, %v719
        %721 = vdwg.mxu0
        %v722 = vand.u32 %v374, 4294901760
        %723 = vmatpush.msra.mxu0 %v722
        %v724 = vand.u32 %v372, 4294901760
        %725 = vmatpush.msra.mxu0 %v724
        %v726 = vand.u32 %v370, 4294901760
        %727 = vmatpush.msra.mxu0 %v726
        %v728 = vand.u32 %v368, 4294901760
        %729 = vmatpush.msra.mxu0 %v728
        %v730 = vand.u32 %v366, 4294901760
        %731 = vmatpush.msra.mxu0 %v730
        %v732 = vand.u32 %v364, 4294901760
        %733 = vmatpush.msra.mxu0 %v732
        %v734 = vand.u32 %v362, 4294901760
        %735 = vmatpush.msra.mxu0 %v734
        %v736 = vand.u32 %v360, 4294901760
        %737 = vmatpush.msra.mxu0 %v736
        %v738 = vand.u32 %v358, 4294901760
        %739 = vmatpush.msra.mxu0 %v738
        %v740 = vand.u32 %v356, 4294901760
        %741 = vmatpush.msra.mxu0 %v740
        %v742 = vand.u32 %v354, 4294901760
        %743 = vmatpush.msra.mxu0 %v742
        %v744 = vand.u32 %v352, 4294901760
        %745 = vmatpush.msra.mxu0 %v744
        %v746 = vand.u32 %v350, 4294901760
        %747 = vmatpush.msra.mxu0 %v746
        %v748 = vand.u32 %v348, 4294901760
        %749 = vmatpush.msra.mxu0 %v748
        %v750 = vand.u32 %v346, 4294901760
        %751 = vmatpush.msra.mxu0 %v750
        %v752 = vand.u32 %v344, 4294901760
        %753 = vmatpush.msra.mxu0 %v752
        %v754 = vand.u32 %v342, 4294901760
        %v755 = vsub.f32 %v342, %v754
        %v756 = vand.u32 %v755, 4294901760
        %v757 = vsub.f32 %v755, %v756
        %v758 = vand.u32 %v757, 4294901760
        %759 = vmatmul.f32.gmra.mxu0 %v758
        %v760 = vpop.f32.mrf.mxu0
        %v761 = vadd.f32 %v378, %v760
        %762 = vdwg.mxu0
        %v763 = vand.u32 %v374, 4294901760
        %v764 = vsub.f32 %v374, %v763
        %v765 = vand.u32 %v764, 4294901760
        %v766 = vsub.f32 %v764, %v765
        %v767 = vand.u32 %v766, 4294901760
        %768 = vmatpush.msra.mxu0 %v767
        %v769 = vand.u32 %v372, 4294901760
        %v770 = vsub.f32 %v372, %v769
        %v771 = vand.u32 %v770, 4294901760
        %v772 = vsub.f32 %v770, %v771
        %v773 = vand.u32 %v772, 4294901760
        %774 = vmatpush.msra.mxu0 %v773
        %v775 = vand.u32 %v370, 4294901760
        %v776 = vsub.f32 %v370, %v775
        %v777 = vand.u32 %v776, 4294901760
        %v778 = vsub.f32 %v776, %v777
        %v779 = vand.u32 %v778, 4294901760
        %780 = vmatpush.msra.mxu0 %v779
        %v781 = vand.u32 %v368, 4294901760
        %v782 = vsub.f32 %v368, %v781
        %v783 = vand.u32 %v782, 4294901760
        %v784 = vsub.f32 %v782, %v783
        %v785 = vand.u32 %v784, 4294901760
        %786 = vmatpush.msra.mxu0 %v785
        %v787 = vand.u32 %v366, 4294901760
        %v788 = vsub.f32 %v366, %v787
        %v789 = vand.u32 %v788, 4294901760
        %v790 = vsub.f32 %v788, %v789
        %v791 = vand.u32 %v790, 4294901760
        %792 = vmatpush.msra.mxu0 %v791
        %v793 = vand.u32 %v364, 4294901760
        %v794 = vsub.f32 %v364, %v793
        %v795 = vand.u32 %v794, 4294901760
        %v796 = vsub.f32 %v794, %v795
        %v797 = vand.u32 %v796, 4294901760
        %798 = vmatpush.msra.mxu0 %v797
        %v799 = vand.u32 %v362, 4294901760
        %v800 = vsub.f32 %v362, %v799
        %v801 = vand.u32 %v800, 4294901760
        %v802 = vsub.f32 %v800, %v801
        %v803 = vand.u32 %v802, 4294901760
        %804 = vmatpush.msra.mxu0 %v803
        %v805 = vand.u32 %v360, 4294901760
        %v806 = vsub.f32 %v360, %v805
        %v807 = vand.u32 %v806, 4294901760
        %v808 = vsub.f32 %v806, %v807
        %v809 = vand.u32 %v808, 4294901760
        %810 = vmatpush.msra.mxu0 %v809
        %v811 = vand.u32 %v358, 4294901760
        %v812 = vsub.f32 %v358, %v811
        %v813 = vand.u32 %v812, 4294901760
        %v814 = vsub.f32 %v812, %v813
        %v815 = vand.u32 %v814, 4294901760
        %816 = vmatpush.msra.mxu0 %v815
        %v817 = vand.u32 %v356, 4294901760
        %v818 = vsub.f32 %v356, %v817
        %v819 = vand.u32 %v818, 4294901760
        %v820 = vsub.f32 %v818, %v819
        %v821 = vand.u32 %v820, 4294901760
        %822 = vmatpush.msra.mxu0 %v821
        %v823 = vand.u32 %v354, 4294901760
        %v824 = vsub.f32 %v354, %v823
        %v825 = vand.u32 %v824, 4294901760
        %v826 = vsub.f32 %v824, %v825
        %v827 = vand.u32 %v826, 4294901760
        %828 = vmatpush.msra.mxu0 %v827
        %v829 = vand.u32 %v352, 4294901760
        %v830 = vsub.f32 %v352, %v829
        %v831 = vand.u32 %v830, 4294901760
        %v832 = vsub.f32 %v830, %v831
        %v833 = vand.u32 %v832, 4294901760
        %834 = vmatpush.msra.mxu0 %v833
        %v835 = vand.u32 %v350, 4294901760
        %v836 = vsub.f32 %v350, %v835
        %v837 = vand.u32 %v836, 4294901760
        %v838 = vsub.f32 %v836, %v837
        %v839 = vand.u32 %v838, 4294901760
        %840 = vmatpush.msra.mxu0 %v839
        %v841 = vand.u32 %v348, 4294901760
        %v842 = vsub.f32 %v348, %v841
        %v843 = vand.u32 %v842, 4294901760
        %v844 = vsub.f32 %v842, %v843
        %v845 = vand.u32 %v844, 4294901760
        %846 = vmatpush.msra.mxu0 %v845
        %v847 = vand.u32 %v346, 4294901760
        %v848 = vsub.f32 %v346, %v847
        %v849 = vand.u32 %v848, 4294901760
        %v850 = vsub.f32 %v848, %v849
        %v851 = vand.u32 %v850, 4294901760
        %852 = vmatpush.msra.mxu0 %v851
        %v853 = vand.u32 %v344, 4294901760
        %v854 = vsub.f32 %v344, %v853
        %v855 = vand.u32 %v854, 4294901760
        %v856 = vsub.f32 %v854, %v855
        %v857 = vand.u32 %v856, 4294901760
        %858 = vmatpush.msra.mxu0 %v857
        %v859 = vand.u32 %v342, 4294901760
        %860 = vmatmul.f32.gmra.mxu0 %v859
        %v861 = vpop.f32.mrf.mxu0
        %v862 = vadd.f32 %v761, %v861
        %863 = vdwg.mxu0
        %v864 = vand.u32 %v374, 4294901760
        %v865 = vsub.f32 %v374, %v864
        %866 = vmatpush.msra.mxu0 %v865
        %v867 = vand.u32 %v372, 4294901760
        %v868 = vsub.f32 %v372, %v867
        %869 = vmatpush.msra.mxu0 %v868
        %v870 = vand.u32 %v370, 4294901760
        %v871 = vsub.f32 %v370, %v870
        %872 = vmatpush.msra.mxu0 %v871
        %v873 = vand.u32 %v368, 4294901760
        %v874 = vsub.f32 %v368, %v873
        %875 = vmatpush.msra.mxu0 %v874
        %v876 = vand.u32 %v366, 4294901760
        %v877 = vsub.f32 %v366, %v876
        %878 = vmatpush.msra.mxu0 %v877
        %v879 = vand.u32 %v364, 4294901760
        %v880 = vsub.f32 %v364, %v879
        %881 = vmatpush.msra.mxu0 %v880
        %v882 = vand.u32 %v362, 4294901760
        %v883 = vsub.f32 %v362, %v882
        %884 = vmatpush.msra.mxu0 %v883
        %v885 = vand.u32 %v360, 4294901760
        %v886 = vsub.f32 %v360, %v885
        %887 = vmatpush.msra.mxu0 %v886
        %v888 = vand.u32 %v358, 4294901760
        %v889 = vsub.f32 %v358, %v888
        %890 = vmatpush.msra.mxu0 %v889
        %v891 = vand.u32 %v356, 4294901760
        %v892 = vsub.f32 %v356, %v891
        %893 = vmatpush.msra.mxu0 %v892
        %v894 = vand.u32 %v354, 4294901760
        %v895 = vsub.f32 %v354, %v894
        %896 = vmatpush.msra.mxu0 %v895
        %v897 = vand.u32 %v352, 4294901760
        %v898 = vsub.f32 %v352, %v897
        %899 = vmatpush.msra.mxu0 %v898
        %v900 = vand.u32 %v350, 4294901760
        %v901 = vsub.f32 %v350, %v900
        %902 = vmatpush.msra.mxu0 %v901
        %v903 = vand.u32 %v348, 4294901760
        %v904 = vsub.f32 %v348, %v903
        %905 = vmatpush.msra.mxu0 %v904
        %v906 = vand.u32 %v346, 4294901760
        %v907 = vsub.f32 %v346, %v906
        %908 = vmatpush.msra.mxu0 %v907
        %v909 = vand.u32 %v344, 4294901760
        %v910 = vsub.f32 %v344, %v909
        %911 = vmatpush.msra.mxu0 %v910
        %v912 = vand.u32 %v342, 4294901760
        %v913 = vsub.f32 %v342, %v912
        %914 = vmatmul.f32.gmra.mxu0 %v913
        %v915 = vpop.f32.mrf.mxu0
        %v916 = vadd.f32 %v862, %v915
        %917 = vdwg.mxu0
        %v918 = vand.u32 %v374, 4294901760
        %919 = vmatpush.msra.mxu0 %v918
        %v920 = vand.u32 %v372, 4294901760
        %921 = vmatpush.msra.mxu0 %v920
        %v922 = vand.u32 %v370, 4294901760
        %923 = vmatpush.msra.mxu0 %v922
        %v924 = vand.u32 %v368, 4294901760
        %925 = vmatpush.msra.mxu0 %v924
        %v926 = vand.u32 %v366, 4294901760
        %927 = vmatpush.msra.mxu0 %v926
        %v928 = vand.u32 %v364, 4294901760
        %929 = vmatpush.msra.mxu0 %v928
        %v930 = vand.u32 %v362, 4294901760
        %931 = vmatpush.msra.mxu0 %v930
        %v932 = vand.u32 %v360, 4294901760
        %933 = vmatpush.msra.mxu0 %v932
        %v934 = vand.u32 %v358, 4294901760
        %935 = vmatpush.msra.mxu0 %v934
        %v936 = vand.u32 %v356, 4294901760
        %937 = vmatpush.msra.mxu0 %v936
        %v938 = vand.u32 %v354, 4294901760
        %939 = vmatpush.msra.mxu0 %v938
        %v940 = vand.u32 %v352, 4294901760
        %941 = vmatpush.msra.mxu0 %v940
        %v942 = vand.u32 %v350, 4294901760
        %943 = vmatpush.msra.mxu0 %v942
        %v944 = vand.u32 %v348, 4294901760
        %945 = vmatpush.msra.mxu0 %v944
        %v946 = vand.u32 %v346, 4294901760
        %947 = vmatpush.msra.mxu0 %v946
        %v948 = vand.u32 %v344, 4294901760
        %949 = vmatpush.msra.mxu0 %v948
        %v950 = vand.u32 %v342, 4294901760
        %v951 = vsub.f32 %v342, %v950
        %v952 = vand.u32 %v951, 4294901760
        %953 = vmatmul.f32.gmra.mxu0 %v952
        %v954 = vpop.f32.mrf.mxu0
        %v955 = vadd.f32 %v916, %v954
        %956 = vdwg.mxu0
        %v957 = vand.u32 %v374, 4294901760
        %v958 = vsub.f32 %v374, %v957
        %v959 = vand.u32 %v958, 4294901760
        %960 = vmatpush.msra.mxu0 %v959
        %v961 = vand.u32 %v372, 4294901760
        %v962 = vsub.f32 %v372, %v961
        %v963 = vand.u32 %v962, 4294901760
        %964 = vmatpush.msra.mxu0 %v963
        %v965 = vand.u32 %v370, 4294901760
        %v966 = vsub.f32 %v370, %v965
        %v967 = vand.u32 %v966, 4294901760
        %968 = vmatpush.msra.mxu0 %v967
        %v969 = vand.u32 %v368, 4294901760
        %v970 = vsub.f32 %v368, %v969
        %v971 = vand.u32 %v970, 4294901760
        %972 = vmatpush.msra.mxu0 %v971
        %v973 = vand.u32 %v366, 4294901760
        %v974 = vsub.f32 %v366, %v973
        %v975 = vand.u32 %v974, 4294901760
        %976 = vmatpush.msra.mxu0 %v975
        %v977 = vand.u32 %v364, 4294901760
        %v978 = vsub.f32 %v364, %v977
        %v979 = vand.u32 %v978, 4294901760
        %980 = vmatpush.msra.mxu0 %v979
        %v981 = vand.u32 %v362, 4294901760
        %v982 = vsub.f32 %v362, %v981
        %v983 = vand.u32 %v982, 4294901760
        %984 = vmatpush.msra.mxu0 %v983
        %v985 = vand.u32 %v360, 4294901760
        %v986 = vsub.f32 %v360, %v985
        %v987 = vand.u32 %v986, 4294901760
        %988 = vmatpush.msra.mxu0 %v987
        %v989 = vand.u32 %v358, 4294901760
        %v990 = vsub.f32 %v358, %v989
        %v991 = vand.u32 %v990, 4294901760
        %992 = vmatpush.msra.mxu0 %v991
        %v993 = vand.u32 %v356, 4294901760
        %v994 = vsub.f32 %v356, %v993
        %v995 = vand.u32 %v994, 4294901760
        %996 = vmatpush.msra.mxu0 %v995
        %v997 = vand.u32 %v354, 4294901760
        %v998 = vsub.f32 %v354, %v997
        %v999 = vand.u32 %v998, 4294901760
        %1000 = vmatpush.msra.mxu0 %v999
        %v1001 = vand.u32 %v352, 4294901760
        %v1002 = vsub.f32 %v352, %v1001
        %v1003 = vand.u32 %v1002, 4294901760
        %1004 = vmatpush.msra.mxu0 %v1003
        %v1005 = vand.u32 %v350, 4294901760
        %v1006 = vsub.f32 %v350, %v1005
        %v1007 = vand.u32 %v1006, 4294901760
        %1008 = vmatpush.msra.mxu0 %v1007
        %v1009 = vand.u32 %v348, 4294901760
        %v1010 = vsub.f32 %v348, %v1009
        %v1011 = vand.u32 %v1010, 4294901760
        %1012 = vmatpush.msra.mxu0 %v1011
        %v1013 = vand.u32 %v346, 4294901760
        %v1014 = vsub.f32 %v346, %v1013
        %v1015 = vand.u32 %v1014, 4294901760
        %1016 = vmatpush.msra.mxu0 %v1015
        %v1017 = vand.u32 %v344, 4294901760
        %v1018 = vsub.f32 %v344, %v1017
        %v1019 = vand.u32 %v1018, 4294901760
        %1020 = vmatpush.msra.mxu0 %v1019
        %v1021 = vand.u32 %v342, 4294901760
        %1022 = vmatmul.f32.gmra.mxu0 %v1021
        %v1023 = vpop.f32.mrf.mxu0
        %v1024 = vadd.f32 %v955, %v1023
        %1025 = vdwg.mxu0
        %v1026 = vand.u32 %v374, 4294901760
        %1027 = vmatpush.msra.mxu0 %v1026
        %v1028 = vand.u32 %v372, 4294901760
        %1029 = vmatpush.msra.mxu0 %v1028
        %v1030 = vand.u32 %v370, 4294901760
        %1031 = vmatpush.msra.mxu0 %v1030
        %v1032 = vand.u32 %v368, 4294901760
        %1033 = vmatpush.msra.mxu0 %v1032
        %v1034 = vand.u32 %v366, 4294901760
        %1035 = vmatpush.msra.mxu0 %v1034
        %v1036 = vand.u32 %v364, 4294901760
        %1037 = vmatpush.msra.mxu0 %v1036
        %v1038 = vand.u32 %v362, 4294901760
        %1039 = vmatpush.msra.mxu0 %v1038
        %v1040 = vand.u32 %v360, 4294901760
        %1041 = vmatpush.msra.mxu0 %v1040
        %v1042 = vand.u32 %v358, 4294901760
        %1043 = vmatpush.msra.mxu0 %v1042
        %v1044 = vand.u32 %v356, 4294901760
        %1045 = vmatpush.msra.mxu0 %v1044
        %v1046 = vand.u32 %v354, 4294901760
        %1047 = vmatpush.msra.mxu0 %v1046
        %v1048 = vand.u32 %v352, 4294901760
        %1049 = vmatpush.msra.mxu0 %v1048
        %v1050 = vand.u32 %v350, 4294901760
        %1051 = vmatpush.msra.mxu0 %v1050
        %v1052 = vand.u32 %v348, 4294901760
        %1053 = vmatpush.msra.mxu0 %v1052
        %v1054 = vand.u32 %v346, 4294901760
        %1055 = vmatpush.msra.mxu0 %v1054
        %v1056 = vand.u32 %v344, 4294901760
        %1057 = vmatpush.msra.mxu0 %v1056
        %v1058 = vand.u32 %v342, 4294901760
        %1059 = vmatmul.f32.gmra.mxu0 %v1058
        %v1060 = vpop.f32.mrf.mxu0
        %v1061 = vadd.f32 %v1024, %v1060
        %1062 = vdwg.mxu0
        %v1063 = vmax.f32 %v720, 0.0
        %v1064 = vmax.f32 %v1061, 0.0
        %v1065 = vld [vmem:[#allocation6] sm:$0xff]
        %v1066 = vld [vmem:[#allocation6 + $0x8] sm:$0xff]
        %v1067 = vld [vmem:[#allocation6 + $0x10] sm:$0xff]
        %v1068 = vld [vmem:[#allocation6 + $0x18] sm:$0xff]
        %v1069 = vld [vmem:[#allocation6 + $0x20] sm:$0xff]
        %v1070 = vld [vmem:[#allocation6 + $0x28] sm:$0xff]
        %v1071 = vld [vmem:[#allocation6 + $0x30] sm:$0xff]
        %v1072 = vld [vmem:[#allocation6 + $0x38] sm:$0xff]
        %v1073 = vld [vmem:[#allocation6 + $0x40] sm:$0xff]
        %v1074 = vld [vmem:[#allocation6 + $0x48] sm:$0xff]
        %v1075 = vld [vmem:[#allocation6 + $0x50] sm:$0xff]
        %v1076 = vld [vmem:[#allocation6 + $0x58] sm:$0xff]
        %v1077 = vld [vmem:[#allocation6 + $0x60] sm:$0xff]
        %v1078 = vld [vmem:[#allocation6 + $0x68] sm:$0xff]
        %v1079 = vld [vmem:[#allocation6 + $0x70] sm:$0xff]
        %v1080 = vld [vmem:[#allocation6 + $0x78] sm:$0xff]
        %v1081 = vld [vmem:[#allocation6 + $0x80] sm:$0xff]
        %v1082 = vld [vmem:[#allocation6 + $0x88] sm:$0xff]
        %v1083 = vld [vmem:[#allocation6 + $0x90] sm:$0xff]
        %v1084 = vld [vmem:[#allocation6 + $0x98] sm:$0xff]
        %v1085 = vld [vmem:[#allocation6 + $0xa0] sm:$0xff]
        %v1086 = vld [vmem:[#allocation6 + $0xa8] sm:$0xff]
        %v1087 = vld [vmem:[#allocation6 + $0xb0] sm:$0xff]
        %v1088 = vld [vmem:[#allocation6 + $0xb8] sm:$0xff]
        %v1089 = vld [vmem:[#allocation6 + $0xc0] sm:$0xff]
        %v1090 = vld [vmem:[#allocation6 + $0xc8] sm:$0xff]
        %v1091 = vld [vmem:[#allocation6 + $0xd0] sm:$0xff]
        %v1092 = vld [vmem:[#allocation6 + $0xd8] sm:$0xff]
        %v1093 = vld [vmem:[#allocation6 + $0xe0] sm:$0xff]
        %v1094 = vld [vmem:[#allocation6 + $0xe8] sm:$0xff]
        %v1095 = vld [vmem:[#allocation6 + $0xf0] sm:$0xff]
        %v1096 = vld [vmem:[#allocation6 + $0xf8] sm:$0xff]
        %v1097 = vld [vmem:[%s7] sm:$0x1]
        %v1099 = vperm.slane %v1097, 0
        %v1101 = vand.u32 %v1080, 4294901760
        %1102 = vmatpush.msra.mxu0 %v1101
        %v1103 = vand.u32 %v1079, 4294901760
        %1104 = vmatpush.msra.mxu0 %v1103
        %v1105 = vand.u32 %v1078, 4294901760
        %1106 = vmatpush.msra.mxu0 %v1105
        %v1107 = vand.u32 %v1077, 4294901760
        %1108 = vmatpush.msra.mxu0 %v1107
        %v1109 = vand.u32 %v1076, 4294901760
        %1110 = vmatpush.msra.mxu0 %v1109
        %v1111 = vand.u32 %v1075, 4294901760
        %1112 = vmatpush.msra.mxu0 %v1111
        %v1113 = vand.u32 %v1074, 4294901760
        %1114 = vmatpush.msra.mxu0 %v1113
        %v1115 = vand.u32 %v1073, 4294901760
        %1116 = vmatpush.msra.mxu0 %v1115
        %v1117 = vand.u32 %v1072, 4294901760
        %1118 = vmatpush.msra.mxu0 %v1117
        %v1119 = vand.u32 %v1071, 4294901760
        %1120 = vmatpush.msra.mxu0 %v1119
        %v1121 = vand.u32 %v1070, 4294901760
        %1122 = vmatpush.msra.mxu0 %v1121
        %v1123 = vand.u32 %v1069, 4294901760
        %1124 = vmatpush.msra.mxu0 %v1123
        %v1125 = vand.u32 %v1068, 4294901760
        %1126 = vmatpush.msra.mxu0 %v1125
        %v1127 = vand.u32 %v1067, 4294901760
        %1128 = vmatpush.msra.mxu0 %v1127
        %v1129 = vand.u32 %v1066, 4294901760
        %1130 = vmatpush.msra.mxu0 %v1129
        %v1131 = vand.u32 %v1065, 4294901760
        %1132 = vmatpush.msra.mxu0 %v1131
        %v1133 = vand.u32 %v1063, 4294901760
        %v1134 = vsub.f32 %v1063, %v1133
        %v1135 = vand.u32 %v1134, 4294901760
        %v1136 = vsub.f32 %v1134, %v1135
        %v1137 = vand.u32 %v1136, 4294901760
        %1138 = vmatmul.f32.gmra.mxu0 %v1137
        %v1139 = vpop.f32.mrf.mxu0
        %v1140 = vadd.f32 %v1099, %v1139
        %1141 = vdwg.mxu0
        %v1142 = vand.u32 %v1080, 4294901760
        %v1143 = vsub.f32 %v1080, %v1142
        %v1144 = vand.u32 %v1143, 4294901760
        %v1145 = vsub.f32 %v1143, %v1144
        %v1146 = vand.u32 %v1145, 4294901760
        %1147 = vmatpush.msra.mxu0 %v1146
        %v1148 = vand.u32 %v1079, 4294901760
        %v1149 = vsub.f32 %v1079, %v1148
        %v1150 = vand.u32 %v1149, 4294901760
        %v1151 = vsub.f32 %v1149, %v1150
        %v1152 = vand.u32 %v1151, 4294901760
        %1153 = vmatpush.msra.mxu0 %v1152
        %v1154 = vand.u32 %v1078, 4294901760
        %v1155 = vsub.f32 %v1078, %v1154
        %v1156 = vand.u32 %v1155, 4294901760
        %v1157 = vsub.f32 %v1155, %v1156
        %v1158 = vand.u32 %v1157, 4294901760
        %1159 = vmatpush.msra.mxu0 %v1158
        %v1160 = vand.u32 %v1077, 4294901760
        %v1161 = vsub.f32 %v1077, %v1160
        %v1162 = vand.u32 %v1161, 4294901760
        %v1163 = vsub.f32 %v1161, %v1162
        %v1164 = vand.u32 %v1163, 4294901760
        %1165 = vmatpush.msra.mxu0 %v1164
        %v1166 = vand.u32 %v1076, 4294901760
        %v1167 = vsub.f32 %v1076, %v1166
        %v1168 = vand.u32 %v1167, 4294901760
        %v1169 = vsub.f32 %v1167, %v1168
        %v1170 = vand.u32 %v1169, 4294901760
        %1171 = vmatpush.msra.mxu0 %v1170
        %v1172 = vand.u32 %v1075, 4294901760
        %v1173 = vsub.f32 %v1075, %v1172
        %v1174 = vand.u32 %v1173, 4294901760
        %v1175 = vsub.f32 %v1173, %v1174
        %v1176 = vand.u32 %v1175, 4294901760
        %1177 = vmatpush.msra.mxu0 %v1176
        %v1178 = vand.u32 %v1074, 4294901760
        %v1179 = vsub.f32 %v1074, %v1178
        %v1180 = vand.u32 %v1179, 4294901760
        %v1181 = vsub.f32 %v1179, %v1180
        %v1182 = vand.u32 %v1181, 4294901760
        %1183 = vmatpush.msra.mxu0 %v1182
        %v1184 = vand.u32 %v1073, 4294901760
        %v1185 = vsub.f32 %v1073, %v1184
        %v1186 = vand.u32 %v1185, 4294901760
        %v1187 = vsub.f32 %v1185, %v1186
        %v1188 = vand.u32 %v1187, 4294901760
        %1189 = vmatpush.msra.mxu0 %v1188
        %v1190 = vand.u32 %v1072, 4294901760
        %v1191 = vsub.f32 %v1072, %v1190
        %v1192 = vand.u32 %v1191, 4294901760
        %v1193 = vsub.f32 %v1191, %v1192
        %v1194 = vand.u32 %v1193, 4294901760
        %1195 = vmatpush.msra.mxu0 %v1194
        %v1196 = vand.u32 %v1071, 4294901760
        %v1197 = vsub.f32 %v1071, %v1196
        %v1198 = vand.u32 %v1197, 4294901760
        %v1199 = vsub.f32 %v1197, %v1198
        %v1200 = vand.u32 %v1199, 4294901760
        %1201 = vmatpush.msra.mxu0 %v1200
        %v1202 = vand.u32 %v1070, 4294901760
        %v1203 = vsub.f32 %v1070, %v1202
        %v1204 = vand.u32 %v1203, 4294901760
        %v1205 = vsub.f32 %v1203, %v1204
        %v1206 = vand.u32 %v1205, 4294901760
        %1207 = vmatpush.msra.mxu0 %v1206
        %v1208 = vand.u32 %v1069, 4294901760
        %v1209 = vsub.f32 %v1069, %v1208
        %v1210 = vand.u32 %v1209, 4294901760
        %v1211 = vsub.f32 %v1209, %v1210
        %v1212 = vand.u32 %v1211, 4294901760
        %1213 = vmatpush.msra.mxu0 %v1212
        %v1214 = vand.u32 %v1068, 4294901760
        %v1215 = vsub.f32 %v1068, %v1214
        %v1216 = vand.u32 %v1215, 4294901760
        %v1217 = vsub.f32 %v1215, %v1216
        %v1218 = vand.u32 %v1217, 4294901760
        %1219 = vmatpush.msra.mxu0 %v1218
        %v1220 = vand.u32 %v1067, 4294901760
        %v1221 = vsub.f32 %v1067, %v1220
        %v1222 = vand.u32 %v1221, 4294901760
        %v1223 = vsub.f32 %v1221, %v1222
        %v1224 = vand.u32 %v1223, 4294901760
        %1225 = vmatpush.msra.mxu0 %v1224
        %v1226 = vand.u32 %v1066, 4294901760
        %v1227 = vsub.f32 %v1066, %v1226
        %v1228 = vand.u32 %v1227, 4294901760
        %v1229 = vsub.f32 %v1227, %v1228
        %v1230 = vand.u32 %v1229, 4294901760
        %1231 = vmatpush.msra.mxu0 %v1230
        %v1232 = vand.u32 %v1065, 4294901760
        %v1233 = vsub.f32 %v1065, %v1232
        %v1234 = vand.u32 %v1233, 4294901760
        %v1235 = vsub.f32 %v1233, %v1234
        %v1236 = vand.u32 %v1235, 4294901760
        %1237 = vmatpush.msra.mxu0 %v1236
        %v1238 = vand.u32 %v1063, 4294901760
        %1239 = vmatmul.f32.gmra.mxu0 %v1238
        %v1240 = vpop.f32.mrf.mxu0
        %v1241 = vadd.f32 %v1140, %v1240
        %1242 = vdwg.mxu0
        %v1243 = vand.u32 %v1080, 4294901760
        %v1244 = vsub.f32 %v1080, %v1243
        %1245 = vmatpush.msra.mxu0 %v1244
        %v1246 = vand.u32 %v1079, 4294901760
        %v1247 = vsub.f32 %v1079, %v1246
        %1248 = vmatpush.msra.mxu0 %v1247
        %v1249 = vand.u32 %v1078, 4294901760
        %v1250 = vsub.f32 %v1078, %v1249
        %1251 = vmatpush.msra.mxu0 %v1250
        %v1252 = vand.u32 %v1077, 4294901760
        %v1253 = vsub.f32 %v1077, %v1252
        %1254 = vmatpush.msra.mxu0 %v1253
        %v1255 = vand.u32 %v1076, 4294901760
        %v1256 = vsub.f32 %v1076, %v1255
        %1257 = vmatpush.msra.mxu0 %v1256
        %v1258 = vand.u32 %v1075, 4294901760
        %v1259 = vsub.f32 %v1075, %v1258
        %1260 = vmatpush.msra.mxu0 %v1259
        %v1261 = vand.u32 %v1074, 4294901760
        %v1262 = vsub.f32 %v1074, %v1261
        %1263 = vmatpush.msra.mxu0 %v1262
        %v1264 = vand.u32 %v1073, 4294901760
        %v1265 = vsub.f32 %v1073, %v1264
        %1266 = vmatpush.msra.mxu0 %v1265
        %v1267 = vand.u32 %v1072, 4294901760
        %v1268 = vsub.f32 %v1072, %v1267
        %1269 = vmatpush.msra.mxu0 %v1268
        %v1270 = vand.u32 %v1071, 4294901760
        %v1271 = vsub.f32 %v1071, %v1270
        %1272 = vmatpush.msra.mxu0 %v1271
        %v1273 = vand.u32 %v1070, 4294901760
        %v1274 = vsub.f32 %v1070, %v1273
        %1275 = vmatpush.msra.mxu0 %v1274
        %v1276 = vand.u32 %v1069, 4294901760
        %v1277 = vsub.f32 %v1069, %v1276
        %1278 = vmatpush.msra.mxu0 %v1277
        %v1279 = vand.u32 %v1068, 4294901760
        %v1280 = vsub.f32 %v1068, %v1279
        %1281 = vmatpush.msra.mxu0 %v1280
        %v1282 = vand.u32 %v1067, 4294901760
        %v1283 = vsub.f32 %v1067, %v1282
        %1284 = vmatpush.msra.mxu0 %v1283
        %v1285 = vand.u32 %v1066, 4294901760
        %v1286 = vsub.f32 %v1066, %v1285
        %1287 = vmatpush.msra.mxu0 %v1286
        %v1288 = vand.u32 %v1065, 4294901760
        %v1289 = vsub.f32 %v1065, %v1288
        %1290 = vmatpush.msra.mxu0 %v1289
        %v1291 = vand.u32 %v1063, 4294901760
        %v1292 = vsub.f32 %v1063, %v1291
        %1293 = vmatmul.f32.gmra.mxu0 %v1292
        %v1294 = vpop.f32.mrf.mxu0
        %v1295 = vadd.f32 %v1241, %v1294
        %1296 = vdwg.mxu0
        %v1297 = vand.u32 %v1080, 4294901760
        %1298 = vmatpush.msra.mxu0 %v1297
        %v1299 = vand.u32 %v1079, 4294901760
        %1300 = vmatpush.msra.mxu0 %v1299
        %v1301 = vand.u32 %v1078, 4294901760
        %1302 = vmatpush.msra.mxu0 %v1301
        %v1303 = vand.u32 %v1077, 4294901760
        %1304 = vmatpush.msra.mxu0 %v1303
        %v1305 = vand.u32 %v1076, 4294901760
        %1306 = vmatpush.msra.mxu0 %v1305
        %v1307 = vand.u32 %v1075, 4294901760
        %1308 = vmatpush.msra.mxu0 %v1307
        %v1309 = vand.u32 %v1074, 4294901760
        %1310 = vmatpush.msra.mxu0 %v1309
        %v1311 = vand.u32 %v1073, 4294901760
        %1312 = vmatpush.msra.mxu0 %v1311
        %v1313 = vand.u32 %v1072, 4294901760
        %1314 = vmatpush.msra.mxu0 %v1313
        %v1315 = vand.u32 %v1071, 4294901760
        %1316 = vmatpush.msra.mxu0 %v1315
        %v1317 = vand.u32 %v1070, 4294901760
        %1318 = vmatpush.msra.mxu0 %v1317
        %v1319 = vand.u32 %v1069, 4294901760
        %1320 = vmatpush.msra.mxu0 %v1319
        %v1321 = vand.u32 %v1068, 4294901760
        %1322 = vmatpush.msra.mxu0 %v1321
        %v1323 = vand.u32 %v1067, 4294901760
        %1324 = vmatpush.msra.mxu0 %v1323
        %v1325 = vand.u32 %v1066, 4294901760
        %1326 = vmatpush.msra.mxu0 %v1325
        %v1327 = vand.u32 %v1065, 4294901760
        %1328 = vmatpush.msra.mxu0 %v1327
        %v1329 = vand.u32 %v1063, 4294901760
        %v1330 = vsub.f32 %v1063, %v1329
        %v1331 = vand.u32 %v1330, 4294901760
        %1332 = vmatmul.f32.gmra.mxu0 %v1331
        %v1333 = vpop.f32.mrf.mxu0
        %v1334 = vadd.f32 %v1295, %v1333
        %1335 = vdwg.mxu0
        %v1336 = vand.u32 %v1080, 4294901760
        %v1337 = vsub.f32 %v1080, %v1336
        %v1338 = vand.u32 %v1337, 4294901760
        %1339 = vmatpush.msra.mxu0 %v1338
        %v1340 = vand.u32 %v1079, 4294901760
        %v1341 = vsub.f32 %v1079, %v1340
        %v1342 = vand.u32 %v1341, 4294901760
        %1343 = vmatpush.msra.mxu0 %v1342
        %v1344 = vand.u32 %v1078, 4294901760
        %v1345 = vsub.f32 %v1078, %v1344
        %v1346 = vand.u32 %v1345, 4294901760
        %1347 = vmatpush.msra.mxu0 %v1346
        %v1348 = vand.u32 %v1077, 4294901760
        %v1349 = vsub.f32 %v1077, %v1348
        %v1350 = vand.u32 %v1349, 4294901760
        %1351 = vmatpush.msra.mxu0 %v1350
        %v1352 = vand.u32 %v1076, 4294901760
        %v1353 = vsub.f32 %v1076, %v1352
        %v1354 = vand.u32 %v1353, 4294901760
        %1355 = vmatpush.msra.mxu0 %v1354
        %v1356 = vand.u32 %v1075, 4294901760
        %v1357 = vsub.f32 %v1075, %v1356
        %v1358 = vand.u32 %v1357, 4294901760
        %1359 = vmatpush.msra.mxu0 %v1358
        %v1360 = vand.u32 %v1074, 4294901760
        %v1361 = vsub.f32 %v1074, %v1360
        %v1362 = vand.u32 %v1361, 4294901760
        %1363 = vmatpush.msra.mxu0 %v1362
        %v1364 = vand.u32 %v1073, 4294901760
        %v1365 = vsub.f32 %v1073, %v1364
        %v1366 = vand.u32 %v1365, 4294901760
        %1367 = vmatpush.msra.mxu0 %v1366
        %v1368 = vand.u32 %v1072, 4294901760
        %v1369 = vsub.f32 %v1072, %v1368
        %v1370 = vand.u32 %v1369, 4294901760
        %1371 = vmatpush.msra.mxu0 %v1370
        %v1372 = vand.u32 %v1071, 4294901760
        %v1373 = vsub.f32 %v1071, %v1372
        %v1374 = vand.u32 %v1373, 4294901760
        %1375 = vmatpush.msra.mxu0 %v1374
        %v1376 = vand.u32 %v1070, 4294901760
        %v1377 = vsub.f32 %v1070, %v1376
        %v1378 = vand.u32 %v1377, 4294901760
        %1379 = vmatpush.msra.mxu0 %v1378
        %v1380 = vand.u32 %v1069, 4294901760
        %v1381 = vsub.f32 %v1069, %v1380
        %v1382 = vand.u32 %v1381, 4294901760
        %1383 = vmatpush.msra.mxu0 %v1382
        %v1384 = vand.u32 %v1068, 4294901760
        %v1385 = vsub.f32 %v1068, %v1384
        %v1386 = vand.u32 %v1385, 4294901760
        %1387 = vmatpush.msra.mxu0 %v1386
        %v1388 = vand.u32 %v1067, 4294901760
        %v1389 = vsub.f32 %v1067, %v1388
        %v1390 = vand.u32 %v1389, 4294901760
        %1391 = vmatpush.msra.mxu0 %v1390
        %v1392 = vand.u32 %v1066, 4294901760
        %v1393 = vsub.f32 %v1066, %v1392
        %v1394 = vand.u32 %v1393, 4294901760
        %1395 = vmatpush.msra.mxu0 %v1394
        %v1396 = vand.u32 %v1065, 4294901760
        %v1397 = vsub.f32 %v1065, %v1396
        %v1398 = vand.u32 %v1397, 4294901760
        %1399 = vmatpush.msra.mxu0 %v1398
        %v1400 = vand.u32 %v1063, 4294901760
        %1401 = vmatmul.f32.gmra.mxu0 %v1400
        %v1402 = vpop.f32.mrf.mxu0
        %v1403 = vadd.f32 %v1334, %v1402
        %1404 = vdwg.mxu0
        %v1405 = vand.u32 %v1080, 4294901760
        %1406 = vmatpush.msra.mxu0 %v1405
        %v1407 = vand.u32 %v1079, 4294901760
        %1408 = vmatpush.msra.mxu0 %v1407
        %v1409 = vand.u32 %v1078, 4294901760
        %1410 = vmatpush.msra.mxu0 %v1409
        %v1411 = vand.u32 %v1077, 4294901760
        %1412 = vmatpush.msra.mxu0 %v1411
        %v1413 = vand.u32 %v1076, 4294901760
        %1414 = vmatpush.msra.mxu0 %v1413
        %v1415 = vand.u32 %v1075, 4294901760
        %1416 = vmatpush.msra.mxu0 %v1415
        %v1417 = vand.u32 %v1074, 4294901760
        %1418 = vmatpush.msra.mxu0 %v1417
        %v1419 = vand.u32 %v1073, 4294901760
        %1420 = vmatpush.msra.mxu0 %v1419
        %v1421 = vand.u32 %v1072, 4294901760
        %1422 = vmatpush.msra.mxu0 %v1421
        %v1423 = vand.u32 %v1071, 4294901760
        %1424 = vmatpush.msra.mxu0 %v1423
        %v1425 = vand.u32 %v1070, 4294901760
        %1426 = vmatpush.msra.mxu0 %v1425
        %v1427 = vand.u32 %v1069, 4294901760
        %1428 = vmatpush.msra.mxu0 %v1427
        %v1429 = vand.u32 %v1068, 4294901760
        %1430 = vmatpush.msra.mxu0 %v1429
        %v1431 = vand.u32 %v1067, 4294901760
        %1432 = vmatpush.msra.mxu0 %v1431
        %v1433 = vand.u32 %v1066, 4294901760
        %1434 = vmatpush.msra.mxu0 %v1433
        %v1435 = vand.u32 %v1065, 4294901760
        %1436 = vmatpush.msra.mxu0 %v1435
        %v1437 = vand.u32 %v1063, 4294901760
        %1438 = vmatmul.f32.gmra.mxu0 %v1437
        %v1439 = vpop.f32.mrf.mxu0
        %v1440 = vadd.f32 %v1403, %v1439
        %1441 = vdwg.mxu0
        %v1442 = vand.u32 %v1096, 4294901760
        %1443 = vmatpush.msra.mxu0 %v1442
        %v1444 = vand.u32 %v1095, 4294901760
        %1445 = vmatpush.msra.mxu0 %v1444
        %v1446 = vand.u32 %v1094, 4294901760
        %1447 = vmatpush.msra.mxu0 %v1446
        %v1448 = vand.u32 %v1093, 4294901760
        %1449 = vmatpush.msra.mxu0 %v1448
        %v1450 = vand.u32 %v1092, 4294901760
        %1451 = vmatpush.msra.mxu0 %v1450
        %v1452 = vand.u32 %v1091, 4294901760
        %1453 = vmatpush.msra.mxu0 %v1452
        %v1454 = vand.u32 %v1090, 4294901760
        %1455 = vmatpush.msra.mxu0 %v1454
        %v1456 = vand.u32 %v1089, 4294901760
        %1457 = vmatpush.msra.mxu0 %v1456
        %v1458 = vand.u32 %v1088, 4294901760
        %1459 = vmatpush.msra.mxu0 %v1458
        %v1460 = vand.u32 %v1087, 4294901760
        %1461 = vmatpush.msra.mxu0 %v1460
        %v1462 = vand.u32 %v1086, 4294901760
        %1463 = vmatpush.msra.mxu0 %v1462
        %v1464 = vand.u32 %v1085, 4294901760
        %1465 = vmatpush.msra.mxu0 %v1464
        %v1466 = vand.u32 %v1084, 4294901760
        %1467 = vmatpush.msra.mxu0 %v1466
        %v1468 = vand.u32 %v1083, 4294901760
        %1469 = vmatpush.msra.mxu0 %v1468
        %v1470 = vand.u32 %v1082, 4294901760
        %1471 = vmatpush.msra.mxu0 %v1470
        %v1472 = vand.u32 %v1081, 4294901760
        %1473 = vmatpush.msra.mxu0 %v1472
        %v1474 = vand.u32 %v1064, 4294901760
        %v1475 = vsub.f32 %v1064, %v1474
        %v1476 = vand.u32 %v1475, 4294901760
        %v1477 = vsub.f32 %v1475, %v1476
        %v1478 = vand.u32 %v1477, 4294901760
        %1479 = vmatmul.f32.gmra.mxu0 %v1478
        %v1480 = vpop.f32.mrf.mxu0
        %v1481 = vadd.f32 %v1440, %v1480
        %1482 = vdwg.mxu0
        %v1483 = vand.u32 %v1096, 4294901760
        %v1484 = vsub.f32 %v1096, %v1483
        %v1485 = vand.u32 %v1484, 4294901760
        %v1486 = vsub.f32 %v1484, %v1485
        %v1487 = vand.u32 %v1486, 4294901760
        %1488 = vmatpush.msra.mxu0 %v1487
        %v1489 = vand.u32 %v1095, 4294901760
        %v1490 = vsub.f32 %v1095, %v1489
        %v1491 = vand.u32 %v1490, 4294901760
        %v1492 = vsub.f32 %v1490, %v1491
        %v1493 = vand.u32 %v1492, 4294901760
        %1494 = vmatpush.msra.mxu0 %v1493
        %v1495 = vand.u32 %v1094, 4294901760
        %v1496 = vsub.f32 %v1094, %v1495
        %v1497 = vand.u32 %v1496, 4294901760
        %v1498 = vsub.f32 %v1496, %v1497
        %v1499 = vand.u32 %v1498, 4294901760
        %1500 = vmatpush.msra.mxu0 %v1499
        %v1501 = vand.u32 %v1093, 4294901760
        %v1502 = vsub.f32 %v1093, %v1501
        %v1503 = vand.u32 %v1502, 4294901760
        %v1504 = vsub.f32 %v1502, %v1503
        %v1505 = vand.u32 %v1504, 4294901760
        %1506 = vmatpush.msra.mxu0 %v1505
        %v1507 = vand.u32 %v1092, 4294901760
        %v1508 = vsub.f32 %v1092, %v1507
        %v1509 = vand.u32 %v1508, 4294901760
        %v1510 = vsub.f32 %v1508, %v1509
        %v1511 = vand.u32 %v1510, 4294901760
        %1512 = vmatpush.msra.mxu0 %v1511
        %v1513 = vand.u32 %v1091, 4294901760
        %v1514 = vsub.f32 %v1091, %v1513
        %v1515 = vand.u32 %v1514, 4294901760
        %v1516 = vsub.f32 %v1514, %v1515
        %v1517 = vand.u32 %v1516, 4294901760
        %1518 = vmatpush.msra.mxu0 %v1517
        %v1519 = vand.u32 %v1090, 4294901760
        %v1520 = vsub.f32 %v1090, %v1519
        %v1521 = vand.u32 %v1520, 4294901760
        %v1522 = vsub.f32 %v1520, %v1521
        %v1523 = vand.u32 %v1522, 4294901760
        %1524 = vmatpush.msra.mxu0 %v1523
        %v1525 = vand.u32 %v1089, 4294901760
        %v1526 = vsub.f32 %v1089, %v1525
        %v1527 = vand.u32 %v1526, 4294901760
        %v1528 = vsub.f32 %v1526, %v1527
        %v1529 = vand.u32 %v1528, 4294901760
        %1530 = vmatpush.msra.mxu0 %v1529
        %v1531 = vand.u32 %v1088, 4294901760
        %v1532 = vsub.f32 %v1088, %v1531
        %v1533 = vand.u32 %v1532, 4294901760
        %v1534 = vsub.f32 %v1532, %v1533
        %v1535 = vand.u32 %v1534, 4294901760
        %1536 = vmatpush.msra.mxu0 %v1535
        %v1537 = vand.u32 %v1087, 4294901760
        %v1538 = vsub.f32 %v1087, %v1537
        %v1539 = vand.u32 %v1538, 4294901760
        %v1540 = vsub.f32 %v1538, %v1539
        %v1541 = vand.u32 %v1540, 4294901760
        %1542 = vmatpush.msra.mxu0 %v1541
        %v1543 = vand.u32 %v1086, 4294901760
        %v1544 = vsub.f32 %v1086, %v1543
        %v1545 = vand.u32 %v1544, 4294901760
        %v1546 = vsub.f32 %v1544, %v1545
        %v1547 = vand.u32 %v1546, 4294901760
        %1548 = vmatpush.msra.mxu0 %v1547
        %v1549 = vand.u32 %v1085, 4294901760
        %v1550 = vsub.f32 %v1085, %v1549
        %v1551 = vand.u32 %v1550, 4294901760
        %v1552 = vsub.f32 %v1550, %v1551
        %v1553 = vand.u32 %v1552, 4294901760
        %1554 = vmatpush.msra.mxu0 %v1553
        %v1555 = vand.u32 %v1084, 4294901760
        %v1556 = vsub.f32 %v1084, %v1555
        %v1557 = vand.u32 %v1556, 4294901760
        %v1558 = vsub.f32 %v1556, %v1557
        %v1559 = vand.u32 %v1558, 4294901760
        %1560 = vmatpush.msra.mxu0 %v1559
        %v1561 = vand.u32 %v1083, 4294901760
        %v1562 = vsub.f32 %v1083, %v1561
        %v1563 = vand.u32 %v1562, 4294901760
        %v1564 = vsub.f32 %v1562, %v1563
        %v1565 = vand.u32 %v1564, 4294901760
        %1566 = vmatpush.msra.mxu0 %v1565
        %v1567 = vand.u32 %v1082, 4294901760
        %v1568 = vsub.f32 %v1082, %v1567
        %v1569 = vand.u32 %v1568, 4294901760
        %v1570 = vsub.f32 %v1568, %v1569
        %v1571 = vand.u32 %v1570, 4294901760
        %1572 = vmatpush.msra.mxu0 %v1571
        %v1573 = vand.u32 %v1081, 4294901760
        %v1574 = vsub.f32 %v1081, %v1573
        %v1575 = vand.u32 %v1574, 4294901760
        %v1576 = vsub.f32 %v1574, %v1575
        %v1577 = vand.u32 %v1576, 4294901760
        %1578 = vmatpush.msra.mxu0 %v1577
        %v1579 = vand.u32 %v1064, 4294901760
        %1580 = vmatmul.f32.gmra.mxu0 %v1579
        %v1581 = vpop.f32.mrf.mxu0
        %v1582 = vadd.f32 %v1481, %v1581
        %1583 = vdwg.mxu0
        %v1584 = vand.u32 %v1096, 4294901760
        %v1585 = vsub.f32 %v1096, %v1584
        %1586 = vmatpush.msra.mxu0 %v1585
        %v1587 = vand.u32 %v1095, 4294901760
        %v1588 = vsub.f32 %v1095, %v1587
        %1589 = vmatpush.msra.mxu0 %v1588
        %v1590 = vand.u32 %v1094, 4294901760
        %v1591 = vsub.f32 %v1094, %v1590
        %1592 = vmatpush.msra.mxu0 %v1591
        %v1593 = vand.u32 %v1093, 4294901760
        %v1594 = vsub.f32 %v1093, %v1593
        %1595 = vmatpush.msra.mxu0 %v1594
        %v1596 = vand.u32 %v1092, 4294901760
        %v1597 = vsub.f32 %v1092, %v1596
        %1598 = vmatpush.msra.mxu0 %v1597
        %v1599 = vand.u32 %v1091, 4294901760
        %v1600 = vsub.f32 %v1091, %v1599
        %1601 = vmatpush.msra.mxu0 %v1600
        %v1602 = vand.u32 %v1090, 4294901760
        %v1603 = vsub.f32 %v1090, %v1602
        %1604 = vmatpush.msra.mxu0 %v1603
        %v1605 = vand.u32 %v1089, 4294901760
        %v1606 = vsub.f32 %v1089, %v1605
        %1607 = vmatpush.msra.mxu0 %v1606
        %v1608 = vand.u32 %v1088, 4294901760
        %v1609 = vsub.f32 %v1088, %v1608
        %1610 = vmatpush.msra.mxu0 %v1609
        %v1611 = vand.u32 %v1087, 4294901760
        %v1612 = vsub.f32 %v1087, %v1611
        %1613 = vmatpush.msra.mxu0 %v1612
        %v1614 = vand.u32 %v1086, 4294901760
        %v1615 = vsub.f32 %v1086, %v1614
        %1616 = vmatpush.msra.mxu0 %v1615
        %v1617 = vand.u32 %v1085, 4294901760
        %v1618 = vsub.f32 %v1085, %v1617
        %1619 = vmatpush.msra.mxu0 %v1618
        %v1620 = vand.u32 %v1084, 4294901760
        %v1621 = vsub.f32 %v1084, %v1620
        %1622 = vmatpush.msra.mxu0 %v1621
        %v1623 = vand.u32 %v1083, 4294901760
        %v1624 = vsub.f32 %v1083, %v1623
        %1625 = vmatpush.msra.mxu0 %v1624
        %v1626 = vand.u32 %v1082, 4294901760
        %v1627 = vsub.f32 %v1082, %v1626
        %1628 = vmatpush.msra.mxu0 %v1627
        %v1629 = vand.u32 %v1081, 4294901760
        %v1630 = vsub.f32 %v1081, %v1629
        %1631 = vmatpush.msra.mxu0 %v1630
        %v1632 = vand.u32 %v1064, 4294901760
        %v1633 = vsub.f32 %v1064, %v1632
        %1634 = vmatmul.f32.gmra.mxu0 %v1633
        %v1635 = vpop.f32.mrf.mxu0
        %v1636 = vadd.f32 %v1582, %v1635
        %1637 = vdwg.mxu0
        %v1638 = vand.u32 %v1096, 4294901760
        %1639 = vmatpush.msra.mxu0 %v1638
        %v1640 = vand.u32 %v1095, 4294901760
        %1641 = vmatpush.msra.mxu0 %v1640
        %v1642 = vand.u32 %v1094, 4294901760
        %1643 = vmatpush.msra.mxu0 %v1642
        %v1644 = vand.u32 %v1093, 4294901760
        %1645 = vmatpush.msra.mxu0 %v1644
        %v1646 = vand.u32 %v1092, 4294901760
        %1647 = vmatpush.msra.mxu0 %v1646
        %v1648 = vand.u32 %v1091, 4294901760
        %1649 = vmatpush.msra.mxu0 %v1648
        %v1650 = vand.u32 %v1090, 4294901760
        %1651 = vmatpush.msra.mxu0 %v1650
        %v1652 = vand.u32 %v1089, 4294901760
        %1653 = vmatpush.msra.mxu0 %v1652
        %v1654 = vand.u32 %v1088, 4294901760
        %1655 = vmatpush.msra.mxu0 %v1654
        %v1656 = vand.u32 %v1087, 4294901760
        %1657 = vmatpush.msra.mxu0 %v1656
        %v1658 = vand.u32 %v1086, 4294901760
        %1659 = vmatpush.msra.mxu0 %v1658
        %v1660 = vand.u32 %v1085, 4294901760
        %1661 = vmatpush.msra.mxu0 %v1660
        %v1662 = vand.u32 %v1084, 4294901760
        %1663 = vmatpush.msra.mxu0 %v1662
        %v1664 = vand.u32 %v1083, 4294901760
        %1665 = vmatpush.msra.mxu0 %v1664
        %v1666 = vand.u32 %v1082, 4294901760
        %1667 = vmatpush.msra.mxu0 %v1666
        %v1668 = vand.u32 %v1081, 4294901760
        %1669 = vmatpush.msra.mxu0 %v1668
        %v1670 = vand.u32 %v1064, 4294901760
        %v1671 = vsub.f32 %v1064, %v1670
        %v1672 = vand.u32 %v1671, 4294901760
        %1673 = vmatmul.f32.gmra.mxu0 %v1672
        %v1674 = vpop.f32.mrf.mxu0
        %v1675 = vadd.f32 %v1636, %v1674
        %1676 = vdwg.mxu0
        %v1677 = vand.u32 %v1096, 4294901760
        %v1678 = vsub.f32 %v1096, %v1677
        %v1679 = vand.u32 %v1678, 4294901760
        %1680 = vmatpush.msra.mxu0 %v1679
        %v1681 = vand.u32 %v1095, 4294901760
        %v1682 = vsub.f32 %v1095, %v1681
        %v1683 = vand.u32 %v1682, 4294901760
        %1684 = vmatpush.msra.mxu0 %v1683
        %v1685 = vand.u32 %v1094, 4294901760
        %v1686 = vsub.f32 %v1094, %v1685
        %v1687 = vand.u32 %v1686, 4294901760
        %1688 = vmatpush.msra.mxu0 %v1687
        %v1689 = vand.u32 %v1093, 4294901760
        %v1690 = vsub.f32 %v1093, %v1689
        %v1691 = vand.u32 %v1690, 4294901760
        %1692 = vmatpush.msra.mxu0 %v1691
        %v1693 = vand.u32 %v1092, 4294901760
        %v1694 = vsub.f32 %v1092, %v1693
        %v1695 = vand.u32 %v1694, 4294901760
        %1696 = vmatpush.msra.mxu0 %v1695
        %v1697 = vand.u32 %v1091, 4294901760
        %v1698 = vsub.f32 %v1091, %v1697
        %v1699 = vand.u32 %v1698, 4294901760
        %1700 = vmatpush.msra.mxu0 %v1699
        %v1701 = vand.u32 %v1090, 4294901760
        %v1702 = vsub.f32 %v1090, %v1701
        %v1703 = vand.u32 %v1702, 4294901760
        %1704 = vmatpush.msra.mxu0 %v1703
        %v1705 = vand.u32 %v1089, 4294901760
        %v1706 = vsub.f32 %v1089, %v1705
        %v1707 = vand.u32 %v1706, 4294901760
        %1708 = vmatpush.msra.mxu0 %v1707
        %v1709 = vand.u32 %v1088, 4294901760
        %v1710 = vsub.f32 %v1088, %v1709
        %v1711 = vand.u32 %v1710, 4294901760
        %1712 = vmatpush.msra.mxu0 %v1711
        %v1713 = vand.u32 %v1087, 4294901760
        %v1714 = vsub.f32 %v1087, %v1713
        %v1715 = vand.u32 %v1714, 4294901760
        %1716 = vmatpush.msra.mxu0 %v1715
        %v1717 = vand.u32 %v1086, 4294901760
        %v1718 = vsub.f32 %v1086, %v1717
        %v1719 = vand.u32 %v1718, 4294901760
        %1720 = vmatpush.msra.mxu0 %v1719
        %v1721 = vand.u32 %v1085, 4294901760
        %v1722 = vsub.f32 %v1085, %v1721
        %v1723 = vand.u32 %v1722, 4294901760
        %1724 = vmatpush.msra.mxu0 %v1723
        %v1725 = vand.u32 %v1084, 4294901760
        %v1726 = vsub.f32 %v1084, %v1725
        %v1727 = vand.u32 %v1726, 4294901760
        %1728 = vmatpush.msra.mxu0 %v1727
        %v1729 = vand.u32 %v1083, 4294901760
        %v1730 = vsub.f32 %v1083, %v1729
        %v1731 = vand.u32 %v1730, 4294901760
        %1732 = vmatpush.msra.mxu0 %v1731
        %v1733 = vand.u32 %v1082, 4294901760
        %v1734 = vsub.f32 %v1082, %v1733
        %v1735 = vand.u32 %v1734, 4294901760
        %1736 = vmatpush.msra.mxu0 %v1735
        %v1737 = vand.u32 %v1081, 4294901760
        %v1738 = vsub.f32 %v1081, %v1737
        %v1739 = vand.u32 %v1738, 4294901760
        %1740 = vmatpush.msra.mxu0 %v1739
        %v1741 = vand.u32 %v1064, 4294901760
        %1742 = vmatmul.f32.gmra.mxu0 %v1741
        %v1743 = vpop.f32.mrf.mxu0
        %v1744 = vadd.f32 %v1675, %v1743
        %1745 = vdwg.mxu0
        %v1746 = vand.u32 %v1096, 4294901760
        %1747 = vmatpush.msra.mxu0 %v1746
        %v1748 = vand.u32 %v1095, 4294901760
        %1749 = vmatpush.msra.mxu0 %v1748
        %v1750 = vand.u32 %v1094, 4294901760
        %1751 = vmatpush.msra.mxu0 %v1750
        %v1752 = vand.u32 %v1093, 4294901760
        %1753 = vmatpush.msra.mxu0 %v1752
        %v1754 = vand.u32 %v1092, 4294901760
        %1755 = vmatpush.msra.mxu0 %v1754
        %v1756 = vand.u32 %v1091, 4294901760
        %1757 = vmatpush.msra.mxu0 %v1756
        %v1758 = vand.u32 %v1090, 4294901760
        %1759 = vmatpush.msra.mxu0 %v1758
        %v1760 = vand.u32 %v1089, 4294901760
        %1761 = vmatpush.msra.mxu0 %v1760
        %v1762 = vand.u32 %v1088, 4294901760
        %1763 = vmatpush.msra.mxu0 %v1762
        %v1764 = vand.u32 %v1087, 4294901760
        %1765 = vmatpush.msra.mxu0 %v1764
        %v1766 = vand.u32 %v1086, 4294901760
        %1767 = vmatpush.msra.mxu0 %v1766
        %v1768 = vand.u32 %v1085, 4294901760
        %1769 = vmatpush.msra.mxu0 %v1768
        %v1770 = vand.u32 %v1084, 4294901760
        %1771 = vmatpush.msra.mxu0 %v1770
        %v1772 = vand.u32 %v1083, 4294901760
        %1773 = vmatpush.msra.mxu0 %v1772
        %v1774 = vand.u32 %v1082, 4294901760
        %1775 = vmatpush.msra.mxu0 %v1774
        %v1776 = vand.u32 %v1081, 4294901760
        %1777 = vmatpush.msra.mxu0 %v1776
        %v1778 = vand.u32 %v1064, 4294901760
        %1779 = vmatmul.f32.gmra.mxu0 %v1778
        %v1780 = vpop.f32.mrf.mxu0
        %v1781 = vadd.f32 %v1744, %v1780
        %1782 = vdwg.mxu0
        %v1783 = vadd.f32 %v310, %v1781
        %1784 = vst [vmem:[%s309] sm:$0xff] %v1783
        %p1785 = scmp.lt.s32.totalorder %s22, 1
        %s1786 = scalar_select %p1785, %s22, 1
        %s1787 = smul.addr %s1786, 8
        %s1788 = scalar_lea.vmem %s8, %s1787
        // Predicated region
        $region57: #{encoder_forward.9} parent=47 // pred_check
          %p1789 = pneg %p192
        $region58: #{encoder_forward.9} parent=47 // pred_check_branch
          %1791 = sbr.rel (%p1789) target = $region60
        $region59: #{encoder_forward.9} parent=47 // pred_region
          _
        $region60: #{encoder_forward.9} parent=47 // pred_fallthru
          _
      $region48: #{encoder_forward.9} parent=5 // pred_fallthru
        _
      %p1792 = scmp.le.s32.totalorder 2, %s17
      // Predicated region
      $region61: #{encoder_forward.9} parent=5 // pred_check
        %p1793 = pneg %p1792
      $region62: #{encoder_forward.9} parent=5 // pred_check_branch
        %1795 = sbr.rel (%p1793) target = $region64
      $region63: #{encoder_forward.9} parent=5 // pred_region
        %s1796 = ssub.s32 %s17, 2
        // Predicated region
        $region65: #{encoder_forward.9} parent=63 // pred_check
          %p1797 = pneg %p198
        $region66: #{encoder_forward.9} parent=63 // pred_check_branch
          %1799 = sbr.rel (%p1797) target = $region68
        $region67: #{encoder_forward.9} parent=63 // pred_region
          %p1800 = scmp.lt.s32.totalorder %s23, 1
          %s1801 = scalar_select %p1800, %s23, 1
          %s1802 = smul.addr %s1801, 8
          %s1803 = scalar_lea.vmem %s8, %s1802
        $region68: #{encoder_forward.9} parent=63 // pred_fallthru
          _
      $region64: #{encoder_forward.9} parent=5 // pred_fallthru
        _
    $region6: #{encoder_forward.9} parent=1 // loop_footer
      %s21 = sadd.s32 1, %s17
    $region7: #{encoder_forward.9} parent=1 // loop_footer_branch
      %16 = sbr.rel target = $region3
    $region8: #{encoder_forward.9} parent=1 // loop_exit
      _
    %1804 = vsyncpa [#allocation5], 1
    %s1805 = scalar_lea.sflag [#allocation5], 1
    %1806 = vsyncpa %s1805, 1
    %1807 = vsyncpa [#allocation7], 1

// kernel: encoder_forward.13
$region0: #{encoder_forward.13}
  #allocation0 [shape = 'u32[]', space=smem, size = 0x4, offset = 0x4, fixed_abs, tag = 'smem constant byte address 0x4 - core index']
  #allocation1 [shape = 'u32[72,128]{1,0:T(1,128)}', space=vmem, size = 0x9000, scoped, tag = 'internal scratch']
  %s0 = inlined_call_operand.vmem [shape: f32[16,128], index: 0, kind: input, shape index: {}]
  %s1 = inlined_call_operand.vmem [shape: f32[1,128], index: 1, kind: input, shape index: {}]
  %s2 = inlined_call_operand.vmem [shape: f32[1,128], index: 2, kind: input, shape index: {}]
  %s3 = inlined_call_operand.hbm [shape: f32[16,128], index: 3, kind: output, shape index: {}]
  %s4 = sld [smem:[#allocation0]]
  $region45: #{encoder_forward.13} parent=0
    _
  %s6 = ssub.s32 1, %s4
  %s7 = scalar_select 0, %s6, %s4
  $region1: #{encoder_forward.13} parent=0
    #allocation2 [shape = 'u8[8192]{0}', space=vmem, size = 0x2000, scoped, tag = 'output window, operand 0']
    #allocation3 [shape = 's32[2]{0}', space=sflag, size = 0x8, scoped, tag = 'scoped memory for encoder_forward.13']
    %8 = vsyncpa [#allocation3], 0
    %s9 = scalar_lea.sflag [#allocation3], 1
    %10 = vsyncpa %s9, 0
    loop: start=0, step=1, limit=4
    $region2: #{encoder_forward.13} parent=1 // loop_pre_header
      _
    $region3: #{encoder_forward.13} parent=1 // loop_header
      %s12 = sphi 0, %s16
      %p13 = scmp.ge.s32.totalorder %s12, 4
      %s22 = sphi 0, %s24
      %s25 = sphi 0, %s22
      %s26 = sphi 0, %s25
      %s42 = sphi 0, %s26
      %s46 = sphi 0, %s46
      %s48 = sphi 0, %s46
      %s49 = sphi 0, %s48
      %s63 = sphi 0, %s49
      %s67 = sphi 0, %s67
      %s69 = sphi 0, %s67
      %s70 = sphi 0, %s69
      %s84 = sphi 0, %s70
      %s90 = sphi 0, %s92
      %s93 = sphi 0, %s90
      %s94 = sphi 0, %s93
      %s110 = sphi 0, %s94
    $region4: #{encoder_forward.13} parent=1 // loop_header_branch
      %15 = sbr.rel (%p13) target = $region8
    $region5: #{encoder_forward.13} parent=1 // loop_body
      %s17 = ssub.s32 %s12, 1
      %s18 = ssub.s32 %s12, 2
      %s19 = sadd.s32 %s12, 1
      %s20 = ssub.s32 %s12, %s19
      %p21 = scmp.eq.s32.totalorder %s20, 0
      %s23 = sadd.s32 %s22, 1
      %s24 = scalar_select %p21, %s22, %s23
      %p27 = pneg %p21
      %p28 = scmp.eq.s32.totalorder %s12, 1
      %p29 = por %p27, %p28
      %p30 = scmp.ne.s32.totalorder %s22, %s25
      %p31 = scmp.eq.s32.totalorder %s12, 0
      %p32 = por %p30, %p31
      %p33 = scmp.ne.s32.totalorder %s22, %s25
      %p34 = scmp.eq.s32.totalorder %s17, 1
      %p35 = por %p33, %p34
      %p36 = scmp.ne.s32.totalorder %s25, %s26
      %p37 = scmp.eq.s32.totalorder %s17, 0
      %p38 = por %p36, %p37
      %p39 = scmp.ne.s32.totalorder %s25, %s26
      %p40 = scmp.eq.s32.totalorder %s18, 1
      %p41 = por %p39, %p40
      %p43 = scmp.ne.s32.totalorder %s26, %s42
      %p44 = scmp.eq.s32.totalorder %s18, 0
      %p45 = por %p43, %p44
      %s47 = sadd.s32 %s46, 1
      %p50 = scmp.eq.s32.totalorder %s12, 1
      %p51 = scmp.ne.s32.totalorder %s46, %s48
      %p52 = scmp.eq.s32.totalorder %s12, 0
      %p53 = por %p51, %p52
      %p54 = scmp.ne.s32.totalorder %s46, %s48
      %p55 = scmp.eq.s32.totalorder %s17, 1
      %p56 = por %p54, %p55
      %p57 = scmp.ne.s32.totalorder %s48, %s49
      %p58 = scmp.eq.s32.totalorder %s17, 0
      %p59 = por %p57, %p58
      %p60 = scmp.ne.s32.totalorder %s48, %s49
      %p61 = scmp.eq.s32.totalorder %s18, 1
      %p62 = por %p60, %p61
      %p64 = scmp.ne.s32.totalorder %s49, %s63
      %p65 = scmp.eq.s32.totalorder %s18, 0
      %p66 = por %p64, %p65
      %s68 = sadd.s32 %s67, 1
      %p71 = scmp.eq.s32.totalorder %s12, 1
      %p72 = scmp.ne.s32.totalorder %s67, %s69
      %p73 = scmp.eq.s32.totalorder %s12, 0
      %p74 = por %p72, %p73
      %p75 = scmp.ne.s32.totalorder %s67, %s69
      %p76 = scmp.eq.s32.totalorder %s17, 1
      %p77 = por %p75, %p76
      %p78 = scmp.ne.s32.totalorder %s69, %s70
      %p79 = scmp.eq.s32.totalorder %s17, 0
      %p80 = por %p78, %p79
      %p81 = scmp.ne.s32.totalorder %s69, %s70
      %p82 = scmp.eq.s32.totalorder %s18, 1
      %p83 = por %p81, %p82
      %p85 = scmp.ne.s32.totalorder %s70, %s84
      %p86 = scmp.eq.s32.totalorder %s18, 0
      %p87 = por %p85, %p86
      %s88 = ssub.s32 %s12, %s19
      %p89 = scmp.eq.s32.totalorder %s88, 0
      %s91 = sadd.s32 %s90, 1
      %s92 = scalar_select %p89, %s90, %s91
      %p95 = pneg %p89
      %p96 = scmp.eq.s32.totalorder %s12, 1
      %p97 = por %p95, %p96
      %p98 = scmp.ne.s32.totalorder %s90, %s93
      %p99 = scmp.eq.s32.totalorder %s12, 0
      %p100 = por %p98, %p99
      %p101 = scmp.ne.s32.totalorder %s90, %s93
      %p102 = scmp.eq.s32.totalorder %s17, 1
      %p103 = por %p101, %p102
      %p104 = scmp.ne.s32.totalorder %s93, %s94
      %p105 = scmp.eq.s32.totalorder %s17, 0
      %p106 = por %p104, %p105
      %p107 = scmp.ne.s32.totalorder %s93, %s94
      %p108 = scmp.eq.s32.totalorder %s18, 1
      %p109 = por %p107, %p108
      %p111 = scmp.ne.s32.totalorder %s94, %s110
      %p112 = scmp.eq.s32.totalorder %s18, 0
      %p113 = por %p111, %p112
      %p114 = scmp.le.s32.totalorder 1, %s12
      %p115 = scmp.lt.s32.totalorder %s12, 3
      %p116 = pnand %p114, %p115
      %p117 = pneg %p116
      // Predicated region
      $region9: #{encoder_forward.13} parent=5 // pred_check
        _
      $region10: #{encoder_forward.13} parent=5 // pred_check_branch
        %119 = sbr.rel (%p116) target = $region12
      $region11: #{encoder_forward.13} parent=5 // pred_region
        %s120 = ssub.s32 %s12, 1
        // Predicated region
        $region13: #{encoder_forward.13} parent=11 // pred_check
          %p121 = pneg %p59
        $region14: #{encoder_forward.13} parent=11 // pred_check_branch
          %123 = sbr.rel (%p121) target = $region16
        $region15: #{encoder_forward.13} parent=11 // pred_region
          _
        $region16: #{encoder_forward.13} parent=11 // pred_fallthru
          _
        // Predicated region
        $region17: #{encoder_forward.13} parent=11 // pred_check
          %p124 = pneg %p80
        $region18: #{encoder_forward.13} parent=11 // pred_check_branch
          %126 = sbr.rel (%p124) target = $region20
        $region19: #{encoder_forward.13} parent=11 // pred_region
          _
        $region20: #{encoder_forward.13} parent=11 // pred_fallthru
          _
      $region12: #{encoder_forward.13} parent=5 // pred_fallthru
        _
      %p127 = scmp.lt.s32.totalorder %s12, 2
      // Predicated region
      $region21: #{encoder_forward.13} parent=5 // pred_check
        %p128 = pneg %p127
      $region22: #{encoder_forward.13} parent=5 // pred_check_branch
        %130 = sbr.rel (%p128) target = $region24
      $region23: #{encoder_forward.13} parent=5 // pred_region
        // Predicated region
        $region25: #{encoder_forward.13} parent=23 // pred_check
          %p131 = pneg %p32
        $region26: #{encoder_forward.13} parent=23 // pred_check_branch
          %133 = sbr.rel (%p131) target = $region28
        $region27: #{encoder_forward.13} parent=23 // pred_region
          %p134 = scmp.lt.s32.totalorder %s12, 1
          %s135 = scalar_select %p134, %s12, 1
          %s136 = smul.addr %s135, 8
          %s137 = scalar_lea.vmem %s0, %s136
        $region28: #{encoder_forward.13} parent=23 // pred_fallthru
          _
      $region24: #{encoder_forward.13} parent=5 // pred_fallthru
        _
      %p138 = scmp.le.s32.totalorder 1, %s12
      %p139 = scmp.lt.s32.totalorder %s12, 3
      %p140 = pnand %p138, %p139
      %p141 = pneg %p140
      // Predicated region
      $region29: #{encoder_forward.13} parent=5 // pred_check
        _
      $region30: #{encoder_forward.13} parent=5 // pred_check_branch
        %143 = sbr.rel (%p140) target = $region32
      $region31: #{encoder_forward.13} parent=5 // pred_region
        %s144 = ssub.s32 %s12, 1
        %p145 = scmp.lt.s32.totalorder %s17, 1
        %s146 = scalar_select %p145, %s17, 1
        %s147 = smul.addr %s146, 8
        %s148 = scalar_lea.vmem %s0, %s147
        %p149 = pneg %p38
        %p150 = pneg %p35
        %p151 = pneg %p59
        %p152 = pneg %p56
        %p153 = pneg %p80
        %p154 = pneg %p77
        %p155 = pneg %p106
        %p156 = pneg %p103
        %s157 = sand.u32 %s93, 1
        %s158 = scalar_lea.sflag [#allocation3], %s157
        %s159 = sand.u32 %s93, 1
        %s160 = smul.addr %s159, 8
        %s161 = scalar_lea.vmem [#allocation2], %s160
        %p162 = scmp.lt.s32.totalorder %s17, 1
        %s163 = scalar_select %p162, %s17, 1
        %s164 = smul.addr %s163, 8
        %s165 = scalar_lea.vmem %s0, %s164
        %v166 = vld [vmem:[%s165] sm:$0xff]
        %v167 = vld [vmem:[%s1] sm:$0x1]
        %v168 = vld [vmem:[%s2] sm:$0x1]
        %169 = vadd.xlane.f32.xlu0 %v166
        %v170 = vpop.xlane.xlu0 %169
        %v171 = vmul.f32 %v170, 0.0078125
        %v172 = vmul.f32 %v166, %v166
        %173 = vadd.xlane.f32.xlu0 %v172
        %v174 = vpop.xlane.xlu0 %173
        %v175 = vmul.f32 %v174, 0.0078125
        %v176 = vmul.f32 %v171, %v171
        %v177 = vsub.f32 %v175, %v176
        %v178 = vsub.f32 %v166, %v171
        %v179 = vadd.f32 %v177, 1e-05
        %v180 = vrsqrt.pop %v179
        %v181 = vmul.f32 %v180, %v179
        %v182 = vmul.f32 %v181, %v180
        %v183 = vmul.f32 0.5, %v182
        %v184 = vsub.f32 1.5, %v183
        %v185 = vmul.f32 %v180, %v184
        %vm186 = vweird.f32 %v179
        %vm187 = vweird.f32 %v180
        %vm188 = vmor %vm186, %vm187
        %v189 = vsel %vm188, %v180, %v185
        %v190 = vmul.f32 %v178, %v189
        %v192 = vperm.slane %v167, 0
        %v194 = vmul.f32 %v190, %v192
        %v196 = vperm.slane %v168, 0
        %v198 = vadd.f32 %v194, %v196
        %199 = vst [vmem:[%s161] sm:$0xff] %v198
        %s200 = sand.u32 %s93, 1
        %s201 = scalar_lea.sflag [#allocation3], %s200
        %s202 = sand.u32 %s93, 1
        %s203 = smul.addr %s202, 8
        %s204 = scalar_lea.vmem [#allocation2], %s203
        // Predicated region
        $region33: #{encoder_forward.13} parent=31 // pred_check
          %p205 = pneg %p103
        $region34: #{encoder_forward.13} parent=31 // pred_check_branch
          %207 = sbr.rel (%p205) target = $region36
        $region35: #{encoder_forward.13} parent=31 // pred_region
          %209 = vsyncadd %s201, 0
          %s210 = smul.addr %s17, 8
          %s211 = scalar_lea.hbm %s3, %s210
          %s213 = sshll.u32 %s204, 4
          %s214 = int_to_ptr.vmem [resolvable:$true] %s213
          %s215 = sshll.u32 %s211, 4
          %s216 = int_to_ptr.hbm [resolvable:$true] %s215
          %218 = dma.vmem_to_hbm [thread:$0]  %s214, 128, %s216, %s201
        $region36: #{encoder_forward.13} parent=31 // pred_fallthru
          _
      $region32: #{encoder_forward.13} parent=5 // pred_fallthru
        _
      %p219 = scmp.le.s32.totalorder 2, %s12
      // Predicated region
      $region37: #{encoder_forward.13} parent=5 // pred_check
        %p220 = pneg %p219
      $region38: #{encoder_forward.13} parent=5 // pred_check_branch
        %222 = sbr.rel (%p220) target = $region40
      $region39: #{encoder_forward.13} parent=5 // pred_region
        %s223 = ssub.s32 %s12, 2
        // Predicated region
        $region41: #{encoder_forward.13} parent=39 // pred_check
          %p224 = pneg %p109
        $region42: #{encoder_forward.13} parent=39 // pred_check_branch
          %226 = sbr.rel (%p224) target = $region44
        $region43: #{encoder_forward.13} parent=39 // pred_region
          %s227 = sand.u32 %s94, 1
          %s228 = scalar_lea.sflag [#allocation3], %s227
          %s229 = sand.u32 %s94, 1
          %s230 = smul.addr %s229, 8
          %s231 = scalar_lea.vmem [#allocation2], %s230
          %233 = dma.done %s228, 128
        $region44: #{encoder_forward.13} parent=39 // pred_fallthru
          _
      $region40: #{encoder_forward.13} parent=5 // pred_fallthru
        _
    $region6: #{encoder_forward.13} parent=1 // loop_footer
      %s16 = sadd.s32 1, %s12
    $region7: #{encoder_forward.13} parent=1 // loop_footer_branch
      %11 = sbr.rel target = $region3
    $region8: #{encoder_forward.13} parent=1 // loop_exit
      _
    %234 = vsyncpa [#allocation3], 1
    %s235 = scalar_lea.sflag [#allocation3], 1
    %236 = vsyncpa %s235, 1

// kernel: encoder_forward.8
$region0: #{encoder_forward.8}
  #allocation0 [shape = 'u32[]', space=smem, size = 0x4, offset = 0x4, fixed_abs, tag = 'smem constant byte address 0x4 - core index']
  #allocation1 [shape = 'u32[72,128]{1,0:T(1,128)}', space=vmem, size = 0x9000, scoped, tag = 'internal scratch']
  #allocation2 [shape = 's32[1]{0}', space=sflag, size = 0x4, scoped, tag = 'scoped memory for encoder_forward.8']
  #allocation3 [shape = 's32[1]{0:T(128)S(6)}', space=smem, size = 0x200, scoped, tag = 'prefetched SMEM operand 0']
  %s0 = inlined_call_operand.<no memory space> [shape: s32[1], index: 0, kind: input, shape index: {}]
  %s1 = inlined_call_operand.vmem [shape: f32[2,8,128], index: 1, kind: input, shape index: {}]
  %s2 = inlined_call_operand.vmem [shape: f32[2,8,128], index: 2, kind: input, shape index: {}]
  %s3 = inlined_call_operand.vmem [shape: f32[2,8,128], index: 3, kind: input, shape index: {}]
  %s4 = inlined_call_operand.vmem [shape: f32[2,1,8], index: 4, kind: input, shape index: {}]
  %s5 = inlined_call_operand.vmem [shape: f32[2,8,128], index: 5, kind: input, shape index: {}]
  %s6 = inlined_call_operand.hbm [shape: f32[128,128], index: 6, kind: input, shape index: {}]
  %s7 = inlined_call_operand.vmem [shape: f32[1,128], index: 7, kind: input, shape index: {}]
  %s8 = inlined_call_operand.vmem [shape: f32[2,8,128], index: 8, kind: output, shape index: {}]
  %s9 = sld [smem:[#allocation0]]
  $region65: #{encoder_forward.8} parent=0
    _
  %s11 = ssub.s32 1, %s9
  %s12 = scalar_select 0, %s11, %s9
  %13 = sst [smem:[#allocation3]] %s0
  $region1: #{encoder_forward.8} parent=0
    #allocation4 [shape = 'u8[65536]{0}', space=vmem, size = 0x10000, scoped, tag = 'input window, operand 6, single buffered']
    #allocation5 [shape = 's32[2]{0}', space=sflag, size = 0x8, scoped, tag = 'scoped memory for encoder_forward.8']
    %14 = vsyncpa [#allocation5], 0
    loop: start=0, step=1, limit=4
    $region2: #{encoder_forward.8} parent=1 // loop_pre_header
      _
    $region3: #{encoder_forward.8} parent=1 // loop_header
      %s16 = sphi 0, %s20
      %p17 = scmp.ge.s32.totalorder %s16, 4
      %s26 = sphi 0, %s28
      %s29 = sphi 0, %s26
      %s30 = sphi 0, %s29
      %s46 = sphi 0, %s30
      %s52 = sphi 0, %s54
      %s55 = sphi 0, %s52
      %s56 = sphi 0, %s55
      %s72 = sphi 0, %s56
      %s78 = sphi 0, %s80
      %s81 = sphi 0, %s78
      %s82 = sphi 0, %s81
      %s98 = sphi 0, %s82
      %s104 = sphi 0, %s106
      %s107 = sphi 0, %s104
      %s108 = sphi 0, %s107
      %s124 = sphi 0, %s108
      %s130 = sphi 0, %s132
      %s133 = sphi 0, %s130
      %s134 = sphi 0, %s133
      %s150 = sphi 0, %s134
      %s154 = sphi 0, %s154
      %s156 = sphi 0, %s154
      %s157 = sphi 0, %s156
      %s171 = sphi 0, %s157
      %s175 = sphi 0, %s175
      %s177 = sphi 0, %s175
      %s178 = sphi 0, %s177
      %s192 = sphi 0, %s178
      %s198 = sphi 0, %s200
      %s201 = sphi 0, %s198
      %s202 = sphi 0, %s201
      %s218 = sphi 0, %s202
    $region4: #{encoder_forward.8} parent=1 // loop_header_branch
      %19 = sbr.rel (%p17) target = $region8
    $region5: #{encoder_forward.8} parent=1 // loop_body
      %s21 = ssub.s32 %s16, 1
      %s22 = ssub.s32 %s16, 2
      %s23 = sadd.s32 %s16, 1
      %s24 = ssub.s32 %s16, %s23
      %p25 = scmp.eq.s32.totalorder %s24, 0
      %s27 = sadd.s32 %s26, 1
      %s28 = scalar_select %p25, %s26, %s27
      %p31 = pneg %p25
      %p32 = scmp.eq.s32.totalorder %s16, 1
      %p33 = por %p31, %p32
      %p34 = scmp.ne.s32.totalorder %s26, %s29
      %p35 = scmp.eq.s32.totalorder %s16, 0
      %p36 = por %p34, %p35
      %p37 = scmp.ne.s32.totalorder %s26, %s29
      %p38 = scmp.eq.s32.totalorder %s21, 1
      %p39 = por %p37, %p38
      %p40 = scmp.ne.s32.totalorder %s29, %s30
      %p41 = scmp.eq.s32.totalorder %s21, 0
      %p42 = por %p40, %p41
      %p43 = scmp.ne.s32.totalorder %s29, %s30
      %p44 = scmp.eq.s32.totalorder %s22, 1
      %p45 = por %p43, %p44
      %p47 = scmp.ne.s32.totalorder %s30, %s46
      %p48 = scmp.eq.s32.totalorder %s22, 0
      %p49 = por %p47, %p48
      %s50 = ssub.s32 %s16, %s23
      %p51 = scmp.eq.s32.totalorder %s50, 0
      %s53 = sadd.s32 %s52, 1
      %s54 = scalar_select %p51, %s52, %s53
      %p57 = pneg %p51
      %p58 = scmp.eq.s32.totalorder %s16, 1
      %p59 = por %p57, %p58
      %p60 = scmp.ne.s32.totalorder %s52, %s55
      %p61 = scmp.eq.s32.totalorder %s16, 0
      %p62 = por %p60, %p61
      %p63 = scmp.ne.s32.totalorder %s52, %s55
      %p64 = scmp.eq.s32.totalorder %s21, 1
      %p65 = por %p63, %p64
      %p66 = scmp.ne.s32.totalorder %s55, %s56
      %p67 = scmp.eq.s32.totalorder %s21, 0
      %p68 = por %p66, %p67
      %p69 = scmp.ne.s32.totalorder %s55, %s56
      %p70 = scmp.eq.s32.totalorder %s22, 1
      %p71 = por %p69, %p70
      %p73 = scmp.ne.s32.totalorder %s56, %s72
      %p74 = scmp.eq.s32.totalorder %s22, 0
      %p75 = por %p73, %p74
      %s76 = ssub.s32 %s16, %s23
      %p77 = scmp.eq.s32.totalorder %s76, 0
      %s79 = sadd.s32 %s78, 1
      %s80 = scalar_select %p77, %s78, %s79
      %p83 = pneg %p77
      %p84 = scmp.eq.s32.totalorder %s16, 1
      %p85 = por %p83, %p84
      %p86 = scmp.ne.s32.totalorder %s78, %s81
      %p87 = scmp.eq.s32.totalorder %s16, 0
      %p88 = por %p86, %p87
      %p89 = scmp.ne.s32.totalorder %s78, %s81
      %p90 = scmp.eq.s32.totalorder %s21, 1
      %p91 = por %p89, %p90
      %p92 = scmp.ne.s32.totalorder %s81, %s82
      %p93 = scmp.eq.s32.totalorder %s21, 0
      %p94 = por %p92, %p93
      %p95 = scmp.ne.s32.totalorder %s81, %s82
      %p96 = scmp.eq.s32.totalorder %s22, 1
      %p97 = por %p95, %p96
      %p99 = scmp.ne.s32.totalorder %s82, %s98
      %p100 = scmp.eq.s32.totalorder %s22, 0
      %p101 = por %p99, %p100
      %s102 = ssub.s32 %s16, %s23
      %p103 = scmp.eq.s32.totalorder %s102, 0
      %s105 = sadd.s32 %s104, 1
      %s106 = scalar_select %p103, %s104, %s105
      %p109 = pneg %p103
      %p110 = scmp.eq.s32.totalorder %s16, 1
      %p111 = por %p109, %p110
      %p112 = scmp.ne.s32.totalorder %s104, %s107
      %p113 = scmp.eq.s32.totalorder %s16, 0
      %p114 = por %p112, %p113
      %p115 = scmp.ne.s32.totalorder %s104, %s107
      %p116 = scmp.eq.s32.totalorder %s21, 1
      %p117 = por %p115, %p116
      %p118 = scmp.ne.s32.totalorder %s107, %s108
      %p119 = scmp.eq.s32.totalorder %s21, 0
      %p120 = por %p118, %p119
      %p121 = scmp.ne.s32.totalorder %s107, %s108
      %p122 = scmp.eq.s32.totalorder %s22, 1
      %p123 = por %p121, %p122
      %p125 = scmp.ne.s32.totalorder %s108, %s124
      %p126 = scmp.eq.s32.totalorder %s22, 0
      %p127 = por %p125, %p126
      %s128 = ssub.s32 %s16, %s23
      %p129 = scmp.eq.s32.totalorder %s128, 0
      %s131 = sadd.s32 %s130, 1
      %s132 = scalar_select %p129, %s130, %s131
      %p135 = pneg %p129
      %p136 = scmp.eq.s32.totalorder %s16, 1
      %p137 = por %p135, %p136
      %p138 = scmp.ne.s32.totalorder %s130, %s133
      %p139 = scmp.eq.s32.totalorder %s16, 0
      %p140 = por %p138, %p139
      %p141 = scmp.ne.s32.totalorder %s130, %s133
      %p142 = scmp.eq.s32.totalorder %s21, 1
      %p143 = por %p141, %p142
      %p144 = scmp.ne.s32.totalorder %s133, %s134
      %p145 = scmp.eq.s32.totalorder %s21, 0
      %p146 = por %p144, %p145
      %p147 = scmp.ne.s32.totalorder %s133, %s134
      %p148 = scmp.eq.s32.totalorder %s22, 1
      %p149 = por %p147, %p148
      %p151 = scmp.ne.s32.totalorder %s134, %s150
      %p152 = scmp.eq.s32.totalorder %s22, 0
      %p153 = por %p151, %p152
      %s155 = sadd.s32 %s154, 1
      %p158 = scmp.eq.s32.totalorder %s16, 1
      %p159 = scmp.ne.s32.totalorder %s154, %s156
      %p160 = scmp.eq.s32.totalorder %s16, 0
      %p161 = por %p159, %p160
      %p162 = scmp.ne.s32.totalorder %s154, %s156
      %p163 = scmp.eq.s32.totalorder %s21, 1
      %p164 = por %p162, %p163
      %p165 = scmp.ne.s32.totalorder %s156, %s157
      %p166 = scmp.eq.s32.totalorder %s21, 0
      %p167 = por %p165, %p166
      %p168 = scmp.ne.s32.totalorder %s156, %s157
      %p169 = scmp.eq.s32.totalorder %s22, 1
      %p170 = por %p168, %p169
      %p172 = scmp.ne.s32.totalorder %s157, %s171
      %p173 = scmp.eq.s32.totalorder %s22, 0
      %p174 = por %p172, %p173
      %s176 = sadd.s32 %s175, 1
      %p179 = scmp.eq.s32.totalorder %s16, 1
      %p180 = scmp.ne.s32.totalorder %s175, %s177
      %p181 = scmp.eq.s32.totalorder %s16, 0
      %p182 = por %p180, %p181
      %p183 = scmp.ne.s32.totalorder %s175, %s177
      %p184 = scmp.eq.s32.totalorder %s21, 1
      %p185 = por %p183, %p184
      %p186 = scmp.ne.s32.totalorder %s177, %s178
      %p187 = scmp.eq.s32.totalorder %s21, 0
      %p188 = por %p186, %p187
      %p189 = scmp.ne.s32.totalorder %s177, %s178
      %p190 = scmp.eq.s32.totalorder %s22, 1
      %p191 = por %p189, %p190
      %p193 = scmp.ne.s32.totalorder %s178, %s192
      %p194 = scmp.eq.s32.totalorder %s22, 0
      %p195 = por %p193, %p194
      %s196 = ssub.s32 %s16, %s23
      %p197 = scmp.eq.s32.totalorder %s196, 0
      %s199 = sadd.s32 %s198, 1
      %s200 = scalar_select %p197, %s198, %s199
      %p203 = pneg %p197
      %p204 = scmp.eq.s32.totalorder %s16, 1
      %p205 = por %p203, %p204
      %p206 = scmp.ne.s32.totalorder %s198, %s201
      %p207 = scmp.eq.s32.totalorder %s16, 0
      %p208 = por %p206, %p207
      %p209 = scmp.ne.s32.totalorder %s198, %s201
      %p210 = scmp.eq.s32.totalorder %s21, 1
      %p211 = por %p209, %p210
      %p212 = scmp.ne.s32.totalorder %s201, %s202
      %p213 = scmp.eq.s32.totalorder %s21, 0
      %p214 = por %p212, %p213
      %p215 = scmp.ne.s32.totalorder %s201, %s202
      %p216 = scmp.eq.s32.totalorder %s22, 1
      %p217 = por %p215, %p216
      %p219 = scmp.ne.s32.totalorder %s202, %s218
      %p220 = scmp.eq.s32.totalorder %s22, 0
      %p221 = por %p219, %p220
      %p222 = scmp.le.s32.totalorder 1, %s16
      %p223 = scmp.lt.s32.totalorder %s16, 3
      %p224 = pnand %p222, %p223
      %p225 = pneg %p224
      // Predicated region
      $region9: #{encoder_forward.8} parent=5 // pred_check
        _
      $region10: #{encoder_forward.8} parent=5 // pred_check_branch
        %227 = sbr.rel (%p224) target = $region12
      $region11: #{encoder_forward.8} parent=5 // pred_region
        %s228 = ssub.s32 %s16, 1
        // Predicated region
        $region13: #{encoder_forward.8} parent=11 // pred_check
          %p229 = pneg %p167
        $region14: #{encoder_forward.8} parent=11 // pred_check_branch
          %231 = sbr.rel (%p229) target = $region16
        $region15: #{encoder_forward.8} parent=11 // pred_region
          %233 = vsyncadd [#allocation5], 0
          %s234 = sshll.u32 %s6, 4
          %s235 = int_to_ptr.hbm [resolvable:$true] %s234
          %s236 = sshll.u32 [#allocation4], 4
          %s237 = int_to_ptr.vmem [resolvable:$true] %s236
          %242 = dma.hbm_to_vmem [thread:$0]  %s235, 2048, %s237, [#allocation5], 128, 128, 8
        $region16: #{encoder_forward.8} parent=11 // pred_fallthru
          _
        // Predicated region
        $region17: #{encoder_forward.8} parent=11 // pred_check
          %p243 = pneg %p188
        $region18: #{encoder_forward.8} parent=11 // pred_check_branch
          %245 = sbr.rel (%p243) target = $region20
        $region19: #{encoder_forward.8} parent=11 // pred_region
          _
        $region20: #{encoder_forward.8} parent=11 // pred_fallthru
          _
      $region12: #{encoder_forward.8} parent=5 // pred_fallthru
        _
      %p246 = scmp.lt.s32.totalorder %s16, 2
      // Predicated region
      $region21: #{encoder_forward.8} parent=5 // pred_check
        %p247 = pneg %p246
      $region22: #{encoder_forward.8} parent=5 // pred_check_branch
        %249 = sbr.rel (%p247) target = $region24
      $region23: #{encoder_forward.8} parent=5 // pred_region
        // Predicated region
        $region25: #{encoder_forward.8} parent=23 // pred_check
          %p250 = pneg %p36
        $region26: #{encoder_forward.8} parent=23 // pred_check_branch
          %252 = sbr.rel (%p250) target = $region28
        $region27: #{encoder_forward.8} parent=23 // pred_region
          %p253 = scmp.lt.s32.totalorder %s16, 1
          %s254 = scalar_select %p253, %s16, 1
          %s255 = smul.addr %s254, 8
          %s256 = scalar_lea.vmem %s1, %s255
        $region28: #{encoder_forward.8} parent=23 // pred_fallthru
          _
        // Predicated region
        $region29: #{encoder_forward.8} parent=23 // pred_check
          %p257 = pneg %p62
        $region30: #{encoder_forward.8} parent=23 // pred_check_branch
          %259 = sbr.rel (%p257) target = $region32
        $region31: #{encoder_forward.8} parent=23 // pred_region
          %p260 = scmp.lt.s32.totalorder %s16, 1
          %s261 = scalar_select %p260, %s16, 1
          %s262 = smul.addr %s261, 8
          %s263 = scalar_lea.vmem %s2, %s262
        $region32: #{encoder_forward.8} parent=23 // pred_fallthru
          _
        // Predicated region
        $region33: #{encoder_forward.8} parent=23 // pred_check
          %p264 = pneg %p88
        $region34: #{encoder_forward.8} parent=23 // pred_check_branch
          %266 = sbr.rel (%p264) target = $region36
        $region35: #{encoder_forward.8} parent=23 // pred_region
          %p267 = scmp.lt.s32.totalorder %s16, 1
          %s268 = scalar_select %p267, %s16, 1
          %s269 = smul.addr %s268, 8
          %s270 = scalar_lea.vmem %s3, %s269
        $region36: #{encoder_forward.8} parent=23 // pred_fallthru
          _
        // Predicated region
        $region37: #{encoder_forward.8} parent=23 // pred_check
          %p271 = pneg %p114
        $region38: #{encoder_forward.8} parent=23 // pred_check_branch
          %273 = sbr.rel (%p271) target = $region40
        $region39: #{encoder_forward.8} parent=23 // pred_region
          %p274 = scmp.lt.s32.totalorder %s16, 1
          %s275 = scalar_select %p274, %s16, 1
          %s276 = scalar_lea.vmem %s4, %s275
        $region40: #{encoder_forward.8} parent=23 // pred_fallthru
          _
        // Predicated region
        $region41: #{encoder_forward.8} parent=23 // pred_check
          %p277 = pneg %p140
        $region42: #{encoder_forward.8} parent=23 // pred_check_branch
          %279 = sbr.rel (%p277) target = $region44
        $region43: #{encoder_forward.8} parent=23 // pred_region
          %p280 = scmp.lt.s32.totalorder %s16, 1
          %s281 = scalar_select %p280, %s16, 1
          %s282 = smul.addr %s281, 8
          %s283 = scalar_lea.vmem %s5, %s282
        $region44: #{encoder_forward.8} parent=23 // pred_fallthru
          _
      $region24: #{encoder_forward.8} parent=5 // pred_fallthru
        _
      %p284 = scmp.le.s32.totalorder 1, %s16
      %p285 = scmp.lt.s32.totalorder %s16, 3
      %p286 = pnand %p284, %p285
      %p287 = pneg %p286
      // Predicated region
      $region45: #{encoder_forward.8} parent=5 // pred_check
        _
      $region46: #{encoder_forward.8} parent=5 // pred_check_branch
        %289 = sbr.rel (%p286) target = $region48
      $region47: #{encoder_forward.8} parent=5 // pred_region
        %s290 = ssub.s32 %s16, 1
        // Predicated region
        $region49: #{encoder_forward.8} parent=47 // pred_check
          %p291 = pneg %p167
        $region50: #{encoder_forward.8} parent=47 // pred_check_branch
          %293 = sbr.rel (%p291) target = $region52
        $region51: #{encoder_forward.8} parent=47 // pred_region
          %295 = dma.done [#allocation5], 2048
        $region52: #{encoder_forward.8} parent=47 // pred_fallthru
          _
        %p296 = scmp.lt.s32.totalorder %s21, 1
        %s297 = scalar_select %p296, %s21, 1
        %s298 = smul.addr %s297, 8
        %s299 = scalar_lea.vmem %s1, %s298
        %p300 = pneg %p42
        %p301 = pneg %p39
        %p302 = scmp.lt.s32.totalorder %s21, 1
        %s303 = scalar_select %p302, %s21, 1
        %s304 = smul.addr %s303, 8
        %s305 = scalar_lea.vmem %s2, %s304
        %p306 = pneg %p68
        %p307 = pneg %p65
        %p308 = scmp.lt.s32.totalorder %s21, 1
        %s309 = scalar_select %p308, %s21, 1
        %s310 = smul.addr %s309, 8
        %s311 = scalar_lea.vmem %s3, %s310
        %p312 = pneg %p94
        %p313 = pneg %p91
        %p314 = scmp.lt.s32.totalorder %s21, 1
        %s315 = scalar_select %p314, %s21, 1
        %s316 = scalar_lea.vmem %s4, %s315
        %p317 = pneg %p120
        %p318 = pneg %p117
        %p319 = scmp.lt.s32.totalorder %s21, 1
        %s320 = scalar_select %p319, %s21, 1
        %s321 = smul.addr %s320, 8
        %s322 = scalar_lea.vmem %s5, %s321
        %p323 = pneg %p146
        %p324 = pneg %p143
        %p325 = pneg %p167
        %p326 = pneg %p164
        %p327 = pneg %p188
        %p328 = pneg %p185
        %p329 = pneg %p214
        %p330 = pneg %p211
        %p331 = scmp.lt.s32.totalorder %s21, 1
        %s332 = scalar_select %p331, %s21, 1
        %s333 = smul.addr %s332, 8
        %s334 = scalar_lea.vmem %s8, %s333
        %p335 = scmp.lt.s32.totalorder %s21, 1
        %s336 = scalar_select %p335, %s21, 1
        %s337 = smul.addr %s336, 8
        %s338 = scalar_lea.vmem %s1, %s337
        %p339 = scmp.lt.s32.totalorder %s21, 1
        %s340 = scalar_select %p339, %s21, 1
        %s341 = smul.addr %s340, 8
        %s342 = scalar_lea.vmem %s2, %s341
        %p343 = scmp.lt.s32.totalorder %s21, 1
        %s344 = scalar_select %p343, %s21, 1
        %s345 = smul.addr %s344, 8
        %s346 = scalar_lea.vmem %s3, %s345
        %p347 = scmp.lt.s32.totalorder %s21, 1
        %s348 = scalar_select %p347, %s21, 1
        %s349 = scalar_lea.vmem %s4, %s348
        %p350 = scmp.lt.s32.totalorder %s21, 1
        %s351 = scalar_select %p350, %s21, 1
        %s352 = smul.addr %s351, 8
        %s353 = scalar_lea.vmem %s5, %s352
        %p354 = scmp.lt.s32.totalorder %s21, 1
        %s355 = scalar_select %p354, %s21, 1
        %s356 = smul.addr %s355, 8
        %s357 = scalar_lea.vmem %s8, %s356
        %v358 = vld [vmem:[%s338] sm:$0xff]
        %v359 = vld [vmem:[%s342] sm:$0xff]
        %v360 = vld [vmem:[%s346] sm:$0xff]
        %v361 = vld [vmem:[%s349] sm:$0x1]
        %vm362 = vcmask 130048
        %v364 = vsel %vm362, %v358, 0
        %v367 = vsel %vm362, %v359, 0
        %369 = vmatpush.xpose.msra.mxu0 0.0
        %370 = vmatpush.xpose.msra.mxu0 0.0
        %371 = vmatpush.xpose.msra.mxu0 0.0
        %372 = vmatpush.xpose.msra.mxu0 0.0
        %373 = vmatpush.xpose.msra.mxu0 0.0
        %374 = vmatpush.xpose.msra.mxu0 0.0
        %375 = vmatpush.xpose.msra.mxu0 0.0
        %376 = vmatpush.xpose.msra.mxu0 0.0
        %377 = vmatpush.xpose.msra.mxu0 0.0
        %378 = vmatpush.xpose.msra.mxu0 0.0
        %379 = vmatpush.xpose.msra.mxu0 0.0
        %380 = vmatpush.xpose.msra.mxu0 0.0
        %381 = vmatpush.xpose.msra.mxu0 0.0
        %382 = vmatpush.xpose.msra.mxu0 0.0
        %383 = vmatpush.xpose.msra.mxu0 0.0
        %v384 = vand.u32 %v367, 4294901760
        %385 = vmatpush.xpose.msra.mxu0 %v384
        %v386 = vand.u32 %v364, 4294901760
        %v387 = vsub.f32 %v364, %v386
        %v388 = vand.u32 %v387, 4294901760
        %v389 = vsub.f32 %v387, %v388
        %v390 = vand.u32 %v389, 4294901760
        %391 = vmatmul.f32.gmra.mxu0 %v390
        %v392 = vpop.f32.mrf.mxu0
        %v393 = vadd.f32 0.0, %v392
        %394 = vdwg.mxu0
        %395 = vmatpush.xpose.msra.mxu0 0.0
        %396 = vmatpush.xpose.msra.mxu0 0.0
        %397 = vmatpush.xpose.msra.mxu0 0.0
        %398 = vmatpush.xpose.msra.mxu0 0.0
        %399 = vmatpush.xpose.msra.mxu0 0.0
        %400 = vmatpush.xpose.msra.mxu0 0.0
        %401 = vmatpush.xpose.msra.mxu0 0.0
        %402 = vmatpush.xpose.msra.mxu0 0.0
        %403 = vmatpush.xpose.msra.mxu0 0.0
        %404 = vmatpush.xpose.msra.mxu0 0.0
        %405 = vmatpush.xpose.msra.mxu0 0.0
        %406 = vmatpush.xpose.msra.mxu0 0.0
        %407 = vmatpush.xpose.msra.mxu0 0.0
        %408 = vmatpush.xpose.msra.mxu0 0.0
        %409 = vmatpush.xpose.msra.mxu0 0.0
        %v410 = vand.u32 %v367, 4294901760
        %v411 = vsub.f32 %v367, %v410
        %v412 = vand.u32 %v411, 4294901760
        %v413 = vsub.f32 %v411, %v412
        %v414 = vand.u32 %v413, 4294901760
        %415 = vmatpush.xpose.msra.mxu0 %v414
        %v416 = vand.u32 %v364, 4294901760
        %417 = vmatmul.f32.gmra.mxu0 %v416
        %v418 = vpop.f32.mrf.mxu0
        %v419 = vadd.f32 %v393, %v418
        %420 = vdwg.mxu0
        %421 = vmatpush.xpose.msra.mxu0 0.0
        %422 = vmatpush.xpose.msra.mxu0 0.0
        %423 = vmatpush.xpose.msra.mxu0 0.0
        %424 = vmatpush.xpose.msra.mxu0 0.0
        %425 = vmatpush.xpose.msra.mxu0 0.0
        %426 = vmatpush.xpose.msra.mxu0 0.0
        %427 = vmatpush.xpose.msra.mxu0 0.0
        %428 = vmatpush.xpose.msra.mxu0 0.0
        %429 = vmatpush.xpose.msra.mxu0 0.0
        %430 = vmatpush.xpose.msra.mxu0 0.0
        %431 = vmatpush.xpose.msra.mxu0 0.0
        %432 = vmatpush.xpose.msra.mxu0 0.0
        %433 = vmatpush.xpose.msra.mxu0 0.0
        %434 = vmatpush.xpose.msra.mxu0 0.0
        %435 = vmatpush.xpose.msra.mxu0 0.0
        %v436 = vand.u32 %v367, 4294901760
        %v437 = vsub.f32 %v367, %v436
        %438 = vmatpush.xpose.msra.mxu0 %v437
        %v439 = vand.u32 %v364, 4294901760
        %v440 = vsub.f32 %v364, %v439
        %441 = vmatmul.f32.gmra.mxu0 %v440
        %v442 = vpop.f32.mrf.mxu0
        %v443 = vadd.f32 %v419, %v442
        %444 = vdwg.mxu0
        %445 = vmatpush.xpose.msra.mxu0 0.0
        %446 = vmatpush.xpose.msra.mxu0 0.0
        %447 = vmatpush.xpose.msra.mxu0 0.0
        %448 = vmatpush.xpose.msra.mxu0 0.0
        %449 = vmatpush.xpose.msra.mxu0 0.0
        %450 = vmatpush.xpose.msra.mxu0 0.0
        %451 = vmatpush.xpose.msra.mxu0 0.0
        %452 = vmatpush.xpose.msra.mxu0 0.0
        %453 = vmatpush.xpose.msra.mxu0 0.0
        %454 = vmatpush.xpose.msra.mxu0 0.0
        %455 = vmatpush.xpose.msra.mxu0 0.0
        %456 = vmatpush.xpose.msra.mxu0 0.0
        %457 = vmatpush.xpose.msra.mxu0 0.0
        %458 = vmatpush.xpose.msra.mxu0 0.0
        %459 = vmatpush.xpose.msra.mxu0 0.0
        %v460 = vand.u32 %v367, 4294901760
        %461 = vmatpush.xpose.msra.mxu0 %v460
        %v462 = vand.u32 %v364, 4294901760
        %v463 = vsub.f32 %v364, %v462
        %v464 = vand.u32 %v463, 4294901760
        %465 = vmatmul.f32.gmra.mxu0 %v464
        %v466 = vpop.f32.mrf.mxu0
        %v467 = vadd.f32 %v443, %v466
        %468 = vdwg.mxu0
        %469 = vmatpush.xpose.msra.mxu0 0.0
        %470 = vmatpush.xpose.msra.mxu0 0.0
        %471 = vmatpush.xpose.msra.mxu0 0.0
        %472 = vmatpush.xpose.msra.mxu0 0.0
        %473 = vmatpush.xpose.msra.mxu0 0.0
        %474 = vmatpush.xpose.msra.mxu0 0.0
        %475 = vmatpush.xpose.msra.mxu0 0.0
        %476 = vmatpush.xpose.msra.mxu0 0.0
        %477 = vmatpush.xpose.msra.mxu0 0.0
        %478 = vmatpush.xpose.msra.mxu0 0.0
        %479 = vmatpush.xpose.msra.mxu0 0.0
        %480 = vmatpush.xpose.msra.mxu0 0.0
        %481 = vmatpush.xpose.msra.mxu0 0.0
        %482 = vmatpush.xpose.msra.mxu0 0.0
        %483 = vmatpush.xpose.msra.mxu0 0.0
        %v484 = vand.u32 %v367, 4294901760
        %v485 = vsub.f32 %v367, %v484
        %v486 = vand.u32 %v485, 4294901760
        %487 = vmatpush.xpose.msra.mxu0 %v486
        %v488 = vand.u32 %v364, 4294901760
        %489 = vmatmul.f32.gmra.mxu0 %v488
        %v490 = vpop.f32.mrf.mxu0
        %v491 = vadd.f32 %v467, %v490
        %492 = vdwg.mxu0
        %493 = vmatpush.xpose.msra.mxu0 0.0
        %494 = vmatpush.xpose.msra.mxu0 0.0
        %495 = vmatpush.xpose.msra.mxu0 0.0
        %496 = vmatpush.xpose.msra.mxu0 0.0
        %497 = vmatpush.xpose.msra.mxu0 0.0
        %498 = vmatpush.xpose.msra.mxu0 0.0
        %499 = vmatpush.xpose.msra.mxu0 0.0
        %500 = vmatpush.xpose.msra.mxu0 0.0
        %501 = vmatpush.xpose.msra.mxu0 0.0
        %502 = vmatpush.xpose.msra.mxu0 0.0
        %503 = vmatpush.xpose.msra.mxu0 0.0
        %504 = vmatpush.xpose.msra.mxu0 0.0
        %505 = vmatpush.xpose.msra.mxu0 0.0
        %506 = vmatpush.xpose.msra.mxu0 0.0
        %507 = vmatpush.xpose.msra.mxu0 0.0
        %v508 = vand.u32 %v367, 4294901760
        %509 = vmatpush.xpose.msra.mxu0 %v508
        %v510 = vand.u32 %v364, 4294901760
        %511 = vmatmul.f32.gmra.mxu0 %v510
        %v512 = vpop.f32.mrf.mxu0
        %v513 = vadd.f32 %v491, %v512
        %514 = vdwg.mxu0
        %v515 = vmul.f32 %v513, 0.25
        %v517 = vperm.slane %v361, 0
        %v519 = vadd.f32 %v515, %v517
        %vm520 = vcmask 64512
        %v521 = vsel %vm520, %v519, -inf
        %522 = vmax.xlane.f32.xlu0 %v521
        %v523 = vpop.xlane.xlu0 %522
        %v524 = vsub.f32 %v519, %v523
        %v525 = vmul.f32 %v524, 1.442695
        %v526 = vpow.pop %v525
        %v527 = vsel %vm520, %v526, 0.0
        %528 = vadd.xlane.f32.xlu0 %v527
        %v529 = vpop.xlane.xlu0 %528
        %v530 = vrcp.pop %v529
        %v531 = vmul.f32 %v529, %v530
        %v532 = vsub.f32 1.0, %v531
        %v533 = vmul.f32 %v530, %v532
        %v534 = vadd.f32 %v530, %v533
        %vm535 = vweird.f32 %v529
        %vm536 = vweird.f32 %v530
        %vm537 = vmor %vm535, %vm536
        %v538 = vsel %vm537, %v530, %v534
        %v539 = vand.u32 2147483647, %v529
        %vm540 = vcmp.eq.f32.partialorder %v539, 8.507059e+37
        %v541 = vand.u32 %v529, 2147483648
        %v542 = vor.u32 1.1754944e-38, %v541
        %v543 = vsel %vm540, %v542, %v538
        %v544 = vmul.f32 %v526, %v543
        %v546 = vsel %vm520, %v544, 0
        %548 = vmatpush.msra.mxu0 0.0
        %549 = vmatpush.msra.mxu0 0.0
        %550 = vmatpush.msra.mxu0 0.0
        %551 = vmatpush.msra.mxu0 0.0
        %552 = vmatpush.msra.mxu0 0.0
        %553 = vmatpush.msra.mxu0 0.0
        %554 = vmatpush.msra.mxu0 0.0
        %555 = vmatpush.msra.mxu0 0.0
        %556 = vmatpush.msra.mxu0 0.0
        %557 = vmatpush.msra.mxu0 0.0
        %558 = vmatpush.msra.mxu0 0.0
        %559 = vmatpush.msra.mxu0 0.0
        %560 = vmatpush.msra.mxu0 0.0
        %561 = vmatpush.msra.mxu0 0.0
        %562 = vmatpush.msra.mxu0 0.0
        %v563 = vand.u32 %v360, 4294901760
        %564 = vmatpush.msra.mxu0 %v563
        %v565 = vand.u32 %v546, 4294901760
        %v566 = vsub.f32 %v546, %v565
        %v567 = vand.u32 %v566, 4294901760
        %v568 = vsub.f32 %v566, %v567
        %v569 = vand.u32 %v568, 4294901760
        %570 = vmatmul.f32.gmra.mxu0 %v569
        %v571 = vpop.f32.mrf.mxu0
        %v572 = vadd.f32 0.0, %v571
        %573 = vdwg.mxu0
        %574 = vmatpush.msra.mxu0 0.0
        %575 = vmatpush.msra.mxu0 0.0
        %576 = vmatpush.msra.mxu0 0.0
        %577 = vmatpush.msra.mxu0 0.0
        %578 = vmatpush.msra.mxu0 0.0
        %579 = vmatpush.msra.mxu0 0.0
        %580 = vmatpush.msra.mxu0 0.0
        %581 = vmatpush.msra.mxu0 0.0
        %582 = vmatpush.msra.mxu0 0.0
        %583 = vmatpush.msra.mxu0 0.0
        %584 = vmatpush.msra.mxu0 0.0
        %585 = vmatpush.msra.mxu0 0.0
        %586 = vmatpush.msra.mxu0 0.0
        %587 = vmatpush.msra.mxu0 0.0
        %588 = vmatpush.msra.mxu0 0.0
        %v589 = vand.u32 %v360, 4294901760
        %v590 = vsub.f32 %v360, %v589
        %v591 = vand.u32 %v590, 4294901760
        %v592 = vsub.f32 %v590, %v591
        %v593 = vand.u32 %v592, 4294901760
        %594 = vmatpush.msra.mxu0 %v593
        %v595 = vand.u32 %v546, 4294901760
        %596 = vmatmul.f32.gmra.mxu0 %v595
        %v597 = vpop.f32.mrf.mxu0
        %v598 = vadd.f32 %v572, %v597
        %599 = vdwg.mxu0
        %600 = vmatpush.msra.mxu0 0.0
        %601 = vmatpush.msra.mxu0 0.0
        %602 = vmatpush.msra.mxu0 0.0
        %603 = vmatpush.msra.mxu0 0.0
        %604 = vmatpush.msra.mxu0 0.0
        %605 = vmatpush.msra.mxu0 0.0
        %606 = vmatpush.msra.mxu0 0.0
        %607 = vmatpush.msra.mxu0 0.0
        %608 = vmatpush.msra.mxu0 0.0
        %609 = vmatpush.msra.mxu0 0.0
        %610 = vmatpush.msra.mxu0 0.0
        %611 = vmatpush.msra.mxu0 0.0
        %612 = vmatpush.msra.mxu0 0.0
        %613 = vmatpush.msra.mxu0 0.0
        %614 = vmatpush.msra.mxu0 0.0
        %v615 = vand.u32 %v360, 4294901760
        %v616 = vsub.f32 %v360, %v615
        %617 = vmatpush.msra.mxu0 %v616
        %v618 = vand.u32 %v546, 4294901760
        %v619 = vsub.f32 %v546, %v618
        %620 = vmatmul.f32.gmra.mxu0 %v619
        %v621 = vpop.f32.mrf.mxu0
        %v622 = vadd.f32 %v598, %v621
        %623 = vdwg.mxu0
        %624 = vmatpush.msra.mxu0 0.0
        %625 = vmatpush.msra.mxu0 0.0
        %626 = vmatpush.msra.mxu0 0.0
        %627 = vmatpush.msra.mxu0 0.0
        %628 = vmatpush.msra.mxu0 0.0
        %629 = vmatpush.msra.mxu0 0.0
        %630 = vmatpush.msra.mxu0 0.0
        %631 = vmatpush.msra.mxu0 0.0
        %632 = vmatpush.msra.mxu0 0.0
        %633 = vmatpush.msra.mxu0 0.0
        %634 = vmatpush.msra.mxu0 0.0
        %635 = vmatpush.msra.mxu0 0.0
        %636 = vmatpush.msra.mxu0 0.0
        %637 = vmatpush.msra.mxu0 0.0
        %638 = vmatpush.msra.mxu0 0.0
        %v639 = vand.u32 %v360, 4294901760
        %640 = vmatpush.msra.mxu0 %v639
        %v641 = vand.u32 %v546, 4294901760
        %v642 = vsub.f32 %v546, %v641
        %v643 = vand.u32 %v642, 4294901760
        %644 = vmatmul.f32.gmra.mxu0 %v643
        %v645 = vpop.f32.mrf.mxu0
        %v646 = vadd.f32 %v622, %v645
        %647 = vdwg.mxu0
        %648 = vmatpush.msra.mxu0 0.0
        %649 = vmatpush.msra.mxu0 0.0
        %650 = vmatpush.msra.mxu0 0.0
        %651 = vmatpush.msra.mxu0 0.0
        %652 = vmatpush.msra.mxu0 0.0
        %653 = vmatpush.msra.mxu0 0.0
        %654 = vmatpush.msra.mxu0 0.0
        %655 = vmatpush.msra.mxu0 0.0
        %656 = vmatpush.msra.mxu0 0.0
        %657 = vmatpush.msra.mxu0 0.0
        %658 = vmatpush.msra.mxu0 0.0
        %659 = vmatpush.msra.mxu0 0.0
        %660 = vmatpush.msra.mxu0 0.0
        %661 = vmatpush.msra.mxu0 0.0
        %662 = vmatpush.msra.mxu0 0.0
        %v663 = vand.u32 %v360, 4294901760
        %v664 = vsub.f32 %v360, %v663
        %v665 = vand.u32 %v664, 4294901760
        %666 = vmatpush.msra.mxu0 %v665
        %v667 = vand.u32 %v546, 4294901760
        %668 = vmatmul.f32.gmra.mxu0 %v667
        %v669 = vpop.f32.mrf.mxu0
        %v670 = vadd.f32 %v646, %v669
        %671 = vdwg.mxu0
        %672 = vmatpush.msra.mxu0 0.0
        %673 = vmatpush.msra.mxu0 0.0
        %674 = vmatpush.msra.mxu0 0.0
        %675 = vmatpush.msra.mxu0 0.0
        %676 = vmatpush.msra.mxu0 0.0
        %677 = vmatpush.msra.mxu0 0.0
        %678 = vmatpush.msra.mxu0 0.0
        %679 = vmatpush.msra.mxu0 0.0
        %680 = vmatpush.msra.mxu0 0.0
        %681 = vmatpush.msra.mxu0 0.0
        %682 = vmatpush.msra.mxu0 0.0
        %683 = vmatpush.msra.mxu0 0.0
        %684 = vmatpush.msra.mxu0 0.0
        %685 = vmatpush.msra.mxu0 0.0
        %686 = vmatpush.msra.mxu0 0.0
        %v687 = vand.u32 %v360, 4294901760
        %688 = vmatpush.msra.mxu0 %v687
        %v689 = vand.u32 %v546, 4294901760
        %690 = vmatmul.f32.gmra.mxu0 %v689
        %v691 = vpop.f32.mrf.mxu0
        %v692 = vadd.f32 %v670, %v691
        %693 = vdwg.mxu0
        %694 = vrot.lane.b32.xlu0 %v358, 112
        %v695 = vpop.permute.xlu0 %694
        %696 = vrot.lane.b32.xlu0 %v359, 112
        %v697 = vpop.permute.xlu0 %696
        %v698 = vsel %vm362, %v695, 0
        %v700 = vsel %vm362, %v697, 0
        %702 = vmatpush.xpose.msra.mxu0 0.0
        %703 = vmatpush.xpose.msra.mxu0 0.0
        %704 = vmatpush.xpose.msra.mxu0 0.0
        %705 = vmatpush.xpose.msra.mxu0 0.0
        %706 = vmatpush.xpose.msra.mxu0 0.0
        %707 = vmatpush.xpose.msra.mxu0 0.0
        %708 = vmatpush.xpose.msra.mxu0 0.0
        %709 = vmatpush.xpose.msra.mxu0 0.0
        %710 = vmatpush.xpose.msra.mxu0 0.0
        %711 = vmatpush.xpose.msra.mxu0 0.0
        %712 = vmatpush.xpose.msra.mxu0 0.0
        %713 = vmatpush.xpose.msra.mxu0 0.0
        %714 = vmatpush.xpose.msra.mxu0 0.0
        %715 = vmatpush.xpose.msra.mxu0 0.0
        %716 = vmatpush.xpose.msra.mxu0 0.0
        %v717 = vand.u32 %v700, 4294901760
        %718 = vmatpush.xpose.msra.mxu0 %v717
        %v719 = vand.u32 %v698, 4294901760
        %v720 = vsub.f32 %v698, %v719
        %v721 = vand.u32 %v720, 4294901760
        %v722 = vsub.f32 %v720, %v721
        %v723 = vand.u32 %v722, 4294901760
        %724 = vmatmul.f32.gmra.mxu0 %v723
        %v725 = vpop.f32.mrf.mxu0
        %v726 = vadd.f32 0.0, %v725
        %727 = vdwg.mxu0
        %728 = vmatpush.xpose.msra.mxu0 0.0
        %729 = vmatpush.xpose.msra.mxu0 0.0
        %730 = vmatpush.xpose.msra.mxu0 0.0
        %731 = vmatpush.xpose.msra.mxu0 0.0
        %732 = vmatpush.xpose.msra.mxu0 0.0
        %733 = vmatpush.xpose.msra.mxu0 0.0
        %734 = vmatpush.xpose.msra.mxu0 0.0
        %735 = vmatpush.xpose.msra.mxu0 0.0
        %736 = vmatpush.xpose.msra.mxu0 0.0
        %737 = vmatpush.xpose.msra.mxu0 0.0
        %738 = vmatpush.xpose.msra.mxu0 0.0
        %739 = vmatpush.xpose.msra.mxu0 0.0
        %740 = vmatpush.xpose.msra.mxu0 0.0
        %741 = vmatpush.xpose.msra.mxu0 0.0
        %742 = vmatpush.xpose.msra.mxu0 0.0
        %v743 = vand.u32 %v700, 4294901760
        %v744 = vsub.f32 %v700, %v743
        %v745 = vand.u32 %v744, 4294901760
        %v746 = vsub.f32 %v744, %v745
        %v747 = vand.u32 %v746, 4294901760
        %748 = vmatpush.xpose.msra.mxu0 %v747
        %v749 = vand.u32 %v698, 4294901760
        %750 = vmatmul.f32.gmra.mxu0 %v749
        %v751 = vpop.f32.mrf.mxu0
        %v752 = vadd.f32 %v726, %v751
        %753 = vdwg.mxu0
        %754 = vmatpush.xpose.msra.mxu0 0.0
        %755 = vmatpush.xpose.msra.mxu0 0.0
        %756 = vmatpush.xpose.msra.mxu0 0.0
        %757 = vmatpush.xpose.msra.mxu0 0.0
        %758 = vmatpush.xpose.msra.mxu0 0.0
        %759 = vmatpush.xpose.msra.mxu0 0.0
        %760 = vmatpush.xpose.msra.mxu0 0.0
        %761 = vmatpush.xpose.msra.mxu0 0.0
        %762 = vmatpush.xpose.msra.mxu0 0.0
        %763 = vmatpush.xpose.msra.mxu0 0.0
        %764 = vmatpush.xpose.msra.mxu0 0.0
        %765 = vmatpush.xpose.msra.mxu0 0.0
        %766 = vmatpush.xpose.msra.mxu0 0.0
        %767 = vmatpush.xpose.msra.mxu0 0.0
        %768 = vmatpush.xpose.msra.mxu0 0.0
        %v769 = vand.u32 %v700, 4294901760
        %v770 = vsub.f32 %v700, %v769
        %771 = vmatpush.xpose.msra.mxu0 %v770
        %v772 = vand.u32 %v698, 4294901760
        %v773 = vsub.f32 %v698, %v772
        %774 = vmatmul.f32.gmra.mxu0 %v773
        %v775 = vpop.f32.mrf.mxu0
        %v776 = vadd.f32 %v752, %v775
        %777 = vdwg.mxu0
        %778 = vmatpush.xpose.msra.mxu0 0.0
        %779 = vmatpush.xpose.msra.mxu0 0.0
        %780 = vmatpush.xpose.msra.mxu0 0.0
        %781 = vmatpush.xpose.msra.mxu0 0.0
        %782 = vmatpush.xpose.msra.mxu0 0.0
        %783 = vmatpush.xpose.msra.mxu0 0.0
        %784 = vmatpush.xpose.msra.mxu0 0.0
        %785 = vmatpush.xpose.msra.mxu0 0.0
        %786 = vmatpush.xpose.msra.mxu0 0.0
        %787 = vmatpush.xpose.msra.mxu0 0.0
        %788 = vmatpush.xpose.msra.mxu0 0.0
        %789 = vmatpush.xpose.msra.mxu0 0.0
        %790 = vmatpush.xpose.msra.mxu0 0.0
        %791 = vmatpush.xpose.msra.mxu0 0.0
        %792 = vmatpush.xpose.msra.mxu0 0.0
        %v793 = vand.u32 %v700, 4294901760
        %794 = vmatpush.xpose.msra.mxu0 %v793
        %v795 = vand.u32 %v698, 4294901760
        %v796 = vsub.f32 %v698, %v795
        %v797 = vand.u32 %v796, 4294901760
        %798 = vmatmul.f32.gmra.mxu0 %v797
        %v799 = vpop.f32.mrf.mxu0
        %v800 = vadd.f32 %v776, %v799
        %801 = vdwg.mxu0
        %802 = vmatpush.xpose.msra.mxu0 0.0
        %803 = vmatpush.xpose.msra.mxu0 0.0
        %804 = vmatpush.xpose.msra.mxu0 0.0
        %805 = vmatpush.xpose.msra.mxu0 0.0
        %806 = vmatpush.xpose.msra.mxu0 0.0
        %807 = vmatpush.xpose.msra.mxu0 0.0
        %808 = vmatpush.xpose.msra.mxu0 0.0
        %809 = vmatpush.xpose.msra.mxu0 0.0
        %810 = vmatpush.xpose.msra.mxu0 0.0
        %811 = vmatpush.xpose.msra.mxu0 0.0
        %812 = vmatpush.xpose.msra.mxu0 0.0
        %813 = vmatpush.xpose.msra.mxu0 0.0
        %814 = vmatpush.xpose.msra.mxu0 0.0
        %815 = vmatpush.xpose.msra.mxu0 0.0
        %816 = vmatpush.xpose.msra.mxu0 0.0
        %v817 = vand.u32 %v700, 4294901760
        %v818 = vsub.f32 %v700, %v817
        %v819 = vand.u32 %v818, 4294901760
        %820 = vmatpush.xpose.msra.mxu0 %v819
        %v821 = vand.u32 %v698, 4294901760
        %822 = vmatmul.f32.gmra.mxu0 %v821
        %v823 = vpop.f32.mrf.mxu0
        %v824 = vadd.f32 %v800, %v823
        %825 = vdwg.mxu0
        %826 = vmatpush.xpose.msra.mxu0 0.0
        %827 = vmatpush.xpose.msra.mxu0 0.0
        %828 = vmatpush.xpose.msra.mxu0 0.0
        %829 = vmatpush.xpose.msra.mxu0 0.0
        %830 = vmatpush.xpose.msra.mxu0 0.0
        %831 = vmatpush.xpose.msra.mxu0 0.0
        %832 = vmatpush.xpose.msra.mxu0 0.0
        %833 = vmatpush.xpose.msra.mxu0 0.0
        %834 = vmatpush.xpose.msra.mxu0 0.0
        %835 = vmatpush.xpose.msra.mxu0 0.0
        %836 = vmatpush.xpose.msra.mxu0 0.0
        %837 = vmatpush.xpose.msra.mxu0 0.0
        %838 = vmatpush.xpose.msra.mxu0 0.0
        %839 = vmatpush.xpose.msra.mxu0 0.0
        %840 = vmatpush.xpose.msra.mxu0 0.0
        %v841 = vand.u32 %v700, 4294901760
        %842 = vmatpush.xpose.msra.mxu0 %v841
        %v843 = vand.u32 %v698, 4294901760
        %844 = vmatmul.f32.gmra.mxu0 %v843
        %v845 = vpop.f32.mrf.mxu0
        %v846 = vadd.f32 %v824, %v845
        %847 = vdwg.mxu0
        %v848 = vmul.f32 %v846, 0.25
        %v849 = vadd.f32 %v848, %v517
        %v850 = vsel %vm520, %v849, -inf
        %851 = vmax.xlane.f32.xlu0 %v850
        %v852 = vpop.xlane.xlu0 %851
        %v853 = vsub.f32 %v849, %v852
        %v854 = vmul.f32 %v853, 1.442695
        %v855 = vpow.pop %v854
        %v856 = vsel %vm520, %v855, 0.0
        %857 = vadd.xlane.f32.xlu0 %v856
        %v858 = vpop.xlane.xlu0 %857
        %v859 = vrcp.pop %v858
        %v860 = vmul.f32 %v858, %v859
        %v861 = vsub.f32 1.0, %v860
        %v862 = vmul.f32 %v859, %v861
        %v863 = vadd.f32 %v859, %v862
        %vm864 = vweird.f32 %v858
        %vm865 = vweird.f32 %v859
        %vm866 = vmor %vm864, %vm865
        %v867 = vsel %vm866, %v859, %v863
        %v868 = vand.u32 2147483647, %v858
        %vm869 = vcmp.eq.f32.partialorder %v868, 8.507059e+37
        %v870 = vand.u32 %v858, 2147483648
        %v871 = vor.u32 1.1754944e-38, %v870
        %v872 = vsel %vm869, %v871, %v867
        %v873 = vmul.f32 %v855, %v872
        %875 = vrot.lane.b32.xlu0 %v360, 112
        %v876 = vpop.permute.xlu0 %875
        %v879 = vsel %vm520, %v873, 0
        %881 = vmatpush.msra.mxu0 0.0
        %882 = vmatpush.msra.mxu0 0.0
        %883 = vmatpush.msra.mxu0 0.0
        %884 = vmatpush.msra.mxu0 0.0
        %885 = vmatpush.msra.mxu0 0.0
        %886 = vmatpush.msra.mxu0 0.0
        %887 = vmatpush.msra.mxu0 0.0
        %888 = vmatpush.msra.mxu0 0.0
        %889 = vmatpush.msra.mxu0 0.0
        %890 = vmatpush.msra.mxu0 0.0
        %891 = vmatpush.msra.mxu0 0.0
        %892 = vmatpush.msra.mxu0 0.0
        %893 = vmatpush.msra.mxu0 0.0
        %894 = vmatpush.msra.mxu0 0.0
        %895 = vmatpush.msra.mxu0 0.0
        %v896 = vand.u32 %v876, 4294901760
        %897 = vmatpush.msra.mxu0 %v896
        %v898 = vand.u32 %v879, 4294901760
        %v899 = vsub.f32 %v879, %v898
        %v900 = vand.u32 %v899, 4294901760
        %v901 = vsub.f32 %v899, %v900
        %v902 = vand.u32 %v901, 4294901760
        %903 = vmatmul.f32.gmra.mxu0 %v902
        %v904 = vpop.f32.mrf.mxu0
        %v905 = vadd.f32 0.0, %v904
        %906 = vdwg.mxu0
        %907 = vmatpush.msra.mxu0 0.0
        %908 = vmatpush.msra.mxu0 0.0
        %909 = vmatpush.msra.mxu0 0.0
        %910 = vmatpush.msra.mxu0 0.0
        %911 = vmatpush.msra.mxu0 0.0
        %912 = vmatpush.msra.mxu0 0.0
        %913 = vmatpush.msra.mxu0 0.0
        %914 = vmatpush.msra.mxu0 0.0
        %915 = vmatpush.msra.mxu0 0.0
        %916 = vmatpush.msra.mxu0 0.0
        %917 = vmatpush.msra.mxu0 0.0
        %918 = vmatpush.msra.mxu0 0.0
        %919 = vmatpush.msra.mxu0 0.0
        %920 = vmatpush.msra.mxu0 0.0
        %921 = vmatpush.msra.mxu0 0.0
        %v922 = vand.u32 %v876, 4294901760
        %v923 = vsub.f32 %v876, %v922
        %v924 = vand.u32 %v923, 4294901760
        %v925 = vsub.f32 %v923, %v924
        %v926 = vand.u32 %v925, 4294901760
        %927 = vmatpush.msra.mxu0 %v926
        %v928 = vand.u32 %v879, 4294901760
        %929 = vmatmul.f32.gmra.mxu0 %v928
        %v930 = vpop.f32.mrf.mxu0
        %v931 = vadd.f32 %v905, %v930
        %932 = vdwg.mxu0
        %933 = vmatpush.msra.mxu0 0.0
        %934 = vmatpush.msra.mxu0 0.0
        %935 = vmatpush.msra.mxu0 0.0
        %936 = vmatpush.msra.mxu0 0.0
        %937 = vmatpush.msra.mxu0 0.0
        %938 = vmatpush.msra.mxu0 0.0
        %939 = vmatpush.msra.mxu0 0.0
        %940 = vmatpush.msra.mxu0 0.0
        %941 = vmatpush.msra.mxu0 0.0
        %942 = vmatpush.msra.mxu0 0.0
        %943 = vmatpush.msra.mxu0 0.0
        %944 = vmatpush.msra.mxu0 0.0
        %945 = vmatpush.msra.mxu0 0.0
        %946 = vmatpush.msra.mxu0 0.0
        %947 = vmatpush.msra.mxu0 0.0
        %v948 = vand.u32 %v876, 4294901760
        %v949 = vsub.f32 %v876, %v948
        %950 = vmatpush.msra.mxu0 %v949
        %v951 = vand.u32 %v879, 4294901760
        %v952 = vsub.f32 %v879, %v951
        %953 = vmatmul.f32.gmra.mxu0 %v952
        %v954 = vpop.f32.mrf.mxu0
        %v955 = vadd.f32 %v931, %v954
        %956 = vdwg.mxu0
        %957 = vmatpush.msra.mxu0 0.0
        %958 = vmatpush.msra.mxu0 0.0
        %959 = vmatpush.msra.mxu0 0.0
        %960 = vmatpush.msra.mxu0 0.0
        %961 = vmatpush.msra.mxu0 0.0
        %962 = vmatpush.msra.mxu0 0.0
        %963 = vmatpush.msra.mxu0 0.0
        %964 = vmatpush.msra.mxu0 0.0
        %965 = vmatpush.msra.mxu0 0.0
        %966 = vmatpush.msra.mxu0 0.0
        %967 = vmatpush.msra.mxu0 0.0
        %968 = vmatpush.msra.mxu0 0.0
        %969 = vmatpush.msra.mxu0 0.0
        %970 = vmatpush.msra.mxu0 0.0
        %971 = vmatpush.msra.mxu0 0.0
        %v972 = vand.u32 %v876, 4294901760
        %973 = vmatpush.msra.mxu0 %v972
        %v974 = vand.u32 %v879, 4294901760
        %v975 = vsub.f32 %v879, %v974
        %v976 = vand.u32 %v975, 4294901760
        %977 = vmatmul.f32.gmra.mxu0 %v976
        %v978 = vpop.f32.mrf.mxu0
        %v979 = vadd.f32 %v955, %v978
        %980 = vdwg.mxu0
        %981 = vmatpush.msra.mxu0 0.0
        %982 = vmatpush.msra.mxu0 0.0
        %983 = vmatpush.msra.mxu0 0.0
        %984 = vmatpush.msra.mxu0 0.0
        %985 = vmatpush.msra.mxu0 0.0
        %986 = vmatpush.msra.mxu0 0.0
        %987 = vmatpush.msra.mxu0 0.0
        %988 = vmatpush.msra.mxu0 0.0
        %989 = vmatpush.msra.mxu0 0.0
        %990 = vmatpush.msra.mxu0 0.0
        %991 = vmatpush.msra.mxu0 0.0
        %992 = vmatpush.msra.mxu0 0.0
        %993 = vmatpush.msra.mxu0 0.0
        %994 = vmatpush.msra.mxu0 0.0
        %995 = vmatpush.msra.mxu0 0.0
        %v996 = vand.u32 %v876, 4294901760
        %v997 = vsub.f32 %v876, %v996
        %v998 = vand.u32 %v997, 4294901760
        %999 = vmatpush.msra.mxu0 %v998
        %v1000 = vand.u32 %v879, 4294901760
        %1001 = vmatmul.f32.gmra.mxu0 %v1000
        %v1002 = vpop.f32.mrf.mxu0
        %v1003 = vadd.f32 %v979, %v1002
        %1004 = vdwg.mxu0
        %1005 = vmatpush.msra.mxu0 0.0
        %1006 = vmatpush.msra.mxu0 0.0
        %1007 = vmatpush.msra.mxu0 0.0
        %1008 = vmatpush.msra.mxu0 0.0
        %1009 = vmatpush.msra.mxu0 0.0
        %1010 = vmatpush.msra.mxu0 0.0
        %1011 = vmatpush.msra.mxu0 0.0
        %1012 = vmatpush.msra.mxu0 0.0
        %1013 = vmatpush.msra.mxu0 0.0
        %1014 = vmatpush.msra.mxu0 0.0
        %1015 = vmatpush.msra.mxu0 0.0
        %1016 = vmatpush.msra.mxu0 0.0
        %1017 = vmatpush.msra.mxu0 0.0
        %1018 = vmatpush.msra.mxu0 0.0
        %1019 = vmatpush.msra.mxu0 0.0
        %v1020 = vand.u32 %v876, 4294901760
        %1021 = vmatpush.msra.mxu0 %v1020
        %v1022 = vand.u32 %v879, 4294901760
        %1023 = vmatmul.f32.gmra.mxu0 %v1022
        %v1024 = vpop.f32.mrf.mxu0
        %v1025 = vadd.f32 %v1003, %v1024
        %1026 = vdwg.mxu0
        %1027 = vrot.lane.b32.xlu0 %v358, 96
        %v1028 = vpop.permute.xlu0 %1027
        %1029 = vrot.lane.b32.xlu0 %v359, 96
        %v1030 = vpop.permute.xlu0 %1029
        %v1031 = vsel %vm362, %v1028, 0
        %v1033 = vsel %vm362, %v1030, 0
        %1035 = vmatpush.xpose.msra.mxu0 0.0
        %1036 = vmatpush.xpose.msra.mxu0 0.0
        %1037 = vmatpush.xpose.msra.mxu0 0.0
        %1038 = vmatpush.xpose.msra.mxu0 0.0
        %1039 = vmatpush.xpose.msra.mxu0 0.0
        %1040 = vmatpush.xpose.msra.mxu0 0.0
        %1041 = vmatpush.xpose.msra.mxu0 0.0
        %1042 = vmatpush.xpose.msra.mxu0 0.0
        %1043 = vmatpush.xpose.msra.mxu0 0.0
        %1044 = vmatpush.xpose.msra.mxu0 0.0
        %1045 = vmatpush.xpose.msra.mxu0 0.0
        %1046 = vmatpush.xpose.msra.mxu0 0.0
        %1047 = vmatpush.xpose.msra.mxu0 0.0
        %1048 = vmatpush.xpose.msra.mxu0 0.0
        %1049 = vmatpush.xpose.msra.mxu0 0.0
        %v1050 = vand.u32 %v1033, 4294901760
        %1051 = vmatpush.xpose.msra.mxu0 %v1050
        %v1052 = vand.u32 %v1031, 4294901760
        %v1053 = vsub.f32 %v1031, %v1052
        %v1054 = vand.u32 %v1053, 4294901760
        %v1055 = vsub.f32 %v1053, %v1054
        %v1056 = vand.u32 %v1055, 4294901760
        %1057 = vmatmul.f32.gmra.mxu0 %v1056
        %v1058 = vpop.f32.mrf.mxu0
        %v1059 = vadd.f32 0.0, %v1058
        %1060 = vdwg.mxu0
        %1061 = vmatpush.xpose.msra.mxu0 0.0
        %1062 = vmatpush.xpose.msra.mxu0 0.0
        %1063 = vmatpush.xpose.msra.mxu0 0.0
        %1064 = vmatpush.xpose.msra.mxu0 0.0
        %1065 = vmatpush.xpose.msra.mxu0 0.0
        %1066 = vmatpush.xpose.msra.mxu0 0.0
        %1067 = vmatpush.xpose.msra.mxu0 0.0
        %1068 = vmatpush.xpose.msra.mxu0 0.0
        %1069 = vmatpush.xpose.msra.mxu0 0.0
        %1070 = vmatpush.xpose.msra.mxu0 0.0
        %1071 = vmatpush.xpose.msra.mxu0 0.0
        %1072 = vmatpush.xpose.msra.mxu0 0.0
        %1073 = vmatpush.xpose.msra.mxu0 0.0
        %1074 = vmatpush.xpose.msra.mxu0 0.0
        %1075 = vmatpush.xpose.msra.mxu0 0.0
        %v1076 = vand.u32 %v1033, 4294901760
        %v1077 = vsub.f32 %v1033, %v1076
        %v1078 = vand.u32 %v1077, 4294901760
        %v1079 = vsub.f32 %v1077, %v1078
        %v1080 = vand.u32 %v1079, 4294901760
        %1081 = vmatpush.xpose.msra.mxu0 %v1080
        %v1082 = vand.u32 %v1031, 4294901760
        %1083 = vmatmul.f32.gmra.mxu0 %v1082
        %v1084 = vpop.f32.mrf.mxu0
        %v1085 = vadd.f32 %v1059, %v1084
        %1086 = vdwg.mxu0
        %1087 = vmatpush.xpose.msra.mxu0 0.0
        %1088 = vmatpush.xpose.msra.mxu0 0.0
        %1089 = vmatpush.xpose.msra.mxu0 0.0
        %1090 = vmatpush.xpose.msra.mxu0 0.0
        %1091 = vmatpush.xpose.msra.mxu0 0.0
        %1092 = vmatpush.xpose.msra.mxu0 0.0
        %1093 = vmatpush.xpose.msra.mxu0 0.0
        %1094 = vmatpush.xpose.msra.mxu0 0.0
        %1095 = vmatpush.xpose.msra.mxu0 0.0
        %1096 = vmatpush.xpose.msra.mxu0 0.0
        %1097 = vmatpush.xpose.msra.mxu0 0.0
        %1098 = vmatpush.xpose.msra.mxu0 0.0
        %1099 = vmatpush.xpose.msra.mxu0 0.0
        %1100 = vmatpush.xpose.msra.mxu0 0.0
        %1101 = vmatpush.xpose.msra.mxu0 0.0
        %v1102 = vand.u32 %v1033, 4294901760
        %v1103 = vsub.f32 %v1033, %v1102
        %1104 = vmatpush.xpose.msra.mxu0 %v1103
        %v1105 = vand.u32 %v1031, 4294901760
        %v1106 = vsub.f32 %v1031, %v1105
        %1107 = vmatmul.f32.gmra.mxu0 %v1106
        %v1108 = vpop.f32.mrf.mxu0
        %v1109 = vadd.f32 %v1085, %v1108
        %1110 = vdwg.mxu0
        %1111 = vmatpush.xpose.msra.mxu0 0.0
        %1112 = vmatpush.xpose.msra.mxu0 0.0
        %1113 = vmatpush.xpose.msra.mxu0 0.0
        %1114 = vmatpush.xpose.msra.mxu0 0.0
        %1115 = vmatpush.xpose.msra.mxu0 0.0
        %1116 = vmatpush.xpose.msra.mxu0 0.0
        %1117 = vmatpush.xpose.msra.mxu0 0.0
        %1118 = vmatpush.xpose.msra.mxu0 0.0
        %1119 = vmatpush.xpose.msra.mxu0 0.0
        %1120 = vmatpush.xpose.msra.mxu0 0.0
        %1121 = vmatpush.xpose.msra.mxu0 0.0
        %1122 = vmatpush.xpose.msra.mxu0 0.0
        %1123 = vmatpush.xpose.msra.mxu0 0.0
        %1124 = vmatpush.xpose.msra.mxu0 0.0
        %1125 = vmatpush.xpose.msra.mxu0 0.0
        %v1126 = vand.u32 %v1033, 4294901760
        %1127 = vmatpush.xpose.msra.mxu0 %v1126
        %v1128 = vand.u32 %v1031, 4294901760
        %v1129 = vsub.f32 %v1031, %v1128
        %v1130 = vand.u32 %v1129, 4294901760
        %1131 = vmatmul.f32.gmra.mxu0 %v1130
        %v1132 = vpop.f32.mrf.mxu0
        %v1133 = vadd.f32 %v1109, %v1132
        %1134 = vdwg.mxu0
        %1135 = vmatpush.xpose.msra.mxu0 0.0
        %1136 = vmatpush.xpose.msra.mxu0 0.0
        %1137 = vmatpush.xpose.msra.mxu0 0.0
        %1138 = vmatpush.xpose.msra.mxu0 0.0
        %1139 = vmatpush.xpose.msra.mxu0 0.0
        %1140 = vmatpush.xpose.msra.mxu0 0.0
        %1141 = vmatpush.xpose.msra.mxu0 0.0
        %1142 = vmatpush.xpose.msra.mxu0 0.0
        %1143 = vmatpush.xpose.msra.mxu0 0.0
        %1144 = vmatpush.xpose.msra.mxu0 0.0
        %1145 = vmatpush.xpose.msra.mxu0 0.0
        %1146 = vmatpush.xpose.msra.mxu0 0.0
        %1147 = vmatpush.xpose.msra.mxu0 0.0
        %1148 = vmatpush.xpose.msra.mxu0 0.0
        %1149 = vmatpush.xpose.msra.mxu0 0.0
        %v1150 = vand.u32 %v1033, 4294901760
        %v1151 = vsub.f32 %v1033, %v1150
        %v1152 = vand.u32 %v1151, 4294901760
        %1153 = vmatpush.xpose.msra.mxu0 %v1152
        %v1154 = vand.u32 %v1031, 4294901760
        %1155 = vmatmul.f32.gmra.mxu0 %v1154
        %v1156 = vpop.f32.mrf.mxu0
        %v1157 = vadd.f32 %v1133, %v1156
        %1158 = vdwg.mxu0
        %1159 = vmatpush.xpose.msra.mxu0 0.0
        %1160 = vmatpush.xpose.msra.mxu0 0.0
        %1161 = vmatpush.xpose.msra.mxu0 0.0
        %1162 = vmatpush.xpose.msra.mxu0 0.0
        %1163 = vmatpush.xpose.msra.mxu0 0.0
        %1164 = vmatpush.xpose.msra.mxu0 0.0
        %1165 = vmatpush.xpose.msra.mxu0 0.0
        %1166 = vmatpush.xpose.msra.mxu0 0.0
        %1167 = vmatpush.xpose.msra.mxu0 0.0
        %1168 = vmatpush.xpose.msra.mxu0 0.0
        %1169 = vmatpush.xpose.msra.mxu0 0.0
        %1170 = vmatpush.xpose.msra.mxu0 0.0
        %1171 = vmatpush.xpose.msra.mxu0 0.0
        %1172 = vmatpush.xpose.msra.mxu0 0.0
        %1173 = vmatpush.xpose.msra.mxu0 0.0
        %v1174 = vand.u32 %v1033, 4294901760
        %1175 = vmatpush.xpose.msra.mxu0 %v1174
        %v1176 = vand.u32 %v1031, 4294901760
        %1177 = vmatmul.f32.gmra.mxu0 %v1176
        %v1178 = vpop.f32.mrf.mxu0
        %v1179 = vadd.f32 %v1157, %v1178
        %1180 = vdwg.mxu0
        %v1181 = vmul.f32 %v1179, 0.25
        %v1182 = vadd.f32 %v1181, %v517
        %v1183 = vsel %vm520, %v1182, -inf
        %1184 = vmax.xlane.f32.xlu0 %v1183
        %v1185 = vpop.xlane.xlu0 %1184
        %v1186 = vsub.f32 %v1182, %v1185
        %v1187 = vmul.f32 %v1186, 1.442695
        %v1188 = vpow.pop %v1187
        %v1189 = vsel %vm520, %v1188, 0.0
        %1190 = vadd.xlane.f32.xlu0 %v1189
        %v1191 = vpop.xlane.xlu0 %1190
        %v1192 = vrcp.pop %v1191
        %v1193 = vmul.f32 %v1191, %v1192
        %v1194 = vsub.f32 1.0, %v1193
        %v1195 = vmul.f32 %v1192, %v1194
        %v1196 = vadd.f32 %v1192, %v1195
        %vm1197 = vweird.f32 %v1191
        %vm1198 = vweird.f32 %v1192
        %vm1199 = vmor %vm1197, %vm1198
        %v1200 = vsel %vm1199, %v1192, %v1196
        %v1201 = vand.u32 2147483647, %v1191
        %vm1202 = vcmp.eq.f32.partialorder %v1201, 8.507059e+37
        %v1203 = vand.u32 %v1191, 2147483648
        %v1204 = vor.u32 1.1754944e-38, %v1203
        %v1205 = vsel %vm1202, %v1204, %v1200
        %v1206 = vmul.f32 %v1188, %v1205
        %1207 = vrot.lane.b32.xlu0 %v360, 96
        %v1208 = vpop.permute.xlu0 %1207
        %v1211 = vsel %vm520, %v1206, 0
        %1213 = vmatpush.msra.mxu0 0.0
        %1214 = vmatpush.msra.mxu0 0.0
        %1215 = vmatpush.msra.mxu0 0.0
        %1216 = vmatpush.msra.mxu0 0.0
        %1217 = vmatpush.msra.mxu0 0.0
        %1218 = vmatpush.msra.mxu0 0.0
        %1219 = vmatpush.msra.mxu0 0.0
        %1220 = vmatpush.msra.mxu0 0.0
        %1221 = vmatpush.msra.mxu0 0.0
        %1222 = vmatpush.msra.mxu0 0.0
        %1223 = vmatpush.msra.mxu0 0.0
        %1224 = vmatpush.msra.mxu0 0.0
        %1225 = vmatpush.msra.mxu0 0.0
        %1226 = vmatpush.msra.mxu0 0.0
        %1227 = vmatpush.msra.mxu0 0.0
        %v1228 = vand.u32 %v1208, 4294901760
        %1229 = vmatpush.msra.mxu0 %v1228
        %v1230 = vand.u32 %v1211, 4294901760
        %v1231 = vsub.f32 %v1211, %v1230
        %v1232 = vand.u32 %v1231, 4294901760
        %v1233 = vsub.f32 %v1231, %v1232
        %v1234 = vand.u32 %v1233, 4294901760
        %1235 = vmatmul.f32.gmra.mxu0 %v1234
        %v1236 = vpop.f32.mrf.mxu0
        %v1237 = vadd.f32 0.0, %v1236
        %1238 = vdwg.mxu0
        %1239 = vmatpush.msra.mxu0 0.0
        %1240 = vmatpush.msra.mxu0 0.0
        %1241 = vmatpush.msra.mxu0 0.0
        %1242 = vmatpush.msra.mxu0 0.0
        %1243 = vmatpush.msra.mxu0 0.0
        %1244 = vmatpush.msra.mxu0 0.0
        %1245 = vmatpush.msra.mxu0 0.0
        %1246 = vmatpush.msra.mxu0 0.0
        %1247 = vmatpush.msra.mxu0 0.0
        %1248 = vmatpush.msra.mxu0 0.0
        %1249 = vmatpush.msra.mxu0 0.0
        %1250 = vmatpush.msra.mxu0 0.0
        %1251 = vmatpush.msra.mxu0 0.0
        %1252 = vmatpush.msra.mxu0 0.0
        %1253 = vmatpush.msra.mxu0 0.0
        %v1254 = vand.u32 %v1208, 4294901760
        %v1255 = vsub.f32 %v1208, %v1254
        %v1256 = vand.u32 %v1255, 4294901760
        %v1257 = vsub.f32 %v1255, %v1256
        %v1258 = vand.u32 %v1257, 4294901760
        %1259 = vmatpush.msra.mxu0 %v1258
        %v1260 = vand.u32 %v1211, 4294901760
        %1261 = vmatmul.f32.gmra.mxu0 %v1260
        %v1262 = vpop.f32.mrf.mxu0
        %v1263 = vadd.f32 %v1237, %v1262
        %1264 = vdwg.mxu0
        %1265 = vmatpush.msra.mxu0 0.0
        %1266 = vmatpush.msra.mxu0 0.0
        %1267 = vmatpush.msra.mxu0 0.0
        %1268 = vmatpush.msra.mxu0 0.0
        %1269 = vmatpush.msra.mxu0 0.0
        %1270 = vmatpush.msra.mxu0 0.0
        %1271 = vmatpush.msra.mxu0 0.0
        %1272 = vmatpush.msra.mxu0 0.0
        %1273 = vmatpush.msra.mxu0 0.0
        %1274 = vmatpush.msra.mxu0 0.0
        %1275 = vmatpush.msra.mxu0 0.0
        %1276 = vmatpush.msra.mxu0 0.0
        %1277 = vmatpush.msra.mxu0 0.0
        %1278 = vmatpush.msra.mxu0 0.0
        %1279 = vmatpush.msra.mxu0 0.0
        %v1280 = vand.u32 %v1208, 4294901760
        %v1281 = vsub.f32 %v1208, %v1280
        %1282 = vmatpush.msra.mxu0 %v1281
        %v1283 = vand.u32 %v1211, 4294901760
        %v1284 = vsub.f32 %v1211, %v1283
        %1285 = vmatmul.f32.gmra.mxu0 %v1284
        %v1286 = vpop.f32.mrf.mxu0
        %v1287 = vadd.f32 %v1263, %v1286
        %1288 = vdwg.mxu0
        %1289 = vmatpush.msra.mxu0 0.0
        %1290 = vmatpush.msra.mxu0 0.0
        %1291 = vmatpush.msra.mxu0 0.0
        %1292 = vmatpush.msra.mxu0 0.0
        %1293 = vmatpush.msra.mxu0 0.0
        %1294 = vmatpush.msra.mxu0 0.0
        %1295 = vmatpush.msra.mxu0 0.0
        %1296 = vmatpush.msra.mxu0 0.0
        %1297 = vmatpush.msra.mxu0 0.0
        %1298 = vmatpush.msra.mxu0 0.0
        %1299 = vmatpush.msra.mxu0 0.0
        %1300 = vmatpush.msra.mxu0 0.0
        %1301 = vmatpush.msra.mxu0 0.0
        %1302 = vmatpush.msra.mxu0 0.0
        %1303 = vmatpush.msra.mxu0 0.0
        %v1304 = vand.u32 %v1208, 4294901760
        %1305 = vmatpush.msra.mxu0 %v1304
        %v1306 = vand.u32 %v1211, 4294901760
        %v1307 = vsub.f32 %v1211, %v1306
        %v1308 = vand.u32 %v1307, 4294901760
        %1309 = vmatmul.f32.gmra.mxu0 %v1308
        %v1310 = vpop.f32.mrf.mxu0
        %v1311 = vadd.f32 %v1287, %v1310
        %1312 = vdwg.mxu0
        %1313 = vmatpush.msra.mxu0 0.0
        %1314 = vmatpush.msra.mxu0 0.0
        %1315 = vmatpush.msra.mxu0 0.0
        %1316 = vmatpush.msra.mxu0 0.0
        %1317 = vmatpush.msra.mxu0 0.0
        %1318 = vmatpush.msra.mxu0 0.0
        %1319 = vmatpush.msra.mxu0 0.0
        %1320 = vmatpush.msra.mxu0 0.0
        %1321 = vmatpush.msra.mxu0 0.0
        %1322 = vmatpush.msra.mxu0 0.0
        %1323 = vmatpush.msra.mxu0 0.0
        %1324 = vmatpush.msra.mxu0 0.0
        %1325 = vmatpush.msra.mxu0 0.0
        %1326 = vmatpush.msra.mxu0 0.0
        %1327 = vmatpush.msra.mxu0 0.0
        %v1328 = vand.u32 %v1208, 4294901760
        %v1329 = vsub.f32 %v1208, %v1328
        %v1330 = vand.u32 %v1329, 4294901760
        %1331 = vmatpush.msra.mxu0 %v1330
        %v1332 = vand.u32 %v1211, 4294901760
        %1333 = vmatmul.f32.gmra.mxu0 %v1332
        %v1334 = vpop.f32.mrf.mxu0
        %v1335 = vadd.f32 %v1311, %v1334
        %1336 = vdwg.mxu0
        %1337 = vmatpush.msra.mxu0 0.0
        %1338 = vmatpush.msra.mxu0 0.0
        %1339 = vmatpush.msra.mxu0 0.0
        %1340 = vmatpush.msra.mxu0 0.0
        %1341 = vmatpush.msra.mxu0 0.0
        %1342 = vmatpush.msra.mxu0 0.0
        %1343 = vmatpush.msra.mxu0 0.0
        %1344 = vmatpush.msra.mxu0 0.0
        %1345 = vmatpush.msra.mxu0 0.0
        %1346 = vmatpush.msra.mxu0 0.0
        %1347 = vmatpush.msra.mxu0 0.0
        %1348 = vmatpush.msra.mxu0 0.0
        %1349 = vmatpush.msra.mxu0 0.0
        %1350 = vmatpush.msra.mxu0 0.0
        %1351 = vmatpush.msra.mxu0 0.0
        %v1352 = vand.u32 %v1208, 4294901760
        %1353 = vmatpush.msra.mxu0 %v1352
        %v1354 = vand.u32 %v1211, 4294901760
        %1355 = vmatmul.f32.gmra.mxu0 %v1354
        %v1356 = vpop.f32.mrf.mxu0
        %v1357 = vadd.f32 %v1335, %v1356
        %1358 = vdwg.mxu0
        %1359 = vrot.lane.b32.xlu0 %v358, 80
        %v1360 = vpop.permute.xlu0 %1359
        %1361 = vrot.lane.b32.xlu0 %v359, 80
        %v1362 = vpop.permute.xlu0 %1361
        %v1363 = vsel %vm362, %v1360, 0
        %v1365 = vsel %vm362, %v1362, 0
        %1367 = vmatpush.xpose.msra.mxu0 0.0
        %1368 = vmatpush.xpose.msra.mxu0 0.0
        %1369 = vmatpush.xpose.msra.mxu0 0.0
        %1370 = vmatpush.xpose.msra.mxu0 0.0
        %1371 = vmatpush.xpose.msra.mxu0 0.0
        %1372 = vmatpush.xpose.msra.mxu0 0.0
        %1373 = vmatpush.xpose.msra.mxu0 0.0
        %1374 = vmatpush.xpose.msra.mxu0 0.0
        %1375 = vmatpush.xpose.msra.mxu0 0.0
        %1376 = vmatpush.xpose.msra.mxu0 0.0
        %1377 = vmatpush.xpose.msra.mxu0 0.0
        %1378 = vmatpush.xpose.msra.mxu0 0.0
        %1379 = vmatpush.xpose.msra.mxu0 0.0
        %1380 = vmatpush.xpose.msra.mxu0 0.0
        %1381 = vmatpush.xpose.msra.mxu0 0.0
        %v1382 = vand.u32 %v1365, 4294901760
        %1383 = vmatpush.xpose.msra.mxu0 %v1382
        %v1384 = vand.u32 %v1363, 4294901760
        %v1385 = vsub.f32 %v1363, %v1384
        %v1386 = vand.u32 %v1385, 4294901760
        %v1387 = vsub.f32 %v1385, %v1386
        %v1388 = vand.u32 %v1387, 4294901760
        %1389 = vmatmul.f32.gmra.mxu0 %v1388
        %v1390 = vpop.f32.mrf.mxu0
        %v1391 = vadd.f32 0.0, %v1390
        %1392 = vdwg.mxu0
        %1393 = vmatpush.xpose.msra.mxu0 0.0
        %1394 = vmatpush.xpose.msra.mxu0 0.0
        %1395 = vmatpush.xpose.msra.mxu0 0.0
        %1396 = vmatpush.xpose.msra.mxu0 0.0
        %1397 = vmatpush.xpose.msra.mxu0 0.0
        %1398 = vmatpush.xpose.msra.mxu0 0.0
        %1399 = vmatpush.xpose.msra.mxu0 0.0
        %1400 = vmatpush.xpose.msra.mxu0 0.0
        %1401 = vmatpush.xpose.msra.mxu0 0.0
        %1402 = vmatpush.xpose.msra.mxu0 0.0
        %1403 = vmatpush.xpose.msra.mxu0 0.0
        %1404 = vmatpush.xpose.msra.mxu0 0.0
        %1405 = vmatpush.xpose.msra.mxu0 0.0
        %1406 = vmatpush.xpose.msra.mxu0 0.0
        %1407 = vmatpush.xpose.msra.mxu0 0.0
        %v1408 = vand.u32 %v1365, 4294901760
        %v1409 = vsub.f32 %v1365, %v1408
        %v1410 = vand.u32 %v1409, 4294901760
        %v1411 = vsub.f32 %v1409, %v1410
        %v1412 = vand.u32 %v1411, 4294901760
        %1413 = vmatpush.xpose.msra.mxu0 %v1412
        %v1414 = vand.u32 %v1363, 4294901760
        %1415 = vmatmul.f32.gmra.mxu0 %v1414
        %v1416 = vpop.f32.mrf.mxu0
        %v1417 = vadd.f32 %v1391, %v1416
        %1418 = vdwg.mxu0
        %1419 = vmatpush.xpose.msra.mxu0 0.0
        %1420 = vmatpush.xpose.msra.mxu0 0.0
        %1421 = vmatpush.xpose.msra.mxu0 0.0
        %1422 = vmatpush.xpose.msra.mxu0 0.0
        %1423 = vmatpush.xpose.msra.mxu0 0.0
        %1424 = vmatpush.xpose.msra.mxu0 0.0
        %1425 = vmatpush.xpose.msra.mxu0 0.0
        %1426 = vmatpush.xpose.msra.mxu0 0.0
        %1427 = vmatpush.xpose.msra.mxu0 0.0
        %1428 = vmatpush.xpose.msra.mxu0 0.0
        %1429 = vmatpush.xpose.msra.mxu0 0.0
        %1430 = vmatpush.xpose.msra.mxu0 0.0
        %1431 = vmatpush.xpose.msra.mxu0 0.0
        %1432 = vmatpush.xpose.msra.mxu0 0.0
        %1433 = vmatpush.xpose.msra.mxu0 0.0
        %v1434 = vand.u32 %v1365, 4294901760
        %v1435 = vsub.f32 %v1365, %v1434
        %1436 = vmatpush.xpose.msra.mxu0 %v1435
        %v1437 = vand.u32 %v1363, 4294901760
        %v1438 = vsub.f32 %v1363, %v1437
        %1439 = vmatmul.f32.gmra.mxu0 %v1438
        %v1440 = vpop.f32.mrf.mxu0
        %v1441 = vadd.f32 %v1417, %v1440
        %1442 = vdwg.mxu0
        %1443 = vmatpush.xpose.msra.mxu0 0.0
        %1444 = vmatpush.xpose.msra.mxu0 0.0
        %1445 = vmatpush.xpose.msra.mxu0 0.0
        %1446 = vmatpush.xpose.msra.mxu0 0.0
        %1447 = vmatpush.xpose.msra.mxu0 0.0
        %1448 = vmatpush.xpose.msra.mxu0 0.0
        %1449 = vmatpush.xpose.msra.mxu0 0.0
        %1450 = vmatpush.xpose.msra.mxu0 0.0
        %1451 = vmatpush.xpose.msra.mxu0 0.0
        %1452 = vmatpush.xpose.msra.mxu0 0.0
        %1453 = vmatpush.xpose.msra.mxu0 0.0
        %1454 = vmatpush.xpose.msra.mxu0 0.0
        %1455 = vmatpush.xpose.msra.mxu0 0.0
        %1456 = vmatpush.xpose.msra.mxu0 0.0
        %1457 = vmatpush.xpose.msra.mxu0 0.0
        %v1458 = vand.u32 %v1365, 4294901760
        %1459 = vmatpush.xpose.msra.mxu0 %v1458
        %v1460 = vand.u32 %v1363, 4294901760
        %v1461 = vsub.f32 %v1363, %v1460
        %v1462 = vand.u32 %v1461, 4294901760
        %1463 = vmatmul.f32.gmra.mxu0 %v1462
        %v1464 = vpop.f32.mrf.mxu0
        %v1465 = vadd.f32 %v1441, %v1464
        %1466 = vdwg.mxu0
        %1467 = vmatpush.xpose.msra.mxu0 0.0
        %1468 = vmatpush.xpose.msra.mxu0 0.0
        %1469 = vmatpush.xpose.msra.mxu0 0.0
        %1470 = vmatpush.xpose.msra.mxu0 0.0
        %1471 = vmatpush.xpose.msra.mxu0 0.0
        %1472 = vmatpush.xpose.msra.mxu0 0.0
        %1473 = vmatpush.xpose.msra.mxu0 0.0
        %1474 = vmatpush.xpose.msra.mxu0 0.0
        %1475 = vmatpush.xpose.msra.mxu0 0.0
        %1476 = vmatpush.xpose.msra.mxu0 0.0
        %1477 = vmatpush.xpose.msra.mxu0 0.0
        %1478 = vmatpush.xpose.msra.mxu0 0.0
        %1479 = vmatpush.xpose.msra.mxu0 0.0
        %1480 = vmatpush.xpose.msra.mxu0 0.0
        %1481 = vmatpush.xpose.msra.mxu0 0.0
        %v1482 = vand.u32 %v1365, 4294901760
        %v1483 = vsub.f32 %v1365, %v1482
        %v1484 = vand.u32 %v1483, 4294901760
        %1485 = vmatpush.xpose.msra.mxu0 %v1484
        %v1486 = vand.u32 %v1363, 4294901760
        %1487 = vmatmul.f32.gmra.mxu0 %v1486
        %v1488 = vpop.f32.mrf.mxu0
        %v1489 = vadd.f32 %v1465, %v1488
        %1490 = vdwg.mxu0
        %1491 = vmatpush.xpose.msra.mxu0 0.0
        %1492 = vmatpush.xpose.msra.mxu0 0.0
        %1493 = vmatpush.xpose.msra.mxu0 0.0
        %1494 = vmatpush.xpose.msra.mxu0 0.0
        %1495 = vmatpush.xpose.msra.mxu0 0.0
        %1496 = vmatpush.xpose.msra.mxu0 0.0
        %1497 = vmatpush.xpose.msra.mxu0 0.0
        %1498 = vmatpush.xpose.msra.mxu0 0.0
        %1499 = vmatpush.xpose.msra.mxu0 0.0
        %1500 = vmatpush.xpose.msra.mxu0 0.0
        %1501 = vmatpush.xpose.msra.mxu0 0.0
        %1502 = vmatpush.xpose.msra.mxu0 0.0
        %1503 = vmatpush.xpose.msra.mxu0 0.0
        %1504 = vmatpush.xpose.msra.mxu0 0.0
        %1505 = vmatpush.xpose.msra.mxu0 0.0
        %v1506 = vand.u32 %v1365, 4294901760
        %1507 = vmatpush.xpose.msra.mxu0 %v1506
        %v1508 = vand.u32 %v1363, 4294901760
        %1509 = vmatmul.f32.gmra.mxu0 %v1508
        %v1510 = vpop.f32.mrf.mxu0
        %v1511 = vadd.f32 %v1489, %v1510
        %1512 = vdwg.mxu0
        %v1513 = vmul.f32 %v1511, 0.25
        %v1514 = vadd.f32 %v1513, %v517
        %v1515 = vsel %vm520, %v1514, -inf
        %1516 = vmax.xlane.f32.xlu0 %v1515
        %v1517 = vpop.xlane.xlu0 %1516
        %v1518 = vsub.f32 %v1514, %v1517
        %v1519 = vmul.f32 %v1518, 1.442695
        %v1520 = vpow.pop %v1519
        %v1521 = vsel %vm520, %v1520, 0.0
        %1522 = vadd.xlane.f32.xlu0 %v1521
        %v1523 = vpop.xlane.xlu0 %1522
        %v1524 = vrcp.pop %v1523
        %v1525 = vmul.f32 %v1523, %v1524
        %v1526 = vsub.f32 1.0, %v1525
        %v1527 = vmul.f32 %v1524, %v1526
        %v1528 = vadd.f32 %v1524, %v1527
        %vm1529 = vweird.f32 %v1523
        %vm1530 = vweird.f32 %v1524
        %vm1531 = vmor %vm1529, %vm1530
        %v1532 = vsel %vm1531, %v1524, %v1528
        %v1533 = vand.u32 2147483647, %v1523
        %vm1534 = vcmp.eq.f32.partialorder %v1533, 8.507059e+37
        %v1535 = vand.u32 %v1523, 2147483648
        %v1536 = vor.u32 1.1754944e-38, %v1535
        %v1537 = vsel %vm1534, %v1536, %v1532
        %v1538 = vmul.f32 %v1520, %v1537
        %1539 = vrot.lane.b32.xlu0 %v360, 80
        %v1540 = vpop.permute.xlu0 %1539
        %v1543 = vsel %vm520, %v1538, 0
        %1545 = vmatpush.msra.mxu0 0.0
        %1546 = vmatpush.msra.mxu0 0.0
        %1547 = vmatpush.msra.mxu0 0.0
        %1548 = vmatpush.msra.mxu0 0.0
        %1549 = vmatpush.msra.mxu0 0.0
        %1550 = vmatpush.msra.mxu0 0.0
        %1551 = vmatpush.msra.mxu0 0.0
        %1552 = vmatpush.msra.mxu0 0.0
        %1553 = vmatpush.msra.mxu0 0.0
        %1554 = vmatpush.msra.mxu0 0.0
        %1555 = vmatpush.msra.mxu0 0.0
        %1556 = vmatpush.msra.mxu0 0.0
        %1557 = vmatpush.msra.mxu0 0.0
        %1558 = vmatpush.msra.mxu0 0.0
        %1559 = vmatpush.msra.mxu0 0.0
        %v1560 = vand.u32 %v1540, 4294901760
        %1561 = vmatpush.msra.mxu0 %v1560
        %v1562 = vand.u32 %v1543, 4294901760
        %v1563 = vsub.f32 %v1543, %v1562
        %v1564 = vand.u32 %v1563, 4294901760
        %v1565 = vsub.f32 %v1563, %v1564
        %v1566 = vand.u32 %v1565, 4294901760
        %1567 = vmatmul.f32.gmra.mxu0 %v1566
        %v1568 = vpop.f32.mrf.mxu0
        %v1569 = vadd.f32 0.0, %v1568
        %1570 = vdwg.mxu0
        %1571 = vmatpush.msra.mxu0 0.0
        %1572 = vmatpush.msra.mxu0 0.0
        %1573 = vmatpush.msra.mxu0 0.0
        %1574 = vmatpush.msra.mxu0 0.0
        %1575 = vmatpush.msra.mxu0 0.0
        %1576 = vmatpush.msra.mxu0 0.0
        %1577 = vmatpush.msra.mxu0 0.0
        %1578 = vmatpush.msra.mxu0 0.0
        %1579 = vmatpush.msra.mxu0 0.0
        %1580 = vmatpush.msra.mxu0 0.0
        %1581 = vmatpush.msra.mxu0 0.0
        %1582 = vmatpush.msra.mxu0 0.0
        %1583 = vmatpush.msra.mxu0 0.0
        %1584 = vmatpush.msra.mxu0 0.0
        %1585 = vmatpush.msra.mxu0 0.0
        %v1586 = vand.u32 %v1540, 4294901760
        %v1587 = vsub.f32 %v1540, %v1586
        %v1588 = vand.u32 %v1587, 4294901760
        %v1589 = vsub.f32 %v1587, %v1588
        %v1590 = vand.u32 %v1589, 4294901760
        %1591 = vmatpush.msra.mxu0 %v1590
        %v1592 = vand.u32 %v1543, 4294901760
        %1593 = vmatmul.f32.gmra.mxu0 %v1592
        %v1594 = vpop.f32.mrf.mxu0
        %v1595 = vadd.f32 %v1569, %v1594
        %1596 = vdwg.mxu0
        %1597 = vmatpush.msra.mxu0 0.0
        %1598 = vmatpush.msra.mxu0 0.0
        %1599 = vmatpush.msra.mxu0 0.0
        %1600 = vmatpush.msra.mxu0 0.0
        %1601 = vmatpush.msra.mxu0 0.0
        %1602 = vmatpush.msra.mxu0 0.0
        %1603 = vmatpush.msra.mxu0 0.0
        %1604 = vmatpush.msra.mxu0 0.0
        %1605 = vmatpush.msra.mxu0 0.0
        %1606 = vmatpush.msra.mxu0 0.0
        %1607 = vmatpush.msra.mxu0 0.0
        %1608 = vmatpush.msra.mxu0 0.0
        %1609 = vmatpush.msra.mxu0 0.0
        %1610 = vmatpush.msra.mxu0 0.0
        %1611 = vmatpush.msra.mxu0 0.0
        %v1612 = vand.u32 %v1540, 4294901760
        %v1613 = vsub.f32 %v1540, %v1612
        %1614 = vmatpush.msra.mxu0 %v1613
        %v1615 = vand.u32 %v1543, 4294901760
        %v1616 = vsub.f32 %v1543, %v1615
        %1617 = vmatmul.f32.gmra.mxu0 %v1616
        %v1618 = vpop.f32.mrf.mxu0
        %v1619 = vadd.f32 %v1595, %v1618
        %1620 = vdwg.mxu0
        %1621 = vmatpush.msra.mxu0 0.0
        %1622 = vmatpush.msra.mxu0 0.0
        %1623 = vmatpush.msra.mxu0 0.0
        %1624 = vmatpush.msra.mxu0 0.0
        %1625 = vmatpush.msra.mxu0 0.0
        %1626 = vmatpush.msra.mxu0 0.0
        %1627 = vmatpush.msra.mxu0 0.0
        %1628 = vmatpush.msra.mxu0 0.0
        %1629 = vmatpush.msra.mxu0 0.0
        %1630 = vmatpush.msra.mxu0 0.0
        %1631 = vmatpush.msra.mxu0 0.0
        %1632 = vmatpush.msra.mxu0 0.0
        %1633 = vmatpush.msra.mxu0 0.0
        %1634 = vmatpush.msra.mxu0 0.0
        %1635 = vmatpush.msra.mxu0 0.0
        %v1636 = vand.u32 %v1540, 4294901760
        %1637 = vmatpush.msra.mxu0 %v1636
        %v1638 = vand.u32 %v1543, 4294901760
        %v1639 = vsub.f32 %v1543, %v1638
        %v1640 = vand.u32 %v1639, 4294901760
        %1641 = vmatmul.f32.gmra.mxu0 %v1640
        %v1642 = vpop.f32.mrf.mxu0
        %v1643 = vadd.f32 %v1619, %v1642
        %1644 = vdwg.mxu0
        %1645 = vmatpush.msra.mxu0 0.0
        %1646 = vmatpush.msra.mxu0 0.0
        %1647 = vmatpush.msra.mxu0 0.0
        %1648 = vmatpush.msra.mxu0 0.0
        %1649 = vmatpush.msra.mxu0 0.0
        %1650 = vmatpush.msra.mxu0 0.0
        %1651 = vmatpush.msra.mxu0 0.0
        %1652 = vmatpush.msra.mxu0 0.0
        %1653 = vmatpush.msra.mxu0 0.0
        %1654 = vmatpush.msra.mxu0 0.0
        %1655 = vmatpush.msra.mxu0 0.0
        %1656 = vmatpush.msra.mxu0 0.0
        %1657 = vmatpush.msra.mxu0 0.0
        %1658 = vmatpush.msra.mxu0 0.0
        %1659 = vmatpush.msra.mxu0 0.0
        %v1660 = vand.u32 %v1540, 4294901760
        %v1661 = vsub.f32 %v1540, %v1660
        %v1662 = vand.u32 %v1661, 4294901760
        %1663 = vmatpush.msra.mxu0 %v1662
        %v1664 = vand.u32 %v1543, 4294901760
        %1665 = vmatmul.f32.gmra.mxu0 %v1664
        %v1666 = vpop.f32.mrf.mxu0
        %v1667 = vadd.f32 %v1643, %v1666
        %1668 = vdwg.mxu0
        %1669 = vmatpush.msra.mxu0 0.0
        %1670 = vmatpush.msra.mxu0 0.0
        %1671 = vmatpush.msra.mxu0 0.0
        %1672 = vmatpush.msra.mxu0 0.0
        %1673 = vmatpush.msra.mxu0 0.0
        %1674 = vmatpush.msra.mxu0 0.0
        %1675 = vmatpush.msra.mxu0 0.0
        %1676 = vmatpush.msra.mxu0 0.0
        %1677 = vmatpush.msra.mxu0 0.0
        %1678 = vmatpush.msra.mxu0 0.0
        %1679 = vmatpush.msra.mxu0 0.0
        %1680 = vmatpush.msra.mxu0 0.0
        %1681 = vmatpush.msra.mxu0 0.0
        %1682 = vmatpush.msra.mxu0 0.0
        %1683 = vmatpush.msra.mxu0 0.0
        %v1684 = vand.u32 %v1540, 4294901760
        %1685 = vmatpush.msra.mxu0 %v1684
        %v1686 = vand.u32 %v1543, 4294901760
        %1687 = vmatmul.f32.gmra.mxu0 %v1686
        %v1688 = vpop.f32.mrf.mxu0
        %v1689 = vadd.f32 %v1667, %v1688
        %1690 = vdwg.mxu0
        %1691 = vrot.lane.b32.xlu0 %v358, 64
        %v1692 = vpop.permute.xlu0 %1691
        %1693 = vrot.lane.b32.xlu0 %v359, 64
        %v1694 = vpop.permute.xlu0 %1693
        %v1695 = vsel %vm362, %v1692, 0
        %v1697 = vsel %vm362, %v1694, 0
        %1699 = vmatpush.xpose.msra.mxu0 0.0
        %1700 = vmatpush.xpose.msra.mxu0 0.0
        %1701 = vmatpush.xpose.msra.mxu0 0.0
        %1702 = vmatpush.xpose.msra.mxu0 0.0
        %1703 = vmatpush.xpose.msra.mxu0 0.0
        %1704 = vmatpush.xpose.msra.mxu0 0.0
        %1705 = vmatpush.xpose.msra.mxu0 0.0
        %1706 = vmatpush.xpose.msra.mxu0 0.0
        %1707 = vmatpush.xpose.msra.mxu0 0.0
        %1708 = vmatpush.xpose.msra.mxu0 0.0
        %1709 = vmatpush.xpose.msra.mxu0 0.0
        %1710 = vmatpush.xpose.msra.mxu0 0.0
        %1711 = vmatpush.xpose.msra.mxu0 0.0
        %1712 = vmatpush.xpose.msra.mxu0 0.0
        %1713 = vmatpush.xpose.msra.mxu0 0.0
        %v1714 = vand.u32 %v1697, 4294901760
        %1715 = vmatpush.xpose.msra.mxu0 %v1714
        %v1716 = vand.u32 %v1695, 4294901760
        %v1717 = vsub.f32 %v1695, %v1716
        %v1718 = vand.u32 %v1717, 4294901760
        %v1719 = vsub.f32 %v1717, %v1718
        %v1720 = vand.u32 %v1719, 4294901760
        %1721 = vmatmul.f32.gmra.mxu0 %v1720
        %v1722 = vpop.f32.mrf.mxu0
        %v1723 = vadd.f32 0.0, %v1722
        %1724 = vdwg.mxu0
        %1725 = vmatpush.xpose.msra.mxu0 0.0
        %1726 = vmatpush.xpose.msra.mxu0 0.0
        %1727 = vmatpush.xpose.msra.mxu0 0.0
        %1728 = vmatpush.xpose.msra.mxu0 0.0
        %1729 = vmatpush.xpose.msra.mxu0 0.0
        %1730 = vmatpush.xpose.msra.mxu0 0.0
        %1731 = vmatpush.xpose.msra.mxu0 0.0
        %1732 = vmatpush.xpose.msra.mxu0 0.0
        %1733 = vmatpush.xpose.msra.mxu0 0.0
        %1734 = vmatpush.xpose.msra.mxu0 0.0
        %1735 = vmatpush.xpose.msra.mxu0 0.0
        %1736 = vmatpush.xpose.msra.mxu0 0.0
        %1737 = vmatpush.xpose.msra.mxu0 0.0
        %1738 = vmatpush.xpose.msra.mxu0 0.0
        %1739 = vmatpush.xpose.msra.mxu0 0.0
        %v1740 = vand.u32 %v1697, 4294901760
        %v1741 = vsub.f32 %v1697, %v1740
        %v1742 = vand.u32 %v1741, 4294901760
        %v1743 = vsub.f32 %v1741, %v1742
        %v1744 = vand.u32 %v1743, 4294901760
        %1745 = vmatpush.xpose.msra.mxu0 %v1744
        %v1746 = vand.u32 %v1695, 4294901760
        %1747 = vmatmul.f32.gmra.mxu0 %v1746
        %v1748 = vpop.f32.mrf.mxu0
        %v1749 = vadd.f32 %v1723, %v1748
        %1750 = vdwg.mxu0
        %1751 = vmatpush.xpose.msra.mxu0 0.0
        %1752 = vmatpush.xpose.msra.mxu0 0.0
        %1753 = vmatpush.xpose.msra.mxu0 0.0
        %1754 = vmatpush.xpose.msra.mxu0 0.0
        %1755 = vmatpush.xpose.msra.mxu0 0.0
        %1756 = vmatpush.xpose.msra.mxu0 0.0
        %1757 = vmatpush.xpose.msra.mxu0 0.0
        %1758 = vmatpush.xpose.msra.mxu0 0.0
        %1759 = vmatpush.xpose.msra.mxu0 0.0
        %1760 = vmatpush.xpose.msra.mxu0 0.0
        %1761 = vmatpush.xpose.msra.mxu0 0.0
        %1762 = vmatpush.xpose.msra.mxu0 0.0
        %1763 = vmatpush.xpose.msra.mxu0 0.0
        %1764 = vmatpush.xpose.msra.mxu0 0.0
        %1765 = vmatpush.xpose.msra.mxu0 0.0
        %v1766 = vand.u32 %v1697, 4294901760
        %v1767 = vsub.f32 %v1697, %v1766
        %1768 = vmatpush.xpose.msra.mxu0 %v1767
        %v1769 = vand.u32 %v1695, 4294901760
        %v1770 = vsub.f32 %v1695, %v1769
        %1771 = vmatmul.f32.gmra.mxu0 %v1770
        %v1772 = vpop.f32.mrf.mxu0
        %v1773 = vadd.f32 %v1749, %v1772
        %1774 = vdwg.mxu0
        %1775 = vmatpush.xpose.msra.mxu0 0.0
        %1776 = vmatpush.xpose.msra.mxu0 0.0
        %1777 = vmatpush.xpose.msra.mxu0 0.0
        %1778 = vmatpush.xpose.msra.mxu0 0.0
        %1779 = vmatpush.xpose.msra.mxu0 0.0
        %1780 = vmatpush.xpose.msra.mxu0 0.0
        %1781 = vmatpush.xpose.msra.mxu0 0.0
        %1782 = vmatpush.xpose.msra.mxu0 0.0
        %1783 = vmatpush.xpose.msra.mxu0 0.0
        %1784 = vmatpush.xpose.msra.mxu0 0.0
        %1785 = vmatpush.xpose.msra.mxu0 0.0
        %1786 = vmatpush.xpose.msra.mxu0 0.0
        %1787 = vmatpush.xpose.msra.mxu0 0.0
        %1788 = vmatpush.xpose.msra.mxu0 0.0
        %1789 = vmatpush.xpose.msra.mxu0 0.0
        %v1790 = vand.u32 %v1697, 4294901760
        %1791 = vmatpush.xpose.msra.mxu0 %v1790
        %v1792 = vand.u32 %v1695, 4294901760
        %v1793 = vsub.f32 %v1695, %v1792
        %v1794 = vand.u32 %v1793, 4294901760
        %1795 = vmatmul.f32.gmra.mxu0 %v1794
        %v1796 = vpop.f32.mrf.mxu0
        %v1797 = vadd.f32 %v1773, %v1796
        %1798 = vdwg.mxu0
        %1799 = vmatpush.xpose.msra.mxu0 0.0
        %1800 = vmatpush.xpose.msra.mxu0 0.0
        %1801 = vmatpush.xpose.msra.mxu0 0.0
        %1802 = vmatpush.xpose.msra.mxu0 0.0
        %1803 = vmatpush.xpose.msra.mxu0 0.0
        %1804 = vmatpush.xpose.msra.mxu0 0.0
        %1805 = vmatpush.xpose.msra.mxu0 0.0
        %1806 = vmatpush.xpose.msra.mxu0 0.0
        %1807 = vmatpush.xpose.msra.mxu0 0.0
        %1808 = vmatpush.xpose.msra.mxu0 0.0
        %1809 = vmatpush.xpose.msra.mxu0 0.0
        %1810 = vmatpush.xpose.msra.mxu0 0.0
        %1811 = vmatpush.xpose.msra.mxu0 0.0
        %1812 = vmatpush.xpose.msra.mxu0 0.0
        %1813 = vmatpush.xpose.msra.mxu0 0.0
        %v1814 = vand.u32 %v1697, 4294901760
        %v1815 = vsub.f32 %v1697, %v1814
        %v1816 = vand.u32 %v1815, 4294901760
        %1817 = vmatpush.xpose.msra.mxu0 %v1816
        %v1818 = vand.u32 %v1695, 4294901760
        %1819 = vmatmul.f32.gmra.mxu0 %v1818
        %v1820 = vpop.f32.mrf.mxu0
        %v1821 = vadd.f32 %v1797, %v1820
        %1822 = vdwg.mxu0
        %1823 = vmatpush.xpose.msra.mxu0 0.0
        %1824 = vmatpush.xpose.msra.mxu0 0.0
        %1825 = vmatpush.xpose.msra.mxu0 0.0
        %1826 = vmatpush.xpose.msra.mxu0 0.0
        %1827 = vmatpush.xpose.msra.mxu0 0.0
        %1828 = vmatpush.xpose.msra.mxu0 0.0
        %1829 = vmatpush.xpose.msra.mxu0 0.0
        %1830 = vmatpush.xpose.msra.mxu0 0.0
        %1831 = vmatpush.xpose.msra.mxu0 0.0
        %1832 = vmatpush.xpose.msra.mxu0 0.0
        %1833 = vmatpush.xpose.msra.mxu0 0.0
        %1834 = vmatpush.xpose.msra.mxu0 0.0
        %1835 = vmatpush.xpose.msra.mxu0 0.0
        %1836 = vmatpush.xpose.msra.mxu0 0.0
        %1837 = vmatpush.xpose.msra.mxu0 0.0
        %v1838 = vand.u32 %v1697, 4294901760
        %1839 = vmatpush.xpose.msra.mxu0 %v1838
        %v1840 = vand.u32 %v1695, 4294901760
        %1841 = vmatmul.f32.gmra.mxu0 %v1840
        %v1842 = vpop.f32.mrf.mxu0
        %v1843 = vadd.f32 %v1821, %v1842
        %1844 = vdwg.mxu0
        %v1845 = vmul.f32 %v1843, 0.25
        %v1846 = vadd.f32 %v1845, %v517
        %v1847 = vsel %vm520, %v1846, -inf
        %1848 = vmax.xlane.f32.xlu0 %v1847
        %v1849 = vpop.xlane.xlu0 %1848
        %v1850 = vsub.f32 %v1846, %v1849
        %v1851 = vmul.f32 %v1850, 1.442695
        %v1852 = vpow.pop %v1851
        %v1853 = vsel %vm520, %v1852, 0.0
        %1854 = vadd.xlane.f32.xlu0 %v1853
        %v1855 = vpop.xlane.xlu0 %1854
        %v1856 = vrcp.pop %v1855
        %v1857 = vmul.f32 %v1855, %v1856
        %v1858 = vsub.f32 1.0, %v1857
        %v1859 = vmul.f32 %v1856, %v1858
        %v1860 = vadd.f32 %v1856, %v1859
        %vm1861 = vweird.f32 %v1855
        %vm1862 = vweird.f32 %v1856
        %vm1863 = vmor %vm1861, %vm1862
        %v1864 = vsel %vm1863, %v1856, %v1860
        %v1865 = vand.u32 2147483647, %v1855
        %vm1866 = vcmp.eq.f32.partialorder %v1865, 8.507059e+37
        %v1867 = vand.u32 %v1855, 2147483648
        %v1868 = vor.u32 1.1754944e-38, %v1867
        %v1869 = vsel %vm1866, %v1868, %v1864
        %v1870 = vmul.f32 %v1852, %v1869
        %1871 = vrot.lane.b32.xlu0 %v360, 64
        %v1872 = vpop.permute.xlu0 %1871
        %v1875 = vsel %vm520, %v1870, 0
        %1877 = vmatpush.msra.mxu0 0.0
        %1878 = vmatpush.msra.mxu0 0.0
        %1879 = vmatpush.msra.mxu0 0.0
        %1880 = vmatpush.msra.mxu0 0.0
        %1881 = vmatpush.msra.mxu0 0.0
        %1882 = vmatpush.msra.mxu0 0.0
        %1883 = vmatpush.msra.mxu0 0.0
        %1884 = vmatpush.msra.mxu0 0.0
        %1885 = vmatpush.msra.mxu0 0.0
        %1886 = vmatpush.msra.mxu0 0.0
        %1887 = vmatpush.msra.mxu0 0.0
        %1888 = vmatpush.msra.mxu0 0.0
        %1889 = vmatpush.msra.mxu0 0.0
        %1890 = vmatpush.msra.mxu0 0.0
        %1891 = vmatpush.msra.mxu0 0.0
        %v1892 = vand.u32 %v1872, 4294901760
        %1893 = vmatpush.msra.mxu0 %v1892
        %v1894 = vand.u32 %v1875, 4294901760
        %v1895 = vsub.f32 %v1875, %v1894
        %v1896 = vand.u32 %v1895, 4294901760
        %v1897 = vsub.f32 %v1895, %v1896
        %v1898 = vand.u32 %v1897, 4294901760
        %1899 = vmatmul.f32.gmra.mxu0 %v1898
        %v1900 = vpop.f32.mrf.mxu0
        %v1901 = vadd.f32 0.0, %v1900
        %1902 = vdwg.mxu0
        %1903 = vmatpush.msra.mxu0 0.0
        %1904 = vmatpush.msra.mxu0 0.0
        %1905 = vmatpush.msra.mxu0 0.0
        %1906 = vmatpush.msra.mxu0 0.0
        %1907 = vmatpush.msra.mxu0 0.0
        %1908 = vmatpush.msra.mxu0 0.0
        %1909 = vmatpush.msra.mxu0 0.0
        %1910 = vmatpush.msra.mxu0 0.0
        %1911 = vmatpush.msra.mxu0 0.0
        %1912 = vmatpush.msra.mxu0 0.0
        %1913 = vmatpush.msra.mxu0 0.0
        %1914 = vmatpush.msra.mxu0 0.0
        %1915 = vmatpush.msra.mxu0 0.0
        %1916 = vmatpush.msra.mxu0 0.0
        %1917 = vmatpush.msra.mxu0 0.0
        %v1918 = vand.u32 %v1872, 4294901760
        %v1919 = vsub.f32 %v1872, %v1918
        %v1920 = vand.u32 %v1919, 4294901760
        %v1921 = vsub.f32 %v1919, %v1920
        %v1922 = vand.u32 %v1921, 4294901760
        %1923 = vmatpush.msra.mxu0 %v1922
        %v1924 = vand.u32 %v1875, 4294901760
        %1925 = vmatmul.f32.gmra.mxu0 %v1924
        %v1926 = vpop.f32.mrf.mxu0
        %v1927 = vadd.f32 %v1901, %v1926
        %1928 = vdwg.mxu0
        %1929 = vmatpush.msra.mxu0 0.0
        %1930 = vmatpush.msra.mxu0 0.0
        %1931 = vmatpush.msra.mxu0 0.0
        %1932 = vmatpush.msra.mxu0 0.0
        %1933 = vmatpush.msra.mxu0 0.0
        %1934 = vmatpush.msra.mxu0 0.0
        %1935 = vmatpush.msra.mxu0 0.0
        %1936 = vmatpush.msra.mxu0 0.0
        %1937 = vmatpush.msra.mxu0 0.0
        %1938 = vmatpush.msra.mxu0 0.0
        %1939 = vmatpush.msra.mxu0 0.0
        %1940 = vmatpush.msra.mxu0 0.0
        %1941 = vmatpush.msra.mxu0 0.0
        %1942 = vmatpush.msra.mxu0 0.0
        %1943 = vmatpush.msra.mxu0 0.0
        %v1944 = vand.u32 %v1872, 4294901760
        %v1945 = vsub.f32 %v1872, %v1944
        %1946 = vmatpush.msra.mxu0 %v1945
        %v1947 = vand.u32 %v1875, 4294901760
        %v1948 = vsub.f32 %v1875, %v1947
        %1949 = vmatmul.f32.gmra.mxu0 %v1948
        %v1950 = vpop.f32.mrf.mxu0
        %v1951 = vadd.f32 %v1927, %v1950
        %1952 = vdwg.mxu0
        %1953 = vmatpush.msra.mxu0 0.0
        %1954 = vmatpush.msra.mxu0 0.0
        %1955 = vmatpush.msra.mxu0 0.0
        %1956 = vmatpush.msra.mxu0 0.0
        %1957 = vmatpush.msra.mxu0 0.0
        %1958 = vmatpush.msra.mxu0 0.0
        %1959 = vmatpush.msra.mxu0 0.0
        %1960 = vmatpush.msra.mxu0 0.0
        %1961 = vmatpush.msra.mxu0 0.0
        %1962 = vmatpush.msra.mxu0 0.0
        %1963 = vmatpush.msra.mxu0 0.0
        %1964 = vmatpush.msra.mxu0 0.0
        %1965 = vmatpush.msra.mxu0 0.0
        %1966 = vmatpush.msra.mxu0 0.0
        %1967 = vmatpush.msra.mxu0 0.0
        %v1968 = vand.u32 %v1872, 4294901760
        %1969 = vmatpush.msra.mxu0 %v1968
        %v1970 = vand.u32 %v1875, 4294901760
        %v1971 = vsub.f32 %v1875, %v1970
        %v1972 = vand.u32 %v1971, 4294901760
        %1973 = vmatmul.f32.gmra.mxu0 %v1972
        %v1974 = vpop.f32.mrf.mxu0
        %v1975 = vadd.f32 %v1951, %v1974
        %1976 = vdwg.mxu0
        %1977 = vmatpush.msra.mxu0 0.0
        %1978 = vmatpush.msra.mxu0 0.0
        %1979 = vmatpush.msra.mxu0 0.0
        %1980 = vmatpush.msra.mxu0 0.0
        %1981 = vmatpush.msra.mxu0 0.0
        %1982 = vmatpush.msra.mxu0 0.0
        %1983 = vmatpush.msra.mxu0 0.0
        %1984 = vmatpush.msra.mxu0 0.0
        %1985 = vmatpush.msra.mxu0 0.0
        %1986 = vmatpush.msra.mxu0 0.0
        %1987 = vmatpush.msra.mxu0 0.0
        %1988 = vmatpush.msra.mxu0 0.0
        %1989 = vmatpush.msra.mxu0 0.0
        %1990 = vmatpush.msra.mxu0 0.0
        %1991 = vmatpush.msra.mxu0 0.0
        %v1992 = vand.u32 %v1872, 4294901760
        %v1993 = vsub.f32 %v1872, %v1992
        %v1994 = vand.u32 %v1993, 4294901760
        %1995 = vmatpush.msra.mxu0 %v1994
        %v1996 = vand.u32 %v1875, 4294901760
        %1997 = vmatmul.f32.gmra.mxu0 %v1996
        %v1998 = vpop.f32.mrf.mxu0
        %v1999 = vadd.f32 %v1975, %v1998
        %2000 = vdwg.mxu0
        %2001 = vmatpush.msra.mxu0 0.0
        %2002 = vmatpush.msra.mxu0 0.0
        %2003 = vmatpush.msra.mxu0 0.0
        %2004 = vmatpush.msra.mxu0 0.0
        %2005 = vmatpush.msra.mxu0 0.0
        %2006 = vmatpush.msra.mxu0 0.0
        %2007 = vmatpush.msra.mxu0 0.0
        %2008 = vmatpush.msra.mxu0 0.0
        %2009 = vmatpush.msra.mxu0 0.0
        %2010 = vmatpush.msra.mxu0 0.0
        %2011 = vmatpush.msra.mxu0 0.0
        %2012 = vmatpush.msra.mxu0 0.0
        %2013 = vmatpush.msra.mxu0 0.0
        %2014 = vmatpush.msra.mxu0 0.0
        %2015 = vmatpush.msra.mxu0 0.0
        %v2016 = vand.u32 %v1872, 4294901760
        %2017 = vmatpush.msra.mxu0 %v2016
        %v2018 = vand.u32 %v1875, 4294901760
        %2019 = vmatmul.f32.gmra.mxu0 %v2018
        %v2020 = vpop.f32.mrf.mxu0
        %v2021 = vadd.f32 %v1999, %v2020
        %2022 = vdwg.mxu0
        %2023 = vrot.lane.b32.xlu0 %v358, 48
        %v2024 = vpop.permute.xlu0 %2023
        %2025 = vrot.lane.b32.xlu0 %v359, 48
        %v2026 = vpop.permute.xlu0 %2025
        %v2027 = vsel %vm362, %v2024, 0
        %v2029 = vsel %vm362, %v2026, 0
        %2031 = vmatpush.xpose.msra.mxu0 0.0
        %2032 = vmatpush.xpose.msra.mxu0 0.0
        %2033 = vmatpush.xpose.msra.mxu0 0.0
        %2034 = vmatpush.xpose.msra.mxu0 0.0
        %2035 = vmatpush.xpose.msra.mxu0 0.0
        %2036 = vmatpush.xpose.msra.mxu0 0.0
        %2037 = vmatpush.xpose.msra.mxu0 0.0
        %2038 = vmatpush.xpose.msra.mxu0 0.0
        %2039 = vmatpush.xpose.msra.mxu0 0.0
        %2040 = vmatpush.xpose.msra.mxu0 0.0
        %2041 = vmatpush.xpose.msra.mxu0 0.0
        %2042 = vmatpush.xpose.msra.mxu0 0.0
        %2043 = vmatpush.xpose.msra.mxu0 0.0
        %2044 = vmatpush.xpose.msra.mxu0 0.0
        %2045 = vmatpush.xpose.msra.mxu0 0.0
        %v2046 = vand.u32 %v2029, 4294901760
        %2047 = vmatpush.xpose.msra.mxu0 %v2046
        %v2048 = vand.u32 %v2027, 4294901760
        %v2049 = vsub.f32 %v2027, %v2048
        %v2050 = vand.u32 %v2049, 4294901760
        %v2051 = vsub.f32 %v2049, %v2050
        %v2052 = vand.u32 %v2051, 4294901760
        %2053 = vmatmul.f32.gmra.mxu0 %v2052
        %v2054 = vpop.f32.mrf.mxu0
        %v2055 = vadd.f32 0.0, %v2054
        %2056 = vdwg.mxu0
        %2057 = vmatpush.xpose.msra.mxu0 0.0
        %2058 = vmatpush.xpose.msra.mxu0 0.0
        %2059 = vmatpush.xpose.msra.mxu0 0.0
        %2060 = vmatpush.xpose.msra.mxu0 0.0
        %2061 = vmatpush.xpose.msra.mxu0 0.0
        %2062 = vmatpush.xpose.msra.mxu0 0.0
        %2063 = vmatpush.xpose.msra.mxu0 0.0
        %2064 = vmatpush.xpose.msra.mxu0 0.0
        %2065 = vmatpush.xpose.msra.mxu0 0.0
        %2066 = vmatpush.xpose.msra.mxu0 0.0
        %2067 = vmatpush.xpose.msra.mxu0 0.0
        %2068 = vmatpush.xpose.msra.mxu0 0.0
        %2069 = vmatpush.xpose.msra.mxu0 0.0
        %2070 = vmatpush.xpose.msra.mxu0 0.0
        %2071 = vmatpush.xpose.msra.mxu0 0.0
        %v2072 = vand.u32 %v2029, 4294901760
        %v2073 = vsub.f32 %v2029, %v2072
        %v2074 = vand.u32 %v2073, 4294901760
        %v2075 = vsub.f32 %v2073, %v2074
        %v2076 = vand.u32 %v2075, 4294901760
        %2077 = vmatpush.xpose.msra.mxu0 %v2076
        %v2078 = vand.u32 %v2027, 4294901760
        %2079 = vmatmul.f32.gmra.mxu0 %v2078
        %v2080 = vpop.f32.mrf.mxu0
        %v2081 = vadd.f32 %v2055, %v2080
        %2082 = vdwg.mxu0
        %2083 = vmatpush.xpose.msra.mxu0 0.0
        %2084 = vmatpush.xpose.msra.mxu0 0.0
        %2085 = vmatpush.xpose.msra.mxu0 0.0
        %2086 = vmatpush.xpose.msra.mxu0 0.0
        %2087 = vmatpush.xpose.msra.mxu0 0.0
        %2088 = vmatpush.xpose.msra.mxu0 0.0
        %2089 = vmatpush.xpose.msra.mxu0 0.0
        %2090 = vmatpush.xpose.msra.mxu0 0.0
        %2091 = vmatpush.xpose.msra.mxu0 0.0
        %2092 = vmatpush.xpose.msra.mxu0 0.0
        %2093 = vmatpush.xpose.msra.mxu0 0.0
        %2094 = vmatpush.xpose.msra.mxu0 0.0
        %2095 = vmatpush.xpose.msra.mxu0 0.0
        %2096 = vmatpush.xpose.msra.mxu0 0.0
        %2097 = vmatpush.xpose.msra.mxu0 0.0
        %v2098 = vand.u32 %v2029, 4294901760
        %v2099 = vsub.f32 %v2029, %v2098
        %2100 = vmatpush.xpose.msra.mxu0 %v2099
        %v2101 = vand.u32 %v2027, 4294901760
        %v2102 = vsub.f32 %v2027, %v2101
        %2103 = vmatmul.f32.gmra.mxu0 %v2102
        %v2104 = vpop.f32.mrf.mxu0
        %v2105 = vadd.f32 %v2081, %v2104
        %2106 = vdwg.mxu0
        %2107 = vmatpush.xpose.msra.mxu0 0.0
        %2108 = vmatpush.xpose.msra.mxu0 0.0
        %2109 = vmatpush.xpose.msra.mxu0 0.0
        %2110 = vmatpush.xpose.msra.mxu0 0.0
        %2111 = vmatpush.xpose.msra.mxu0 0.0
        %2112 = vmatpush.xpose.msra.mxu0 0.0
        %2113 = vmatpush.xpose.msra.mxu0 0.0
        %2114 = vmatpush.xpose.msra.mxu0 0.0
        %2115 = vmatpush.xpose.msra.mxu0 0.0
        %2116 = vmatpush.xpose.msra.mxu0 0.0
        %2117 = vmatpush.xpose.msra.mxu0 0.0
        %2118 = vmatpush.xpose.msra.mxu0 0.0
        %2119 = vmatpush.xpose.msra.mxu0 0.0
        %2120 = vmatpush.xpose.msra.mxu0 0.0
        %2121 = vmatpush.xpose.msra.mxu0 0.0
        %v2122 = vand.u32 %v2029, 4294901760
        %2123 = vmatpush.xpose.msra.mxu0 %v2122
        %v2124 = vand.u32 %v2027, 4294901760
        %v2125 = vsub.f32 %v2027, %v2124
        %v2126 = vand.u32 %v2125, 4294901760
        %2127 = vmatmul.f32.gmra.mxu0 %v2126
        %v2128 = vpop.f32.mrf.mxu0
        %v2129 = vadd.f32 %v2105, %v2128
        %2130 = vdwg.mxu0
        %2131 = vmatpush.xpose.msra.mxu0 0.0
        %2132 = vmatpush.xpose.msra.mxu0 0.0
        %2133 = vmatpush.xpose.msra.mxu0 0.0
        %2134 = vmatpush.xpose.msra.mxu0 0.0
        %2135 = vmatpush.xpose.msra.mxu0 0.0
        %2136 = vmatpush.xpose.msra.mxu0 0.0
        %2137 = vmatpush.xpose.msra.mxu0 0.0
        %2138 = vmatpush.xpose.msra.mxu0 0.0
        %2139 = vmatpush.xpose.msra.mxu0 0.0
        %2140 = vmatpush.xpose.msra.mxu0 0.0
        %2141 = vmatpush.xpose.msra.mxu0 0.0
        %2142 = vmatpush.xpose.msra.mxu0 0.0
        %2143 = vmatpush.xpose.msra.mxu0 0.0
        %2144 = vmatpush.xpose.msra.mxu0 0.0
        %2145 = vmatpush.xpose.msra.mxu0 0.0
        %v2146 = vand.u32 %v2029, 4294901760
        %v2147 = vsub.f32 %v2029, %v2146
        %v2148 = vand.u32 %v2147, 4294901760
        %2149 = vmatpush.xpose.msra.mxu0 %v2148
        %v2150 = vand.u32 %v2027, 4294901760
        %2151 = vmatmul.f32.gmra.mxu0 %v2150
        %v2152 = vpop.f32.mrf.mxu0
        %v2153 = vadd.f32 %v2129, %v2152
        %2154 = vdwg.mxu0
        %2155 = vmatpush.xpose.msra.mxu0 0.0
        %2156 = vmatpush.xpose.msra.mxu0 0.0
        %2157 = vmatpush.xpose.msra.mxu0 0.0
        %2158 = vmatpush.xpose.msra.mxu0 0.0
        %2159 = vmatpush.xpose.msra.mxu0 0.0
        %2160 = vmatpush.xpose.msra.mxu0 0.0
        %2161 = vmatpush.xpose.msra.mxu0 0.0
        %2162 = vmatpush.xpose.msra.mxu0 0.0
        %2163 = vmatpush.xpose.msra.mxu0 0.0
        %2164 = vmatpush.xpose.msra.mxu0 0.0
        %2165 = vmatpush.xpose.msra.mxu0 0.0
        %2166 = vmatpush.xpose.msra.mxu0 0.0
        %2167 = vmatpush.xpose.msra.mxu0 0.0
        %2168 = vmatpush.xpose.msra.mxu0 0.0
        %2169 = vmatpush.xpose.msra.mxu0 0.0
        %v2170 = vand.u32 %v2029, 4294901760
        %2171 = vmatpush.xpose.msra.mxu0 %v2170
        %v2172 = vand.u32 %v2027, 4294901760
        %2173 = vmatmul.f32.gmra.mxu0 %v2172
        %v2174 = vpop.f32.mrf.mxu0
        %v2175 = vadd.f32 %v2153, %v2174
        %2176 = vdwg.mxu0
        %v2177 = vmul.f32 %v2175, 0.25
        %v2178 = vadd.f32 %v2177, %v517
        %v2179 = vsel %vm520, %v2178, -inf
        %2180 = vmax.xlane.f32.xlu0 %v2179
        %v2181 = vpop.xlane.xlu0 %2180
        %v2182 = vsub.f32 %v2178, %v2181
        %v2183 = vmul.f32 %v2182, 1.442695
        %v2184 = vpow.pop %v2183
        %v2185 = vsel %vm520, %v2184, 0.0
        %2186 = vadd.xlane.f32.xlu0 %v2185
        %v2187 = vpop.xlane.xlu0 %2186
        %v2188 = vrcp.pop %v2187
        %v2189 = vmul.f32 %v2187, %v2188
        %v2190 = vsub.f32 1.0, %v2189
        %v2191 = vmul.f32 %v2188, %v2190
        %v2192 = vadd.f32 %v2188, %v2191
        %vm2193 = vweird.f32 %v2187
        %vm2194 = vweird.f32 %v2188
        %vm2195 = vmor %vm2193, %vm2194
        %v2196 = vsel %vm2195, %v2188, %v2192
        %v2197 = vand.u32 2147483647, %v2187
        %vm2198 = vcmp.eq.f32.partialorder %v2197, 8.507059e+37
        %v2199 = vand.u32 %v2187, 2147483648
        %v2200 = vor.u32 1.1754944e-38, %v2199
        %v2201 = vsel %vm2198, %v2200, %v2196
        %v2202 = vmul.f32 %v2184, %v2201
        %2203 = vrot.lane.b32.xlu0 %v360, 48
        %v2204 = vpop.permute.xlu0 %2203
        %v2207 = vsel %vm520, %v2202, 0
        %2209 = vmatpush.msra.mxu0 0.0
        %2210 = vmatpush.msra.mxu0 0.0
        %2211 = vmatpush.msra.mxu0 0.0
        %2212 = vmatpush.msra.mxu0 0.0
        %2213 = vmatpush.msra.mxu0 0.0
        %2214 = vmatpush.msra.mxu0 0.0
        %2215 = vmatpush.msra.mxu0 0.0
        %2216 = vmatpush.msra.mxu0 0.0
        %2217 = vmatpush.msra.mxu0 0.0
        %2218 = vmatpush.msra.mxu0 0.0
        %2219 = vmatpush.msra.mxu0 0.0
        %2220 = vmatpush.msra.mxu0 0.0
        %2221 = vmatpush.msra.mxu0 0.0
        %2222 = vmatpush.msra.mxu0 0.0
        %2223 = vmatpush.msra.mxu0 0.0
        %v2224 = vand.u32 %v2204, 4294901760
        %2225 = vmatpush.msra.mxu0 %v2224
        %v2226 = vand.u32 %v2207, 4294901760
        %v2227 = vsub.f32 %v2207, %v2226
        %v2228 = vand.u32 %v2227, 4294901760
        %v2229 = vsub.f32 %v2227, %v2228
        %v2230 = vand.u32 %v2229, 4294901760
        %2231 = vmatmul.f32.gmra.mxu0 %v2230
        %v2232 = vpop.f32.mrf.mxu0
        %v2233 = vadd.f32 0.0, %v2232
        %2234 = vdwg.mxu0
        %2235 = vmatpush.msra.mxu0 0.0
        %2236 = vmatpush.msra.mxu0 0.0
        %2237 = vmatpush.msra.mxu0 0.0
        %2238 = vmatpush.msra.mxu0 0.0
        %2239 = vmatpush.msra.mxu0 0.0
        %2240 = vmatpush.msra.mxu0 0.0
        %2241 = vmatpush.msra.mxu0 0.0
        %2242 = vmatpush.msra.mxu0 0.0
        %2243 = vmatpush.msra.mxu0 0.0
        %2244 = vmatpush.msra.mxu0 0.0
        %2245 = vmatpush.msra.mxu0 0.0
        %2246 = vmatpush.msra.mxu0 0.0
        %2247 = vmatpush.msra.mxu0 0.0
        %2248 = vmatpush.msra.mxu0 0.0
        %2249 = vmatpush.msra.mxu0 0.0
        %v2250 = vand.u32 %v2204, 4294901760
        %v2251 = vsub.f32 %v2204, %v2250
        %v2252 = vand.u32 %v2251, 4294901760
        %v2253 = vsub.f32 %v2251, %v2252
        %v2254 = vand.u32 %v2253, 4294901760
        %2255 = vmatpush.msra.mxu0 %v2254
        %v2256 = vand.u32 %v2207, 4294901760
        %2257 = vmatmul.f32.gmra.mxu0 %v2256
        %v2258 = vpop.f32.mrf.mxu0
        %v2259 = vadd.f32 %v2233, %v2258
        %2260 = vdwg.mxu0
        %2261 = vmatpush.msra.mxu0 0.0
        %2262 = vmatpush.msra.mxu0 0.0
        %2263 = vmatpush.msra.mxu0 0.0
        %2264 = vmatpush.msra.mxu0 0.0
        %2265 = vmatpush.msra.mxu0 0.0
        %2266 = vmatpush.msra.mxu0 0.0
        %2267 = vmatpush.msra.mxu0 0.0
        %2268 = vmatpush.msra.mxu0 0.0
        %2269 = vmatpush.msra.mxu0 0.0
        %2270 = vmatpush.msra.mxu0 0.0
        %2271 = vmatpush.msra.mxu0 0.0
        %2272 = vmatpush.msra.mxu0 0.0
        %2273 = vmatpush.msra.mxu0 0.0
        %2274 = vmatpush.msra.mxu0 0.0
        %2275 = vmatpush.msra.mxu0 0.0
        %v2276 = vand.u32 %v2204, 4294901760
        %v2277 = vsub.f32 %v2204, %v2276
        %2278 = vmatpush.msra.mxu0 %v2277
        %v2279 = vand.u32 %v2207, 4294901760
        %v2280 = vsub.f32 %v2207, %v2279
        %2281 = vmatmul.f32.gmra.mxu0 %v2280
        %v2282 = vpop.f32.mrf.mxu0
        %v2283 = vadd.f32 %v2259, %v2282
        %2284 = vdwg.mxu0
        %2285 = vmatpush.msra.mxu0 0.0
        %2286 = vmatpush.msra.mxu0 0.0
        %2287 = vmatpush.msra.mxu0 0.0
        %2288 = vmatpush.msra.mxu0 0.0
        %2289 = vmatpush.msra.mxu0 0.0
        %2290 = vmatpush.msra.mxu0 0.0
        %2291 = vmatpush.msra.mxu0 0.0
        %2292 = vmatpush.msra.mxu0 0.0
        %2293 = vmatpush.msra.mxu0 0.0
        %2294 = vmatpush.msra.mxu0 0.0
        %2295 = vmatpush.msra.mxu0 0.0
        %2296 = vmatpush.msra.mxu0 0.0
        %2297 = vmatpush.msra.mxu0 0.0
        %2298 = vmatpush.msra.mxu0 0.0
        %2299 = vmatpush.msra.mxu0 0.0
        %v2300 = vand.u32 %v2204, 4294901760
        %2301 = vmatpush.msra.mxu0 %v2300
        %v2302 = vand.u32 %v2207, 4294901760
        %v2303 = vsub.f32 %v2207, %v2302
        %v2304 = vand.u32 %v2303, 4294901760
        %2305 = vmatmul.f32.gmra.mxu0 %v2304
        %v2306 = vpop.f32.mrf.mxu0
        %v2307 = vadd.f32 %v2283, %v2306
        %2308 = vdwg.mxu0
        %2309 = vmatpush.msra.mxu0 0.0
        %2310 = vmatpush.msra.mxu0 0.0
        %2311 = vmatpush.msra.mxu0 0.0
        %2312 = vmatpush.msra.mxu0 0.0
        %2313 = vmatpush.msra.mxu0 0.0
        %2314 = vmatpush.msra.mxu0 0.0
        %2315 = vmatpush.msra.mxu0 0.0
        %2316 = vmatpush.msra.mxu0 0.0
        %2317 = vmatpush.msra.mxu0 0.0
        %2318 = vmatpush.msra.mxu0 0.0
        %2319 = vmatpush.msra.mxu0 0.0
        %2320 = vmatpush.msra.mxu0 0.0
        %2321 = vmatpush.msra.mxu0 0.0
        %2322 = vmatpush.msra.mxu0 0.0
        %2323 = vmatpush.msra.mxu0 0.0
        %v2324 = vand.u32 %v2204, 4294901760
        %v2325 = vsub.f32 %v2204, %v2324
        %v2326 = vand.u32 %v2325, 4294901760
        %2327 = vmatpush.msra.mxu0 %v2326
        %v2328 = vand.u32 %v2207, 4294901760
        %2329 = vmatmul.f32.gmra.mxu0 %v2328
        %v2330 = vpop.f32.mrf.mxu0
        %v2331 = vadd.f32 %v2307, %v2330
        %2332 = vdwg.mxu0
        %2333 = vmatpush.msra.mxu0 0.0
        %2334 = vmatpush.msra.mxu0 0.0
        %2335 = vmatpush.msra.mxu0 0.0
        %2336 = vmatpush.msra.mxu0 0.0
        %2337 = vmatpush.msra.mxu0 0.0
        %2338 = vmatpush.msra.mxu0 0.0
        %2339 = vmatpush.msra.mxu0 0.0
        %2340 = vmatpush.msra.mxu0 0.0
        %2341 = vmatpush.msra.mxu0 0.0
        %2342 = vmatpush.msra.mxu0 0.0
        %2343 = vmatpush.msra.mxu0 0.0
        %2344 = vmatpush.msra.mxu0 0.0
        %2345 = vmatpush.msra.mxu0 0.0
        %2346 = vmatpush.msra.mxu0 0.0
        %2347 = vmatpush.msra.mxu0 0.0
        %v2348 = vand.u32 %v2204, 4294901760
        %2349 = vmatpush.msra.mxu0 %v2348
        %v2350 = vand.u32 %v2207, 4294901760
        %2351 = vmatmul.f32.gmra.mxu0 %v2350
        %v2352 = vpop.f32.mrf.mxu0
        %v2353 = vadd.f32 %v2331, %v2352
        %2354 = vdwg.mxu0
        %2355 = vrot.lane.b32.xlu0 %v358, 32
        %v2356 = vpop.permute.xlu0 %2355
        %2357 = vrot.lane.b32.xlu0 %v359, 32
        %v2358 = vpop.permute.xlu0 %2357
        %v2359 = vsel %vm362, %v2356, 0
        %v2361 = vsel %vm362, %v2358, 0
        %2363 = vmatpush.xpose.msra.mxu0 0.0
        %2364 = vmatpush.xpose.msra.mxu0 0.0
        %2365 = vmatpush.xpose.msra.mxu0 0.0
        %2366 = vmatpush.xpose.msra.mxu0 0.0
        %2367 = vmatpush.xpose.msra.mxu0 0.0
        %2368 = vmatpush.xpose.msra.mxu0 0.0
        %2369 = vmatpush.xpose.msra.mxu0 0.0
        %2370 = vmatpush.xpose.msra.mxu0 0.0
        %2371 = vmatpush.xpose.msra.mxu0 0.0
        %2372 = vmatpush.xpose.msra.mxu0 0.0
        %2373 = vmatpush.xpose.msra.mxu0 0.0
        %2374 = vmatpush.xpose.msra.mxu0 0.0
        %2375 = vmatpush.xpose.msra.mxu0 0.0
        %2376 = vmatpush.xpose.msra.mxu0 0.0
        %2377 = vmatpush.xpose.msra.mxu0 0.0
        %v2378 = vand.u32 %v2361, 4294901760
        %2379 = vmatpush.xpose.msra.mxu0 %v2378
        %v2380 = vand.u32 %v2359, 4294901760
        %v2381 = vsub.f32 %v2359, %v2380
        %v2382 = vand.u32 %v2381, 4294901760
        %v2383 = vsub.f32 %v2381, %v2382
        %v2384 = vand.u32 %v2383, 4294901760
        %2385 = vmatmul.f32.gmra.mxu0 %v2384
        %v2386 = vpop.f32.mrf.mxu0
        %v2387 = vadd.f32 0.0, %v2386
        %2388 = vdwg.mxu0
        %2389 = vmatpush.xpose.msra.mxu0 0.0
        %2390 = vmatpush.xpose.msra.mxu0 0.0
        %2391 = vmatpush.xpose.msra.mxu0 0.0
        %2392 = vmatpush.xpose.msra.mxu0 0.0
        %2393 = vmatpush.xpose.msra.mxu0 0.0
        %2394 = vmatpush.xpose.msra.mxu0 0.0
        %2395 = vmatpush.xpose.msra.mxu0 0.0
        %2396 = vmatpush.xpose.msra.mxu0 0.0
        %2397 = vmatpush.xpose.msra.mxu0 0.0
        %2398 = vmatpush.xpose.msra.mxu0 0.0
        %2399 = vmatpush.xpose.msra.mxu0 0.0
        %2400 = vmatpush.xpose.msra.mxu0 0.0
        %2401 = vmatpush.xpose.msra.mxu0 0.0
        %2402 = vmatpush.xpose.msra.mxu0 0.0
        %2403 = vmatpush.xpose.msra.mxu0 0.0
        %v2404 = vand.u32 %v2361, 4294901760
        %v2405 = vsub.f32 %v2361, %v2404
        %v2406 = vand.u32 %v2405, 4294901760
        %v2407 = vsub.f32 %v2405, %v2406
        %v2408 = vand.u32 %v2407, 4294901760
        %2409 = vmatpush.xpose.msra.mxu0 %v2408
        %v2410 = vand.u32 %v2359, 4294901760
        %2411 = vmatmul.f32.gmra.mxu0 %v2410
        %v2412 = vpop.f32.mrf.mxu0
        %v2413 = vadd.f32 %v2387, %v2412
        %2414 = vdwg.mxu0
        %2415 = vmatpush.xpose.msra.mxu0 0.0
        %2416 = vmatpush.xpose.msra.mxu0 0.0
        %2417 = vmatpush.xpose.msra.mxu0 0.0
        %2418 = vmatpush.xpose.msra.mxu0 0.0
        %2419 = vmatpush.xpose.msra.mxu0 0.0
        %2420 = vmatpush.xpose.msra.mxu0 0.0
        %2421 = vmatpush.xpose.msra.mxu0 0.0
        %2422 = vmatpush.xpose.msra.mxu0 0.0
        %2423 = vmatpush.xpose.msra.mxu0 0.0
        %2424 = vmatpush.xpose.msra.mxu0 0.0
        %2425 = vmatpush.xpose.msra.mxu0 0.0
        %2426 = vmatpush.xpose.msra.mxu0 0.0
        %2427 = vmatpush.xpose.msra.mxu0 0.0
        %2428 = vmatpush.xpose.msra.mxu0 0.0
        %2429 = vmatpush.xpose.msra.mxu0 0.0
        %v2430 = vand.u32 %v2361, 4294901760
        %v2431 = vsub.f32 %v2361, %v2430
        %2432 = vmatpush.xpose.msra.mxu0 %v2431
        %v2433 = vand.u32 %v2359, 4294901760
        %v2434 = vsub.f32 %v2359, %v2433
        %2435 = vmatmul.f32.gmra.mxu0 %v2434
        %v2436 = vpop.f32.mrf.mxu0
        %v2437 = vadd.f32 %v2413, %v2436
        %2438 = vdwg.mxu0
        %2439 = vmatpush.xpose.msra.mxu0 0.0
        %2440 = vmatpush.xpose.msra.mxu0 0.0
        %2441 = vmatpush.xpose.msra.mxu0 0.0
        %2442 = vmatpush.xpose.msra.mxu0 0.0
        %2443 = vmatpush.xpose.msra.mxu0 0.0
        %2444 = vmatpush.xpose.msra.mxu0 0.0
        %2445 = vmatpush.xpose.msra.mxu0 0.0
        %2446 = vmatpush.xpose.msra.mxu0 0.0
        %2447 = vmatpush.xpose.msra.mxu0 0.0
        %2448 = vmatpush.xpose.msra.mxu0 0.0
        %2449 = vmatpush.xpose.msra.mxu0 0.0
        %2450 = vmatpush.xpose.msra.mxu0 0.0
        %2451 = vmatpush.xpose.msra.mxu0 0.0
        %2452 = vmatpush.xpose.msra.mxu0 0.0
        %2453 = vmatpush.xpose.msra.mxu0 0.0
        %v2454 = vand.u32 %v2361, 4294901760
        %2455 = vmatpush.xpose.msra.mxu0 %v2454
        %v2456 = vand.u32 %v2359, 4294901760
        %v2457 = vsub.f32 %v2359, %v2456
        %v2458 = vand.u32 %v2457, 4294901760
        %2459 = vmatmul.f32.gmra.mxu0 %v2458
        %v2460 = vpop.f32.mrf.mxu0
        %v2461 = vadd.f32 %v2437, %v2460
        %2462 = vdwg.mxu0
        %2463 = vmatpush.xpose.msra.mxu0 0.0
        %2464 = vmatpush.xpose.msra.mxu0 0.0
        %2465 = vmatpush.xpose.msra.mxu0 0.0
        %2466 = vmatpush.xpose.msra.mxu0 0.0
        %2467 = vmatpush.xpose.msra.mxu0 0.0
        %2468 = vmatpush.xpose.msra.mxu0 0.0
        %2469 = vmatpush.xpose.msra.mxu0 0.0
        %2470 = vmatpush.xpose.msra.mxu0 0.0
        %2471 = vmatpush.xpose.msra.mxu0 0.0
        %2472 = vmatpush.xpose.msra.mxu0 0.0
        %2473 = vmatpush.xpose.msra.mxu0 0.0
        %2474 = vmatpush.xpose.msra.mxu0 0.0
        %2475 = vmatpush.xpose.msra.mxu0 0.0
        %2476 = vmatpush.xpose.msra.mxu0 0.0
        %2477 = vmatpush.xpose.msra.mxu0 0.0
        %v2478 = vand.u32 %v2361, 4294901760
        %v2479 = vsub.f32 %v2361, %v2478
        %v2480 = vand.u32 %v2479, 4294901760
        %2481 = vmatpush.xpose.msra.mxu0 %v2480
        %v2482 = vand.u32 %v2359, 4294901760
        %2483 = vmatmul.f32.gmra.mxu0 %v2482
        %v2484 = vpop.f32.mrf.mxu0
        %v2485 = vadd.f32 %v2461, %v2484
        %2486 = vdwg.mxu0
        %2487 = vmatpush.xpose.msra.mxu0 0.0
        %2488 = vmatpush.xpose.msra.mxu0 0.0
        %2489 = vmatpush.xpose.msra.mxu0 0.0
        %2490 = vmatpush.xpose.msra.mxu0 0.0
        %2491 = vmatpush.xpose.msra.mxu0 0.0
        %2492 = vmatpush.xpose.msra.mxu0 0.0
        %2493 = vmatpush.xpose.msra.mxu0 0.0
        %2494 = vmatpush.xpose.msra.mxu0 0.0
        %2495 = vmatpush.xpose.msra.mxu0 0.0
        %2496 = vmatpush.xpose.msra.mxu0 0.0
        %2497 = vmatpush.xpose.msra.mxu0 0.0
        %2498 = vmatpush.xpose.msra.mxu0 0.0
        %2499 = vmatpush.xpose.msra.mxu0 0.0
        %2500 = vmatpush.xpose.msra.mxu0 0.0
        %2501 = vmatpush.xpose.msra.mxu0 0.0
        %v2502 = vand.u32 %v2361, 4294901760
        %2503 = vmatpush.xpose.msra.mxu0 %v2502
        %v2504 = vand.u32 %v2359, 4294901760
        %2505 = vmatmul.f32.gmra.mxu0 %v2504
        %v2506 = vpop.f32.mrf.mxu0
        %v2507 = vadd.f32 %v2485, %v2506
        %2508 = vdwg.mxu0
        %v2509 = vmul.f32 %v2507, 0.25
        %v2510 = vadd.f32 %v2509, %v517
        %v2511 = vsel %vm520, %v2510, -inf
        %2512 = vmax.xlane.f32.xlu0 %v2511
        %v2513 = vpop.xlane.xlu0 %2512
        %v2514 = vsub.f32 %v2510, %v2513
        %v2515 = vmul.f32 %v2514, 1.442695
        %v2516 = vpow.pop %v2515
        %v2517 = vsel %vm520, %v2516, 0.0
        %2518 = vadd.xlane.f32.xlu0 %v2517
        %v2519 = vpop.xlane.xlu0 %2518
        %v2520 = vrcp.pop %v2519
        %v2521 = vmul.f32 %v2519, %v2520
        %v2522 = vsub.f32 1.0, %v2521
        %v2523 = vmul.f32 %v2520, %v2522
        %v2524 = vadd.f32 %v2520, %v2523
        %vm2525 = vweird.f32 %v2519
        %vm2526 = vweird.f32 %v2520
        %vm2527 = vmor %vm2525, %vm2526
        %v2528 = vsel %vm2527, %v2520, %v2524
        %v2529 = vand.u32 2147483647, %v2519
        %vm2530 = vcmp.eq.f32.partialorder %v2529, 8.507059e+37
        %v2531 = vand.u32 %v2519, 2147483648
        %v2532 = vor.u32 1.1754944e-38, %v2531
        %v2533 = vsel %vm2530, %v2532, %v2528
        %v2534 = vmul.f32 %v2516, %v2533
        %2535 = vrot.lane.b32.xlu0 %v360, 32
        %v2536 = vpop.permute.xlu0 %2535
        %v2539 = vsel %vm520, %v2534, 0
        %2541 = vmatpush.msra.mxu0 0.0
        %2542 = vmatpush.msra.mxu0 0.0
        %2543 = vmatpush.msra.mxu0 0.0
        %2544 = vmatpush.msra.mxu0 0.0
        %2545 = vmatpush.msra.mxu0 0.0
        %2546 = vmatpush.msra.mxu0 0.0
        %2547 = vmatpush.msra.mxu0 0.0
        %2548 = vmatpush.msra.mxu0 0.0
        %2549 = vmatpush.msra.mxu0 0.0
        %2550 = vmatpush.msra.mxu0 0.0
        %2551 = vmatpush.msra.mxu0 0.0
        %2552 = vmatpush.msra.mxu0 0.0
        %2553 = vmatpush.msra.mxu0 0.0
        %2554 = vmatpush.msra.mxu0 0.0
        %2555 = vmatpush.msra.mxu0 0.0
        %v2556 = vand.u32 %v2536, 4294901760
        %2557 = vmatpush.msra.mxu0 %v2556
        %v2558 = vand.u32 %v2539, 4294901760
        %v2559 = vsub.f32 %v2539, %v2558
        %v2560 = vand.u32 %v2559, 4294901760
        %v2561 = vsub.f32 %v2559, %v2560
        %v2562 = vand.u32 %v2561, 4294901760
        %2563 = vmatmul.f32.gmra.mxu0 %v2562
        %v2564 = vpop.f32.mrf.mxu0
        %v2565 = vadd.f32 0.0, %v2564
        %2566 = vdwg.mxu0
        %2567 = vmatpush.msra.mxu0 0.0
        %2568 = vmatpush.msra.mxu0 0.0
        %2569 = vmatpush.msra.mxu0 0.0
        %2570 = vmatpush.msra.mxu0 0.0
        %2571 = vmatpush.msra.mxu0 0.0
        %2572 = vmatpush.msra.mxu0 0.0
        %2573 = vmatpush.msra.mxu0 0.0
        %2574 = vmatpush.msra.mxu0 0.0
        %2575 = vmatpush.msra.mxu0 0.0
        %2576 = vmatpush.msra.mxu0 0.0
        %2577 = vmatpush.msra.mxu0 0.0
        %2578 = vmatpush.msra.mxu0 0.0
        %2579 = vmatpush.msra.mxu0 0.0
        %2580 = vmatpush.msra.mxu0 0.0
        %2581 = vmatpush.msra.mxu0 0.0
        %v2582 = vand.u32 %v2536, 4294901760
        %v2583 = vsub.f32 %v2536, %v2582
        %v2584 = vand.u32 %v2583, 4294901760
        %v2585 = vsub.f32 %v2583, %v2584
        %v2586 = vand.u32 %v2585, 4294901760
        %2587 = vmatpush.msra.mxu0 %v2586
        %v2588 = vand.u32 %v2539, 4294901760
        %2589 = vmatmul.f32.gmra.mxu0 %v2588
        %v2590 = vpop.f32.mrf.mxu0
        %v2591 = vadd.f32 %v2565, %v2590
        %2592 = vdwg.mxu0
        %2593 = vmatpush.msra.mxu0 0.0
        %2594 = vmatpush.msra.mxu0 0.0
        %2595 = vmatpush.msra.mxu0 0.0
        %2596 = vmatpush.msra.mxu0 0.0
        %2597 = vmatpush.msra.mxu0 0.0
        %2598 = vmatpush.msra.mxu0 0.0
        %2599 = vmatpush.msra.mxu0 0.0
        %2600 = vmatpush.msra.mxu0 0.0
        %2601 = vmatpush.msra.mxu0 0.0
        %2602 = vmatpush.msra.mxu0 0.0
        %2603 = vmatpush.msra.mxu0 0.0
        %2604 = vmatpush.msra.mxu0 0.0
        %2605 = vmatpush.msra.mxu0 0.0
        %2606 = vmatpush.msra.mxu0 0.0
        %2607 = vmatpush.msra.mxu0 0.0
        %v2608 = vand.u32 %v2536, 4294901760
        %v2609 = vsub.f32 %v2536, %v2608
        %2610 = vmatpush.msra.mxu0 %v2609
        %v2611 = vand.u32 %v2539, 4294901760
        %v2612 = vsub.f32 %v2539, %v2611
        %2613 = vmatmul.f32.gmra.mxu0 %v2612
        %v2614 = vpop.f32.mrf.mxu0
        %v2615 = vadd.f32 %v2591, %v2614
        %2616 = vdwg.mxu0
        %2617 = vmatpush.msra.mxu0 0.0
        %2618 = vmatpush.msra.mxu0 0.0
        %2619 = vmatpush.msra.mxu0 0.0
        %2620 = vmatpush.msra.mxu0 0.0
        %2621 = vmatpush.msra.mxu0 0.0
        %2622 = vmatpush.msra.mxu0 0.0
        %2623 = vmatpush.msra.mxu0 0.0
        %2624 = vmatpush.msra.mxu0 0.0
        %2625 = vmatpush.msra.mxu0 0.0
        %2626 = vmatpush.msra.mxu0 0.0
        %2627 = vmatpush.msra.mxu0 0.0
        %2628 = vmatpush.msra.mxu0 0.0
        %2629 = vmatpush.msra.mxu0 0.0
        %2630 = vmatpush.msra.mxu0 0.0
        %2631 = vmatpush.msra.mxu0 0.0
        %v2632 = vand.u32 %v2536, 4294901760
        %2633 = vmatpush.msra.mxu0 %v2632
        %v2634 = vand.u32 %v2539, 4294901760
        %v2635 = vsub.f32 %v2539, %v2634
        %v2636 = vand.u32 %v2635, 4294901760
        %2637 = vmatmul.f32.gmra.mxu0 %v2636
        %v2638 = vpop.f32.mrf.mxu0
        %v2639 = vadd.f32 %v2615, %v2638
        %2640 = vdwg.mxu0
        %2641 = vmatpush.msra.mxu0 0.0
        %2642 = vmatpush.msra.mxu0 0.0
        %2643 = vmatpush.msra.mxu0 0.0
        %2644 = vmatpush.msra.mxu0 0.0
        %2645 = vmatpush.msra.mxu0 0.0
        %2646 = vmatpush.msra.mxu0 0.0
        %2647 = vmatpush.msra.mxu0 0.0
        %2648 = vmatpush.msra.mxu0 0.0
        %2649 = vmatpush.msra.mxu0 0.0
        %2650 = vmatpush.msra.mxu0 0.0
        %2651 = vmatpush.msra.mxu0 0.0
        %2652 = vmatpush.msra.mxu0 0.0
        %2653 = vmatpush.msra.mxu0 0.0
        %2654 = vmatpush.msra.mxu0 0.0
        %2655 = vmatpush.msra.mxu0 0.0
        %v2656 = vand.u32 %v2536, 4294901760
        %v2657 = vsub.f32 %v2536, %v2656
        %v2658 = vand.u32 %v2657, 4294901760
        %2659 = vmatpush.msra.mxu0 %v2658
        %v2660 = vand.u32 %v2539, 4294901760
        %2661 = vmatmul.f32.gmra.mxu0 %v2660
        %v2662 = vpop.f32.mrf.mxu0
        %v2663 = vadd.f32 %v2639, %v2662
        %2664 = vdwg.mxu0
        %2665 = vmatpush.msra.mxu0 0.0
        %2666 = vmatpush.msra.mxu0 0.0
        %2667 = vmatpush.msra.mxu0 0.0
        %2668 = vmatpush.msra.mxu0 0.0
        %2669 = vmatpush.msra.mxu0 0.0
        %2670 = vmatpush.msra.mxu0 0.0
        %2671 = vmatpush.msra.mxu0 0.0
        %2672 = vmatpush.msra.mxu0 0.0
        %2673 = vmatpush.msra.mxu0 0.0
        %2674 = vmatpush.msra.mxu0 0.0
        %2675 = vmatpush.msra.mxu0 0.0
        %2676 = vmatpush.msra.mxu0 0.0
        %2677 = vmatpush.msra.mxu0 0.0
        %2678 = vmatpush.msra.mxu0 0.0
        %2679 = vmatpush.msra.mxu0 0.0
        %v2680 = vand.u32 %v2536, 4294901760
        %2681 = vmatpush.msra.mxu0 %v2680
        %v2682 = vand.u32 %v2539, 4294901760
        %2683 = vmatmul.f32.gmra.mxu0 %v2682
        %v2684 = vpop.f32.mrf.mxu0
        %v2685 = vadd.f32 %v2663, %v2684
        %2686 = vdwg.mxu0
        %2687 = vrot.lane.b32.xlu0 %v358, 16
        %v2688 = vpop.permute.xlu0 %2687
        %2689 = vrot.lane.b32.xlu0 %v359, 16
        %v2690 = vpop.permute.xlu0 %2689
        %v2691 = vsel %vm362, %v2688, 0
        %v2693 = vsel %vm362, %v2690, 0
        %2695 = vmatpush.xpose.msra.mxu0 0.0
        %2696 = vmatpush.xpose.msra.mxu0 0.0
        %2697 = vmatpush.xpose.msra.mxu0 0.0
        %2698 = vmatpush.xpose.msra.mxu0 0.0
        %2699 = vmatpush.xpose.msra.mxu0 0.0
        %2700 = vmatpush.xpose.msra.mxu0 0.0
        %2701 = vmatpush.xpose.msra.mxu0 0.0
        %2702 = vmatpush.xpose.msra.mxu0 0.0
        %2703 = vmatpush.xpose.msra.mxu0 0.0
        %2704 = vmatpush.xpose.msra.mxu0 0.0
        %2705 = vmatpush.xpose.msra.mxu0 0.0
        %2706 = vmatpush.xpose.msra.mxu0 0.0
        %2707 = vmatpush.xpose.msra.mxu0 0.0
        %2708 = vmatpush.xpose.msra.mxu0 0.0
        %2709 = vmatpush.xpose.msra.mxu0 0.0
        %v2710 = vand.u32 %v2693, 4294901760
        %2711 = vmatpush.xpose.msra.mxu0 %v2710
        %v2712 = vand.u32 %v2691, 4294901760
        %v2713 = vsub.f32 %v2691, %v2712
        %v2714 = vand.u32 %v2713, 4294901760
        %v2715 = vsub.f32 %v2713, %v2714
        %v2716 = vand.u32 %v2715, 4294901760
        %2717 = vmatmul.f32.gmra.mxu0 %v2716
        %v2718 = vpop.f32.mrf.mxu0
        %v2719 = vadd.f32 0.0, %v2718
        %2720 = vdwg.mxu0
        %2721 = vmatpush.xpose.msra.mxu0 0.0
        %2722 = vmatpush.xpose.msra.mxu0 0.0
        %2723 = vmatpush.xpose.msra.mxu0 0.0
        %2724 = vmatpush.xpose.msra.mxu0 0.0
        %2725 = vmatpush.xpose.msra.mxu0 0.0
        %2726 = vmatpush.xpose.msra.mxu0 0.0
        %2727 = vmatpush.xpose.msra.mxu0 0.0
        %2728 = vmatpush.xpose.msra.mxu0 0.0
        %2729 = vmatpush.xpose.msra.mxu0 0.0
        %2730 = vmatpush.xpose.msra.mxu0 0.0
        %2731 = vmatpush.xpose.msra.mxu0 0.0
        %2732 = vmatpush.xpose.msra.mxu0 0.0
        %2733 = vmatpush.xpose.msra.mxu0 0.0
        %2734 = vmatpush.xpose.msra.mxu0 0.0
        %2735 = vmatpush.xpose.msra.mxu0 0.0
        %v2736 = vand.u32 %v2693, 4294901760
        %v2737 = vsub.f32 %v2693, %v2736
        %v2738 = vand.u32 %v2737, 4294901760
        %v2739 = vsub.f32 %v2737, %v2738
        %v2740 = vand.u32 %v2739, 4294901760
        %2741 = vmatpush.xpose.msra.mxu0 %v2740
        %v2742 = vand.u32 %v2691, 4294901760
        %2743 = vmatmul.f32.gmra.mxu0 %v2742
        %v2744 = vpop.f32.mrf.mxu0
        %v2745 = vadd.f32 %v2719, %v2744
        %2746 = vdwg.mxu0
        %2747 = vmatpush.xpose.msra.mxu0 0.0
        %2748 = vmatpush.xpose.msra.mxu0 0.0
        %2749 = vmatpush.xpose.msra.mxu0 0.0
        %2750 = vmatpush.xpose.msra.mxu0 0.0
        %2751 = vmatpush.xpose.msra.mxu0 0.0
        %2752 = vmatpush.xpose.msra.mxu0 0.0
        %2753 = vmatpush.xpose.msra.mxu0 0.0
        %2754 = vmatpush.xpose.msra.mxu0 0.0
        %2755 = vmatpush.xpose.msra.mxu0 0.0
        %2756 = vmatpush.xpose.msra.mxu0 0.0
        %2757 = vmatpush.xpose.msra.mxu0 0.0
        %2758 = vmatpush.xpose.msra.mxu0 0.0
        %2759 = vmatpush.xpose.msra.mxu0 0.0
        %2760 = vmatpush.xpose.msra.mxu0 0.0
        %2761 = vmatpush.xpose.msra.mxu0 0.0
        %v2762 = vand.u32 %v2693, 4294901760
        %v2763 = vsub.f32 %v2693, %v2762
        %2764 = vmatpush.xpose.msra.mxu0 %v2763
        %v2765 = vand.u32 %v2691, 4294901760
        %v2766 = vsub.f32 %v2691, %v2765
        %2767 = vmatmul.f32.gmra.mxu0 %v2766
        %v2768 = vpop.f32.mrf.mxu0
        %v2769 = vadd.f32 %v2745, %v2768
        %2770 = vdwg.mxu0
        %2771 = vmatpush.xpose.msra.mxu0 0.0
        %2772 = vmatpush.xpose.msra.mxu0 0.0
        %2773 = vmatpush.xpose.msra.mxu0 0.0
        %2774 = vmatpush.xpose.msra.mxu0 0.0
        %2775 = vmatpush.xpose.msra.mxu0 0.0
        %2776 = vmatpush.xpose.msra.mxu0 0.0
        %2777 = vmatpush.xpose.msra.mxu0 0.0
        %2778 = vmatpush.xpose.msra.mxu0 0.0
        %2779 = vmatpush.xpose.msra.mxu0 0.0
        %2780 = vmatpush.xpose.msra.mxu0 0.0
        %2781 = vmatpush.xpose.msra.mxu0 0.0
        %2782 = vmatpush.xpose.msra.mxu0 0.0
        %2783 = vmatpush.xpose.msra.mxu0 0.0
        %2784 = vmatpush.xpose.msra.mxu0 0.0
        %2785 = vmatpush.xpose.msra.mxu0 0.0
        %v2786 = vand.u32 %v2693, 4294901760
        %2787 = vmatpush.xpose.msra.mxu0 %v2786
        %v2788 = vand.u32 %v2691, 4294901760
        %v2789 = vsub.f32 %v2691, %v2788
        %v2790 = vand.u32 %v2789, 4294901760
        %2791 = vmatmul.f32.gmra.mxu0 %v2790
        %v2792 = vpop.f32.mrf.mxu0
        %v2793 = vadd.f32 %v2769, %v2792
        %2794 = vdwg.mxu0
        %2795 = vmatpush.xpose.msra.mxu0 0.0
        %2796 = vmatpush.xpose.msra.mxu0 0.0
        %2797 = vmatpush.xpose.msra.mxu0 0.0
        %2798 = vmatpush.xpose.msra.mxu0 0.0
        %2799 = vmatpush.xpose.msra.mxu0 0.0
        %2800 = vmatpush.xpose.msra.mxu0 0.0
        %2801 = vmatpush.xpose.msra.mxu0 0.0
        %2802 = vmatpush.xpose.msra.mxu0 0.0
        %2803 = vmatpush.xpose.msra.mxu0 0.0
        %2804 = vmatpush.xpose.msra.mxu0 0.0
        %2805 = vmatpush.xpose.msra.mxu0 0.0
        %2806 = vmatpush.xpose.msra.mxu0 0.0
        %2807 = vmatpush.xpose.msra.mxu0 0.0
        %2808 = vmatpush.xpose.msra.mxu0 0.0
        %2809 = vmatpush.xpose.msra.mxu0 0.0
        %v2810 = vand.u32 %v2693, 4294901760
        %v2811 = vsub.f32 %v2693, %v2810
        %v2812 = vand.u32 %v2811, 4294901760
        %2813 = vmatpush.xpose.msra.mxu0 %v2812
        %v2814 = vand.u32 %v2691, 4294901760
        %2815 = vmatmul.f32.gmra.mxu0 %v2814
        %v2816 = vpop.f32.mrf.mxu0
        %v2817 = vadd.f32 %v2793, %v2816
        %2818 = vdwg.mxu0
        %2819 = vmatpush.xpose.msra.mxu0 0.0
        %2820 = vmatpush.xpose.msra.mxu0 0.0
        %2821 = vmatpush.xpose.msra.mxu0 0.0
        %2822 = vmatpush.xpose.msra.mxu0 0.0
        %2823 = vmatpush.xpose.msra.mxu0 0.0
        %2824 = vmatpush.xpose.msra.mxu0 0.0
        %2825 = vmatpush.xpose.msra.mxu0 0.0
        %2826 = vmatpush.xpose.msra.mxu0 0.0
        %2827 = vmatpush.xpose.msra.mxu0 0.0
        %2828 = vmatpush.xpose.msra.mxu0 0.0
        %2829 = vmatpush.xpose.msra.mxu0 0.0
        %2830 = vmatpush.xpose.msra.mxu0 0.0
        %2831 = vmatpush.xpose.msra.mxu0 0.0
        %2832 = vmatpush.xpose.msra.mxu0 0.0
        %2833 = vmatpush.xpose.msra.mxu0 0.0
        %v2834 = vand.u32 %v2693, 4294901760
        %2835 = vmatpush.xpose.msra.mxu0 %v2834
        %v2836 = vand.u32 %v2691, 4294901760
        %2837 = vmatmul.f32.gmra.mxu0 %v2836
        %v2838 = vpop.f32.mrf.mxu0
        %v2839 = vadd.f32 %v2817, %v2838
        %2840 = vdwg.mxu0
        %v2841 = vmul.f32 %v2839, 0.25
        %v2842 = vadd.f32 %v2841, %v517
        %v2843 = vsel %vm520, %v2842, -inf
        %2844 = vmax.xlane.f32.xlu0 %v2843
        %v2845 = vpop.xlane.xlu0 %2844
        %v2846 = vsub.f32 %v2842, %v2845
        %v2847 = vmul.f32 %v2846, 1.442695
        %v2848 = vpow.pop %v2847
        %v2849 = vsel %vm520, %v2848, 0.0
        %2850 = vadd.xlane.f32.xlu0 %v2849
        %v2851 = vpop.xlane.xlu0 %2850
        %v2852 = vrcp.pop %v2851
        %v2853 = vmul.f32 %v2851, %v2852
        %v2854 = vsub.f32 1.0, %v2853
        %v2855 = vmul.f32 %v2852, %v2854
        %v2856 = vadd.f32 %v2852, %v2855
        %vm2857 = vweird.f32 %v2851
        %vm2858 = vweird.f32 %v2852
        %vm2859 = vmor %vm2857, %vm2858
        %v2860 = vsel %vm2859, %v2852, %v2856
        %v2861 = vand.u32 2147483647, %v2851
        %vm2862 = vcmp.eq.f32.partialorder %v2861, 8.507059e+37
        %v2863 = vand.u32 %v2851, 2147483648
        %v2864 = vor.u32 1.1754944e-38, %v2863
        %v2865 = vsel %vm2862, %v2864, %v2860
        %v2866 = vmul.f32 %v2848, %v2865
        %2867 = vrot.lane.b32.xlu0 %v360, 16
        %v2868 = vpop.permute.xlu0 %2867
        %v2871 = vsel %vm520, %v2866, 0
        %2873 = vmatpush.msra.mxu0 0.0
        %2874 = vmatpush.msra.mxu0 0.0
        %2875 = vmatpush.msra.mxu0 0.0
        %2876 = vmatpush.msra.mxu0 0.0
        %2877 = vmatpush.msra.mxu0 0.0
        %2878 = vmatpush.msra.mxu0 0.0
        %2879 = vmatpush.msra.mxu0 0.0
        %2880 = vmatpush.msra.mxu0 0.0
        %2881 = vmatpush.msra.mxu0 0.0
        %2882 = vmatpush.msra.mxu0 0.0
        %2883 = vmatpush.msra.mxu0 0.0
        %2884 = vmatpush.msra.mxu0 0.0
        %2885 = vmatpush.msra.mxu0 0.0
        %2886 = vmatpush.msra.mxu0 0.0
        %2887 = vmatpush.msra.mxu0 0.0
        %v2888 = vand.u32 %v2868, 4294901760
        %2889 = vmatpush.msra.mxu0 %v2888
        %v2890 = vand.u32 %v2871, 4294901760
        %v2891 = vsub.f32 %v2871, %v2890
        %v2892 = vand.u32 %v2891, 4294901760
        %v2893 = vsub.f32 %v2891, %v2892
        %v2894 = vand.u32 %v2893, 4294901760
        %2895 = vmatmul.f32.gmra.mxu0 %v2894
        %v2896 = vpop.f32.mrf.mxu0
        %v2897 = vadd.f32 0.0, %v2896
        %2898 = vdwg.mxu0
        %2899 = vmatpush.msra.mxu0 0.0
        %2900 = vmatpush.msra.mxu0 0.0
        %2901 = vmatpush.msra.mxu0 0.0
        %2902 = vmatpush.msra.mxu0 0.0
        %2903 = vmatpush.msra.mxu0 0.0
        %2904 = vmatpush.msra.mxu0 0.0
        %2905 = vmatpush.msra.mxu0 0.0
        %2906 = vmatpush.msra.mxu0 0.0
        %2907 = vmatpush.msra.mxu0 0.0
        %2908 = vmatpush.msra.mxu0 0.0
        %2909 = vmatpush.msra.mxu0 0.0
        %2910 = vmatpush.msra.mxu0 0.0
        %2911 = vmatpush.msra.mxu0 0.0
        %2912 = vmatpush.msra.mxu0 0.0
        %2913 = vmatpush.msra.mxu0 0.0
        %v2914 = vand.u32 %v2868, 4294901760
        %v2915 = vsub.f32 %v2868, %v2914
        %v2916 = vand.u32 %v2915, 4294901760
        %v2917 = vsub.f32 %v2915, %v2916
        %v2918 = vand.u32 %v2917, 4294901760
        %2919 = vmatpush.msra.mxu0 %v2918
        %v2920 = vand.u32 %v2871, 4294901760
        %2921 = vmatmul.f32.gmra.mxu0 %v2920
        %v2922 = vpop.f32.mrf.mxu0
        %v2923 = vadd.f32 %v2897, %v2922
        %2924 = vdwg.mxu0
        %2925 = vmatpush.msra.mxu0 0.0
        %2926 = vmatpush.msra.mxu0 0.0
        %2927 = vmatpush.msra.mxu0 0.0
        %2928 = vmatpush.msra.mxu0 0.0
        %2929 = vmatpush.msra.mxu0 0.0
        %2930 = vmatpush.msra.mxu0 0.0
        %2931 = vmatpush.msra.mxu0 0.0
        %2932 = vmatpush.msra.mxu0 0.0
        %2933 = vmatpush.msra.mxu0 0.0
        %2934 = vmatpush.msra.mxu0 0.0
        %2935 = vmatpush.msra.mxu0 0.0
        %2936 = vmatpush.msra.mxu0 0.0
        %2937 = vmatpush.msra.mxu0 0.0
        %2938 = vmatpush.msra.mxu0 0.0
        %2939 = vmatpush.msra.mxu0 0.0
        %v2940 = vand.u32 %v2868, 4294901760
        %v2941 = vsub.f32 %v2868, %v2940
        %2942 = vmatpush.msra.mxu0 %v2941
        %v2943 = vand.u32 %v2871, 4294901760
        %v2944 = vsub.f32 %v2871, %v2943
        %2945 = vmatmul.f32.gmra.mxu0 %v2944
        %v2946 = vpop.f32.mrf.mxu0
        %v2947 = vadd.f32 %v2923, %v2946
        %2948 = vdwg.mxu0
        %2949 = vmatpush.msra.mxu0 0.0
        %2950 = vmatpush.msra.mxu0 0.0
        %2951 = vmatpush.msra.mxu0 0.0
        %2952 = vmatpush.msra.mxu0 0.0
        %2953 = vmatpush.msra.mxu0 0.0
        %2954 = vmatpush.msra.mxu0 0.0
        %2955 = vmatpush.msra.mxu0 0.0
        %2956 = vmatpush.msra.mxu0 0.0
        %2957 = vmatpush.msra.mxu0 0.0
        %2958 = vmatpush.msra.mxu0 0.0
        %2959 = vmatpush.msra.mxu0 0.0
        %2960 = vmatpush.msra.mxu0 0.0
        %2961 = vmatpush.msra.mxu0 0.0
        %2962 = vmatpush.msra.mxu0 0.0
        %2963 = vmatpush.msra.mxu0 0.0
        %v2964 = vand.u32 %v2868, 4294901760
        %2965 = vmatpush.msra.mxu0 %v2964
        %v2966 = vand.u32 %v2871, 4294901760
        %v2967 = vsub.f32 %v2871, %v2966
        %v2968 = vand.u32 %v2967, 4294901760
        %2969 = vmatmul.f32.gmra.mxu0 %v2968
        %v2970 = vpop.f32.mrf.mxu0
        %v2971 = vadd.f32 %v2947, %v2970
        %2972 = vdwg.mxu0
        %2973 = vmatpush.msra.mxu0 0.0
        %2974 = vmatpush.msra.mxu0 0.0
        %2975 = vmatpush.msra.mxu0 0.0
        %2976 = vmatpush.msra.mxu0 0.0
        %2977 = vmatpush.msra.mxu0 0.0
        %2978 = vmatpush.msra.mxu0 0.0
        %2979 = vmatpush.msra.mxu0 0.0
        %2980 = vmatpush.msra.mxu0 0.0
        %2981 = vmatpush.msra.mxu0 0.0
        %2982 = vmatpush.msra.mxu0 0.0
        %2983 = vmatpush.msra.mxu0 0.0
        %2984 = vmatpush.msra.mxu0 0.0
        %2985 = vmatpush.msra.mxu0 0.0
        %2986 = vmatpush.msra.mxu0 0.0
        %2987 = vmatpush.msra.mxu0 0.0
        %v2988 = vand.u32 %v2868, 4294901760
        %v2989 = vsub.f32 %v2868, %v2988
        %v2990 = vand.u32 %v2989, 4294901760
        %2991 = vmatpush.msra.mxu0 %v2990
        %v2992 = vand.u32 %v2871, 4294901760
        %2993 = vmatmul.f32.gmra.mxu0 %v2992
        %v2994 = vpop.f32.mrf.mxu0
        %v2995 = vadd.f32 %v2971, %v2994
        %2996 = vdwg.mxu0
        %2997 = vmatpush.msra.mxu0 0.0
        %2998 = vmatpush.msra.mxu0 0.0
        %2999 = vmatpush.msra.mxu0 0.0
        %3000 = vmatpush.msra.mxu0 0.0
        %3001 = vmatpush.msra.mxu0 0.0
        %3002 = vmatpush.msra.mxu0 0.0
        %3003 = vmatpush.msra.mxu0 0.0
        %3004 = vmatpush.msra.mxu0 0.0
        %3005 = vmatpush.msra.mxu0 0.0
        %3006 = vmatpush.msra.mxu0 0.0
        %3007 = vmatpush.msra.mxu0 0.0
        %3008 = vmatpush.msra.mxu0 0.0
        %3009 = vmatpush.msra.mxu0 0.0
        %3010 = vmatpush.msra.mxu0 0.0
        %3011 = vmatpush.msra.mxu0 0.0
        %v3012 = vand.u32 %v2868, 4294901760
        %3013 = vmatpush.msra.mxu0 %v3012
        %v3014 = vand.u32 %v2871, 4294901760
        %3015 = vmatmul.f32.gmra.mxu0 %v3014
        %v3016 = vpop.f32.mrf.mxu0
        %v3017 = vadd.f32 %v2995, %v3016
        %3018 = vdwg.mxu0
        %3020 = vrot.lane.b32.xlu0 %v1025, 16
        %v3021 = vpop.permute.xlu0 %3020
        %3024 = vrot.lane.b32.xlu0 %v1357, 32
        %v3025 = vpop.permute.xlu0 %3024
        %3028 = vrot.lane.b32.xlu0 %v1689, 48
        %v3029 = vpop.permute.xlu0 %3028
        %3032 = vrot.lane.b32.xlu0 %v2021, 64
        %v3033 = vpop.permute.xlu0 %3032
        %3036 = vrot.lane.b32.xlu0 %v2353, 80
        %v3037 = vpop.permute.xlu0 %3036
        %3040 = vrot.lane.b32.xlu0 %v2685, 96
        %v3041 = vpop.permute.xlu0 %3040
        %3044 = vrot.lane.b32.xlu0 %v3017, 112
        %v3045 = vpop.permute.xlu0 %3044
        %v3047 = vsel %vm362, %v692, %v3021
        %vm3048 = vcmask 261120
        %v3049 = vsel %vm3048, %v3047, %v3025
        %vm3050 = vcmask 392192
        %v3051 = vsel %vm3050, %v3049, %v3029
        %vm3052 = vcmask 523264
        %v3053 = vsel %vm3052, %v3051, %v3033
        %vm3054 = vcmask 654336
        %v3055 = vsel %vm3054, %v3053, %v3037
        %vm3056 = vcmask 785408
        %v3057 = vsel %vm3056, %v3055, %v3041
        %vm3058 = vcmask 916480
        %v3059 = vsel %vm3058, %v3057, %v3045
        %v3060 = vld [vmem:[#allocation4] sm:$0xff]
        %v3061 = vld [vmem:[#allocation4 + $0x8] sm:$0xff]
        %v3062 = vld [vmem:[#allocation4 + $0x10] sm:$0xff]
        %v3063 = vld [vmem:[#allocation4 + $0x18] sm:$0xff]
        %v3064 = vld [vmem:[#allocation4 + $0x20] sm:$0xff]
        %v3065 = vld [vmem:[#allocation4 + $0x28] sm:$0xff]
        %v3066 = vld [vmem:[#allocation4 + $0x30] sm:$0xff]
        %v3067 = vld [vmem:[#allocation4 + $0x38] sm:$0xff]
        %v3068 = vld [vmem:[#allocation4 + $0x40] sm:$0xff]
        %v3069 = vld [vmem:[#allocation4 + $0x48] sm:$0xff]
        %v3070 = vld [vmem:[#allocation4 + $0x50] sm:$0xff]
        %v3071 = vld [vmem:[#allocation4 + $0x58] sm:$0xff]
        %v3072 = vld [vmem:[#allocation4 + $0x60] sm:$0xff]
        %v3073 = vld [vmem:[#allocation4 + $0x68] sm:$0xff]
        %v3074 = vld [vmem:[#allocation4 + $0x70] sm:$0xff]
        %v3075 = vld [vmem:[#allocation4 + $0x78] sm:$0xff]
        %v3076 = vld [vmem:[%s7] sm:$0x1]
        %v3078 = vperm.slane %v3076, 0
        %v3080 = vand.u32 %v3075, 4294901760
        %3081 = vmatpush.msra.mxu0 %v3080
        %v3082 = vand.u32 %v3074, 4294901760
        %3083 = vmatpush.msra.mxu0 %v3082
        %v3084 = vand.u32 %v3073, 4294901760
        %3085 = vmatpush.msra.mxu0 %v3084
        %v3086 = vand.u32 %v3072, 4294901760
        %3087 = vmatpush.msra.mxu0 %v3086
        %v3088 = vand.u32 %v3071, 4294901760
        %3089 = vmatpush.msra.mxu0 %v3088
        %v3090 = vand.u32 %v3070, 4294901760
        %3091 = vmatpush.msra.mxu0 %v3090
        %v3092 = vand.u32 %v3069, 4294901760
        %3093 = vmatpush.msra.mxu0 %v3092
        %v3094 = vand.u32 %v3068, 4294901760
        %3095 = vmatpush.msra.mxu0 %v3094
        %v3096 = vand.u32 %v3067, 4294901760
        %3097 = vmatpush.msra.mxu0 %v3096
        %v3098 = vand.u32 %v3066, 4294901760
        %3099 = vmatpush.msra.mxu0 %v3098
        %v3100 = vand.u32 %v3065, 4294901760
        %3101 = vmatpush.msra.mxu0 %v3100
        %v3102 = vand.u32 %v3064, 4294901760
        %3103 = vmatpush.msra.mxu0 %v3102
        %v3104 = vand.u32 %v3063, 4294901760
        %3105 = vmatpush.msra.mxu0 %v3104
        %v3106 = vand.u32 %v3062, 4294901760
        %3107 = vmatpush.msra.mxu0 %v3106
        %v3108 = vand.u32 %v3061, 4294901760
        %3109 = vmatpush.msra.mxu0 %v3108
        %v3110 = vand.u32 %v3060, 4294901760
        %3111 = vmatpush.msra.mxu0 %v3110
        %v3112 = vand.u32 %v3059, 4294901760
        %v3113 = vsub.f32 %v3059, %v3112
        %v3114 = vand.u32 %v3113, 4294901760
        %v3115 = vsub.f32 %v3113, %v3114
        %v3116 = vand.u32 %v3115, 4294901760
        %3117 = vmatmul.f32.gmra.mxu0 %v3116
        %v3118 = vpop.f32.mrf.mxu0
        %v3119 = vadd.f32 %v3078, %v3118
        %3120 = vdwg.mxu0
        %v3121 = vand.u32 %v3075, 4294901760
        %v3122 = vsub.f32 %v3075, %v3121
        %v3123 = vand.u32 %v3122, 4294901760
        %v3124 = vsub.f32 %v3122, %v3123
        %v3125 = vand.u32 %v3124, 4294901760
        %3126 = vmatpush.msra.mxu0 %v3125
        %v3127 = vand.u32 %v3074, 4294901760
        %v3128 = vsub.f32 %v3074, %v3127
        %v3129 = vand.u32 %v3128, 4294901760
        %v3130 = vsub.f32 %v3128, %v3129
        %v3131 = vand.u32 %v3130, 4294901760
        %3132 = vmatpush.msra.mxu0 %v3131
        %v3133 = vand.u32 %v3073, 4294901760
        %v3134 = vsub.f32 %v3073, %v3133
        %v3135 = vand.u32 %v3134, 4294901760
        %v3136 = vsub.f32 %v3134, %v3135
        %v3137 = vand.u32 %v3136, 4294901760
        %3138 = vmatpush.msra.mxu0 %v3137
        %v3139 = vand.u32 %v3072, 4294901760
        %v3140 = vsub.f32 %v3072, %v3139
        %v3141 = vand.u32 %v3140, 4294901760
        %v3142 = vsub.f32 %v3140, %v3141
        %v3143 = vand.u32 %v3142, 4294901760
        %3144 = vmatpush.msra.mxu0 %v3143
        %v3145 = vand.u32 %v3071, 4294901760
        %v3146 = vsub.f32 %v3071, %v3145
        %v3147 = vand.u32 %v3146, 4294901760
        %v3148 = vsub.f32 %v3146, %v3147
        %v3149 = vand.u32 %v3148, 4294901760
        %3150 = vmatpush.msra.mxu0 %v3149
        %v3151 = vand.u32 %v3070, 4294901760
        %v3152 = vsub.f32 %v3070, %v3151
        %v3153 = vand.u32 %v3152, 4294901760
        %v3154 = vsub.f32 %v3152, %v3153
        %v3155 = vand.u32 %v3154, 4294901760
        %3156 = vmatpush.msra.mxu0 %v3155
        %v3157 = vand.u32 %v3069, 4294901760
        %v3158 = vsub.f32 %v3069, %v3157
        %v3159 = vand.u32 %v3158, 4294901760
        %v3160 = vsub.f32 %v3158, %v3159
        %v3161 = vand.u32 %v3160, 4294901760
        %3162 = vmatpush.msra.mxu0 %v3161
        %v3163 = vand.u32 %v3068, 4294901760
        %v3164 = vsub.f32 %v3068, %v3163
        %v3165 = vand.u32 %v3164, 4294901760
        %v3166 = vsub.f32 %v3164, %v3165
        %v3167 = vand.u32 %v3166, 4294901760
        %3168 = vmatpush.msra.mxu0 %v3167
        %v3169 = vand.u32 %v3067, 4294901760
        %v3170 = vsub.f32 %v3067, %v3169
        %v3171 = vand.u32 %v3170, 4294901760
        %v3172 = vsub.f32 %v3170, %v3171
        %v3173 = vand.u32 %v3172, 4294901760
        %3174 = vmatpush.msra.mxu0 %v3173
        %v3175 = vand.u32 %v3066, 4294901760
        %v3176 = vsub.f32 %v3066, %v3175
        %v3177 = vand.u32 %v3176, 4294901760
        %v3178 = vsub.f32 %v3176, %v3177
        %v3179 = vand.u32 %v3178, 4294901760
        %3180 = vmatpush.msra.mxu0 %v3179
        %v3181 = vand.u32 %v3065, 4294901760
        %v3182 = vsub.f32 %v3065, %v3181
        %v3183 = vand.u32 %v3182, 4294901760
        %v3184 = vsub.f32 %v3182, %v3183
        %v3185 = vand.u32 %v3184, 4294901760
        %3186 = vmatpush.msra.mxu0 %v3185
        %v3187 = vand.u32 %v3064, 4294901760
        %v3188 = vsub.f32 %v3064, %v3187
        %v3189 = vand.u32 %v3188, 4294901760
        %v3190 = vsub.f32 %v3188, %v3189
        %v3191 = vand.u32 %v3190, 4294901760
        %3192 = vmatpush.msra.mxu0 %v3191
        %v3193 = vand.u32 %v3063, 4294901760
        %v3194 = vsub.f32 %v3063, %v3193
        %v3195 = vand.u32 %v3194, 4294901760
        %v3196 = vsub.f32 %v3194, %v3195
        %v3197 = vand.u32 %v3196, 4294901760
        %3198 = vmatpush.msra.mxu0 %v3197
        %v3199 = vand.u32 %v3062, 4294901760
        %v3200 = vsub.f32 %v3062, %v3199
        %v3201 = vand.u32 %v3200, 4294901760
        %v3202 = vsub.f32 %v3200, %v3201
        %v3203 = vand.u32 %v3202, 4294901760
        %3204 = vmatpush.msra.mxu0 %v3203
        %v3205 = vand.u32 %v3061, 4294901760
        %v3206 = vsub.f32 %v3061, %v3205
        %v3207 = vand.u32 %v3206, 4294901760
        %v3208 = vsub.f32 %v3206, %v3207
        %v3209 = vand.u32 %v3208, 4294901760
        %3210 = vmatpush.msra.mxu0 %v3209
        %v3211 = vand.u32 %v3060, 4294901760
        %v3212 = vsub.f32 %v3060, %v3211
        %v3213 = vand.u32 %v3212, 4294901760
        %v3214 = vsub.f32 %v3212, %v3213
        %v3215 = vand.u32 %v3214, 4294901760
        %3216 = vmatpush.msra.mxu0 %v3215
        %v3217 = vand.u32 %v3059, 4294901760
        %3218 = vmatmul.f32.gmra.mxu0 %v3217
        %v3219 = vpop.f32.mrf.mxu0
        %v3220 = vadd.f32 %v3119, %v3219
        %3221 = vdwg.mxu0
        %v3222 = vand.u32 %v3075, 4294901760
        %v3223 = vsub.f32 %v3075, %v3222
        %3224 = vmatpush.msra.mxu0 %v3223
        %v3225 = vand.u32 %v3074, 4294901760
        %v3226 = vsub.f32 %v3074, %v3225
        %3227 = vmatpush.msra.mxu0 %v3226
        %v3228 = vand.u32 %v3073, 4294901760
        %v3229 = vsub.f32 %v3073, %v3228
        %3230 = vmatpush.msra.mxu0 %v3229
        %v3231 = vand.u32 %v3072, 4294901760
        %v3232 = vsub.f32 %v3072, %v3231
        %3233 = vmatpush.msra.mxu0 %v3232
        %v3234 = vand.u32 %v3071, 4294901760
        %v3235 = vsub.f32 %v3071, %v3234
        %3236 = vmatpush.msra.mxu0 %v3235
        %v3237 = vand.u32 %v3070, 4294901760
        %v3238 = vsub.f32 %v3070, %v3237
        %3239 = vmatpush.msra.mxu0 %v3238
        %v3240 = vand.u32 %v3069, 4294901760
        %v3241 = vsub.f32 %v3069, %v3240
        %3242 = vmatpush.msra.mxu0 %v3241
        %v3243 = vand.u32 %v3068, 4294901760
        %v3244 = vsub.f32 %v3068, %v3243
        %3245 = vmatpush.msra.mxu0 %v3244
        %v3246 = vand.u32 %v3067, 4294901760
        %v3247 = vsub.f32 %v3067, %v3246
        %3248 = vmatpush.msra.mxu0 %v3247
        %v3249 = vand.u32 %v3066, 4294901760
        %v3250 = vsub.f32 %v3066, %v3249
        %3251 = vmatpush.msra.mxu0 %v3250
        %v3252 = vand.u32 %v3065, 4294901760
        %v3253 = vsub.f32 %v3065, %v3252
        %3254 = vmatpush.msra.mxu0 %v3253
        %v3255 = vand.u32 %v3064, 4294901760
        %v3256 = vsub.f32 %v3064, %v3255
        %3257 = vmatpush.msra.mxu0 %v3256
        %v3258 = vand.u32 %v3063, 4294901760
        %v3259 = vsub.f32 %v3063, %v3258
        %3260 = vmatpush.msra.mxu0 %v3259
        %v3261 = vand.u32 %v3062, 4294901760
        %v3262 = vsub.f32 %v3062, %v3261
        %3263 = vmatpush.msra.mxu0 %v3262
        %v3264 = vand.u32 %v3061, 4294901760
        %v3265 = vsub.f32 %v3061, %v3264
        %3266 = vmatpush.msra.mxu0 %v3265
        %v3267 = vand.u32 %v3060, 4294901760
        %v3268 = vsub.f32 %v3060, %v3267
        %3269 = vmatpush.msra.mxu0 %v3268
        %v3270 = vand.u32 %v3059, 4294901760
        %v3271 = vsub.f32 %v3059, %v3270
        %3272 = vmatmul.f32.gmra.mxu0 %v3271
        %v3273 = vpop.f32.mrf.mxu0
        %v3274 = vadd.f32 %v3220, %v3273
        %3275 = vdwg.mxu0
        %v3276 = vand.u32 %v3075, 4294901760
        %3277 = vmatpush.msra.mxu0 %v3276
        %v3278 = vand.u32 %v3074, 4294901760
        %3279 = vmatpush.msra.mxu0 %v3278
        %v3280 = vand.u32 %v3073, 4294901760
        %3281 = vmatpush.msra.mxu0 %v3280
        %v3282 = vand.u32 %v3072, 4294901760
        %3283 = vmatpush.msra.mxu0 %v3282
        %v3284 = vand.u32 %v3071, 4294901760
        %3285 = vmatpush.msra.mxu0 %v3284
        %v3286 = vand.u32 %v3070, 4294901760
        %3287 = vmatpush.msra.mxu0 %v3286
        %v3288 = vand.u32 %v3069, 4294901760
        %3289 = vmatpush.msra.mxu0 %v3288
        %v3290 = vand.u32 %v3068, 4294901760
        %3291 = vmatpush.msra.mxu0 %v3290
        %v3292 = vand.u32 %v3067, 4294901760
        %3293 = vmatpush.msra.mxu0 %v3292
        %v3294 = vand.u32 %v3066, 4294901760
        %3295 = vmatpush.msra.mxu0 %v3294
        %v3296 = vand.u32 %v3065, 4294901760
        %3297 = vmatpush.msra.mxu0 %v3296
        %v3298 = vand.u32 %v3064, 4294901760
        %3299 = vmatpush.msra.mxu0 %v3298
        %v3300 = vand.u32 %v3063, 4294901760
        %3301 = vmatpush.msra.mxu0 %v3300
        %v3302 = vand.u32 %v3062, 4294901760
        %3303 = vmatpush.msra.mxu0 %v3302
        %v3304 = vand.u32 %v3061, 4294901760
        %3305 = vmatpush.msra.mxu0 %v3304
        %v3306 = vand.u32 %v3060, 4294901760
        %3307 = vmatpush.msra.mxu0 %v3306
        %v3308 = vand.u32 %v3059, 4294901760
        %v3309 = vsub.f32 %v3059, %v3308
        %v3310 = vand.u32 %v3309, 4294901760
        %3311 = vmatmul.f32.gmra.mxu0 %v3310
        %v3312 = vpop.f32.mrf.mxu0
        %v3313 = vadd.f32 %v3274, %v3312
        %3314 = vdwg.mxu0
        %v3315 = vand.u32 %v3075, 4294901760
        %v3316 = vsub.f32 %v3075, %v3315
        %v3317 = vand.u32 %v3316, 4294901760
        %3318 = vmatpush.msra.mxu0 %v3317
        %v3319 = vand.u32 %v3074, 4294901760
        %v3320 = vsub.f32 %v3074, %v3319
        %v3321 = vand.u32 %v3320, 4294901760
        %3322 = vmatpush.msra.mxu0 %v3321
        %v3323 = vand.u32 %v3073, 4294901760
        %v3324 = vsub.f32 %v3073, %v3323
        %v3325 = vand.u32 %v3324, 4294901760
        %3326 = vmatpush.msra.mxu0 %v3325
        %v3327 = vand.u32 %v3072, 4294901760
        %v3328 = vsub.f32 %v3072, %v3327
        %v3329 = vand.u32 %v3328, 4294901760
        %3330 = vmatpush.msra.mxu0 %v3329
        %v3331 = vand.u32 %v3071, 4294901760
        %v3332 = vsub.f32 %v3071, %v3331
        %v3333 = vand.u32 %v3332, 4294901760
        %3334 = vmatpush.msra.mxu0 %v3333
        %v3335 = vand.u32 %v3070, 4294901760
        %v3336 = vsub.f32 %v3070, %v3335
        %v3337 = vand.u32 %v3336, 4294901760
        %3338 = vmatpush.msra.mxu0 %v3337
        %v3339 = vand.u32 %v3069, 4294901760
        %v3340 = vsub.f32 %v3069, %v3339
        %v3341 = vand.u32 %v3340, 4294901760
        %3342 = vmatpush.msra.mxu0 %v3341
        %v3343 = vand.u32 %v3068, 4294901760
        %v3344 = vsub.f32 %v3068, %v3343
        %v3345 = vand.u32 %v3344, 4294901760
        %3346 = vmatpush.msra.mxu0 %v3345
        %v3347 = vand.u32 %v3067, 4294901760
        %v3348 = vsub.f32 %v3067, %v3347
        %v3349 = vand.u32 %v3348, 4294901760
        %3350 = vmatpush.msra.mxu0 %v3349
        %v3351 = vand.u32 %v3066, 4294901760
        %v3352 = vsub.f32 %v3066, %v3351
        %v3353 = vand.u32 %v3352, 4294901760
        %3354 = vmatpush.msra.mxu0 %v3353
        %v3355 = vand.u32 %v3065, 4294901760
        %v3356 = vsub.f32 %v3065, %v3355
        %v3357 = vand.u32 %v3356, 4294901760
        %3358 = vmatpush.msra.mxu0 %v3357
        %v3359 = vand.u32 %v3064, 4294901760
        %v3360 = vsub.f32 %v3064, %v3359
        %v3361 = vand.u32 %v3360, 4294901760
        %3362 = vmatpush.msra.mxu0 %v3361
        %v3363 = vand.u32 %v3063, 4294901760
        %v3364 = vsub.f32 %v3063, %v3363
        %v3365 = vand.u32 %v3364, 4294901760
        %3366 = vmatpush.msra.mxu0 %v3365
        %v3367 = vand.u32 %v3062, 4294901760
        %v3368 = vsub.f32 %v3062, %v3367
        %v3369 = vand.u32 %v3368, 4294901760
        %3370 = vmatpush.msra.mxu0 %v3369
        %v3371 = vand.u32 %v3061, 4294901760
        %v3372 = vsub.f32 %v3061, %v3371
        %v3373 = vand.u32 %v3372, 4294901760
        %3374 = vmatpush.msra.mxu0 %v3373
        %v3375 = vand.u32 %v3060, 4294901760
        %v3376 = vsub.f32 %v3060, %v3375
        %v3377 = vand.u32 %v3376, 4294901760
        %3378 = vmatpush.msra.mxu0 %v3377
        %v3379 = vand.u32 %v3059, 4294901760
        %3380 = vmatmul.f32.gmra.mxu0 %v3379
        %v3381 = vpop.f32.mrf.mxu0
        %v3382 = vadd.f32 %v3313, %v3381
        %3383 = vdwg.mxu0
        %v3384 = vand.u32 %v3075, 4294901760
        %3385 = vmatpush.msra.mxu0 %v3384
        %v3386 = vand.u32 %v3074, 4294901760
        %3387 = vmatpush.msra.mxu0 %v3386
        %v3388 = vand.u32 %v3073, 4294901760
        %3389 = vmatpush.msra.mxu0 %v3388
        %v3390 = vand.u32 %v3072, 4294901760
        %3391 = vmatpush.msra.mxu0 %v3390
        %v3392 = vand.u32 %v3071, 4294901760
        %3393 = vmatpush.msra.mxu0 %v3392
        %v3394 = vand.u32 %v3070, 4294901760
        %3395 = vmatpush.msra.mxu0 %v3394
        %v3396 = vand.u32 %v3069, 4294901760
        %3397 = vmatpush.msra.mxu0 %v3396
        %v3398 = vand.u32 %v3068, 4294901760
        %3399 = vmatpush.msra.mxu0 %v3398
        %v3400 = vand.u32 %v3067, 4294901760
        %3401 = vmatpush.msra.mxu0 %v3400
        %v3402 = vand.u32 %v3066, 4294901760
        %3403 = vmatpush.msra.mxu0 %v3402
        %v3404 = vand.u32 %v3065, 4294901760
        %3405 = vmatpush.msra.mxu0 %v3404
        %v3406 = vand.u32 %v3064, 4294901760
        %3407 = vmatpush.msra.mxu0 %v3406
        %v3408 = vand.u32 %v3063, 4294901760
        %3409 = vmatpush.msra.mxu0 %v3408
        %v3410 = vand.u32 %v3062, 4294901760
        %3411 = vmatpush.msra.mxu0 %v3410
        %v3412 = vand.u32 %v3061, 4294901760
        %3413 = vmatpush.msra.mxu0 %v3412
        %v3414 = vand.u32 %v3060, 4294901760
        %3415 = vmatpush.msra.mxu0 %v3414
        %v3416 = vand.u32 %v3059, 4294901760
        %3417 = vmatmul.f32.gmra.mxu0 %v3416
        %v3418 = vpop.f32.mrf.mxu0
        %v3419 = vadd.f32 %v3382, %v3418
        %3420 = vdwg.mxu0
        %v3421 = vld [vmem:[%s353] sm:$0xff]
        %v3422 = vadd.f32 %v3421, %v3419
        %3423 = vst [vmem:[%s357] sm:$0xff] %v3422
        %p3424 = scmp.lt.s32.totalorder %s21, 1
        %s3425 = scalar_select %p3424, %s21, 1
        %s3426 = smul.addr %s3425, 8
        %s3427 = scalar_lea.vmem %s8, %s3426
        // Predicated region
        $region53: #{encoder_forward.8} parent=47 // pred_check
          %p3428 = pneg %p211
        $region54: #{encoder_forward.8} parent=47 // pred_check_branch
          %3430 = sbr.rel (%p3428) target = $region56
        $region55: #{encoder_forward.8} parent=47 // pred_region
          _
        $region56: #{encoder_forward.8} parent=47 // pred_fallthru
          _
      $region48: #{encoder_forward.8} parent=5 // pred_fallthru
        _
      %p3431 = scmp.le.s32.totalorder 2, %s16
      // Predicated region
      $region57: #{encoder_forward.8} parent=5 // pred_check
        %p3432 = pneg %p3431
      $region58: #{encoder_forward.8} parent=5 // pred_check_branch
        %3434 = sbr.rel (%p3432) target = $region60
      $region59: #{encoder_forward.8} parent=5 // pred_region
        %s3435 = ssub.s32 %s16, 2
        // Predicated region
        $region61: #{encoder_forward.8} parent=59 // pred_check
          %p3436 = pneg %p217
        $region62: #{encoder_forward.8} parent=59 // pred_check_branch
          %3438 = sbr.rel (%p3436) target = $region64
        $region63: #{encoder_forward.8} parent=59 // pred_region
          %p3439 = scmp.lt.s32.totalorder %s22, 1
          %s3440 = scalar_select %p3439, %s22, 1
          %s3441 = smul.addr %s3440, 8
          %s3442 = scalar_lea.vmem %s8, %s3441
        $region64: #{encoder_forward.8} parent=59 // pred_fallthru
          _
      $region60: #{encoder_forward.8} parent=5 // pred_fallthru
        _
    $region6: #{encoder_forward.8} parent=1 // loop_footer
      %s20 = sadd.s32 1, %s16
    $region7: #{encoder_forward.8} parent=1 // loop_footer_branch
      %15 = sbr.rel target = $region3
    $region8: #{encoder_forward.8} parent=1 // loop_exit
      _
    %3443 = vsyncpa [#allocation5], 1
    %s3444 = scalar_lea.sflag [#allocation5], 1
    %3445 = vsyncpa %s3444, 1

</llo_original>
